<compile_context>
chip_gen: v6e
topology: v6e:2x2x1
jax: 0.10.0
libtpu: 0.0.40
codegen_flags: <defaults>
</compile_context>

<pallas_src>
import functools

import jax
import jax.numpy as jnp
from jax.experimental import pallas as pl
from jax.experimental.pallas import tpu as pltpu


_HALO = 3      # halo rows per tile: kH-1 = 2 for the taps + 1 so the in-kernel
               # chunk window is a whole number of spatial rows.
_LANE = 128    # output-channel padding granularity (lane width)
_SUBL = 16     # spatial-width padding granularity (bf16 sublane packing)


def _round_up(x, m):
    return (x + m - 1) // m * m


def _vmem_capacity_bytes():
    try:
        info = pltpu.get_tpu_info()
        cap = int(getattr(info, "vmem_capacity_bytes", 0) or 0)
        if cap > 0:
            return cap
    except Exception:
        pass
    return 64 * 1024 * 1024          # conservative fallback (v7x per-core VMEM)


def _pick_chunk_rows(wp):
    """Spatial rows per in-kernel chunk (~256 flattened rows); the value either
    divides 8 or is a multiple of 8 so the row tile can be a multiple of it."""
    ch = max(1, 256 // wp)
    if ch >= 8:
        ch = min((ch // 8) * 8, 32)
    else:
        ch = 1 << (ch.bit_length() - 1)
    return ch


def _pick_cout_split(cin, cop, weight_budget):
    """Split padded output channels so the (double-buffered) resident weights
    fit inside `weight_budget` bytes."""
    ncop = 1
    while True:
        cop_t = _round_up(-(-cop // ncop), _LANE)
        if cop_t <= _LANE or 2 * 9 * cin * cop_t * 2 <= weight_budget:
            return ncop, cop_t
        ncop += 1


def _pick_row_tile(ho, wp, cin, cop_t, out_bytes, ch, vmem_cap):
    """Output-row tile from an accounted VMEM budget (~40% of capacity)."""
    budget = int(vmem_cap * 0.40)
    th_step = max(8, ch)
    fixed = 2 * 9 * cin * cop_t * 2                 # weights (2 pipeline buffers)
    fixed += 2 * _HALO * wp * cin * 2               # halo rows of the 2 input buffers
    fixed += 2 * (ch + _HALO) * wp * cin * 2        # chunk window + shifted slab (bf16)
    fixed += 2 * ch * wp * cop_t * 4                # chunk accumulator + dot temps (f32)
    per_row = wp * (2 * cin * 2 + 2 * cop_t * out_bytes)   # dbl-buffered in + out
    th = (budget - fixed) // max(per_row, 1)
    th = max(th_step, th // th_step * th_step)
    th = min(th, 512, _round_up(ho, th_step))
    return int(th), th_step


# ---------------------------------------------------------------------------
# Pallas kernel: fused im2col + MXU matmuls for a 3x3 / stride-1 conv on a
# pre-padded, pre-tiled, row-flattened NHWC input block.
# ---------------------------------------------------------------------------
def _conv3x3_kernel(x_ref, w_ref, b_ref, o_ref, *, th, wp, ch, relu):
    """
    x_ref : (1, (th+3)*wp, C)   input tile incl. 3 duplicated halo rows (bf16)
    w_ref : (9, C, Ct)          tap-major weights, tap = kh*3 + kw (bf16)
    b_ref : (1, Ct)             bias (f32)
    o_ref : (1, th*wp, Ct)      output rows for this tile (junk cols included)
    """
    cop = o_ref.shape[-1]
    n_chunks = th // ch
    win_rows = (ch + _HALO) * wp
    bias = b_ref[...]                               # loop-invariant (1, Ct) f32

    def compute_chunk(s):
        r0 = s * (ch * wp)
        if not isinstance(r0, int):
            r0 = pl.multiple_of(r0, wp)             # wp is a multiple of 16
        win = x_ref[0, pl.ds(r0, win_rows), :]      # ((ch+3)*wp, C) bf16
        acc = jnp.zeros((ch * wp, cop), jnp.float32)
        for j in range(3):
            # one small column-shifted slab per kernel column (chunk-local) ...
            sl = win[j:j + (ch + 2) * wp, :]
            for i in range(3):
                # ... then only sublane-aligned row slices per kernel row.
                tap = sl[i * wp:i * wp + ch * wp, :]
                acc = acc + jnp.dot(tap, w_ref[i * 3 + j],
                                    preferred_element_type=jnp.float32)
        acc = acc + bias
        if relu:
            acc = jnp.maximum(acc, 0.0)
        # every output row is written exactly once
        o_ref[0, pl.ds(r0, ch * wp), :] = acc.astype(o_ref.dtype)

    if n_chunks <= 4:
        for s in range(n_chunks):                   # short loop: fully unrolled
            compute_chunk(s)
    else:
        def body(s, carry):
            compute_chunk(s)
            return carry
        jax.lax.fori_loop(0, n_chunks, body, 0)


def _conv3x3_s1_prepadded(xp, w_eff, bias, *, relu, out_dtype):
    """3x3 stride-1 conv on an already spatially padded NHWC input.

    xp    : (B, Ho+2, Wo+2, C)
    w_eff : (9, C, Cout)   tap-major weights
    bias  : (Cout,)
    returns (B, Ho, Wo, Cout) in out_dtype
    """
    B, hi, wi, c = xp.shape
    ho, wo = hi - 2, wi - 2
    cout = w_eff.shape[-1]
    out_bytes = jnp.dtype(out_dtype).itemsize

    vmem_cap = _vmem_capacity_bytes()
    wp = _round_up(wi, _SUBL)
    ch = _pick_chunk_rows(wp)
    cop_full = _round_up(cout, _LANE)
    ncop, cop_t = _pick_cout_split(c, cop_full, int(vmem_cap * 0.40) // 3)
    copp = ncop * cop_t
    th, th_step = _pick_row_tile(ho, wp, c, cop_t, out_bytes, ch, vmem_cap)
    if B == 1 and ncop == 1 and ho >= 2 * th_step:
        th = min(th, _round_up(-(-ho // 2), th_step))   # >= 2 tiles for 2 TCs
    nt = -(-ho // th)

    # --- single prep pass: pad + cast + tile with a duplicated 3-row halo ---
    hp_rows = (nt + 1) * th
    x_b = jnp.pad(xp.astype(jnp.bfloat16),
                  ((0, 0), (0, hp_rows - hi), (0, wp - wi), (0, 0)))
    body = x_b[:, :nt * th].reshape(B, nt, th, wp, c)
    halo = x_b[:, th:(nt + 1) * th].reshape(B, nt, th, wp, c)[:, :, :_HALO]
    x_tiles = jnp.concatenate([body, halo], axis=2).reshape(
        B * nt, (th + _HALO) * wp, c)

    w_in = jnp.pad(w_eff.astype(jnp.bfloat16),
                   ((0, 0), (0, 0), (0, copp - cout)))
    b_in = jnp.pad(bias.astype(jnp.float32), (0, copp - cout)).reshape(1, copp)

    out = pl.pallas_call(
        functools.partial(_conv3x3_kernel, th=th, wp=wp, ch=ch, relu=relu),
        out_shape=jax.ShapeDtypeStruct((B * nt, th * wp, copp), out_dtype),
        grid=(B * nt, ncop),
        in_specs=[
            pl.BlockSpec((1, (th + _HALO) * wp, c), lambda g, q: (g, 0, 0)),
            pl.BlockSpec((9, c, cop_t), lambda g, q: (0, 0, q)),
            pl.BlockSpec((1, cop_t), lambda g, q: (0, q)),
        ],
        out_specs=pl.BlockSpec((1, th * wp, cop_t), lambda g, q: (g, 0, q)),
        compiler_params=pltpu.CompilerParams(
            dimension_semantics=("parallel", "parallel"),
            vmem_limit_bytes=int(vmem_cap * 0.75)),
    )(x_tiles, w_in, b_in)

    out = out.reshape(B, nt * th, wp, copp)
    return out[:, :ho, :wo, :cout]


# ---------------------------------------------------------------------------
# Glue: layer-specific input / weight rearrangements (pure data movement)
# ---------------------------------------------------------------------------
def _prepad(x, pad):
    return jnp.pad(x, ((0, 0), (pad, pad), (pad, pad), (0, 0)))


def _space_to_depth_prepad(x, pad):
    """Pad by `pad`, then 2x2 space-to-depth: a 5x5/stride-2 conv becomes an
    exactly equivalent 3x3/stride-1 conv over 4x the channels."""
    B, h, w, c = x.shape
    hp, wpd = h + 2 * pad, w + 2 * pad
    hp2, wp2 = _round_up(hp, 2), _round_up(wpd, 2)
    xp = jnp.pad(x, ((0, 0), (pad, pad + hp2 - hp), (pad, pad + wp2 - wpd), (0, 0)))
    xs = xp.reshape(B, hp2 // 2, 2, wp2 // 2, 2, c)          # (B,hm,pr,wm,pc,C)
    xs = xs.transpose(0, 1, 3, 2, 4, 5)                      # (B,hm,wm,pr,pc,C)
    return xs.reshape(B, hp2 // 2, wp2 // 2, 4 * c)


def _weight_3x3(w):
    """(Cout, Cin, 3, 3) -> (9, Cin, Cout), tap = kh*3 + kw."""
    co, ci = w.shape[0], w.shape[1]
    return jnp.transpose(w, (2, 3, 1, 0)).reshape(9, ci, co)


def _weight_5x5_s2(w):
    """(Cout, Cin, 5, 5) stride-2 weights -> (9, 4*Cin, Cout) space-to-depth
    equivalent 3x3 stride-1 weights (channel order = (pr, pc, ci))."""
    co, ci = w.shape[0], w.shape[1]
    wpad = jnp.pad(w, ((0, 0), (0, 0), (0, 1), (0, 1)))      # 5x5 -> 6x6 (zeros)
    wpad = wpad.reshape(co, ci, 3, 2, 3, 2)                  # (co,ci,di,pr,dj,pc)
    wpad = wpad.transpose(2, 4, 3, 5, 1, 0)                  # (di,dj,pr,pc,ci,co)
    return wpad.reshape(9, 4 * ci, co)


# ---------------------------------------------------------------------------
# HyperAnalysisEX forward
# ---------------------------------------------------------------------------
def hyper_analysis_ex(x_nchw, params):
    """(B, M, H, W) -> (B, N, ceil(H/4)-ish, ...), matching the PyTorch module."""
    x = jnp.transpose(x_nchw, (0, 2, 3, 1))                  # NCHW -> NHWC
    x = _conv3x3_s1_prepadded(_prepad(x, 1), _weight_3x3(params["w1"]),
                              params["b1"], relu=True, out_dtype=jnp.bfloat16)
    x = _conv3x3_s1_prepadded(_space_to_depth_prepad(x, 2),
                              _weight_5x5_s2(params["w2"]),
                              params["b2"], relu=True, out_dtype=jnp.bfloat16)
    x = _conv3x3_s1_prepadded(_space_to_depth_prepad(x, 2),
                              _weight_5x5_s2(params["w3"]),
                              params["b3"], relu=False, out_dtype=jnp.float32)
    return jnp.transpose(x, (0, 3, 1, 2))                    # NHWC -> NCHW


def init_params(key, M, N):
    k1, k2, k3, k4, k5, k6 = jax.random.split(key, 6)
    def w_init(k, shape, fan_in):
        return jax.random.normal(k, shape, jnp.float32) / jnp.sqrt(fan_in)
    return {
        "w1": w_init(k1, (N, M, 3, 3), M * 9),
        "b1": 0.01 * jax.random.normal(k2, (N,), jnp.float32),
        "w2": w_init(k3, (N, N, 5, 5), N * 25),
        "b2": 0.01 * jax.random.normal(k4, (N,), jnp.float32),
        "w3": w_init(k5, (N, N, 5, 5), N * 25),
        "b3": 0.01 * jax.random.normal(k6, (N,), jnp.float32),
    }


# ---------------------------------------------------------------------------
# Pure-JAX reference (lax.conv, same bf16-in / f32-accumulate cast points)
# ---------------------------------------------------------------------------
def _ref_forward(x_nchw, params):
    def conv(x, w, b, stride, pad):
        y = jax.lax.conv_general_dilated(
            x.astype(jnp.bfloat16), w.astype(jnp.bfloat16),
            window_strides=(stride, stride),
            padding=[(pad, pad), (pad, pad)],
            dimension_numbers=("NCHW", "OIHW", "NCHW"),
            preferred_element_type=jnp.float32)
        return y + b.reshape(1, -1, 1, 1).astype(jnp.float32)
    x = jax.nn.relu(conv(x_nchw, params["w1"], params["b1"], 1, 1)).astype(jnp.bfloat16)
    x = jax.nn.relu(conv(x, params["w2"], params["b2"], 2, 2)).astype(jnp.bfloat16)
    return conv(x, params["w3"], params["b3"], 2, 2)


if __name__ == "__main__":
    key = jax.random.PRNGKey(0)
    kx, kp, kx2 = jax.random.split(key, 3)

    B, M, N, H, W = 2, 4, 8, 16, 16
    params = init_params(kp, M, N)
    fwd = jax.jit(hyper_analysis_ex)
    ref_fn = jax.jit(_ref_forward)

    # Case 1: even spatial dims, batch 2.
    x = jax.random.normal(kx, (B, M, H, W), jnp.float32)
    out = jax.block_until_ready(fwd(x, params))
    assert out.shape == (B, N, H // 4, W // 4), out.shape
    ref = jax.block_until_ready(ref_fn(x, params))
    err = float(jnp.max(jnp.abs(out - ref)))
    assert jnp.allclose(out, ref, rtol=1e-3, atol=1e-3), err

    # Case 2: odd spatial dims, batch 1 (multi row-tile, ho not a multiple of th,
    # exercises halo duplication across tiles and s2d rounding).
    H2 = W2 = 23
    x2 = jax.random.normal(kx2, (1, M, H2, W2), jnp.float32)
    out2 = jax.block_until_ready(fwd(x2, params))
    ref2 = jax.block_until_ready(ref_fn(x2, params))
    assert out2.shape == ref2.shape, (out2.shape, ref2.shape)
    err2 = float(jnp.max(jnp.abs(out2 - ref2)))
    assert jnp.allclose(out2, ref2, rtol=1e-3, atol=1e-3), err2

    print("KERNEL_OK")
</pallas_src>

<mosaic_0001>
module attributes {stable_mosaic.version = 11 : i64} {
  func.func @_conv3x3_kernel(%arg0: i32, %arg1: i32, %arg2: memref<1x608x4xbf16, #tpu.memory_space<vmem>>, %arg3: memref<9x4x128xbf16, #tpu.memory_space<vmem>>, %arg4: memref<1x128xf32, #tpu.memory_space<vmem>>, %arg5: memref<1x512x128xbf16, #tpu.memory_space<vmem>>) attributes {dimension_semantics = [#tpu.dimension_semantics<parallel>, #tpu.dimension_semantics<parallel>], iteration_bounds = array<i64: 2, 1>, scalar_prefetch = 0 : i64, scratch_operands = 0 : i64, tpu.core_type = #tpu.core_type<tc>, window_params = [{transform_indices = @transform_0, window_bounds = array<i64: 1, 608, 4>}, {transform_indices = @transform_1, window_bounds = array<i64: 9, 4, 128>}, {transform_indices = @transform_2, window_bounds = array<i64: 1, 128>}, {transform_indices = @transform_3, window_bounds = array<i64: 1, 512, 128>}]} {
    %c0 = arith.constant 0 : index
    %c0_0 = arith.constant 0 : index
    %0 = vector.load %arg4[%c0, %c0_0] : memref<1x128xf32, #tpu.memory_space<vmem>>, vector<1x128xf32>
    %c0_1 = arith.constant 0 : index
    %c0_2 = arith.constant 0 : index
    %c0_3 = arith.constant 0 : index
    %1 = vector.load %arg2[%c0_1, %c0_2, %c0_3] : memref<1x608x4xbf16, #tpu.memory_space<vmem>>, vector<1x352x4xbf16>
    %2 = vector.shape_cast %1 : vector<1x352x4xbf16> to vector<352x4xbf16>
    %cst = arith.constant 0.000000e+00 : f32
    %3 = vector.broadcast %cst : f32 to vector<256x128xf32>
    %4 = vector.extract_strided_slice %2 {offsets = [0, 0], sizes = [320, 4], strides = [1, 1]} : vector<352x4xbf16> to vector<320x4xbf16>
    %5 = vector.extract_strided_slice %4 {offsets = [0, 0], sizes = [256, 4], strides = [1, 1]} : vector<320x4xbf16> to vector<256x4xbf16>
    %c0_4 = arith.constant 0 : index
    %c0_5 = arith.constant 0 : index
    %c0_6 = arith.constant 0 : index
    %6 = vector.load %arg3[%c0_4, %c0_5, %c0_6] : memref<9x4x128xbf16, #tpu.memory_space<vmem>>, vector<1x4x128xbf16>
    %7 = vector.shape_cast %6 : vector<1x4x128xbf16> to vector<4x128xbf16>
    %cst_7 = arith.constant dense<0.000000e+00> : vector<256x128xf32>
    %8 = tpu.matmul %5, %7, %cst_7 {dimension_numbers = #tpu.dot_dimension_numbers<[1], [0], [0], [1], [0, 0, 1, 1], [], []>} : vector<256x4xbf16>, vector<4x128xbf16>, vector<256x128xf32> -> vector<256x128xf32>
    %9 = arith.addf %3, %8 : vector<256x128xf32>
    %10 = vector.extract_strided_slice %4 {offsets = [32, 0], sizes = [256, 4], strides = [1, 1]} : vector<320x4xbf16> to vector<256x4xbf16>
    %c3 = arith.constant 3 : index
    %c0_8 = arith.constant 0 : index
    %c0_9 = arith.constant 0 : index
    %11 = vector.load %arg3[%c3, %c0_8, %c0_9] : memref<9x4x128xbf16, #tpu.memory_space<vmem>>, vector<1x4x128xbf16>
    %12 = vector.shape_cast %11 : vector<1x4x128xbf16> to vector<4x128xbf16>
    %cst_10 = arith.constant dense<0.000000e+00> : vector<256x128xf32>
    %13 = tpu.matmul %10, %12, %cst_10 {dimension_numbers = #tpu.dot_dimension_numbers<[1], [0], [0], [1], [0, 0, 1, 1], [], []>} : vector<256x4xbf16>, vector<4x128xbf16>, vector<256x128xf32> -> vector<256x128xf32>
    %14 = arith.addf %9, %13 : vector<256x128xf32>
    %15 = vector.extract_strided_slice %4 {offsets = [64, 0], sizes = [256, 4], strides = [1, 1]} : vector<320x4xbf16> to vector<256x4xbf16>
    %c6 = arith.constant 6 : index
    %c0_11 = arith.constant 0 : index
    %c0_12 = arith.constant 0 : index
    %16 = vector.load %arg3[%c6, %c0_11, %c0_12] : memref<9x4x128xbf16, #tpu.memory_space<vmem>>, vector<1x4x128xbf16>
    %17 = vector.shape_cast %16 : vector<1x4x128xbf16> to vector<4x128xbf16>
    %cst_13 = arith.constant dense<0.000000e+00> : vector<256x128xf32>
    %18 = tpu.matmul %15, %17, %cst_13 {dimension_numbers = #tpu.dot_dimension_numbers<[1], [0], [0], [1], [0, 0, 1, 1], [], []>} : vector<256x4xbf16>, vector<4x128xbf16>, vector<256x128xf32> -> vector<256x128xf32>
    %19 = arith.addf %14, %18 : vector<256x128xf32>
    %20 = vector.extract_strided_slice %2 {offsets = [1, 0], sizes = [320, 4], strides = [1, 1]} : vector<352x4xbf16> to vector<320x4xbf16>
    %21 = vector.extract_strided_slice %20 {offsets = [0, 0], sizes = [256, 4], strides = [1, 1]} : vector<320x4xbf16> to vector<256x4xbf16>
    %c1 = arith.constant 1 : index
    %c0_14 = arith.constant 0 : index
    %c0_15 = arith.constant 0 : index
    %22 = vector.load %arg3[%c1, %c0_14, %c0_15] : memref<9x4x128xbf16, #tpu.memory_space<vmem>>, vector<1x4x128xbf16>
    %23 = vector.shape_cast %22 : vector<1x4x128xbf16> to vector<4x128xbf16>
    %cst_16 = arith.constant dense<0.000000e+00> : vector<256x128xf32>
    %24 = tpu.matmul %21, %23, %cst_16 {dimension_numbers = #tpu.dot_dimension_numbers<[1], [0], [0], [1], [0, 0, 1, 1], [], []>} : vector<256x4xbf16>, vector<4x128xbf16>, vector<256x128xf32> -> vector<256x128xf32>
    %25 = arith.addf %19, %24 : vector<256x128xf32>
    %26 = vector.extract_strided_slice %20 {offsets = [32, 0], sizes = [256, 4], strides = [1, 1]} : vector<320x4xbf16> to vector<256x4xbf16>
    %c4 = arith.constant 4 : index
    %c0_17 = arith.constant 0 : index
    %c0_18 = arith.constant 0 : index
    %27 = vector.load %arg3[%c4, %c0_17, %c0_18] : memref<9x4x128xbf16, #tpu.memory_space<vmem>>, vector<1x4x128xbf16>
    %28 = vector.shape_cast %27 : vector<1x4x128xbf16> to vector<4x128xbf16>
    %cst_19 = arith.constant dense<0.000000e+00> : vector<256x128xf32>
    %29 = tpu.matmul %26, %28, %cst_19 {dimension_numbers = #tpu.dot_dimension_numbers<[1], [0], [0], [1], [0, 0, 1, 1], [], []>} : vector<256x4xbf16>, vector<4x128xbf16>, vector<256x128xf32> -> vector<256x128xf32>
    %30 = arith.addf %25, %29 : vector<256x128xf32>
    %31 = vector.extract_strided_slice %20 {offsets = [64, 0], sizes = [256, 4], strides = [1, 1]} : vector<320x4xbf16> to vector<256x4xbf16>
    %c7 = arith.constant 7 : index
    %c0_20 = arith.constant 0 : index
    %c0_21 = arith.constant 0 : index
    %32 = vector.load %arg3[%c7, %c0_20, %c0_21] : memref<9x4x128xbf16, #tpu.memory_space<vmem>>, vector<1x4x128xbf16>
    %33 = vector.shape_cast %32 : vector<1x4x128xbf16> to vector<4x128xbf16>
    %cst_22 = arith.constant dense<0.000000e+00> : vector<256x128xf32>
    %34 = tpu.matmul %31, %33, %cst_22 {dimension_numbers = #tpu.dot_dimension_numbers<[1], [0], [0], [1], [0, 0, 1, 1], [], []>} : vector<256x4xbf16>, vector<4x128xbf16>, vector<256x128xf32> -> vector<256x128xf32>
    %35 = arith.addf %30, %34 : vector<256x128xf32>
    %36 = vector.extract_strided_slice %2 {offsets = [2, 0], sizes = [320, 4], strides = [1, 1]} : vector<352x4xbf16> to vector<320x4xbf16>
    %37 = vector.extract_strided_slice %36 {offsets = [0, 0], sizes = [256, 4], strides = [1, 1]} : vector<320x4xbf16> to vector<256x4xbf16>
    %c2 = arith.constant 2 : index
    %c0_23 = arith.constant 0 : index
    %c0_24 = arith.constant 0 : index
    %38 = vector.load %arg3[%c2, %c0_23, %c0_24] : memref<9x4x128xbf16, #tpu.memory_space<vmem>>, vector<1x4x128xbf16>
    %39 = vector.shape_cast %38 : vector<1x4x128xbf16> to vector<4x128xbf16>
    %cst_25 = arith.constant dense<0.000000e+00> : vector<256x128xf32>
    %40 = tpu.matmul %37, %39, %cst_25 {dimension_numbers = #tpu.dot_dimension_numbers<[1], [0], [0], [1], [0, 0, 1, 1], [], []>} : vector<256x4xbf16>, vector<4x128xbf16>, vector<256x128xf32> -> vector<256x128xf32>
    %41 = arith.addf %35, %40 : vector<256x128xf32>
    %42 = vector.extract_strided_slice %36 {offsets = [32, 0], sizes = [256, 4], strides = [1, 1]} : vector<320x4xbf16> to vector<256x4xbf16>
    %c5 = arith.constant 5 : index
    %c0_26 = arith.constant 0 : index
    %c0_27 = arith.constant 0 : index
    %43 = vector.load %arg3[%c5, %c0_26, %c0_27] : memref<9x4x128xbf16, #tpu.memory_space<vmem>>, vector<1x4x128xbf16>
    %44 = vector.shape_cast %43 : vector<1x4x128xbf16> to vector<4x128xbf16>
    %cst_28 = arith.constant dense<0.000000e+00> : vector<256x128xf32>
    %45 = tpu.matmul %42, %44, %cst_28 {dimension_numbers = #tpu.dot_dimension_numbers<[1], [0], [0], [1], [0, 0, 1, 1], [], []>} : vector<256x4xbf16>, vector<4x128xbf16>, vector<256x128xf32> -> vector<256x128xf32>
    %46 = arith.addf %41, %45 : vector<256x128xf32>
    %47 = vector.extract_strided_slice %36 {offsets = [64, 0], sizes = [256, 4], strides = [1, 1]} : vector<320x4xbf16> to vector<256x4xbf16>
    %c8 = arith.constant 8 : index
    %c0_29 = arith.constant 0 : index
    %c0_30 = arith.constant 0 : index
    %48 = vector.load %arg3[%c8, %c0_29, %c0_30] : memref<9x4x128xbf16, #tpu.memory_space<vmem>>, vector<1x4x128xbf16>
    %49 = vector.shape_cast %48 : vector<1x4x128xbf16> to vector<4x128xbf16>
    %cst_31 = arith.constant dense<0.000000e+00> : vector<256x128xf32>
    %50 = tpu.matmul %47, %49, %cst_31 {dimension_numbers = #tpu.dot_dimension_numbers<[1], [0], [0], [1], [0, 0, 1, 1], [], []>} : vector<256x4xbf16>, vector<4x128xbf16>, vector<256x128xf32> -> vector<256x128xf32>
    %51 = arith.addf %46, %50 : vector<256x128xf32>
    %52 = vector.broadcast %0 : vector<1x128xf32> to vector<256x128xf32>
    %53 = arith.addf %51, %52 : vector<256x128xf32>
    %cst_32 = arith.constant 0.000000e+00 : f32
    %54 = vector.broadcast %cst_32 : f32 to vector<256x128xf32>
    %55 = arith.maximumf %53, %54 : vector<256x128xf32>
    %56 = arith.truncf %55 : vector<256x128xf32> to vector<256x128xbf16>
    %c0_33 = arith.constant 0 : index
    %c0_34 = arith.constant 0 : index
    %c0_35 = arith.constant 0 : index
    %57 = vector.load %arg5[%c0_33, %c0_34, %c0_35] : memref<1x512x128xbf16, #tpu.memory_space<vmem>>, vector<1x256x128xbf16>
    %58 = vector.shape_cast %57 : vector<1x256x128xbf16> to vector<256x128xbf16>
    %59 = vector.shape_cast %56 : vector<256x128xbf16> to vector<1x256x128xbf16>
    tpu.vector_store %arg5[%c0_33, %c0_34, %c0_35], %59 {strides = array<i32>} : memref<1x512x128xbf16, #tpu.memory_space<vmem>>, vector<1x256x128xbf16>,
    %c0_36 = arith.constant 0 : index
    %c256 = arith.constant 256 : index
    %c0_37 = arith.constant 0 : index
    %60 = vector.load %arg2[%c0_36, %c256, %c0_37] : memref<1x608x4xbf16, #tpu.memory_space<vmem>>, vector<1x352x4xbf16>
    %61 = vector.shape_cast %60 : vector<1x352x4xbf16> to vector<352x4xbf16>
    %cst_38 = arith.constant 0.000000e+00 : f32
    %62 = vector.broadcast %cst_38 : f32 to vector<256x128xf32>
    %63 = vector.extract_strided_slice %61 {offsets = [0, 0], sizes = [320, 4], strides = [1, 1]} : vector<352x4xbf16> to vector<320x4xbf16>
    %64 = vector.extract_strided_slice %63 {offsets = [0, 0], sizes = [256, 4], strides = [1, 1]} : vector<320x4xbf16> to vector<256x4xbf16>
    %c0_39 = arith.constant 0 : index
    %c0_40 = arith.constant 0 : index
    %c0_41 = arith.constant 0 : index
    %65 = vector.load %arg3[%c0_39, %c0_40, %c0_41] : memref<9x4x128xbf16, #tpu.memory_space<vmem>>, vector<1x4x128xbf16>
    %66 = vector.shape_cast %65 : vector<1x4x128xbf16> to vector<4x128xbf16>
    %cst_42 = arith.constant dense<0.000000e+00> : vector<256x128xf32>
    %67 = tpu.matmul %64, %66, %cst_42 {dimension_numbers = #tpu.dot_dimension_numbers<[1], [0], [0], [1], [0, 0, 1, 1], [], []>} : vector<256x4xbf16>, vector<4x128xbf16>, vector<256x128xf32> -> vector<256x128xf32>
    %68 = arith.addf %62, %67 : vector<256x128xf32>
    %69 = vector.extract_strided_slice %63 {offsets = [32, 0], sizes = [256, 4], strides = [1, 1]} : vector<320x4xbf16> to vector<256x4xbf16>
    %c3_43 = arith.constant 3 : index
    %c0_44 = arith.constant 0 : index
    %c0_45 = arith.constant 0 : index
    %70 = vector.load %arg3[%c3_43, %c0_44, %c0_45] : memref<9x4x128xbf16, #tpu.memory_space<vmem>>, vector<1x4x128xbf16>
    %71 = vector.shape_cast %70 : vector<1x4x128xbf16> to vector<4x128xbf16>
    %cst_46 = arith.constant dense<0.000000e+00> : vector<256x128xf32>
    %72 = tpu.matmul %69, %71, %cst_46 {dimension_numbers = #tpu.dot_dimension_numbers<[1], [0], [0], [1], [0, 0, 1, 1], [], []>} : vector<256x4xbf16>, vector<4x128xbf16>, vector<256x128xf32> -> vector<256x128xf32>
    %73 = arith.addf %68, %72 : vector<256x128xf32>
    %74 = vector.extract_strided_slice %63 {offsets = [64, 0], sizes = [256, 4], strides = [1, 1]} : vector<320x4xbf16> to vector<256x4xbf16>
    %c6_47 = arith.constant 6 : index
    %c0_48 = arith.constant 0 : index
    %c0_49 = arith.constant 0 : index
    %75 = vector.load %arg3[%c6_47, %c0_48, %c0_49] : memref<9x4x128xbf16, #tpu.memory_space<vmem>>, vector<1x4x128xbf16>
    %76 = vector.shape_cast %75 : vector<1x4x128xbf16> to vector<4x128xbf16>
    %cst_50 = arith.constant dense<0.000000e+00> : vector<256x128xf32>
    %77 = tpu.matmul %74, %76, %cst_50 {dimension_numbers = #tpu.dot_dimension_numbers<[1], [0], [0], [1], [0, 0, 1, 1], [], []>} : vector<256x4xbf16>, vector<4x128xbf16>, vector<256x128xf32> -> vector<256x128xf32>
    %78 = arith.addf %73, %77 : vector<256x128xf32>
    %79 = vector.extract_strided_slice %61 {offsets = [1, 0], sizes = [320, 4], strides = [1, 1]} : vector<352x4xbf16> to vector<320x4xbf16>
    %80 = vector.extract_strided_slice %79 {offsets = [0, 0], sizes = [256, 4], strides = [1, 1]} : vector<320x4xbf16> to vector<256x4xbf16>
    %c1_51 = arith.constant 1 : index
    %c0_52 = arith.constant 0 : index
    %c0_53 = arith.constant 0 : index
    %81 = vector.load %arg3[%c1_51, %c0_52, %c0_53] : memref<9x4x128xbf16, #tpu.memory_space<vmem>>, vector<1x4x128xbf16>
    %82 = vector.shape_cast %81 : vector<1x4x128xbf16> to vector<4x128xbf16>
    %cst_54 = arith.constant dense<0.000000e+00> : vector<256x128xf32>
    %83 = tpu.matmul %80, %82, %cst_54 {dimension_numbers = #tpu.dot_dimension_numbers<[1], [0], [0], [1], [0, 0, 1, 1], [], []>} : vector<256x4xbf16>, vector<4x128xbf16>, vector<256x128xf32> -> vector<256x128xf32>
    %84 = arith.addf %78, %83 : vector<256x128xf32>
    %85 = vector.extract_strided_slice %79 {offsets = [32, 0], sizes = [256, 4], strides = [1, 1]} : vector<320x4xbf16> to vector<256x4xbf16>
    %c4_55 = arith.constant 4 : index
    %c0_56 = arith.constant 0 : index
    %c0_57 = arith.constant 0 : index
    %86 = vector.load %arg3[%c4_55, %c0_56, %c0_57] : memref<9x4x128xbf16, #tpu.memory_space<vmem>>, vector<1x4x128xbf16>
    %87 = vector.shape_cast %86 : vector<1x4x128xbf16> to vector<4x128xbf16>
    %cst_58 = arith.constant dense<0.000000e+00> : vector<256x128xf32>
    %88 = tpu.matmul %85, %87, %cst_58 {dimension_numbers = #tpu.dot_dimension_numbers<[1], [0], [0], [1], [0, 0, 1, 1], [], []>} : vector<256x4xbf16>, vector<4x128xbf16>, vector<256x128xf32> -> vector<256x128xf32>
    %89 = arith.addf %84, %88 : vector<256x128xf32>
    %90 = vector.extract_strided_slice %79 {offsets = [64, 0], sizes = [256, 4], strides = [1, 1]} : vector<320x4xbf16> to vector<256x4xbf16>
    %c7_59 = arith.constant 7 : index
    %c0_60 = arith.constant 0 : index
    %c0_61 = arith.constant 0 : index
    %91 = vector.load %arg3[%c7_59, %c0_60, %c0_61] : memref<9x4x128xbf16, #tpu.memory_space<vmem>>, vector<1x4x128xbf16>
    %92 = vector.shape_cast %91 : vector<1x4x128xbf16> to vector<4x128xbf16>
    %cst_62 = arith.constant dense<0.000000e+00> : vector<256x128xf32>
    %93 = tpu.matmul %90, %92, %cst_62 {dimension_numbers = #tpu.dot_dimension_numbers<[1], [0], [0], [1], [0, 0, 1, 1], [], []>} : vector<256x4xbf16>, vector<4x128xbf16>, vector<256x128xf32> -> vector<256x128xf32>
    %94 = arith.addf %89, %93 : vector<256x128xf32>
    %95 = vector.extract_strided_slice %61 {offsets = [2, 0], sizes = [320, 4], strides = [1, 1]} : vector<352x4xbf16> to vector<320x4xbf16>
    %96 = vector.extract_strided_slice %95 {offsets = [0, 0], sizes = [256, 4], strides = [1, 1]} : vector<320x4xbf16> to vector<256x4xbf16>
    %c2_63 = arith.constant 2 : index
    %c0_64 = arith.constant 0 : index
    %c0_65 = arith.constant 0 : index
    %97 = vector.load %arg3[%c2_63, %c0_64, %c0_65] : memref<9x4x128xbf16, #tpu.memory_space<vmem>>, vector<1x4x128xbf16>
    %98 = vector.shape_cast %97 : vector<1x4x128xbf16> to vector<4x128xbf16>
    %cst_66 = arith.constant dense<0.000000e+00> : vector<256x128xf32>
    %99 = tpu.matmul %96, %98, %cst_66 {dimension_numbers = #tpu.dot_dimension_numbers<[1], [0], [0], [1], [0, 0, 1, 1], [], []>} : vector<256x4xbf16>, vector<4x128xbf16>, vector<256x128xf32> -> vector<256x128xf32>
    %100 = arith.addf %94, %99 : vector<256x128xf32>
    %101 = vector.extract_strided_slice %95 {offsets = [32, 0], sizes = [256, 4], strides = [1, 1]} : vector<320x4xbf16> to vector<256x4xbf16>
    %c5_67 = arith.constant 5 : index
    %c0_68 = arith.constant 0 : index
    %c0_69 = arith.constant 0 : index
    %102 = vector.load %arg3[%c5_67, %c0_68, %c0_69] : memref<9x4x128xbf16, #tpu.memory_space<vmem>>, vector<1x4x128xbf16>
    %103 = vector.shape_cast %102 : vector<1x4x128xbf16> to vector<4x128xbf16>
    %cst_70 = arith.constant dense<0.000000e+00> : vector<256x128xf32>
    %104 = tpu.matmul %101, %103, %cst_70 {dimension_numbers = #tpu.dot_dimension_numbers<[1], [0], [0], [1], [0, 0, 1, 1], [], []>} : vector<256x4xbf16>, vector<4x128xbf16>, vector<256x128xf32> -> vector<256x128xf32>
    %105 = arith.addf %100, %104 : vector<256x128xf32>
    %106 = vector.extract_strided_slice %95 {offsets = [64, 0], sizes = [256, 4], strides = [1, 1]} : vector<320x4xbf16> to vector<256x4xbf16>
    %c8_71 = arith.constant 8 : index
    %c0_72 = arith.constant 0 : index
    %c0_73 = arith.constant 0 : index
    %107 = vector.load %arg3[%c8_71, %c0_72, %c0_73] : memref<9x4x128xbf16, #tpu.memory_space<vmem>>, vector<1x4x128xbf16>
    %108 = vector.shape_cast %107 : vector<1x4x128xbf16> to vector<4x128xbf16>
    %cst_74 = arith.constant dense<0.000000e+00> : vector<256x128xf32>
    %109 = tpu.matmul %106, %108, %cst_74 {dimension_numbers = #tpu.dot_dimension_numbers<[1], [0], [0], [1], [0, 0, 1, 1], [], []>} : vector<256x4xbf16>, vector<4x128xbf16>, vector<256x128xf32> -> vector<256x128xf32>
    %110 = arith.addf %105, %109 : vector<256x128xf32>
    %111 = vector.broadcast %0 : vector<1x128xf32> to vector<256x128xf32>
    %112 = arith.addf %110, %111 : vector<256x128xf32>
    %cst_75 = arith.constant 0.000000e+00 : f32
    %113 = vector.broadcast %cst_75 : f32 to vector<256x128xf32>
    %114 = arith.maximumf %112, %113 : vector<256x128xf32>
    %115 = arith.truncf %114 : vector<256x128xf32> to vector<256x128xbf16>
    %c0_76 = arith.constant 0 : index
    %c256_77 = arith.constant 256 : index
    %c0_78 = arith.constant 0 : index
    %116 = vector.load %arg5[%c0_76, %c256_77, %c0_78] : memref<1x512x128xbf16, #tpu.memory_space<vmem>>, vector<1x256x128xbf16>
    %117 = vector.shape_cast %116 : vector<1x256x128xbf16> to vector<256x128xbf16>
    %118 = vector.shape_cast %115 : vector<256x128xbf16> to vector<1x256x128xbf16>
    tpu.vector_store %arg5[%c0_76, %c256_77, %c0_78], %118 {strides = array<i32>} : memref<1x512x128xbf16, #tpu.memory_space<vmem>>, vector<1x256x128xbf16>,
    return
  }
  func.func @transform_0(%arg0: i32, %arg1: i32) -> (i32, i32, i32) {
    %c0_i32 = arith.constant 0 : i32
    %c0_i32_0 = arith.constant 0 : i32
    %c0_i32_1 = arith.constant 0 : i32
    return %arg0, %c0_i32, %c0_i32_0 : i32, i32, i32
  }
  func.func @transform_1(%arg0: i32, %arg1: i32) -> (i32, i32, i32) {
    %c0_i32 = arith.constant 0 : i32
    %c0_i32_0 = arith.constant 0 : i32
    %c0_i32_1 = arith.constant 0 : i32
    return %c0_i32, %c0_i32_0, %arg1 : i32, i32, i32
  }
  func.func @transform_2(%arg0: i32, %arg1: i32) -> (i32, i32) {
    %c0_i32 = arith.constant 0 : i32
    %c0_i32_0 = arith.constant 0 : i32
    return %c0_i32, %arg1 : i32, i32
  }
  func.func @transform_3(%arg0: i32, %arg1: i32) -> (i32, i32, i32) {
    %c0_i32 = arith.constant 0 : i32
    %c0_i32_0 = arith.constant 0 : i32
    return %arg0, %c0_i32, %arg1 : i32, i32, i32
  }
}

module attributes {stable_mosaic.version = 11 : i64} {
  func.func @_conv3x3_kernel(%arg0: i32, %arg1: i32, %arg2: memref<1x304x32xbf16, #tpu.memory_space<vmem>>, %arg3: memref<9x32x128xbf16, #tpu.memory_space<vmem>>, %arg4: memref<1x128xf32, #tpu.memory_space<vmem>>, %arg5: memref<1x256x128xbf16, #tpu.memory_space<vmem>>) attributes {dimension_semantics = [#tpu.dimension_semantics<parallel>, #tpu.dimension_semantics<parallel>], iteration_bounds = array<i64: 2, 1>, scalar_prefetch = 0 : i64, scratch_operands = 0 : i64, tpu.core_type = #tpu.core_type<tc>, window_params = [{transform_indices = @transform_0, window_bounds = array<i64: 1, 304, 32>}, {transform_indices = @transform_1, window_bounds = array<i64: 9, 32, 128>}, {transform_indices = @transform_2, window_bounds = array<i64: 1, 128>}, {transform_indices = @transform_3, window_bounds = array<i64: 1, 256, 128>}]} {
    %c0 = arith.constant 0 : index
    %c0_0 = arith.constant 0 : index
    %0 = vector.load %arg4[%c0, %c0_0] : memref<1x128xf32, #tpu.memory_space<vmem>>, vector<1x128xf32>
    %c0_1 = arith.constant 0 : index
    %c0_2 = arith.constant 0 : index
    %c0_3 = arith.constant 0 : index
    %1 = vector.load %arg2[%c0_1, %c0_2, %c0_3] : memref<1x304x32xbf16, #tpu.memory_space<vmem>>, vector<1x304x32xbf16>
    %2 = vector.shape_cast %1 : vector<1x304x32xbf16> to vector<304x32xbf16>
    %cst = arith.constant 0.000000e+00 : f32
    %3 = vector.broadcast %cst : f32 to vector<256x128xf32>
    %4 = vector.extract_strided_slice %2 {offsets = [0, 0], sizes = [288, 32], strides = [1, 1]} : vector<304x32xbf16> to vector<288x32xbf16>
    %5 = vector.extract_strided_slice %4 {offsets = [0, 0], sizes = [256, 32], strides = [1, 1]} : vector<288x32xbf16> to vector<256x32xbf16>
    %c0_4 = arith.constant 0 : index
    %c0_5 = arith.constant 0 : index
    %c0_6 = arith.constant 0 : index
    %6 = vector.load %arg3[%c0_4, %c0_5, %c0_6] : memref<9x32x128xbf16, #tpu.memory_space<vmem>>, vector<1x32x128xbf16>
    %7 = vector.shape_cast %6 : vector<1x32x128xbf16> to vector<32x128xbf16>
    %cst_7 = arith.constant dense<0.000000e+00> : vector<256x128xf32>
    %8 = tpu.matmul %5, %7, %cst_7 {dimension_numbers = #tpu.dot_dimension_numbers<[1], [0], [0], [1], [0, 0, 1, 1], [], []>} : vector<256x32xbf16>, vector<32x128xbf16>, vector<256x128xf32> -> vector<256x128xf32>
    %9 = arith.addf %3, %8 : vector<256x128xf32>
    %10 = vector.extract_strided_slice %4 {offsets = [16, 0], sizes = [256, 32], strides = [1, 1]} : vector<288x32xbf16> to vector<256x32xbf16>
    %c3 = arith.constant 3 : index
    %c0_8 = arith.constant 0 : index
    %c0_9 = arith.constant 0 : index
    %11 = vector.load %arg3[%c3, %c0_8, %c0_9] : memref<9x32x128xbf16, #tpu.memory_space<vmem>>, vector<1x32x128xbf16>
    %12 = vector.shape_cast %11 : vector<1x32x128xbf16> to vector<32x128xbf16>
    %cst_10 = arith.constant dense<0.000000e+00> : vector<256x128xf32>
    %13 = tpu.matmul %10, %12, %cst_10 {dimension_numbers = #tpu.dot_dimension_numbers<[1], [0], [0], [1], [0, 0, 1, 1], [], []>} : vector<256x32xbf16>, vector<32x128xbf16>, vector<256x128xf32> -> vector<256x128xf32>
    %14 = arith.addf %9, %13 : vector<256x128xf32>
    %15 = vector.extract_strided_slice %4 {offsets = [32, 0], sizes = [256, 32], strides = [1, 1]} : vector<288x32xbf16> to vector<256x32xbf16>
    %c6 = arith.constant 6 : index
    %c0_11 = arith.constant 0 : index
    %c0_12 = arith.constant 0 : index
    %16 = vector.load %arg3[%c6, %c0_11, %c0_12] : memref<9x32x128xbf16, #tpu.memory_space<vmem>>, vector<1x32x128xbf16>
    %17 = vector.shape_cast %16 : vector<1x32x128xbf16> to vector<32x128xbf16>
    %cst_13 = arith.constant dense<0.000000e+00> : vector<256x128xf32>
    %18 = tpu.matmul %15, %17, %cst_13 {dimension_numbers = #tpu.dot_dimension_numbers<[1], [0], [0], [1], [0, 0, 1, 1], [], []>} : vector<256x32xbf16>, vector<32x128xbf16>, vector<256x128xf32> -> vector<256x128xf32>
    %19 = arith.addf %14, %18 : vector<256x128xf32>
    %20 = vector.extract_strided_slice %2 {offsets = [1, 0], sizes = [288, 32], strides = [1, 1]} : vector<304x32xbf16> to vector<288x32xbf16>
    %21 = vector.extract_strided_slice %20 {offsets = [0, 0], sizes = [256, 32], strides = [1, 1]} : vector<288x32xbf16> to vector<256x32xbf16>
    %c1 = arith.constant 1 : index
    %c0_14 = arith.constant 0 : index
    %c0_15 = arith.constant 0 : index
    %22 = vector.load %arg3[%c1, %c0_14, %c0_15] : memref<9x32x128xbf16, #tpu.memory_space<vmem>>, vector<1x32x128xbf16>
    %23 = vector.shape_cast %22 : vector<1x32x128xbf16> to vector<32x128xbf16>
    %cst_16 = arith.constant dense<0.000000e+00> : vector<256x128xf32>
    %24 = tpu.matmul %21, %23, %cst_16 {dimension_numbers = #tpu.dot_dimension_numbers<[1], [0], [0], [1], [0, 0, 1, 1], [], []>} : vector<256x32xbf16>, vector<32x128xbf16>, vector<256x128xf32> -> vector<256x128xf32>
    %25 = arith.addf %19, %24 : vector<256x128xf32>
    %26 = vector.extract_strided_slice %20 {offsets = [16, 0], sizes = [256, 32], strides = [1, 1]} : vector<288x32xbf16> to vector<256x32xbf16>
    %c4 = arith.constant 4 : index
    %c0_17 = arith.constant 0 : index
    %c0_18 = arith.constant 0 : index
    %27 = vector.load %arg3[%c4, %c0_17, %c0_18] : memref<9x32x128xbf16, #tpu.memory_space<vmem>>, vector<1x32x128xbf16>
    %28 = vector.shape_cast %27 : vector<1x32x128xbf16> to vector<32x128xbf16>
    %cst_19 = arith.constant dense<0.000000e+00> : vector<256x128xf32>
    %29 = tpu.matmul %26, %28, %cst_19 {dimension_numbers = #tpu.dot_dimension_numbers<[1], [0], [0], [1], [0, 0, 1, 1], [], []>} : vector<256x32xbf16>, vector<32x128xbf16>, vector<256x128xf32> -> vector<256x128xf32>
    %30 = arith.addf %25, %29 : vector<256x128xf32>
    %31 = vector.extract_strided_slice %20 {offsets = [32, 0], sizes = [256, 32], strides = [1, 1]} : vector<288x32xbf16> to vector<256x32xbf16>
    %c7 = arith.constant 7 : index
    %c0_20 = arith.constant 0 : index
    %c0_21 = arith.constant 0 : index
    %32 = vector.load %arg3[%c7, %c0_20, %c0_21] : memref<9x32x128xbf16, #tpu.memory_space<vmem>>, vector<1x32x128xbf16>
    %33 = vector.shape_cast %32 : vector<1x32x128xbf16> to vector<32x128xbf16>
    %cst_22 = arith.constant dense<0.000000e+00> : vector<256x128xf32>
    %34 = tpu.matmul %31, %33, %cst_22 {dimension_numbers = #tpu.dot_dimension_numbers<[1], [0], [0], [1], [0, 0, 1, 1], [], []>} : vector<256x32xbf16>, vector<32x128xbf16>, vector<256x128xf32> -> vector<256x128xf32>
    %35 = arith.addf %30, %34 : vector<256x128xf32>
    %36 = vector.extract_strided_slice %2 {offsets = [2, 0], sizes = [288, 32], strides = [1, 1]} : vector<304x32xbf16> to vector<288x32xbf16>
    %37 = vector.extract_strided_slice %36 {offsets = [0, 0], sizes = [256, 32], strides = [1, 1]} : vector<288x32xbf16> to vector<256x32xbf16>
    %c2 = arith.constant 2 : index
    %c0_23 = arith.constant 0 : index
    %c0_24 = arith.constant 0 : index
    %38 = vector.load %arg3[%c2, %c0_23, %c0_24] : memref<9x32x128xbf16, #tpu.memory_space<vmem>>, vector<1x32x128xbf16>
    %39 = vector.shape_cast %38 : vector<1x32x128xbf16> to vector<32x128xbf16>
    %cst_25 = arith.constant dense<0.000000e+00> : vector<256x128xf32>
    %40 = tpu.matmul %37, %39, %cst_25 {dimension_numbers = #tpu.dot_dimension_numbers<[1], [0], [0], [1], [0, 0, 1, 1], [], []>} : vector<256x32xbf16>, vector<32x128xbf16>, vector<256x128xf32> -> vector<256x128xf32>
    %41 = arith.addf %35, %40 : vector<256x128xf32>
    %42 = vector.extract_strided_slice %36 {offsets = [16, 0], sizes = [256, 32], strides = [1, 1]} : vector<288x32xbf16> to vector<256x32xbf16>
    %c5 = arith.constant 5 : index
    %c0_26 = arith.constant 0 : index
    %c0_27 = arith.constant 0 : index
    %43 = vector.load %arg3[%c5, %c0_26, %c0_27] : memref<9x32x128xbf16, #tpu.memory_space<vmem>>, vector<1x32x128xbf16>
    %44 = vector.shape_cast %43 : vector<1x32x128xbf16> to vector<32x128xbf16>
    %cst_28 = arith.constant dense<0.000000e+00> : vector<256x128xf32>
    %45 = tpu.matmul %42, %44, %cst_28 {dimension_numbers = #tpu.dot_dimension_numbers<[1], [0], [0], [1], [0, 0, 1, 1], [], []>} : vector<256x32xbf16>, vector<32x128xbf16>, vector<256x128xf32> -> vector<256x128xf32>
    %46 = arith.addf %41, %45 : vector<256x128xf32>
    %47 = vector.extract_strided_slice %36 {offsets = [32, 0], sizes = [256, 32], strides = [1, 1]} : vector<288x32xbf16> to vector<256x32xbf16>
    %c8 = arith.constant 8 : index
    %c0_29 = arith.constant 0 : index
    %c0_30 = arith.constant 0 : index
    %48 = vector.load %arg3[%c8, %c0_29, %c0_30] : memref<9x32x128xbf16, #tpu.memory_space<vmem>>, vector<1x32x128xbf16>
    %49 = vector.shape_cast %48 : vector<1x32x128xbf16> to vector<32x128xbf16>
    %cst_31 = arith.constant dense<0.000000e+00> : vector<256x128xf32>
    %50 = tpu.matmul %47, %49, %cst_31 {dimension_numbers = #tpu.dot_dimension_numbers<[1], [0], [0], [1], [0, 0, 1, 1], [], []>} : vector<256x32xbf16>, vector<32x128xbf16>, vector<256x128xf32> -> vector<256x128xf32>
    %51 = arith.addf %46, %50 : vector<256x128xf32>
    %52 = vector.broadcast %0 : vector<1x128xf32> to vector<256x128xf32>
    %53 = arith.addf %51, %52 : vector<256x128xf32>
    %cst_32 = arith.constant 0.000000e+00 : f32
    %54 = vector.broadcast %cst_32 : f32 to vector<256x128xf32>
    %55 = arith.maximumf %53, %54 : vector<256x128xf32>
    %56 = arith.truncf %55 : vector<256x128xf32> to vector<256x128xbf16>
    %c0_33 = arith.constant 0 : index
    %c0_34 = arith.constant 0 : index
    %c0_35 = arith.constant 0 : index
    %57 = vector.load %arg5[%c0_33, %c0_34, %c0_35] : memref<1x256x128xbf16, #tpu.memory_space<vmem>>, vector<1x256x128xbf16>
    %58 = vector.shape_cast %57 : vector<1x256x128xbf16> to vector<256x128xbf16>
    %59 = vector.shape_cast %56 : vector<256x128xbf16> to vector<1x256x128xbf16>
    tpu.vector_store %arg5[%c0_33, %c0_34, %c0_35], %59 {strides = array<i32>} : memref<1x256x128xbf16, #tpu.memory_space<vmem>>, vector<1x256x128xbf16>,
    return
  }
  func.func @transform_0(%arg0: i32, %arg1: i32) -> (i32, i32, i32) {
    %c0_i32 = arith.constant 0 : i32
    %c0_i32_0 = arith.constant 0 : i32
    %c0_i32_1 = arith.constant 0 : i32
    return %arg0, %c0_i32, %c0_i32_0 : i32, i32, i32
  }
  func.func @transform_1(%arg0: i32, %arg1: i32) -> (i32, i32, i32) {
    %c0_i32 = arith.constant 0 : i32
    %c0_i32_0 = arith.constant 0 : i32
    %c0_i32_1 = arith.constant 0 : i32
    return %c0_i32, %c0_i32_0, %arg1 : i32, i32, i32
  }
  func.func @transform_2(%arg0: i32, %arg1: i32) -> (i32, i32) {
    %c0_i32 = arith.constant 0 : i32
    %c0_i32_0 = arith.constant 0 : i32
    return %c0_i32, %arg1 : i32, i32
  }
  func.func @transform_3(%arg0: i32, %arg1: i32) -> (i32, i32, i32) {
    %c0_i32 = arith.constant 0 : i32
    %c0_i32_0 = arith.constant 0 : i32
    return %arg0, %c0_i32, %arg1 : i32, i32, i32
  }
}

module attributes {stable_mosaic.version = 11 : i64} {
  func.func @_conv3x3_kernel(%arg0: i32, %arg1: i32, %arg2: memref<1x304x32xbf16, #tpu.memory_space<vmem>>, %arg3: memref<9x32x128xbf16, #tpu.memory_space<vmem>>, %arg4: memref<1x128xf32, #tpu.memory_space<vmem>>, %arg5: memref<1x256x128xf32, #tpu.memory_space<vmem>>) attributes {dimension_semantics = [#tpu.dimension_semantics<parallel>, #tpu.dimension_semantics<parallel>], iteration_bounds = array<i64: 2, 1>, scalar_prefetch = 0 : i64, scratch_operands = 0 : i64, tpu.core_type = #tpu.core_type<tc>, window_params = [{transform_indices = @transform_0, window_bounds = array<i64: 1, 304, 32>}, {transform_indices = @transform_1, window_bounds = array<i64: 9, 32, 128>}, {transform_indices = @transform_2, window_bounds = array<i64: 1, 128>}, {transform_indices = @transform_3, window_bounds = array<i64: 1, 256, 128>}]} {
    %c0 = arith.constant 0 : index
    %c0_0 = arith.constant 0 : index
    %0 = vector.load %arg4[%c0, %c0_0] : memref<1x128xf32, #tpu.memory_space<vmem>>, vector<1x128xf32>
    %c0_1 = arith.constant 0 : index
    %c0_2 = arith.constant 0 : index
    %c0_3 = arith.constant 0 : index
    %1 = vector.load %arg2[%c0_1, %c0_2, %c0_3] : memref<1x304x32xbf16, #tpu.memory_space<vmem>>, vector<1x304x32xbf16>
    %2 = vector.shape_cast %1 : vector<1x304x32xbf16> to vector<304x32xbf16>
    %cst = arith.constant 0.000000e+00 : f32
    %3 = vector.broadcast %cst : f32 to vector<256x128xf32>
    %4 = vector.extract_strided_slice %2 {offsets = [0, 0], sizes = [288, 32], strides = [1, 1]} : vector<304x32xbf16> to vector<288x32xbf16>
    %5 = vector.extract_strided_slice %4 {offsets = [0, 0], sizes = [256, 32], strides = [1, 1]} : vector<288x32xbf16> to vector<256x32xbf16>
    %c0_4 = arith.constant 0 : index
    %c0_5 = arith.constant 0 : index
    %c0_6 = arith.constant 0 : index
    %6 = vector.load %arg3[%c0_4, %c0_5, %c0_6] : memref<9x32x128xbf16, #tpu.memory_space<vmem>>, vector<1x32x128xbf16>
    %7 = vector.shape_cast %6 : vector<1x32x128xbf16> to vector<32x128xbf16>
    %cst_7 = arith.constant dense<0.000000e+00> : vector<256x128xf32>
    %8 = tpu.matmul %5, %7, %cst_7 {dimension_numbers = #tpu.dot_dimension_numbers<[1], [0], [0], [1], [0, 0, 1, 1], [], []>} : vector<256x32xbf16>, vector<32x128xbf16>, vector<256x128xf32> -> vector<256x128xf32>
    %9 = arith.addf %3, %8 : vector<256x128xf32>
    %10 = vector.extract_strided_slice %4 {offsets = [16, 0], sizes = [256, 32], strides = [1, 1]} : vector<288x32xbf16> to vector<256x32xbf16>
    %c3 = arith.constant 3 : index
    %c0_8 = arith.constant 0 : index
    %c0_9 = arith.constant 0 : index
    %11 = vector.load %arg3[%c3, %c0_8, %c0_9] : memref<9x32x128xbf16, #tpu.memory_space<vmem>>, vector<1x32x128xbf16>
    %12 = vector.shape_cast %11 : vector<1x32x128xbf16> to vector<32x128xbf16>
    %cst_10 = arith.constant dense<0.000000e+00> : vector<256x128xf32>
    %13 = tpu.matmul %10, %12, %cst_10 {dimension_numbers = #tpu.dot_dimension_numbers<[1], [0], [0], [1], [0, 0, 1, 1], [], []>} : vector<256x32xbf16>, vector<32x128xbf16>, vector<256x128xf32> -> vector<256x128xf32>
    %14 = arith.addf %9, %13 : vector<256x128xf32>
    %15 = vector.extract_strided_slice %4 {offsets = [32, 0], sizes = [256, 32], strides = [1, 1]} : vector<288x32xbf16> to vector<256x32xbf16>
    %c6 = arith.constant 6 : index
    %c0_11 = arith.constant 0 : index
    %c0_12 = arith.constant 0 : index
    %16 = vector.load %arg3[%c6, %c0_11, %c0_12] : memref<9x32x128xbf16, #tpu.memory_space<vmem>>, vector<1x32x128xbf16>
    %17 = vector.shape_cast %16 : vector<1x32x128xbf16> to vector<32x128xbf16>
    %cst_13 = arith.constant dense<0.000000e+00> : vector<256x128xf32>
    %18 = tpu.matmul %15, %17, %cst_13 {dimension_numbers = #tpu.dot_dimension_numbers<[1], [0], [0], [1], [0, 0, 1, 1], [], []>} : vector<256x32xbf16>, vector<32x128xbf16>, vector<256x128xf32> -> vector<256x128xf32>
    %19 = arith.addf %14, %18 : vector<256x128xf32>
    %20 = vector.extract_strided_slice %2 {offsets = [1, 0], sizes = [288, 32], strides = [1, 1]} : vector<304x32xbf16> to vector<288x32xbf16>
    %21 = vector.extract_strided_slice %20 {offsets = [0, 0], sizes = [256, 32], strides = [1, 1]} : vector<288x32xbf16> to vector<256x32xbf16>
    %c1 = arith.constant 1 : index
    %c0_14 = arith.constant 0 : index
    %c0_15 = arith.constant 0 : index
    %22 = vector.load %arg3[%c1, %c0_14, %c0_15] : memref<9x32x128xbf16, #tpu.memory_space<vmem>>, vector<1x32x128xbf16>
    %23 = vector.shape_cast %22 : vector<1x32x128xbf16> to vector<32x128xbf16>
    %cst_16 = arith.constant dense<0.000000e+00> : vector<256x128xf32>
    %24 = tpu.matmul %21, %23, %cst_16 {dimension_numbers = #tpu.dot_dimension_numbers<[1], [0], [0], [1], [0, 0, 1, 1], [], []>} : vector<256x32xbf16>, vector<32x128xbf16>, vector<256x128xf32> -> vector<256x128xf32>
    %25 = arith.addf %19, %24 : vector<256x128xf32>
    %26 = vector.extract_strided_slice %20 {offsets = [16, 0], sizes = [256, 32], strides = [1, 1]} : vector<288x32xbf16> to vector<256x32xbf16>
    %c4 = arith.constant 4 : index
    %c0_17 = arith.constant 0 : index
    %c0_18 = arith.constant 0 : index
    %27 = vector.load %arg3[%c4, %c0_17, %c0_18] : memref<9x32x128xbf16, #tpu.memory_space<vmem>>, vector<1x32x128xbf16>
    %28 = vector.shape_cast %27 : vector<1x32x128xbf16> to vector<32x128xbf16>
    %cst_19 = arith.constant dense<0.000000e+00> : vector<256x128xf32>
    %29 = tpu.matmul %26, %28, %cst_19 {dimension_numbers = #tpu.dot_dimension_numbers<[1], [0], [0], [1], [0, 0, 1, 1], [], []>} : vector<256x32xbf16>, vector<32x128xbf16>, vector<256x128xf32> -> vector<256x128xf32>
    %30 = arith.addf %25, %29 : vector<256x128xf32>
    %31 = vector.extract_strided_slice %20 {offsets = [32, 0], sizes = [256, 32], strides = [1, 1]} : vector<288x32xbf16> to vector<256x32xbf16>
    %c7 = arith.constant 7 : index
    %c0_20 = arith.constant 0 : index
    %c0_21 = arith.constant 0 : index
    %32 = vector.load %arg3[%c7, %c0_20, %c0_21] : memref<9x32x128xbf16, #tpu.memory_space<vmem>>, vector<1x32x128xbf16>
    %33 = vector.shape_cast %32 : vector<1x32x128xbf16> to vector<32x128xbf16>
    %cst_22 = arith.constant dense<0.000000e+00> : vector<256x128xf32>
    %34 = tpu.matmul %31, %33, %cst_22 {dimension_numbers = #tpu.dot_dimension_numbers<[1], [0], [0], [1], [0, 0, 1, 1], [], []>} : vector<256x32xbf16>, vector<32x128xbf16>, vector<256x128xf32> -> vector<256x128xf32>
    %35 = arith.addf %30, %34 : vector<256x128xf32>
    %36 = vector.extract_strided_slice %2 {offsets = [2, 0], sizes = [288, 32], strides = [1, 1]} : vector<304x32xbf16> to vector<288x32xbf16>
    %37 = vector.extract_strided_slice %36 {offsets = [0, 0], sizes = [256, 32], strides = [1, 1]} : vector<288x32xbf16> to vector<256x32xbf16>
    %c2 = arith.constant 2 : index
    %c0_23 = arith.constant 0 : index
    %c0_24 = arith.constant 0 : index
    %38 = vector.load %arg3[%c2, %c0_23, %c0_24] : memref<9x32x128xbf16, #tpu.memory_space<vmem>>, vector<1x32x128xbf16>
    %39 = vector.shape_cast %38 : vector<1x32x128xbf16> to vector<32x128xbf16>
    %cst_25 = arith.constant dense<0.000000e+00> : vector<256x128xf32>
    %40 = tpu.matmul %37, %39, %cst_25 {dimension_numbers = #tpu.dot_dimension_numbers<[1], [0], [0], [1], [0, 0, 1, 1], [], []>} : vector<256x32xbf16>, vector<32x128xbf16>, vector<256x128xf32> -> vector<256x128xf32>
    %41 = arith.addf %35, %40 : vector<256x128xf32>
    %42 = vector.extract_strided_slice %36 {offsets = [16, 0], sizes = [256, 32], strides = [1, 1]} : vector<288x32xbf16> to vector<256x32xbf16>
    %c5 = arith.constant 5 : index
    %c0_26 = arith.constant 0 : index
    %c0_27 = arith.constant 0 : index
    %43 = vector.load %arg3[%c5, %c0_26, %c0_27] : memref<9x32x128xbf16, #tpu.memory_space<vmem>>, vector<1x32x128xbf16>
    %44 = vector.shape_cast %43 : vector<1x32x128xbf16> to vector<32x128xbf16>
    %cst_28 = arith.constant dense<0.000000e+00> : vector<256x128xf32>
    %45 = tpu.matmul %42, %44, %cst_28 {dimension_numbers = #tpu.dot_dimension_numbers<[1], [0], [0], [1], [0, 0, 1, 1], [], []>} : vector<256x32xbf16>, vector<32x128xbf16>, vector<256x128xf32> -> vector<256x128xf32>
    %46 = arith.addf %41, %45 : vector<256x128xf32>
    %47 = vector.extract_strided_slice %36 {offsets = [32, 0], sizes = [256, 32], strides = [1, 1]} : vector<288x32xbf16> to vector<256x32xbf16>
    %c8 = arith.constant 8 : index
    %c0_29 = arith.constant 0 : index
    %c0_30 = arith.constant 0 : index
    %48 = vector.load %arg3[%c8, %c0_29, %c0_30] : memref<9x32x128xbf16, #tpu.memory_space<vmem>>, vector<1x32x128xbf16>
    %49 = vector.shape_cast %48 : vector<1x32x128xbf16> to vector<32x128xbf16>
    %cst_31 = arith.constant dense<0.000000e+00> : vector<256x128xf32>
    %50 = tpu.matmul %47, %49, %cst_31 {dimension_numbers = #tpu.dot_dimension_numbers<[1], [0], [0], [1], [0, 0, 1, 1], [], []>} : vector<256x32xbf16>, vector<32x128xbf16>, vector<256x128xf32> -> vector<256x128xf32>
    %51 = arith.addf %46, %50 : vector<256x128xf32>
    %52 = vector.broadcast %0 : vector<1x128xf32> to vector<256x128xf32>
    %53 = arith.addf %51, %52 : vector<256x128xf32>
    %c0_32 = arith.constant 0 : index
    %c0_33 = arith.constant 0 : index
    %c0_34 = arith.constant 0 : index
    %54 = vector.load %arg5[%c0_32, %c0_33, %c0_34] : memref<1x256x128xf32, #tpu.memory_space<vmem>>, vector<1x256x128xf32>
    %55 = vector.shape_cast %54 : vector<1x256x128xf32> to vector<256x128xf32>
    %56 = vector.shape_cast %53 : vector<256x128xf32> to vector<1x256x128xf32>
    tpu.vector_store %arg5[%c0_32, %c0_33, %c0_34], %56 {strides = array<i32>} : memref<1x256x128xf32, #tpu.memory_space<vmem>>, vector<1x256x128xf32>,
    return
  }
  func.func @transform_0(%arg0: i32, %arg1: i32) -> (i32, i32, i32) {
    %c0_i32 = arith.constant 0 : i32
    %c0_i32_0 = arith.constant 0 : i32
    %c0_i32_1 = arith.constant 0 : i32
    return %arg0, %c0_i32, %c0_i32_0 : i32, i32, i32
  }
  func.func @transform_1(%arg0: i32, %arg1: i32) -> (i32, i32, i32) {
    %c0_i32 = arith.constant 0 : i32
    %c0_i32_0 = arith.constant 0 : i32
    %c0_i32_1 = arith.constant 0 : i32
    return %c0_i32, %c0_i32_0, %arg1 : i32, i32, i32
  }
  func.func @transform_2(%arg0: i32, %arg1: i32) -> (i32, i32) {
    %c0_i32 = arith.constant 0 : i32
    %c0_i32_0 = arith.constant 0 : i32
    return %c0_i32, %arg1 : i32, i32
  }
  func.func @transform_3(%arg0: i32, %arg1: i32) -> (i32, i32, i32) {
    %c0_i32 = arith.constant 0 : i32
    %c0_i32_0 = arith.constant 0 : i32
    return %arg0, %c0_i32, %arg1 : i32, i32, i32
  }
}

</mosaic_0001>

<llo_original>
// kernel: hyper_analysis_ex.3
$region0: #{hyper_analysis_ex.3}
  #allocation0 [shape = 'u32[]', space=smem, size = 0x4, offset = 0x4, fixed_abs, tag = 'smem constant byte address 0x4 - core index']
  #allocation1 [shape = 'u32[144,128]{1,0:T(1,128)}', space=vmem, size = 0x12000, scoped, tag = 'internal scratch']
  %s0 = inlined_call_operand.vmem [shape: bf16[2,608,4], index: 0, kind: input, shape index: {}]
  %s1 = inlined_call_operand.vmem [shape: bf16[9,4,128], index: 1, kind: input, shape index: {}]
  %s2 = inlined_call_operand.vmem [shape: f32[1,128], index: 2, kind: input, shape index: {}]
  %s3 = inlined_call_operand.vmem [shape: bf16[2,512,128], index: 3, kind: output, shape index: {}]
  %s4 = sld [smem:[#allocation0]]
  $region45: #{hyper_analysis_ex.3} parent=0
    _
  %s6 = ssub.s32 1, %s4
  %s7 = scalar_select 0, %s6, %s4
  loop: start=0, step=1, limit=4
  $region2: #{hyper_analysis_ex.3} parent=0 // loop_pre_header
    _
  $region3: #{hyper_analysis_ex.3} parent=0 // loop_header
    %s9 = sphi 0, %s13
    %p10 = scmp.ge.s32.totalorder %s9, 4
    %s16 = sphi 0, %s28
    %s17 = sphi 0, %s24
    %s18 = sphi 0, %s16
    %s19 = sphi 0, %s17
    %s20 = sphi 0, %s18
    %s21 = sphi 0, %s19
    %s31 = sphi 0, %s33
    %s34 = sphi 0, %s31
    %s35 = sphi 0, %s34
    %s51 = sphi 0, %s35
    %s57 = sphi 0, %s59
    %s60 = sphi 0, %s57
    %s61 = sphi 0, %s60
    %s77 = sphi 0, %s61
    %s83 = sphi 0, %s85
    %s86 = sphi 0, %s83
    %s87 = sphi 0, %s86
    %s103 = sphi 0, %s87
    %s111 = sphi 0, %s113
    %s114 = sphi 0, %s111
    %s115 = sphi 0, %s114
    %s131 = sphi 0, %s115
  $region4: #{hyper_analysis_ex.3} parent=0 // loop_header_branch
    %12 = sbr.rel (%p10) target = $region8
  $region5: #{hyper_analysis_ex.3} parent=0 // loop_body
    %s14 = ssub.s32 %s9, 1
    %s15 = ssub.s32 %s9, 2
    %s22 = sadd.s32 1, %s17
    %p23 = scmp.ge.s32.totalorder %s22, 1
    %s24 = scalar_select %p23, 0, %s22
    %s25 = sadd.s32 1, %s16
    %s26 = scalar_select %p23, %s25, %s16
    %p27 = scmp.ge.s32.totalorder %s26, 2
    %s28 = scalar_select %p27, 0, %s26
    %s29 = ssub.s32 %s16, %s28
    %p30 = scmp.eq.s32.totalorder %s29, 0
    %s32 = sadd.s32 %s31, 1
    %s33 = scalar_select %p30, %s31, %s32
    %p36 = pneg %p30
    %p37 = scmp.eq.s32.totalorder %s9, 1
    %p38 = por %p36, %p37
    %p39 = scmp.ne.s32.totalorder %s31, %s34
    %p40 = scmp.eq.s32.totalorder %s9, 0
    %p41 = por %p39, %p40
    %p42 = scmp.ne.s32.totalorder %s31, %s34
    %p43 = scmp.eq.s32.totalorder %s14, 1
    %p44 = por %p42, %p43
    %p45 = scmp.ne.s32.totalorder %s34, %s35
    %p46 = scmp.eq.s32.totalorder %s14, 0
    %p47 = por %p45, %p46
    %p48 = scmp.ne.s32.totalorder %s34, %s35
    %p49 = scmp.eq.s32.totalorder %s15, 1
    %p50 = por %p48, %p49
    %p52 = scmp.ne.s32.totalorder %s35, %s51
    %p53 = scmp.eq.s32.totalorder %s15, 0
    %p54 = por %p52, %p53
    %s55 = ssub.s32 %s17, %s24
    %p56 = scmp.eq.s32.totalorder %s55, 0
    %s58 = sadd.s32 %s57, 1
    %s59 = scalar_select %p56, %s57, %s58
    %p62 = pneg %p56
    %p63 = scmp.eq.s32.totalorder %s9, 1
    %p64 = por %p62, %p63
    %p65 = scmp.ne.s32.totalorder %s57, %s60
    %p66 = scmp.eq.s32.totalorder %s9, 0
    %p67 = por %p65, %p66
    %p68 = scmp.ne.s32.totalorder %s57, %s60
    %p69 = scmp.eq.s32.totalorder %s14, 1
    %p70 = por %p68, %p69
    %p71 = scmp.ne.s32.totalorder %s60, %s61
    %p72 = scmp.eq.s32.totalorder %s14, 0
    %p73 = por %p71, %p72
    %p74 = scmp.ne.s32.totalorder %s60, %s61
    %p75 = scmp.eq.s32.totalorder %s15, 1
    %p76 = por %p74, %p75
    %p78 = scmp.ne.s32.totalorder %s61, %s77
    %p79 = scmp.eq.s32.totalorder %s15, 0
    %p80 = por %p78, %p79
    %s81 = ssub.s32 %s17, %s24
    %p82 = scmp.eq.s32.totalorder %s81, 0
    %s84 = sadd.s32 %s83, 1
    %s85 = scalar_select %p82, %s83, %s84
    %p88 = pneg %p82
    %p89 = scmp.eq.s32.totalorder %s9, 1
    %p90 = por %p88, %p89
    %p91 = scmp.ne.s32.totalorder %s83, %s86
    %p92 = scmp.eq.s32.totalorder %s9, 0
    %p93 = por %p91, %p92
    %p94 = scmp.ne.s32.totalorder %s83, %s86
    %p95 = scmp.eq.s32.totalorder %s14, 1
    %p96 = por %p94, %p95
    %p97 = scmp.ne.s32.totalorder %s86, %s87
    %p98 = scmp.eq.s32.totalorder %s14, 0
    %p99 = por %p97, %p98
    %p100 = scmp.ne.s32.totalorder %s86, %s87
    %p101 = scmp.eq.s32.totalorder %s15, 1
    %p102 = por %p100, %p101
    %p104 = scmp.ne.s32.totalorder %s87, %s103
    %p105 = scmp.eq.s32.totalorder %s15, 0
    %p106 = por %p104, %p105
    %s107 = ssub.s32 %s16, %s28
    %s108 = ssub.s32 %s17, %s24
    %s109 = sor.u32 %s107, %s108
    %p110 = scmp.eq.s32.totalorder %s109, 0
    %s112 = sadd.s32 %s111, 1
    %s113 = scalar_select %p110, %s111, %s112
    %p116 = pneg %p110
    %p117 = scmp.eq.s32.totalorder %s9, 1
    %p118 = por %p116, %p117
    %p119 = scmp.ne.s32.totalorder %s111, %s114
    %p120 = scmp.eq.s32.totalorder %s9, 0
    %p121 = por %p119, %p120
    %p122 = scmp.ne.s32.totalorder %s111, %s114
    %p123 = scmp.eq.s32.totalorder %s14, 1
    %p124 = por %p122, %p123
    %p125 = scmp.ne.s32.totalorder %s114, %s115
    %p126 = scmp.eq.s32.totalorder %s14, 0
    %p127 = por %p125, %p126
    %p128 = scmp.ne.s32.totalorder %s114, %s115
    %p129 = scmp.eq.s32.totalorder %s15, 1
    %p130 = por %p128, %p129
    %p132 = scmp.ne.s32.totalorder %s115, %s131
    %p133 = scmp.eq.s32.totalorder %s15, 0
    %p134 = por %p132, %p133
    %p135 = scmp.le.s32.totalorder 1, %s9
    %p136 = scmp.lt.s32.totalorder %s9, 3
    %p137 = pnand %p135, %p136
    %p138 = pneg %p137
    // Predicated region
    $region9: #{hyper_analysis_ex.3} parent=5 // pred_check
      _
    $region10: #{hyper_analysis_ex.3} parent=5 // pred_check_branch
      %140 = sbr.rel (%p137) target = $region12
    $region11: #{hyper_analysis_ex.3} parent=5 // pred_region
      %s141 = ssub.s32 %s9, 1
      // Predicated region
      $region13: #{hyper_analysis_ex.3} parent=11 // pred_check
        %p142 = pneg %p73
      $region14: #{hyper_analysis_ex.3} parent=11 // pred_check_branch
        %144 = sbr.rel (%p142) target = $region16
      $region15: #{hyper_analysis_ex.3} parent=11 // pred_region
        %p145 = scmp.lt.s32.totalorder %s19, 0
        %s146 = scalar_select %p145, %s19, 0
        %s147 = smul.addr %s146, 2
        %s148 = scalar_lea.vmem %s1, %s147
      $region16: #{hyper_analysis_ex.3} parent=11 // pred_fallthru
        _
      // Predicated region
      $region17: #{hyper_analysis_ex.3} parent=11 // pred_check
        %p149 = pneg %p99
      $region18: #{hyper_analysis_ex.3} parent=11 // pred_check_branch
        %151 = sbr.rel (%p149) target = $region20
      $region19: #{hyper_analysis_ex.3} parent=11 // pred_region
        %p152 = scmp.lt.s32.totalorder %s19, 0
        %s153 = scalar_select %p152, %s19, 0
        %s154 = scalar_lea.vmem %s2, %s153
      $region20: #{hyper_analysis_ex.3} parent=11 // pred_fallthru
        _
    $region12: #{hyper_analysis_ex.3} parent=5 // pred_fallthru
      _
    %p155 = scmp.lt.s32.totalorder %s9, 2
    // Predicated region
    $region21: #{hyper_analysis_ex.3} parent=5 // pred_check
      %p156 = pneg %p155
    $region22: #{hyper_analysis_ex.3} parent=5 // pred_check_branch
      %158 = sbr.rel (%p156) target = $region24
    $region23: #{hyper_analysis_ex.3} parent=5 // pred_region
      // Predicated region
      $region25: #{hyper_analysis_ex.3} parent=23 // pred_check
        %p159 = pneg %p41
      $region26: #{hyper_analysis_ex.3} parent=23 // pred_check_branch
        %161 = sbr.rel (%p159) target = $region28
      $region27: #{hyper_analysis_ex.3} parent=23 // pred_region
        %p162 = scmp.lt.s32.totalorder %s16, 1
        %s163 = scalar_select %p162, %s16, 1
        %s164 = smul.addr %s163, 76
        %s165 = smul.addr %s164, 4
        %s166 = scalar_lea.vmem %s0, %s165
      $region28: #{hyper_analysis_ex.3} parent=23 // pred_fallthru
        _
    $region24: #{hyper_analysis_ex.3} parent=5 // pred_fallthru
      _
    %p167 = scmp.le.s32.totalorder 1, %s9
    %p168 = scmp.lt.s32.totalorder %s9, 3
    %p169 = pnand %p167, %p168
    %p170 = pneg %p169
    // Predicated region
    $region29: #{hyper_analysis_ex.3} parent=5 // pred_check
      _
    $region30: #{hyper_analysis_ex.3} parent=5 // pred_check_branch
      %172 = sbr.rel (%p169) target = $region32
    $region31: #{hyper_analysis_ex.3} parent=5 // pred_region
      %s173 = ssub.s32 %s9, 1
      %p174 = scmp.lt.s32.totalorder %s18, 1
      %s175 = scalar_select %p174, %s18, 1
      %s176 = smul.addr %s175, 76
      %s177 = smul.addr %s176, 4
      %s178 = scalar_lea.vmem %s0, %s177
      %p179 = pneg %p47
      %p180 = pneg %p44
      %p181 = scmp.lt.s32.totalorder %s19, 0
      %s182 = scalar_select %p181, %s19, 0
      %s183 = smul.addr %s182, 2
      %s184 = scalar_lea.vmem %s1, %s183
      %p185 = pneg %p73
      %p186 = pneg %p70
      %p187 = scmp.lt.s32.totalorder %s19, 0
      %s188 = scalar_select %p187, %s19, 0
      %s189 = scalar_lea.vmem %s2, %s188
      %p190 = pneg %p99
      %p191 = pneg %p96
      %p192 = pneg %p127
      %p193 = pneg %p124
      %p194 = scmp.lt.s32.totalorder %s18, 1
      %s195 = scalar_select %p194, %s18, 1
      %p196 = scmp.lt.s32.totalorder %s19, 0
      %s197 = scalar_select %p196, %s19, 0
      %s198 = smul.addr %s195, 64
      %s199 = sadd.s32 %s197, %s198
      %s200 = smul.addr %s199, 4
      %s201 = scalar_lea.vmem %s3, %s200
      %p202 = scmp.lt.s32.totalorder %s18, 1
      %s203 = scalar_select %p202, %s18, 1
      %s204 = smul.addr %s203, 76
      %s205 = smul.addr %s204, 4
      %s206 = scalar_lea.vmem %s0, %s205
      %p207 = scmp.lt.s32.totalorder %s19, 0
      %s208 = scalar_select %p207, %s19, 0
      %s209 = smul.addr %s208, 2
      %s210 = scalar_lea.vmem %s1, %s209
      %p211 = scmp.lt.s32.totalorder %s19, 0
      %s212 = scalar_select %p211, %s19, 0
      %s213 = scalar_lea.vmem %s2, %s212
      %p214 = scmp.lt.s32.totalorder %s18, 1
      %s215 = scalar_select %p214, %s18, 1
      %p216 = scmp.lt.s32.totalorder %s19, 0
      %s217 = scalar_select %p216, %s19, 0
      %s218 = smul.addr %s215, 64
      %s219 = sadd.s32 %s217, %s218
      %s220 = smul.addr %s219, 4
      %s221 = scalar_lea.vmem %s3, %s220
      %v223 = vld [vmem:[%s213] sm:$0x1]
      %v224 = vld [vmem:[%s206] sm:$0xf]
      %v225 = vld [vmem:[%s206 + $0x4] sm:$0xf]
      %v226 = vld [vmem:[%s206 + $0x8] sm:$0xf]
      %v227 = vld [vmem:[%s206 + $0xc] sm:$0xf]
      %v228 = vld [vmem:[%s206 + $0x10] sm:$0xf]
      %v229 = vld [vmem:[%s206 + $0x14] sm:$0xf]
      %v230 = vld [vmem:[%s206 + $0x18] sm:$0xf]
      %v231 = vld [vmem:[%s206 + $0x1c] sm:$0xf]
      %v232 = vld [vmem:[%s206 + $0x20] sm:$0xf]
      %v233 = vld [vmem:[%s206 + $0x24] sm:$0xf]
      %v234 = vld [vmem:[%s206 + $0x28] sm:$0xf]
      %v235 = vld [vmem:[%s206 + $0x2c] sm:$0xf]
      %v236 = vld [vmem:[%s206 + $0x30] sm:$0xf]
      %v237 = vld [vmem:[%s206 + $0x34] sm:$0xf]
      %v238 = vld [vmem:[%s206 + $0x38] sm:$0xf]
      %v239 = vld [vmem:[%s206 + $0x3c] sm:$0xf]
      %v240 = vld [vmem:[%s206 + $0x40] sm:$0xf]
      %v241 = vld [vmem:[%s206 + $0x44] sm:$0xf]
      %v242 = vld [vmem:[%s206 + $0x48] sm:$0xf]
      %v243 = vld [vmem:[%s206 + $0x4c] sm:$0xf]
      %v244 = vld [vmem:[%s206 + $0x50] sm:$0xf]
      %v245 = vld [vmem:[%s206 + $0x54] sm:$0xf]
      %v246 = vld [vmem:[%s206 + $0x58] sm:$0xf]
      %v247 = vld [vmem:[%s206 + $0x5c] sm:$0xf]
      %v248 = vld [vmem:[%s206 + $0x60] sm:$0xf]
      %v249 = vld [vmem:[%s206 + $0x64] sm:$0xf]
      %v250 = vld [vmem:[%s206 + $0x68] sm:$0xf]
      %v251 = vld [vmem:[%s206 + $0x6c] sm:$0xf]
      %v252 = vld [vmem:[%s206 + $0x70] sm:$0xf]
      %v253 = vld [vmem:[%s206 + $0x74] sm:$0xf]
      %v254 = vld [vmem:[%s206 + $0x78] sm:$0xf]
      %v255 = vld [vmem:[%s206 + $0x7c] sm:$0xf]
      %v256 = vld [vmem:[%s206 + $0x80] sm:$0xf]
      %v257 = vld [vmem:[%s206 + $0x84] sm:$0xf]
      %v258 = vld [vmem:[%s206 + $0x88] sm:$0xf]
      %v259 = vld [vmem:[%s206 + $0x8c] sm:$0xf]
      %v260 = vld [vmem:[%s206 + $0x90] sm:$0xf]
      %v261 = vld [vmem:[%s206 + $0x94] sm:$0xf]
      %v262 = vld [vmem:[%s206 + $0x98] sm:$0xf]
      %v263 = vld [vmem:[%s206 + $0x9c] sm:$0xf]
      %v264 = vld [vmem:[%s206 + $0xa0] sm:$0xf]
      %v265 = vld [vmem:[%s210] sm:$0x3]
      %s266 = scalar_lea.vmem %s210, 6
      %v267 = vld [vmem:[%s266] sm:$0x3]
      %v300 = vunpack.c.l.b16 %v228
      %v301 = vunpack.c.l.b16 %v229
      %v302 = vunpack.c.l.b16 %v230
      %v303 = vunpack.c.l.b16 %v231
      %v304 = vunpack.c.l.b16 %v232
      %v305 = vunpack.c.l.b16 %v233
      %v306 = vunpack.c.l.b16 %v234
      %v307 = vunpack.c.l.b16 %v235
      %v308 = vunpack.c.l.b16 %v236
      %v309 = vunpack.c.l.b16 %v237
      %v310 = vunpack.c.l.b16 %v238
      %v311 = vunpack.c.l.b16 %v239
      %v312 = vunpack.c.l.b16 %v240
      %v313 = vunpack.c.l.b16 %v241
      %v314 = vunpack.c.l.b16 %v242
      %v315 = vunpack.c.l.b16 %v243
      %v316 = vunpack.c.l.b16 %v244
      %v317 = vunpack.c.l.b16 %v245
      %v318 = vunpack.c.l.b16 %v246
      %v319 = vunpack.c.l.b16 %v247
      %v320 = vunpack.c.l.b16 %v248
      %v321 = vunpack.c.l.b16 %v249
      %v322 = vunpack.c.l.b16 %v250
      %v323 = vunpack.c.l.b16 %v251
      %v324 = vunpack.c.l.b16 %v252
      %v325 = vunpack.c.l.b16 %v253
      %v326 = vunpack.c.l.b16 %v254
      %v327 = vunpack.c.l.b16 %v255
      %v328 = vunpack.c.l.b16 %v256
      %v329 = vunpack.c.l.b16 %v257
      %v330 = vunpack.c.l.b16 %v258
      %v331 = vunpack.c.l.b16 %v259
      %v332 = vpack.c.b16 %v301, %v300
      %v333 = vpack.c.b16 %v303, %v302
      %v334 = vpack.c.b16 %v305, %v304
      %v335 = vpack.c.b16 %v307, %v306
      %v336 = vpack.c.b16 %v309, %v308
      %v337 = vpack.c.b16 %v311, %v310
      %v338 = vpack.c.b16 %v313, %v312
      %v339 = vpack.c.b16 %v315, %v314
      %v340 = vpack.c.b16 %v317, %v316
      %v341 = vpack.c.b16 %v319, %v318
      %v342 = vpack.c.b16 %v321, %v320
      %v343 = vpack.c.b16 %v323, %v322
      %v344 = vpack.c.b16 %v325, %v324
      %v345 = vpack.c.b16 %v327, %v326
      %v346 = vpack.c.b16 %v329, %v328
      %v347 = vpack.c.b16 %v331, %v330
      %vm348 = vcmask 31744
      %v350 = vsel %vm348, %v332, 0
      %v353 = vsel %vm348, %v333, 0
      %v356 = vsel %vm348, %v334, 0
      %v359 = vsel %vm348, %v335, 0
      %v362 = vsel %vm348, %v336, 0
      %v365 = vsel %vm348, %v337, 0
      %v368 = vsel %vm348, %v338, 0
      %v371 = vsel %vm348, %v339, 0
      %v374 = vsel %vm348, %v340, 0
      %v377 = vsel %vm348, %v341, 0
      %v380 = vsel %vm348, %v342, 0
      %v383 = vsel %vm348, %v343, 0
      %v386 = vsel %vm348, %v344, 0
      %v389 = vsel %vm348, %v345, 0
      %v392 = vsel %vm348, %v346, 0
      %v395 = vsel %vm348, %v347, 0
      %vm397 = vcmask 1041408
      %v399 = vsel %vm397, %v267, 0
      %401 = vmatprep.subr.bf16.mxu0 0
      %402 = vmatpush1.bf16.msra.mxu0 0
      %403 = vmatprep.subr.bf16.mxu0 0
      %404 = vmatpush1.bf16.msra.mxu0 0
      %405 = vmatprep.subr.bf16.mxu0 0
      %406 = vmatpush1.bf16.msra.mxu0 0
      %407 = vmatprep.subr.bf16.mxu0 0
      %408 = vmatpush1.bf16.msra.mxu0 0
      %409 = vmatprep.subr.bf16.mxu0 0
      %410 = vmatpush1.bf16.msra.mxu0 0
      %411 = vmatprep.subr.bf16.mxu0 0
      %412 = vmatpush1.bf16.msra.mxu0 0
      %413 = vmatprep.subr.bf16.mxu0 0
      %414 = vmatpush1.bf16.msra.mxu0 0
      %415 = vmatprep.subr.bf16.mxu0 0
      %416 = vmatpush1.bf16.msra.mxu0 %v399
      %417 = vmatprep.subr.bf16.mxu0 0
      %418 = vmatpush2.bf16.msra.mxu0 0
      %419 = vmatprep.subr.bf16.mxu0 0
      %420 = vmatpush2.bf16.msra.mxu0 0
      %421 = vmatprep.subr.bf16.mxu0 0
      %422 = vmatpush2.bf16.msra.mxu0 0
      %423 = vmatprep.subr.bf16.mxu0 0
      %424 = vmatpush2.bf16.msra.mxu0 0
      %425 = vmatprep.subr.bf16.mxu0 0
      %426 = vmatpush2.bf16.msra.mxu0 0
      %427 = vmatprep.subr.bf16.mxu0 0
      %428 = vmatpush2.bf16.msra.mxu0 0
      %429 = vmatprep.subr.bf16.mxu0 0
      %430 = vmatpush2.bf16.msra.mxu0 0
      %431 = vmatprep.subr.bf16.mxu0 0
      %432 = vmatpush2.bf16.msra.mxu0 0
      %433 = vmatprep.mubr.bf16.mxu0 0
      %434 = vmatmul.mubr.bf16.gmra.mxu0 %v350
      %v435 = vpop.f32.mrf.mxu0
      %v436 = vadd.f32 0.0, %v435
      %v437 = vpop.f32.mrf.mxu0
      %v438 = vpop.f32.mrf.mxu0
      %v439 = vadd.f32 0.0, %v438
      %v440 = vpop.f32.mrf.mxu0
      %441 = vmatprep.mubr.bf16.mxu0 0
      %442 = vmatmul.mubr.bf16.gmra.mxu0 %v353
      %v443 = vpop.f32.mrf.mxu0
      %v444 = vadd.f32 0.0, %v443
      %v445 = vpop.f32.mrf.mxu0
      %v446 = vpop.f32.mrf.mxu0
      %v447 = vadd.f32 0.0, %v446
      %v448 = vpop.f32.mrf.mxu0
      %449 = vmatprep.mubr.bf16.mxu0 0
      %450 = vmatmul.mubr.bf16.gmra.mxu0 %v356
      %v451 = vpop.f32.mrf.mxu0
      %v452 = vadd.f32 0.0, %v451
      %v453 = vpop.f32.mrf.mxu0
      %v454 = vpop.f32.mrf.mxu0
      %v455 = vadd.f32 0.0, %v454
      %v456 = vpop.f32.mrf.mxu0
      %457 = vmatprep.mubr.bf16.mxu0 0
      %458 = vmatmul.mubr.bf16.gmra.mxu0 %v359
      %v459 = vpop.f32.mrf.mxu0
      %v460 = vadd.f32 0.0, %v459
      %v461 = vpop.f32.mrf.mxu0
      %v462 = vpop.f32.mrf.mxu0
      %v463 = vadd.f32 0.0, %v462
      %v464 = vpop.f32.mrf.mxu0
      %465 = vmatprep.mubr.bf16.mxu0 0
      %466 = vmatmul.mubr.bf16.gmra.mxu0 %v362
      %v467 = vpop.f32.mrf.mxu0
      %v468 = vadd.f32 0.0, %v467
      %v469 = vpop.f32.mrf.mxu0
      %v470 = vpop.f32.mrf.mxu0
      %v471 = vadd.f32 0.0, %v470
      %v472 = vpop.f32.mrf.mxu0
      %473 = vmatprep.mubr.bf16.mxu0 0
      %474 = vmatmul.mubr.bf16.gmra.mxu0 %v365
      %v475 = vpop.f32.mrf.mxu0
      %v476 = vadd.f32 0.0, %v475
      %v477 = vpop.f32.mrf.mxu0
      %v478 = vpop.f32.mrf.mxu0
      %v479 = vadd.f32 0.0, %v478
      %v480 = vpop.f32.mrf.mxu0
      %481 = vmatprep.mubr.bf16.mxu0 0
      %482 = vmatmul.mubr.bf16.gmra.mxu0 %v368
      %v483 = vpop.f32.mrf.mxu0
      %v484 = vadd.f32 0.0, %v483
      %v485 = vpop.f32.mrf.mxu0
      %v486 = vpop.f32.mrf.mxu0
      %v487 = vadd.f32 0.0, %v486
      %v488 = vpop.f32.mrf.mxu0
      %489 = vmatprep.mubr.bf16.mxu0 0
      %490 = vmatmul.mubr.bf16.gmra.mxu0 %v371
      %v491 = vpop.f32.mrf.mxu0
      %v492 = vadd.f32 0.0, %v491
      %v493 = vpop.f32.mrf.mxu0
      %v494 = vpop.f32.mrf.mxu0
      %v495 = vadd.f32 0.0, %v494
      %v496 = vpop.f32.mrf.mxu0
      %497 = vmatprep.mubr.bf16.mxu0 0
      %498 = vmatmul.mubr.bf16.gmra.mxu0 %v374
      %v499 = vpop.f32.mrf.mxu0
      %v500 = vadd.f32 0.0, %v499
      %v501 = vpop.f32.mrf.mxu0
      %v502 = vpop.f32.mrf.mxu0
      %v503 = vadd.f32 0.0, %v502
      %v504 = vpop.f32.mrf.mxu0
      %505 = vmatprep.mubr.bf16.mxu0 0
      %506 = vmatmul.mubr.bf16.gmra.mxu0 %v377
      %v507 = vpop.f32.mrf.mxu0
      %v508 = vadd.f32 0.0, %v507
      %v509 = vpop.f32.mrf.mxu0
      %v510 = vpop.f32.mrf.mxu0
      %v511 = vadd.f32 0.0, %v510
      %v512 = vpop.f32.mrf.mxu0
      %513 = vmatprep.mubr.bf16.mxu0 0
      %514 = vmatmul.mubr.bf16.gmra.mxu0 %v380
      %v515 = vpop.f32.mrf.mxu0
      %v516 = vadd.f32 0.0, %v515
      %v517 = vpop.f32.mrf.mxu0
      %v518 = vpop.f32.mrf.mxu0
      %v519 = vadd.f32 0.0, %v518
      %v520 = vpop.f32.mrf.mxu0
      %521 = vmatprep.mubr.bf16.mxu0 0
      %522 = vmatmul.mubr.bf16.gmra.mxu0 %v383
      %v523 = vpop.f32.mrf.mxu0
      %v524 = vadd.f32 0.0, %v523
      %v525 = vpop.f32.mrf.mxu0
      %v526 = vpop.f32.mrf.mxu0
      %v527 = vadd.f32 0.0, %v526
      %v528 = vpop.f32.mrf.mxu0
      %529 = vmatprep.mubr.bf16.mxu0 0
      %530 = vmatmul.mubr.bf16.gmra.mxu0 %v386
      %v531 = vpop.f32.mrf.mxu0
      %v532 = vadd.f32 0.0, %v531
      %v533 = vpop.f32.mrf.mxu0
      %v534 = vpop.f32.mrf.mxu0
      %v535 = vadd.f32 0.0, %v534
      %v536 = vpop.f32.mrf.mxu0
      %537 = vmatprep.mubr.bf16.mxu0 0
      %538 = vmatmul.mubr.bf16.gmra.mxu0 %v389
      %v539 = vpop.f32.mrf.mxu0
      %v540 = vadd.f32 0.0, %v539
      %v541 = vpop.f32.mrf.mxu0
      %v542 = vpop.f32.mrf.mxu0
      %v543 = vadd.f32 0.0, %v542
      %v544 = vpop.f32.mrf.mxu0
      %545 = vmatprep.mubr.bf16.mxu0 0
      %546 = vmatmul.mubr.bf16.gmra.mxu0 %v392
      %v547 = vpop.f32.mrf.mxu0
      %v548 = vadd.f32 0.0, %v547
      %v549 = vpop.f32.mrf.mxu0
      %v550 = vpop.f32.mrf.mxu0
      %v551 = vadd.f32 0.0, %v550
      %v552 = vpop.f32.mrf.mxu0
      %553 = vmatprep.mubr.bf16.mxu0 0
      %554 = vmatmul.mubr.bf16.gmra.mxu0 %v395
      %v555 = vpop.f32.mrf.mxu0
      %v556 = vadd.f32 0.0, %v555
      %v557 = vpop.f32.mrf.mxu0
      %v558 = vpop.f32.mrf.mxu0
      %v559 = vadd.f32 0.0, %v558
      %v560 = vpop.f32.mrf.mxu0
      %561 = vdwg.mxu0
      %v566 = vunpack.c.l.b16 %v224
      %v567 = vunpack.c.l.b16 %v225
      %v568 = vunpack.c.l.b16 %v226
      %v569 = vunpack.c.l.b16 %v227
      %v570 = vpack.c.b16 %v567, %v566
      %v571 = vpack.c.b16 %v569, %v568
      %v573 = vsel %vm348, %v570, 0
      %v576 = vsel %vm348, %v571, 0
      %v579 = vsel %vm397, %v265, 0
      %581 = vmatprep.subr.bf16.mxu0 0
      %582 = vmatpush1.bf16.msra.mxu0 0
      %583 = vmatprep.subr.bf16.mxu0 0
      %584 = vmatpush1.bf16.msra.mxu0 0
      %585 = vmatprep.subr.bf16.mxu0 0
      %586 = vmatpush1.bf16.msra.mxu0 0
      %587 = vmatprep.subr.bf16.mxu0 0
      %588 = vmatpush1.bf16.msra.mxu0 0
      %589 = vmatprep.subr.bf16.mxu0 0
      %590 = vmatpush1.bf16.msra.mxu0 0
      %591 = vmatprep.subr.bf16.mxu0 0
      %592 = vmatpush1.bf16.msra.mxu0 0
      %593 = vmatprep.subr.bf16.mxu0 0
      %594 = vmatpush1.bf16.msra.mxu0 0
      %595 = vmatprep.subr.bf16.mxu0 0
      %596 = vmatpush1.bf16.msra.mxu0 %v579
      %597 = vmatprep.subr.bf16.mxu0 0
      %598 = vmatpush2.bf16.msra.mxu0 0
      %599 = vmatprep.subr.bf16.mxu0 0
      %600 = vmatpush2.bf16.msra.mxu0 0
      %601 = vmatprep.subr.bf16.mxu0 0
      %602 = vmatpush2.bf16.msra.mxu0 0
      %603 = vmatprep.subr.bf16.mxu0 0
      %604 = vmatpush2.bf16.msra.mxu0 0
      %605 = vmatprep.subr.bf16.mxu0 0
      %606 = vmatpush2.bf16.msra.mxu0 0
      %607 = vmatprep.subr.bf16.mxu0 0
      %608 = vmatpush2.bf16.msra.mxu0 0
      %609 = vmatprep.subr.bf16.mxu0 0
      %610 = vmatpush2.bf16.msra.mxu0 0
      %611 = vmatprep.subr.bf16.mxu0 0
      %612 = vmatpush2.bf16.msra.mxu0 0
      %613 = vmatprep.mubr.bf16.mxu0 0
      %614 = vmatmul.mubr.bf16.gmra.mxu0 %v573
      %v615 = vpop.f32.mrf.mxu0
      %v616 = vadd.f32 %v436, %v615
      %v617 = vpop.f32.mrf.mxu0
      %v618 = vpop.f32.mrf.mxu0
      %v619 = vadd.f32 %v439, %v618
      %v620 = vpop.f32.mrf.mxu0
      %621 = vmatprep.mubr.bf16.mxu0 0
      %622 = vmatmul.mubr.bf16.gmra.mxu0 %v576
      %v623 = vpop.f32.mrf.mxu0
      %v624 = vadd.f32 %v444, %v623
      %v625 = vpop.f32.mrf.mxu0
      %v626 = vpop.f32.mrf.mxu0
      %v627 = vadd.f32 %v447, %v626
      %v628 = vpop.f32.mrf.mxu0
      %629 = vmatprep.mubr.bf16.mxu0 0
      %630 = vmatmul.mubr.bf16.gmra.mxu0 %v350
      %v631 = vpop.f32.mrf.mxu0
      %v632 = vadd.f32 %v452, %v631
      %v633 = vpop.f32.mrf.mxu0
      %v634 = vpop.f32.mrf.mxu0
      %v635 = vadd.f32 %v455, %v634
      %v636 = vpop.f32.mrf.mxu0
      %637 = vmatprep.mubr.bf16.mxu0 0
      %638 = vmatmul.mubr.bf16.gmra.mxu0 %v353
      %v639 = vpop.f32.mrf.mxu0
      %v640 = vadd.f32 %v460, %v639
      %v641 = vpop.f32.mrf.mxu0
      %v642 = vpop.f32.mrf.mxu0
      %v643 = vadd.f32 %v463, %v642
      %v644 = vpop.f32.mrf.mxu0
      %645 = vmatprep.mubr.bf16.mxu0 0
      %646 = vmatmul.mubr.bf16.gmra.mxu0 %v356
      %v647 = vpop.f32.mrf.mxu0
      %v648 = vadd.f32 %v468, %v647
      %v649 = vpop.f32.mrf.mxu0
      %v650 = vpop.f32.mrf.mxu0
      %v651 = vadd.f32 %v471, %v650
      %v652 = vpop.f32.mrf.mxu0
      %653 = vmatprep.mubr.bf16.mxu0 0
      %654 = vmatmul.mubr.bf16.gmra.mxu0 %v359
      %v655 = vpop.f32.mrf.mxu0
      %v656 = vadd.f32 %v476, %v655
      %v657 = vpop.f32.mrf.mxu0
      %v658 = vpop.f32.mrf.mxu0
      %v659 = vadd.f32 %v479, %v658
      %v660 = vpop.f32.mrf.mxu0
      %661 = vmatprep.mubr.bf16.mxu0 0
      %662 = vmatmul.mubr.bf16.gmra.mxu0 %v362
      %v663 = vpop.f32.mrf.mxu0
      %v664 = vadd.f32 %v484, %v663
      %v665 = vpop.f32.mrf.mxu0
      %v666 = vpop.f32.mrf.mxu0
      %v667 = vadd.f32 %v487, %v666
      %v668 = vpop.f32.mrf.mxu0
      %669 = vmatprep.mubr.bf16.mxu0 0
      %670 = vmatmul.mubr.bf16.gmra.mxu0 %v365
      %v671 = vpop.f32.mrf.mxu0
      %v672 = vadd.f32 %v492, %v671
      %v673 = vpop.f32.mrf.mxu0
      %v674 = vpop.f32.mrf.mxu0
      %v675 = vadd.f32 %v495, %v674
      %v676 = vpop.f32.mrf.mxu0
      %677 = vmatprep.mubr.bf16.mxu0 0
      %678 = vmatmul.mubr.bf16.gmra.mxu0 %v368
      %v679 = vpop.f32.mrf.mxu0
      %v680 = vadd.f32 %v500, %v679
      %v681 = vpop.f32.mrf.mxu0
      %v682 = vpop.f32.mrf.mxu0
      %v683 = vadd.f32 %v503, %v682
      %v684 = vpop.f32.mrf.mxu0
      %685 = vmatprep.mubr.bf16.mxu0 0
      %686 = vmatmul.mubr.bf16.gmra.mxu0 %v371
      %v687 = vpop.f32.mrf.mxu0
      %v688 = vadd.f32 %v508, %v687
      %v689 = vpop.f32.mrf.mxu0
      %v690 = vpop.f32.mrf.mxu0
      %v691 = vadd.f32 %v511, %v690
      %v692 = vpop.f32.mrf.mxu0
      %693 = vmatprep.mubr.bf16.mxu0 0
      %694 = vmatmul.mubr.bf16.gmra.mxu0 %v374
      %v695 = vpop.f32.mrf.mxu0
      %v696 = vadd.f32 %v516, %v695
      %v697 = vpop.f32.mrf.mxu0
      %v698 = vpop.f32.mrf.mxu0
      %v699 = vadd.f32 %v519, %v698
      %v700 = vpop.f32.mrf.mxu0
      %701 = vmatprep.mubr.bf16.mxu0 0
      %702 = vmatmul.mubr.bf16.gmra.mxu0 %v377
      %v703 = vpop.f32.mrf.mxu0
      %v704 = vadd.f32 %v524, %v703
      %v705 = vpop.f32.mrf.mxu0
      %v706 = vpop.f32.mrf.mxu0
      %v707 = vadd.f32 %v527, %v706
      %v708 = vpop.f32.mrf.mxu0
      %709 = vmatprep.mubr.bf16.mxu0 0
      %710 = vmatmul.mubr.bf16.gmra.mxu0 %v380
      %v711 = vpop.f32.mrf.mxu0
      %v712 = vadd.f32 %v532, %v711
      %v713 = vpop.f32.mrf.mxu0
      %v714 = vpop.f32.mrf.mxu0
      %v715 = vadd.f32 %v535, %v714
      %v716 = vpop.f32.mrf.mxu0
      %717 = vmatprep.mubr.bf16.mxu0 0
      %718 = vmatmul.mubr.bf16.gmra.mxu0 %v383
      %v719 = vpop.f32.mrf.mxu0
      %v720 = vadd.f32 %v540, %v719
      %v721 = vpop.f32.mrf.mxu0
      %v722 = vpop.f32.mrf.mxu0
      %v723 = vadd.f32 %v543, %v722
      %v724 = vpop.f32.mrf.mxu0
      %725 = vmatprep.mubr.bf16.mxu0 0
      %726 = vmatmul.mubr.bf16.gmra.mxu0 %v386
      %v727 = vpop.f32.mrf.mxu0
      %v728 = vadd.f32 %v548, %v727
      %v729 = vpop.f32.mrf.mxu0
      %v730 = vpop.f32.mrf.mxu0
      %v731 = vadd.f32 %v551, %v730
      %v732 = vpop.f32.mrf.mxu0
      %733 = vmatprep.mubr.bf16.mxu0 0
      %734 = vmatmul.mubr.bf16.gmra.mxu0 %v389
      %v735 = vpop.f32.mrf.mxu0
      %v736 = vadd.f32 %v556, %v735
      %v737 = vpop.f32.mrf.mxu0
      %v738 = vpop.f32.mrf.mxu0
      %v739 = vadd.f32 %v559, %v738
      %v740 = vpop.f32.mrf.mxu0
      %741 = vdwg.mxu0
      %s742 = scalar_lea.vmem %s210, 12
      %v743 = vld [vmem:[%s742] sm:$0x3]
      %v748 = vunpack.c.l.b16 %v260
      %v749 = vunpack.c.l.b16 %v261
      %v750 = vunpack.c.l.b16 %v262
      %v751 = vunpack.c.l.b16 %v263
      %v752 = vpack.c.b16 %v749, %v748
      %v753 = vpack.c.b16 %v751, %v750
      %v755 = vsel %vm348, %v752, 0
      %v758 = vsel %vm348, %v753, 0
      %v761 = vsel %vm397, %v743, 0
      %763 = vmatprep.subr.bf16.mxu0 0
      %764 = vmatpush1.bf16.msra.mxu0 0
      %765 = vmatprep.subr.bf16.mxu0 0
      %766 = vmatpush1.bf16.msra.mxu0 0
      %767 = vmatprep.subr.bf16.mxu0 0
      %768 = vmatpush1.bf16.msra.mxu0 0
      %769 = vmatprep.subr.bf16.mxu0 0
      %770 = vmatpush1.bf16.msra.mxu0 0
      %771 = vmatprep.subr.bf16.mxu0 0
      %772 = vmatpush1.bf16.msra.mxu0 0
      %773 = vmatprep.subr.bf16.mxu0 0
      %774 = vmatpush1.bf16.msra.mxu0 0
      %775 = vmatprep.subr.bf16.mxu0 0
      %776 = vmatpush1.bf16.msra.mxu0 0
      %777 = vmatprep.subr.bf16.mxu0 0
      %778 = vmatpush1.bf16.msra.mxu0 %v761
      %779 = vmatprep.subr.bf16.mxu0 0
      %780 = vmatpush2.bf16.msra.mxu0 0
      %781 = vmatprep.subr.bf16.mxu0 0
      %782 = vmatpush2.bf16.msra.mxu0 0
      %783 = vmatprep.subr.bf16.mxu0 0
      %784 = vmatpush2.bf16.msra.mxu0 0
      %785 = vmatprep.subr.bf16.mxu0 0
      %786 = vmatpush2.bf16.msra.mxu0 0
      %787 = vmatprep.subr.bf16.mxu0 0
      %788 = vmatpush2.bf16.msra.mxu0 0
      %789 = vmatprep.subr.bf16.mxu0 0
      %790 = vmatpush2.bf16.msra.mxu0 0
      %791 = vmatprep.subr.bf16.mxu0 0
      %792 = vmatpush2.bf16.msra.mxu0 0
      %793 = vmatprep.subr.bf16.mxu0 0
      %794 = vmatpush2.bf16.msra.mxu0 0
      %795 = vmatprep.mubr.bf16.mxu0 0
      %796 = vmatmul.mubr.bf16.gmra.mxu0 %v356
      %v797 = vpop.f32.mrf.mxu0
      %v798 = vadd.f32 0.0, %v797
      %v799 = vpop.f32.mrf.mxu0
      %v800 = vpop.f32.mrf.mxu0
      %v801 = vadd.f32 0.0, %v800
      %v802 = vpop.f32.mrf.mxu0
      %803 = vmatprep.mubr.bf16.mxu0 0
      %804 = vmatmul.mubr.bf16.gmra.mxu0 %v359
      %v805 = vpop.f32.mrf.mxu0
      %v806 = vadd.f32 0.0, %v805
      %v807 = vpop.f32.mrf.mxu0
      %v808 = vpop.f32.mrf.mxu0
      %v809 = vadd.f32 0.0, %v808
      %v810 = vpop.f32.mrf.mxu0
      %811 = vmatprep.mubr.bf16.mxu0 0
      %812 = vmatmul.mubr.bf16.gmra.mxu0 %v362
      %v813 = vpop.f32.mrf.mxu0
      %v814 = vadd.f32 0.0, %v813
      %v815 = vpop.f32.mrf.mxu0
      %v816 = vpop.f32.mrf.mxu0
      %v817 = vadd.f32 0.0, %v816
      %v818 = vpop.f32.mrf.mxu0
      %819 = vmatprep.mubr.bf16.mxu0 0
      %820 = vmatmul.mubr.bf16.gmra.mxu0 %v365
      %v821 = vpop.f32.mrf.mxu0
      %v822 = vadd.f32 0.0, %v821
      %v823 = vpop.f32.mrf.mxu0
      %v824 = vpop.f32.mrf.mxu0
      %v825 = vadd.f32 0.0, %v824
      %v826 = vpop.f32.mrf.mxu0
      %827 = vmatprep.mubr.bf16.mxu0 0
      %828 = vmatmul.mubr.bf16.gmra.mxu0 %v368
      %v829 = vpop.f32.mrf.mxu0
      %v830 = vadd.f32 0.0, %v829
      %v831 = vpop.f32.mrf.mxu0
      %v832 = vpop.f32.mrf.mxu0
      %v833 = vadd.f32 0.0, %v832
      %v834 = vpop.f32.mrf.mxu0
      %835 = vmatprep.mubr.bf16.mxu0 0
      %836 = vmatmul.mubr.bf16.gmra.mxu0 %v371
      %v837 = vpop.f32.mrf.mxu0
      %v838 = vadd.f32 0.0, %v837
      %v839 = vpop.f32.mrf.mxu0
      %v840 = vpop.f32.mrf.mxu0
      %v841 = vadd.f32 0.0, %v840
      %v842 = vpop.f32.mrf.mxu0
      %843 = vmatprep.mubr.bf16.mxu0 0
      %844 = vmatmul.mubr.bf16.gmra.mxu0 %v374
      %v845 = vpop.f32.mrf.mxu0
      %v846 = vadd.f32 0.0, %v845
      %v847 = vpop.f32.mrf.mxu0
      %v848 = vpop.f32.mrf.mxu0
      %v849 = vadd.f32 0.0, %v848
      %v850 = vpop.f32.mrf.mxu0
      %851 = vmatprep.mubr.bf16.mxu0 0
      %852 = vmatmul.mubr.bf16.gmra.mxu0 %v377
      %v853 = vpop.f32.mrf.mxu0
      %v854 = vadd.f32 0.0, %v853
      %v855 = vpop.f32.mrf.mxu0
      %v856 = vpop.f32.mrf.mxu0
      %v857 = vadd.f32 0.0, %v856
      %v858 = vpop.f32.mrf.mxu0
      %859 = vmatprep.mubr.bf16.mxu0 0
      %860 = vmatmul.mubr.bf16.gmra.mxu0 %v380
      %v861 = vpop.f32.mrf.mxu0
      %v862 = vadd.f32 0.0, %v861
      %v863 = vpop.f32.mrf.mxu0
      %v864 = vpop.f32.mrf.mxu0
      %v865 = vadd.f32 0.0, %v864
      %v866 = vpop.f32.mrf.mxu0
      %867 = vmatprep.mubr.bf16.mxu0 0
      %868 = vmatmul.mubr.bf16.gmra.mxu0 %v383
      %v869 = vpop.f32.mrf.mxu0
      %v870 = vadd.f32 0.0, %v869
      %v871 = vpop.f32.mrf.mxu0
      %v872 = vpop.f32.mrf.mxu0
      %v873 = vadd.f32 0.0, %v872
      %v874 = vpop.f32.mrf.mxu0
      %875 = vmatprep.mubr.bf16.mxu0 0
      %876 = vmatmul.mubr.bf16.gmra.mxu0 %v386
      %v877 = vpop.f32.mrf.mxu0
      %v878 = vadd.f32 0.0, %v877
      %v879 = vpop.f32.mrf.mxu0
      %v880 = vpop.f32.mrf.mxu0
      %v881 = vadd.f32 0.0, %v880
      %v882 = vpop.f32.mrf.mxu0
      %883 = vmatprep.mubr.bf16.mxu0 0
      %884 = vmatmul.mubr.bf16.gmra.mxu0 %v389
      %v885 = vpop.f32.mrf.mxu0
      %v886 = vadd.f32 0.0, %v885
      %v887 = vpop.f32.mrf.mxu0
      %v888 = vpop.f32.mrf.mxu0
      %v889 = vadd.f32 0.0, %v888
      %v890 = vpop.f32.mrf.mxu0
      %891 = vmatprep.mubr.bf16.mxu0 0
      %892 = vmatmul.mubr.bf16.gmra.mxu0 %v392
      %v893 = vpop.f32.mrf.mxu0
      %v894 = vadd.f32 0.0, %v893
      %v895 = vpop.f32.mrf.mxu0
      %v896 = vpop.f32.mrf.mxu0
      %v897 = vadd.f32 0.0, %v896
      %v898 = vpop.f32.mrf.mxu0
      %899 = vmatprep.mubr.bf16.mxu0 0
      %900 = vmatmul.mubr.bf16.gmra.mxu0 %v395
      %v901 = vpop.f32.mrf.mxu0
      %v902 = vadd.f32 0.0, %v901
      %v903 = vpop.f32.mrf.mxu0
      %v904 = vpop.f32.mrf.mxu0
      %v905 = vadd.f32 0.0, %v904
      %v906 = vpop.f32.mrf.mxu0
      %907 = vmatprep.mubr.bf16.mxu0 0
      %908 = vmatmul.mubr.bf16.gmra.mxu0 %v755
      %v909 = vpop.f32.mrf.mxu0
      %v910 = vadd.f32 0.0, %v909
      %v911 = vpop.f32.mrf.mxu0
      %v912 = vpop.f32.mrf.mxu0
      %v913 = vadd.f32 0.0, %v912
      %v914 = vpop.f32.mrf.mxu0
      %915 = vmatprep.mubr.bf16.mxu0 0
      %916 = vmatmul.mubr.bf16.gmra.mxu0 %v758
      %v917 = vpop.f32.mrf.mxu0
      %v918 = vadd.f32 0.0, %v917
      %v919 = vpop.f32.mrf.mxu0
      %v920 = vpop.f32.mrf.mxu0
      %v921 = vadd.f32 0.0, %v920
      %v922 = vpop.f32.mrf.mxu0
      %923 = vdwg.mxu0
      %v924 = vadd.f32 %v616, %v798
      %v925 = vadd.f32 %v619, %v801
      %v926 = vadd.f32 %v624, %v806
      %v927 = vadd.f32 %v627, %v809
      %v928 = vadd.f32 %v632, %v814
      %v929 = vadd.f32 %v635, %v817
      %v930 = vadd.f32 %v640, %v822
      %v931 = vadd.f32 %v643, %v825
      %v932 = vadd.f32 %v648, %v830
      %v933 = vadd.f32 %v651, %v833
      %v934 = vadd.f32 %v656, %v838
      %v935 = vadd.f32 %v659, %v841
      %v936 = vadd.f32 %v664, %v846
      %v937 = vadd.f32 %v667, %v849
      %v938 = vadd.f32 %v672, %v854
      %v939 = vadd.f32 %v675, %v857
      %v940 = vadd.f32 %v680, %v862
      %v941 = vadd.f32 %v683, %v865
      %v942 = vadd.f32 %v688, %v870
      %v943 = vadd.f32 %v691, %v873
      %v944 = vadd.f32 %v696, %v878
      %v945 = vadd.f32 %v699, %v881
      %v946 = vadd.f32 %v704, %v886
      %v947 = vadd.f32 %v707, %v889
      %v948 = vadd.f32 %v712, %v894
      %v949 = vadd.f32 %v715, %v897
      %v950 = vadd.f32 %v720, %v902
      %v951 = vadd.f32 %v723, %v905
      %v952 = vadd.f32 %v728, %v910
      %v953 = vadd.f32 %v731, %v913
      %v954 = vadd.f32 %v736, %v918
      %v955 = vadd.f32 %v739, %v921
      %s956 = scalar_lea.vmem %s210, 2
      %v957 = vld [vmem:[%s956] sm:$0x3]
      %v958 = vpack.c.b16 %v328, %v328
      %vm959 = vsmask.f32 7424
      %v960 = vshrl.u32 %v570, 16
      %v962 = vshll.u32 %v570, 16
      %v964 = vrot.slane %v962, 1
      %v965 = vor.u32 %v960, %v964
      %v966 = vshll.u32 %v571, 16
      %v968 = vrot.slane %v966, 1
      %v969 = vsel %vm959, %v965, %v968
      %v970 = vshrl.u32 %v571, 16
      %v972 = vor.u32 %v970, %v968
      %v973 = vshll.u32 %v332, 16
      %v975 = vrot.slane %v973, 1
      %v976 = vsel %vm959, %v972, %v975
      %v977 = vshrl.u32 %v332, 16
      %v979 = vor.u32 %v977, %v975
      %v980 = vshll.u32 %v333, 16
      %v982 = vrot.slane %v980, 1
      %v983 = vsel %vm959, %v979, %v982
      %v984 = vshrl.u32 %v333, 16
      %v986 = vor.u32 %v984, %v982
      %v987 = vshll.u32 %v334, 16
      %v989 = vrot.slane %v987, 1
      %v990 = vsel %vm959, %v986, %v989
      %v991 = vshrl.u32 %v334, 16
      %v993 = vor.u32 %v991, %v989
      %v994 = vshll.u32 %v335, 16
      %v996 = vrot.slane %v994, 1
      %v997 = vsel %vm959, %v993, %v996
      %v998 = vshrl.u32 %v335, 16
      %v1000 = vor.u32 %v998, %v996
      %v1001 = vshll.u32 %v336, 16
      %v1003 = vrot.slane %v1001, 1
      %v1004 = vsel %vm959, %v1000, %v1003
      %v1005 = vshrl.u32 %v336, 16
      %v1007 = vor.u32 %v1005, %v1003
      %v1008 = vshll.u32 %v337, 16
      %v1010 = vrot.slane %v1008, 1
      %v1011 = vsel %vm959, %v1007, %v1010
      %v1012 = vshrl.u32 %v337, 16
      %v1014 = vor.u32 %v1012, %v1010
      %v1015 = vshll.u32 %v338, 16
      %v1017 = vrot.slane %v1015, 1
      %v1018 = vsel %vm959, %v1014, %v1017
      %v1019 = vshrl.u32 %v338, 16
      %v1021 = vor.u32 %v1019, %v1017
      %v1022 = vshll.u32 %v339, 16
      %v1024 = vrot.slane %v1022, 1
      %v1025 = vsel %vm959, %v1021, %v1024
      %v1026 = vshrl.u32 %v339, 16
      %v1028 = vor.u32 %v1026, %v1024
      %v1029 = vshll.u32 %v340, 16
      %v1031 = vrot.slane %v1029, 1
      %v1032 = vsel %vm959, %v1028, %v1031
      %v1033 = vshrl.u32 %v340, 16
      %v1035 = vor.u32 %v1033, %v1031
      %v1036 = vshll.u32 %v341, 16
      %v1038 = vrot.slane %v1036, 1
      %v1039 = vsel %vm959, %v1035, %v1038
      %v1040 = vshrl.u32 %v341, 16
      %v1042 = vor.u32 %v1040, %v1038
      %v1043 = vshll.u32 %v342, 16
      %v1045 = vrot.slane %v1043, 1
      %v1046 = vsel %vm959, %v1042, %v1045
      %v1047 = vshrl.u32 %v342, 16
      %v1049 = vor.u32 %v1047, %v1045
      %v1050 = vshll.u32 %v343, 16
      %v1052 = vrot.slane %v1050, 1
      %v1053 = vsel %vm959, %v1049, %v1052
      %v1054 = vshrl.u32 %v343, 16
      %v1056 = vor.u32 %v1054, %v1052
      %v1057 = vshll.u32 %v344, 16
      %v1059 = vrot.slane %v1057, 1
      %v1060 = vsel %vm959, %v1056, %v1059
      %v1061 = vshrl.u32 %v344, 16
      %v1063 = vor.u32 %v1061, %v1059
      %v1064 = vshll.u32 %v345, 16
      %v1066 = vrot.slane %v1064, 1
      %v1067 = vsel %vm959, %v1063, %v1066
      %v1068 = vshrl.u32 %v345, 16
      %v1070 = vor.u32 %v1068, %v1066
      %v1072 = vshll.u32 %v958, 16
      %v1074 = vrot.slane %v1072, 1
      %v1075 = vsel %vm959, %v1070, %v1074
      %v1077 = vsel %vm348, %v969, 0
      %v1080 = vsel %vm348, %v976, 0
      %v1083 = vsel %vm348, %v983, 0
      %v1086 = vsel %vm348, %v990, 0
      %v1089 = vsel %vm348, %v997, 0
      %v1092 = vsel %vm348, %v1004, 0
      %v1095 = vsel %vm348, %v1011, 0
      %v1098 = vsel %vm348, %v1018, 0
      %v1101 = vsel %vm348, %v1025, 0
      %v1104 = vsel %vm348, %v1032, 0
      %v1107 = vsel %vm348, %v1039, 0
      %v1110 = vsel %vm348, %v1046, 0
      %v1113 = vsel %vm348, %v1053, 0
      %v1116 = vsel %vm348, %v1060, 0
      %v1119 = vsel %vm348, %v1067, 0
      %v1122 = vsel %vm348, %v1075, 0
      %v1125 = vsel %vm397, %v957, 0
      %1127 = vmatprep.subr.bf16.mxu0 0
      %1128 = vmatpush1.bf16.msra.mxu0 0
      %1129 = vmatprep.subr.bf16.mxu0 0
      %1130 = vmatpush1.bf16.msra.mxu0 0
      %1131 = vmatprep.subr.bf16.mxu0 0
      %1132 = vmatpush1.bf16.msra.mxu0 0
      %1133 = vmatprep.subr.bf16.mxu0 0
      %1134 = vmatpush1.bf16.msra.mxu0 0
      %1135 = vmatprep.subr.bf16.mxu0 0
      %1136 = vmatpush1.bf16.msra.mxu0 0
      %1137 = vmatprep.subr.bf16.mxu0 0
      %1138 = vmatpush1.bf16.msra.mxu0 0
      %1139 = vmatprep.subr.bf16.mxu0 0
      %1140 = vmatpush1.bf16.msra.mxu0 0
      %1141 = vmatprep.subr.bf16.mxu0 0
      %1142 = vmatpush1.bf16.msra.mxu0 %v1125
      %1143 = vmatprep.subr.bf16.mxu0 0
      %1144 = vmatpush2.bf16.msra.mxu0 0
      %1145 = vmatprep.subr.bf16.mxu0 0
      %1146 = vmatpush2.bf16.msra.mxu0 0
      %1147 = vmatprep.subr.bf16.mxu0 0
      %1148 = vmatpush2.bf16.msra.mxu0 0
      %1149 = vmatprep.subr.bf16.mxu0 0
      %1150 = vmatpush2.bf16.msra.mxu0 0
      %1151 = vmatprep.subr.bf16.mxu0 0
      %1152 = vmatpush2.bf16.msra.mxu0 0
      %1153 = vmatprep.subr.bf16.mxu0 0
      %1154 = vmatpush2.bf16.msra.mxu0 0
      %1155 = vmatprep.subr.bf16.mxu0 0
      %1156 = vmatpush2.bf16.msra.mxu0 0
      %1157 = vmatprep.subr.bf16.mxu0 0
      %1158 = vmatpush2.bf16.msra.mxu0 0
      %1159 = vmatprep.mubr.bf16.mxu0 0
      %1160 = vmatmul.mubr.bf16.gmra.mxu0 %v1077
      %v1161 = vpop.f32.mrf.mxu0
      %v1162 = vadd.f32 0.0, %v1161
      %v1163 = vpop.f32.mrf.mxu0
      %v1164 = vpop.f32.mrf.mxu0
      %v1165 = vadd.f32 0.0, %v1164
      %v1166 = vpop.f32.mrf.mxu0
      %1167 = vmatprep.mubr.bf16.mxu0 0
      %1168 = vmatmul.mubr.bf16.gmra.mxu0 %v1080
      %v1169 = vpop.f32.mrf.mxu0
      %v1170 = vadd.f32 0.0, %v1169
      %v1171 = vpop.f32.mrf.mxu0
      %v1172 = vpop.f32.mrf.mxu0
      %v1173 = vadd.f32 0.0, %v1172
      %v1174 = vpop.f32.mrf.mxu0
      %1175 = vmatprep.mubr.bf16.mxu0 0
      %1176 = vmatmul.mubr.bf16.gmra.mxu0 %v1083
      %v1177 = vpop.f32.mrf.mxu0
      %v1178 = vadd.f32 0.0, %v1177
      %v1179 = vpop.f32.mrf.mxu0
      %v1180 = vpop.f32.mrf.mxu0
      %v1181 = vadd.f32 0.0, %v1180
      %v1182 = vpop.f32.mrf.mxu0
      %1183 = vmatprep.mubr.bf16.mxu0 0
      %1184 = vmatmul.mubr.bf16.gmra.mxu0 %v1086
      %v1185 = vpop.f32.mrf.mxu0
      %v1186 = vadd.f32 0.0, %v1185
      %v1187 = vpop.f32.mrf.mxu0
      %v1188 = vpop.f32.mrf.mxu0
      %v1189 = vadd.f32 0.0, %v1188
      %v1190 = vpop.f32.mrf.mxu0
      %1191 = vmatprep.mubr.bf16.mxu0 0
      %1192 = vmatmul.mubr.bf16.gmra.mxu0 %v1089
      %v1193 = vpop.f32.mrf.mxu0
      %v1194 = vadd.f32 0.0, %v1193
      %v1195 = vpop.f32.mrf.mxu0
      %v1196 = vpop.f32.mrf.mxu0
      %v1197 = vadd.f32 0.0, %v1196
      %v1198 = vpop.f32.mrf.mxu0
      %1199 = vmatprep.mubr.bf16.mxu0 0
      %1200 = vmatmul.mubr.bf16.gmra.mxu0 %v1092
      %v1201 = vpop.f32.mrf.mxu0
      %v1202 = vadd.f32 0.0, %v1201
      %v1203 = vpop.f32.mrf.mxu0
      %v1204 = vpop.f32.mrf.mxu0
      %v1205 = vadd.f32 0.0, %v1204
      %v1206 = vpop.f32.mrf.mxu0
      %1207 = vmatprep.mubr.bf16.mxu0 0
      %1208 = vmatmul.mubr.bf16.gmra.mxu0 %v1095
      %v1209 = vpop.f32.mrf.mxu0
      %v1210 = vadd.f32 0.0, %v1209
      %v1211 = vpop.f32.mrf.mxu0
      %v1212 = vpop.f32.mrf.mxu0
      %v1213 = vadd.f32 0.0, %v1212
      %v1214 = vpop.f32.mrf.mxu0
      %1215 = vmatprep.mubr.bf16.mxu0 0
      %1216 = vmatmul.mubr.bf16.gmra.mxu0 %v1098
      %v1217 = vpop.f32.mrf.mxu0
      %v1218 = vadd.f32 0.0, %v1217
      %v1219 = vpop.f32.mrf.mxu0
      %v1220 = vpop.f32.mrf.mxu0
      %v1221 = vadd.f32 0.0, %v1220
      %v1222 = vpop.f32.mrf.mxu0
      %1223 = vmatprep.mubr.bf16.mxu0 0
      %1224 = vmatmul.mubr.bf16.gmra.mxu0 %v1101
      %v1225 = vpop.f32.mrf.mxu0
      %v1226 = vadd.f32 0.0, %v1225
      %v1227 = vpop.f32.mrf.mxu0
      %v1228 = vpop.f32.mrf.mxu0
      %v1229 = vadd.f32 0.0, %v1228
      %v1230 = vpop.f32.mrf.mxu0
      %1231 = vmatprep.mubr.bf16.mxu0 0
      %1232 = vmatmul.mubr.bf16.gmra.mxu0 %v1104
      %v1233 = vpop.f32.mrf.mxu0
      %v1234 = vadd.f32 0.0, %v1233
      %v1235 = vpop.f32.mrf.mxu0
      %v1236 = vpop.f32.mrf.mxu0
      %v1237 = vadd.f32 0.0, %v1236
      %v1238 = vpop.f32.mrf.mxu0
      %1239 = vmatprep.mubr.bf16.mxu0 0
      %1240 = vmatmul.mubr.bf16.gmra.mxu0 %v1107
      %v1241 = vpop.f32.mrf.mxu0
      %v1242 = vadd.f32 0.0, %v1241
      %v1243 = vpop.f32.mrf.mxu0
      %v1244 = vpop.f32.mrf.mxu0
      %v1245 = vadd.f32 0.0, %v1244
      %v1246 = vpop.f32.mrf.mxu0
      %1247 = vmatprep.mubr.bf16.mxu0 0
      %1248 = vmatmul.mubr.bf16.gmra.mxu0 %v1110
      %v1249 = vpop.f32.mrf.mxu0
      %v1250 = vadd.f32 0.0, %v1249
      %v1251 = vpop.f32.mrf.mxu0
      %v1252 = vpop.f32.mrf.mxu0
      %v1253 = vadd.f32 0.0, %v1252
      %v1254 = vpop.f32.mrf.mxu0
      %1255 = vmatprep.mubr.bf16.mxu0 0
      %1256 = vmatmul.mubr.bf16.gmra.mxu0 %v1113
      %v1257 = vpop.f32.mrf.mxu0
      %v1258 = vadd.f32 0.0, %v1257
      %v1259 = vpop.f32.mrf.mxu0
      %v1260 = vpop.f32.mrf.mxu0
      %v1261 = vadd.f32 0.0, %v1260
      %v1262 = vpop.f32.mrf.mxu0
      %1263 = vmatprep.mubr.bf16.mxu0 0
      %1264 = vmatmul.mubr.bf16.gmra.mxu0 %v1116
      %v1265 = vpop.f32.mrf.mxu0
      %v1266 = vadd.f32 0.0, %v1265
      %v1267 = vpop.f32.mrf.mxu0
      %v1268 = vpop.f32.mrf.mxu0
      %v1269 = vadd.f32 0.0, %v1268
      %v1270 = vpop.f32.mrf.mxu0
      %1271 = vmatprep.mubr.bf16.mxu0 0
      %1272 = vmatmul.mubr.bf16.gmra.mxu0 %v1119
      %v1273 = vpop.f32.mrf.mxu0
      %v1274 = vadd.f32 0.0, %v1273
      %v1275 = vpop.f32.mrf.mxu0
      %v1276 = vpop.f32.mrf.mxu0
      %v1277 = vadd.f32 0.0, %v1276
      %v1278 = vpop.f32.mrf.mxu0
      %1279 = vmatprep.mubr.bf16.mxu0 0
      %1280 = vmatmul.mubr.bf16.gmra.mxu0 %v1122
      %v1281 = vpop.f32.mrf.mxu0
      %v1282 = vadd.f32 0.0, %v1281
      %v1283 = vpop.f32.mrf.mxu0
      %v1284 = vpop.f32.mrf.mxu0
      %v1285 = vadd.f32 0.0, %v1284
      %v1286 = vpop.f32.mrf.mxu0
      %1287 = vdwg.mxu0
      %v1288 = vadd.f32 %v924, %v1162
      %v1289 = vadd.f32 %v925, %v1165
      %v1290 = vadd.f32 %v926, %v1170
      %v1291 = vadd.f32 %v927, %v1173
      %v1292 = vadd.f32 %v928, %v1178
      %v1293 = vadd.f32 %v929, %v1181
      %v1294 = vadd.f32 %v930, %v1186
      %v1295 = vadd.f32 %v931, %v1189
      %v1296 = vadd.f32 %v932, %v1194
      %v1297 = vadd.f32 %v933, %v1197
      %v1298 = vadd.f32 %v934, %v1202
      %v1299 = vadd.f32 %v935, %v1205
      %v1300 = vadd.f32 %v936, %v1210
      %v1301 = vadd.f32 %v937, %v1213
      %v1302 = vadd.f32 %v938, %v1218
      %v1303 = vadd.f32 %v939, %v1221
      %v1304 = vadd.f32 %v940, %v1226
      %v1305 = vadd.f32 %v941, %v1229
      %v1306 = vadd.f32 %v942, %v1234
      %v1307 = vadd.f32 %v943, %v1237
      %v1308 = vadd.f32 %v944, %v1242
      %v1309 = vadd.f32 %v945, %v1245
      %v1310 = vadd.f32 %v946, %v1250
      %v1311 = vadd.f32 %v947, %v1253
      %v1312 = vadd.f32 %v948, %v1258
      %v1313 = vadd.f32 %v949, %v1261
      %v1314 = vadd.f32 %v950, %v1266
      %v1315 = vadd.f32 %v951, %v1269
      %v1316 = vadd.f32 %v952, %v1274
      %v1317 = vadd.f32 %v953, %v1277
      %v1318 = vadd.f32 %v954, %v1282
      %v1319 = vadd.f32 %v955, %v1285
      %s1320 = scalar_lea.vmem %s210, 8
      %v1321 = vld [vmem:[%s1320] sm:$0x3]
      %v1322 = vpack.c.b16 %v748, %v748
      %v1323 = vshll.u32 %v346, 16
      %v1325 = vrot.slane %v1323, 1
      %v1326 = vsel %vm959, %v1070, %v1325
      %v1327 = vshrl.u32 %v346, 16
      %v1329 = vor.u32 %v1327, %v1325
      %v1330 = vshll.u32 %v347, 16
      %v1332 = vrot.slane %v1330, 1
      %v1333 = vsel %vm959, %v1329, %v1332
      %v1334 = vshrl.u32 %v347, 16
      %v1336 = vor.u32 %v1334, %v1332
      %v1338 = vshll.u32 %v1322, 16
      %v1340 = vrot.slane %v1338, 1
      %v1341 = vsel %vm959, %v1336, %v1340
      %v1343 = vsel %vm348, %v1326, 0
      %v1346 = vsel %vm348, %v1333, 0
      %v1349 = vsel %vm348, %v1341, 0
      %v1352 = vsel %vm397, %v1321, 0
      %1354 = vmatprep.subr.bf16.mxu0 0
      %1355 = vmatpush1.bf16.msra.mxu0 0
      %1356 = vmatprep.subr.bf16.mxu0 0
      %1357 = vmatpush1.bf16.msra.mxu0 0
      %1358 = vmatprep.subr.bf16.mxu0 0
      %1359 = vmatpush1.bf16.msra.mxu0 0
      %1360 = vmatprep.subr.bf16.mxu0 0
      %1361 = vmatpush1.bf16.msra.mxu0 0
      %1362 = vmatprep.subr.bf16.mxu0 0
      %1363 = vmatpush1.bf16.msra.mxu0 0
      %1364 = vmatprep.subr.bf16.mxu0 0
      %1365 = vmatpush1.bf16.msra.mxu0 0
      %1366 = vmatprep.subr.bf16.mxu0 0
      %1367 = vmatpush1.bf16.msra.mxu0 0
      %1368 = vmatprep.subr.bf16.mxu0 0
      %1369 = vmatpush1.bf16.msra.mxu0 %v1352
      %1370 = vmatprep.subr.bf16.mxu0 0
      %1371 = vmatpush2.bf16.msra.mxu0 0
      %1372 = vmatprep.subr.bf16.mxu0 0
      %1373 = vmatpush2.bf16.msra.mxu0 0
      %1374 = vmatprep.subr.bf16.mxu0 0
      %1375 = vmatpush2.bf16.msra.mxu0 0
      %1376 = vmatprep.subr.bf16.mxu0 0
      %1377 = vmatpush2.bf16.msra.mxu0 0
      %1378 = vmatprep.subr.bf16.mxu0 0
      %1379 = vmatpush2.bf16.msra.mxu0 0
      %1380 = vmatprep.subr.bf16.mxu0 0
      %1381 = vmatpush2.bf16.msra.mxu0 0
      %1382 = vmatprep.subr.bf16.mxu0 0
      %1383 = vmatpush2.bf16.msra.mxu0 0
      %1384 = vmatprep.subr.bf16.mxu0 0
      %1385 = vmatpush2.bf16.msra.mxu0 0
      %1386 = vmatprep.mubr.bf16.mxu0 0
      %1387 = vmatmul.mubr.bf16.gmra.mxu0 %v1083
      %v1388 = vpop.f32.mrf.mxu0
      %v1389 = vadd.f32 0.0, %v1388
      %v1390 = vpop.f32.mrf.mxu0
      %v1391 = vpop.f32.mrf.mxu0
      %v1392 = vadd.f32 0.0, %v1391
      %v1393 = vpop.f32.mrf.mxu0
      %1394 = vmatprep.mubr.bf16.mxu0 0
      %1395 = vmatmul.mubr.bf16.gmra.mxu0 %v1086
      %v1396 = vpop.f32.mrf.mxu0
      %v1397 = vadd.f32 0.0, %v1396
      %v1398 = vpop.f32.mrf.mxu0
      %v1399 = vpop.f32.mrf.mxu0
      %v1400 = vadd.f32 0.0, %v1399
      %v1401 = vpop.f32.mrf.mxu0
      %1402 = vmatprep.mubr.bf16.mxu0 0
      %1403 = vmatmul.mubr.bf16.gmra.mxu0 %v1089
      %v1404 = vpop.f32.mrf.mxu0
      %v1405 = vadd.f32 0.0, %v1404
      %v1406 = vpop.f32.mrf.mxu0
      %v1407 = vpop.f32.mrf.mxu0
      %v1408 = vadd.f32 0.0, %v1407
      %v1409 = vpop.f32.mrf.mxu0
      %1410 = vmatprep.mubr.bf16.mxu0 0
      %1411 = vmatmul.mubr.bf16.gmra.mxu0 %v1092
      %v1412 = vpop.f32.mrf.mxu0
      %v1413 = vadd.f32 0.0, %v1412
      %v1414 = vpop.f32.mrf.mxu0
      %v1415 = vpop.f32.mrf.mxu0
      %v1416 = vadd.f32 0.0, %v1415
      %v1417 = vpop.f32.mrf.mxu0
      %1418 = vmatprep.mubr.bf16.mxu0 0
      %1419 = vmatmul.mubr.bf16.gmra.mxu0 %v1095
      %v1420 = vpop.f32.mrf.mxu0
      %v1421 = vadd.f32 0.0, %v1420
      %v1422 = vpop.f32.mrf.mxu0
      %v1423 = vpop.f32.mrf.mxu0
      %v1424 = vadd.f32 0.0, %v1423
      %v1425 = vpop.f32.mrf.mxu0
      %1426 = vmatprep.mubr.bf16.mxu0 0
      %1427 = vmatmul.mubr.bf16.gmra.mxu0 %v1098
      %v1428 = vpop.f32.mrf.mxu0
      %v1429 = vadd.f32 0.0, %v1428
      %v1430 = vpop.f32.mrf.mxu0
      %v1431 = vpop.f32.mrf.mxu0
      %v1432 = vadd.f32 0.0, %v1431
      %v1433 = vpop.f32.mrf.mxu0
      %1434 = vmatprep.mubr.bf16.mxu0 0
      %1435 = vmatmul.mubr.bf16.gmra.mxu0 %v1101
      %v1436 = vpop.f32.mrf.mxu0
      %v1437 = vadd.f32 0.0, %v1436
      %v1438 = vpop.f32.mrf.mxu0
      %v1439 = vpop.f32.mrf.mxu0
      %v1440 = vadd.f32 0.0, %v1439
      %v1441 = vpop.f32.mrf.mxu0
      %1442 = vmatprep.mubr.bf16.mxu0 0
      %1443 = vmatmul.mubr.bf16.gmra.mxu0 %v1104
      %v1444 = vpop.f32.mrf.mxu0
      %v1445 = vadd.f32 0.0, %v1444
      %v1446 = vpop.f32.mrf.mxu0
      %v1447 = vpop.f32.mrf.mxu0
      %v1448 = vadd.f32 0.0, %v1447
      %v1449 = vpop.f32.mrf.mxu0
      %1450 = vmatprep.mubr.bf16.mxu0 0
      %1451 = vmatmul.mubr.bf16.gmra.mxu0 %v1107
      %v1452 = vpop.f32.mrf.mxu0
      %v1453 = vadd.f32 0.0, %v1452
      %v1454 = vpop.f32.mrf.mxu0
      %v1455 = vpop.f32.mrf.mxu0
      %v1456 = vadd.f32 0.0, %v1455
      %v1457 = vpop.f32.mrf.mxu0
      %1458 = vmatprep.mubr.bf16.mxu0 0
      %1459 = vmatmul.mubr.bf16.gmra.mxu0 %v1110
      %v1460 = vpop.f32.mrf.mxu0
      %v1461 = vadd.f32 0.0, %v1460
      %v1462 = vpop.f32.mrf.mxu0
      %v1463 = vpop.f32.mrf.mxu0
      %v1464 = vadd.f32 0.0, %v1463
      %v1465 = vpop.f32.mrf.mxu0
      %1466 = vmatprep.mubr.bf16.mxu0 0
      %1467 = vmatmul.mubr.bf16.gmra.mxu0 %v1113
      %v1468 = vpop.f32.mrf.mxu0
      %v1469 = vadd.f32 0.0, %v1468
      %v1470 = vpop.f32.mrf.mxu0
      %v1471 = vpop.f32.mrf.mxu0
      %v1472 = vadd.f32 0.0, %v1471
      %v1473 = vpop.f32.mrf.mxu0
      %1474 = vmatprep.mubr.bf16.mxu0 0
      %1475 = vmatmul.mubr.bf16.gmra.mxu0 %v1116
      %v1476 = vpop.f32.mrf.mxu0
      %v1477 = vadd.f32 0.0, %v1476
      %v1478 = vpop.f32.mrf.mxu0
      %v1479 = vpop.f32.mrf.mxu0
      %v1480 = vadd.f32 0.0, %v1479
      %v1481 = vpop.f32.mrf.mxu0
      %1482 = vmatprep.mubr.bf16.mxu0 0
      %1483 = vmatmul.mubr.bf16.gmra.mxu0 %v1119
      %v1484 = vpop.f32.mrf.mxu0
      %v1485 = vadd.f32 0.0, %v1484
      %v1486 = vpop.f32.mrf.mxu0
      %v1487 = vpop.f32.mrf.mxu0
      %v1488 = vadd.f32 0.0, %v1487
      %v1489 = vpop.f32.mrf.mxu0
      %1490 = vmatprep.mubr.bf16.mxu0 0
      %1491 = vmatmul.mubr.bf16.gmra.mxu0 %v1343
      %v1492 = vpop.f32.mrf.mxu0
      %v1493 = vadd.f32 0.0, %v1492
      %v1494 = vpop.f32.mrf.mxu0
      %v1495 = vpop.f32.mrf.mxu0
      %v1496 = vadd.f32 0.0, %v1495
      %v1497 = vpop.f32.mrf.mxu0
      %1498 = vmatprep.mubr.bf16.mxu0 0
      %1499 = vmatmul.mubr.bf16.gmra.mxu0 %v1346
      %v1500 = vpop.f32.mrf.mxu0
      %v1501 = vadd.f32 0.0, %v1500
      %v1502 = vpop.f32.mrf.mxu0
      %v1503 = vpop.f32.mrf.mxu0
      %v1504 = vadd.f32 0.0, %v1503
      %v1505 = vpop.f32.mrf.mxu0
      %1506 = vmatprep.mubr.bf16.mxu0 0
      %1507 = vmatmul.mubr.bf16.gmra.mxu0 %v1349
      %v1508 = vpop.f32.mrf.mxu0
      %v1509 = vadd.f32 0.0, %v1508
      %v1510 = vpop.f32.mrf.mxu0
      %v1511 = vpop.f32.mrf.mxu0
      %v1512 = vadd.f32 0.0, %v1511
      %v1513 = vpop.f32.mrf.mxu0
      %1514 = vdwg.mxu0
      %v1515 = vadd.f32 %v1288, %v1389
      %v1516 = vadd.f32 %v1289, %v1392
      %v1517 = vadd.f32 %v1290, %v1397
      %v1518 = vadd.f32 %v1291, %v1400
      %v1519 = vadd.f32 %v1292, %v1405
      %v1520 = vadd.f32 %v1293, %v1408
      %v1521 = vadd.f32 %v1294, %v1413
      %v1522 = vadd.f32 %v1295, %v1416
      %v1523 = vadd.f32 %v1296, %v1421
      %v1524 = vadd.f32 %v1297, %v1424
      %v1525 = vadd.f32 %v1298, %v1429
      %v1526 = vadd.f32 %v1299, %v1432
      %v1527 = vadd.f32 %v1300, %v1437
      %v1528 = vadd.f32 %v1301, %v1440
      %v1529 = vadd.f32 %v1302, %v1445
      %v1530 = vadd.f32 %v1303, %v1448
      %v1531 = vadd.f32 %v1304, %v1453
      %v1532 = vadd.f32 %v1305, %v1456
      %v1533 = vadd.f32 %v1306, %v1461
      %v1534 = vadd.f32 %v1307, %v1464
      %v1535 = vadd.f32 %v1308, %v1469
      %v1536 = vadd.f32 %v1309, %v1472
      %v1537 = vadd.f32 %v1310, %v1477
      %v1538 = vadd.f32 %v1311, %v1480
      %v1539 = vadd.f32 %v1312, %v1485
      %v1540 = vadd.f32 %v1313, %v1488
      %v1541 = vadd.f32 %v1314, %v1493
      %v1542 = vadd.f32 %v1315, %v1496
      %v1543 = vadd.f32 %v1316, %v1501
      %v1544 = vadd.f32 %v1317, %v1504
      %v1545 = vadd.f32 %v1318, %v1509
      %v1546 = vadd.f32 %v1319, %v1512
      %s1547 = scalar_lea.vmem %s210, 14
      %v1548 = vld [vmem:[%s1547] sm:$0x3]
      %v1550 = vunpack.c.l.b16 %v264
      %v1551 = vpack.c.b16 %v1550, %v1550
      %v1552 = vshll.u32 %v752, 16
      %v1554 = vrot.slane %v1552, 1
      %v1555 = vsel %vm959, %v1336, %v1554
      %v1556 = vshrl.u32 %v752, 16
      %v1558 = vor.u32 %v1556, %v1554
      %v1559 = vshll.u32 %v753, 16
      %v1561 = vrot.slane %v1559, 1
      %v1562 = vsel %vm959, %v1558, %v1561
      %v1563 = vshrl.u32 %v753, 16
      %v1565 = vor.u32 %v1563, %v1561
      %v1567 = vshll.u32 %v1551, 16
      %v1569 = vrot.slane %v1567, 1
      %v1570 = vsel %vm959, %v1565, %v1569
      %v1572 = vsel %vm348, %v1555, 0
      %v1575 = vsel %vm348, %v1562, 0
      %v1578 = vsel %vm348, %v1570, 0
      %v1581 = vsel %vm397, %v1548, 0
      %1583 = vmatprep.subr.bf16.mxu0 0
      %1584 = vmatpush1.bf16.msra.mxu0 0
      %1585 = vmatprep.subr.bf16.mxu0 0
      %1586 = vmatpush1.bf16.msra.mxu0 0
      %1587 = vmatprep.subr.bf16.mxu0 0
      %1588 = vmatpush1.bf16.msra.mxu0 0
      %1589 = vmatprep.subr.bf16.mxu0 0
      %1590 = vmatpush1.bf16.msra.mxu0 0
      %1591 = vmatprep.subr.bf16.mxu0 0
      %1592 = vmatpush1.bf16.msra.mxu0 0
      %1593 = vmatprep.subr.bf16.mxu0 0
      %1594 = vmatpush1.bf16.msra.mxu0 0
      %1595 = vmatprep.subr.bf16.mxu0 0
      %1596 = vmatpush1.bf16.msra.mxu0 0
      %1597 = vmatprep.subr.bf16.mxu0 0
      %1598 = vmatpush1.bf16.msra.mxu0 %v1581
      %1599 = vmatprep.subr.bf16.mxu0 0
      %1600 = vmatpush2.bf16.msra.mxu0 0
      %1601 = vmatprep.subr.bf16.mxu0 0
      %1602 = vmatpush2.bf16.msra.mxu0 0
      %1603 = vmatprep.subr.bf16.mxu0 0
      %1604 = vmatpush2.bf16.msra.mxu0 0
      %1605 = vmatprep.subr.bf16.mxu0 0
      %1606 = vmatpush2.bf16.msra.mxu0 0
      %1607 = vmatprep.subr.bf16.mxu0 0
      %1608 = vmatpush2.bf16.msra.mxu0 0
      %1609 = vmatprep.subr.bf16.mxu0 0
      %1610 = vmatpush2.bf16.msra.mxu0 0
      %1611 = vmatprep.subr.bf16.mxu0 0
      %1612 = vmatpush2.bf16.msra.mxu0 0
      %1613 = vmatprep.subr.bf16.mxu0 0
      %1614 = vmatpush2.bf16.msra.mxu0 0
      %1615 = vmatprep.mubr.bf16.mxu0 0
      %1616 = vmatmul.mubr.bf16.gmra.mxu0 %v1089
      %v1617 = vpop.f32.mrf.mxu0
      %v1618 = vadd.f32 0.0, %v1617
      %v1619 = vpop.f32.mrf.mxu0
      %v1620 = vpop.f32.mrf.mxu0
      %v1621 = vadd.f32 0.0, %v1620
      %v1622 = vpop.f32.mrf.mxu0
      %1623 = vmatprep.mubr.bf16.mxu0 0
      %1624 = vmatmul.mubr.bf16.gmra.mxu0 %v1092
      %v1625 = vpop.f32.mrf.mxu0
      %v1626 = vadd.f32 0.0, %v1625
      %v1627 = vpop.f32.mrf.mxu0
      %v1628 = vpop.f32.mrf.mxu0
      %v1629 = vadd.f32 0.0, %v1628
      %v1630 = vpop.f32.mrf.mxu0
      %1631 = vmatprep.mubr.bf16.mxu0 0
      %1632 = vmatmul.mubr.bf16.gmra.mxu0 %v1095
      %v1633 = vpop.f32.mrf.mxu0
      %v1634 = vadd.f32 0.0, %v1633
      %v1635 = vpop.f32.mrf.mxu0
      %v1636 = vpop.f32.mrf.mxu0
      %v1637 = vadd.f32 0.0, %v1636
      %v1638 = vpop.f32.mrf.mxu0
      %1639 = vmatprep.mubr.bf16.mxu0 0
      %1640 = vmatmul.mubr.bf16.gmra.mxu0 %v1098
      %v1641 = vpop.f32.mrf.mxu0
      %v1642 = vadd.f32 0.0, %v1641
      %v1643 = vpop.f32.mrf.mxu0
      %v1644 = vpop.f32.mrf.mxu0
      %v1645 = vadd.f32 0.0, %v1644
      %v1646 = vpop.f32.mrf.mxu0
      %1647 = vmatprep.mubr.bf16.mxu0 0
      %1648 = vmatmul.mubr.bf16.gmra.mxu0 %v1101
      %v1649 = vpop.f32.mrf.mxu0
      %v1650 = vadd.f32 0.0, %v1649
      %v1651 = vpop.f32.mrf.mxu0
      %v1652 = vpop.f32.mrf.mxu0
      %v1653 = vadd.f32 0.0, %v1652
      %v1654 = vpop.f32.mrf.mxu0
      %1655 = vmatprep.mubr.bf16.mxu0 0
      %1656 = vmatmul.mubr.bf16.gmra.mxu0 %v1104
      %v1657 = vpop.f32.mrf.mxu0
      %v1658 = vadd.f32 0.0, %v1657
      %v1659 = vpop.f32.mrf.mxu0
      %v1660 = vpop.f32.mrf.mxu0
      %v1661 = vadd.f32 0.0, %v1660
      %v1662 = vpop.f32.mrf.mxu0
      %1663 = vmatprep.mubr.bf16.mxu0 0
      %1664 = vmatmul.mubr.bf16.gmra.mxu0 %v1107
      %v1665 = vpop.f32.mrf.mxu0
      %v1666 = vadd.f32 0.0, %v1665
      %v1667 = vpop.f32.mrf.mxu0
      %v1668 = vpop.f32.mrf.mxu0
      %v1669 = vadd.f32 0.0, %v1668
      %v1670 = vpop.f32.mrf.mxu0
      %1671 = vmatprep.mubr.bf16.mxu0 0
      %1672 = vmatmul.mubr.bf16.gmra.mxu0 %v1110
      %v1673 = vpop.f32.mrf.mxu0
      %v1674 = vadd.f32 0.0, %v1673
      %v1675 = vpop.f32.mrf.mxu0
      %v1676 = vpop.f32.mrf.mxu0
      %v1677 = vadd.f32 0.0, %v1676
      %v1678 = vpop.f32.mrf.mxu0
      %1679 = vmatprep.mubr.bf16.mxu0 0
      %1680 = vmatmul.mubr.bf16.gmra.mxu0 %v1113
      %v1681 = vpop.f32.mrf.mxu0
      %v1682 = vadd.f32 0.0, %v1681
      %v1683 = vpop.f32.mrf.mxu0
      %v1684 = vpop.f32.mrf.mxu0
      %v1685 = vadd.f32 0.0, %v1684
      %v1686 = vpop.f32.mrf.mxu0
      %1687 = vmatprep.mubr.bf16.mxu0 0
      %1688 = vmatmul.mubr.bf16.gmra.mxu0 %v1116
      %v1689 = vpop.f32.mrf.mxu0
      %v1690 = vadd.f32 0.0, %v1689
      %v1691 = vpop.f32.mrf.mxu0
      %v1692 = vpop.f32.mrf.mxu0
      %v1693 = vadd.f32 0.0, %v1692
      %v1694 = vpop.f32.mrf.mxu0
      %1695 = vmatprep.mubr.bf16.mxu0 0
      %1696 = vmatmul.mubr.bf16.gmra.mxu0 %v1119
      %v1697 = vpop.f32.mrf.mxu0
      %v1698 = vadd.f32 0.0, %v1697
      %v1699 = vpop.f32.mrf.mxu0
      %v1700 = vpop.f32.mrf.mxu0
      %v1701 = vadd.f32 0.0, %v1700
      %v1702 = vpop.f32.mrf.mxu0
      %1703 = vmatprep.mubr.bf16.mxu0 0
      %1704 = vmatmul.mubr.bf16.gmra.mxu0 %v1343
      %v1705 = vpop.f32.mrf.mxu0
      %v1706 = vadd.f32 0.0, %v1705
      %v1707 = vpop.f32.mrf.mxu0
      %v1708 = vpop.f32.mrf.mxu0
      %v1709 = vadd.f32 0.0, %v1708
      %v1710 = vpop.f32.mrf.mxu0
      %1711 = vmatprep.mubr.bf16.mxu0 0
      %1712 = vmatmul.mubr.bf16.gmra.mxu0 %v1346
      %v1713 = vpop.f32.mrf.mxu0
      %v1714 = vadd.f32 0.0, %v1713
      %v1715 = vpop.f32.mrf.mxu0
      %v1716 = vpop.f32.mrf.mxu0
      %v1717 = vadd.f32 0.0, %v1716
      %v1718 = vpop.f32.mrf.mxu0
      %1719 = vmatprep.mubr.bf16.mxu0 0
      %1720 = vmatmul.mubr.bf16.gmra.mxu0 %v1572
      %v1721 = vpop.f32.mrf.mxu0
      %v1722 = vadd.f32 0.0, %v1721
      %v1723 = vpop.f32.mrf.mxu0
      %v1724 = vpop.f32.mrf.mxu0
      %v1725 = vadd.f32 0.0, %v1724
      %v1726 = vpop.f32.mrf.mxu0
      %1727 = vmatprep.mubr.bf16.mxu0 0
      %1728 = vmatmul.mubr.bf16.gmra.mxu0 %v1575
      %v1729 = vpop.f32.mrf.mxu0
      %v1730 = vadd.f32 0.0, %v1729
      %v1731 = vpop.f32.mrf.mxu0
      %v1732 = vpop.f32.mrf.mxu0
      %v1733 = vadd.f32 0.0, %v1732
      %v1734 = vpop.f32.mrf.mxu0
      %1735 = vmatprep.mubr.bf16.mxu0 0
      %1736 = vmatmul.mubr.bf16.gmra.mxu0 %v1578
      %v1737 = vpop.f32.mrf.mxu0
      %v1738 = vadd.f32 0.0, %v1737
      %v1739 = vpop.f32.mrf.mxu0
      %v1740 = vpop.f32.mrf.mxu0
      %v1741 = vadd.f32 0.0, %v1740
      %v1742 = vpop.f32.mrf.mxu0
      %1743 = vdwg.mxu0
      %v1744 = vadd.f32 %v1515, %v1618
      %v1745 = vadd.f32 %v1516, %v1621
      %v1746 = vadd.f32 %v1517, %v1626
      %v1747 = vadd.f32 %v1518, %v1629
      %v1748 = vadd.f32 %v1519, %v1634
      %v1749 = vadd.f32 %v1520, %v1637
      %v1750 = vadd.f32 %v1521, %v1642
      %v1751 = vadd.f32 %v1522, %v1645
      %v1752 = vadd.f32 %v1523, %v1650
      %v1753 = vadd.f32 %v1524, %v1653
      %v1754 = vadd.f32 %v1525, %v1658
      %v1755 = vadd.f32 %v1526, %v1661
      %v1756 = vadd.f32 %v1527, %v1666
      %v1757 = vadd.f32 %v1528, %v1669
      %v1758 = vadd.f32 %v1529, %v1674
      %v1759 = vadd.f32 %v1530, %v1677
      %v1760 = vadd.f32 %v1531, %v1682
      %v1761 = vadd.f32 %v1532, %v1685
      %v1762 = vadd.f32 %v1533, %v1690
      %v1763 = vadd.f32 %v1534, %v1693
      %v1764 = vadd.f32 %v1535, %v1698
      %v1765 = vadd.f32 %v1536, %v1701
      %v1766 = vadd.f32 %v1537, %v1706
      %v1767 = vadd.f32 %v1538, %v1709
      %v1768 = vadd.f32 %v1539, %v1714
      %v1769 = vadd.f32 %v1540, %v1717
      %v1770 = vadd.f32 %v1541, %v1722
      %v1771 = vadd.f32 %v1542, %v1725
      %v1772 = vadd.f32 %v1543, %v1730
      %v1773 = vadd.f32 %v1544, %v1733
      %v1774 = vadd.f32 %v1545, %v1738
      %v1775 = vadd.f32 %v1546, %v1741
      %s1776 = scalar_lea.vmem %s210, 4
      %v1777 = vld [vmem:[%s1776] sm:$0x3]
      %vm1778 = vcmask 1046528
      %v1779 = vrot.slane %v570, 1
      %v1780 = vrot.slane %v571, 1
      %v1781 = vsel %vm1778, %v1779, %v1780
      %v1782 = vrot.slane %v332, 1
      %v1783 = vsel %vm1778, %v1780, %v1782
      %v1784 = vrot.slane %v333, 1
      %v1785 = vsel %vm1778, %v1782, %v1784
      %v1786 = vrot.slane %v334, 1
      %v1787 = vsel %vm1778, %v1784, %v1786
      %v1788 = vrot.slane %v335, 1
      %v1789 = vsel %vm1778, %v1786, %v1788
      %v1790 = vrot.slane %v336, 1
      %v1791 = vsel %vm1778, %v1788, %v1790
      %v1792 = vrot.slane %v337, 1
      %v1793 = vsel %vm1778, %v1790, %v1792
      %v1794 = vrot.slane %v338, 1
      %v1795 = vsel %vm1778, %v1792, %v1794
      %v1796 = vrot.slane %v339, 1
      %v1797 = vsel %vm1778, %v1794, %v1796
      %v1798 = vrot.slane %v340, 1
      %v1799 = vsel %vm1778, %v1796, %v1798
      %v1800 = vrot.slane %v341, 1
      %v1801 = vsel %vm1778, %v1798, %v1800
      %v1802 = vrot.slane %v342, 1
      %v1803 = vsel %vm1778, %v1800, %v1802
      %v1804 = vrot.slane %v343, 1
      %v1805 = vsel %vm1778, %v1802, %v1804
      %v1806 = vrot.slane %v344, 1
      %v1807 = vsel %vm1778, %v1804, %v1806
      %v1808 = vrot.slane %v345, 1
      %v1809 = vsel %vm1778, %v1806, %v1808
      %v1810 = vrot.slane %v958, 1
      %v1811 = vsel %vm1778, %v1808, %v1810
      %v1813 = vsel %vm348, %v1781, 0
      %v1816 = vsel %vm348, %v1783, 0
      %v1819 = vsel %vm348, %v1785, 0
      %v1822 = vsel %vm348, %v1787, 0
      %v1825 = vsel %vm348, %v1789, 0
      %v1828 = vsel %vm348, %v1791, 0
      %v1831 = vsel %vm348, %v1793, 0
      %v1834 = vsel %vm348, %v1795, 0
      %v1837 = vsel %vm348, %v1797, 0
      %v1840 = vsel %vm348, %v1799, 0
      %v1843 = vsel %vm348, %v1801, 0
      %v1846 = vsel %vm348, %v1803, 0
      %v1849 = vsel %vm348, %v1805, 0
      %v1852 = vsel %vm348, %v1807, 0
      %v1855 = vsel %vm348, %v1809, 0
      %v1858 = vsel %vm348, %v1811, 0
      %v1861 = vsel %vm397, %v1777, 0
      %1863 = vmatprep.subr.bf16.mxu0 0
      %1864 = vmatpush1.bf16.msra.mxu0 0
      %1865 = vmatprep.subr.bf16.mxu0 0
      %1866 = vmatpush1.bf16.msra.mxu0 0
      %1867 = vmatprep.subr.bf16.mxu0 0
      %1868 = vmatpush1.bf16.msra.mxu0 0
      %1869 = vmatprep.subr.bf16.mxu0 0
      %1870 = vmatpush1.bf16.msra.mxu0 0
      %1871 = vmatprep.subr.bf16.mxu0 0
      %1872 = vmatpush1.bf16.msra.mxu0 0
      %1873 = vmatprep.subr.bf16.mxu0 0
      %1874 = vmatpush1.bf16.msra.mxu0 0
      %1875 = vmatprep.subr.bf16.mxu0 0
      %1876 = vmatpush1.bf16.msra.mxu0 0
      %1877 = vmatprep.subr.bf16.mxu0 0
      %1878 = vmatpush1.bf16.msra.mxu0 %v1861
      %1879 = vmatprep.subr.bf16.mxu0 0
      %1880 = vmatpush2.bf16.msra.mxu0 0
      %1881 = vmatprep.subr.bf16.mxu0 0
      %1882 = vmatpush2.bf16.msra.mxu0 0
      %1883 = vmatprep.subr.bf16.mxu0 0
      %1884 = vmatpush2.bf16.msra.mxu0 0
      %1885 = vmatprep.subr.bf16.mxu0 0
      %1886 = vmatpush2.bf16.msra.mxu0 0
      %1887 = vmatprep.subr.bf16.mxu0 0
      %1888 = vmatpush2.bf16.msra.mxu0 0
      %1889 = vmatprep.subr.bf16.mxu0 0
      %1890 = vmatpush2.bf16.msra.mxu0 0
      %1891 = vmatprep.subr.bf16.mxu0 0
      %1892 = vmatpush2.bf16.msra.mxu0 0
      %1893 = vmatprep.subr.bf16.mxu0 0
      %1894 = vmatpush2.bf16.msra.mxu0 0
      %1895 = vmatprep.mubr.bf16.mxu0 0
      %1896 = vmatmul.mubr.bf16.gmra.mxu0 %v1813
      %v1897 = vpop.f32.mrf.mxu0
      %v1898 = vadd.f32 0.0, %v1897
      %v1899 = vpop.f32.mrf.mxu0
      %v1900 = vpop.f32.mrf.mxu0
      %v1901 = vadd.f32 0.0, %v1900
      %v1902 = vpop.f32.mrf.mxu0
      %1903 = vmatprep.mubr.bf16.mxu0 0
      %1904 = vmatmul.mubr.bf16.gmra.mxu0 %v1816
      %v1905 = vpop.f32.mrf.mxu0
      %v1906 = vadd.f32 0.0, %v1905
      %v1907 = vpop.f32.mrf.mxu0
      %v1908 = vpop.f32.mrf.mxu0
      %v1909 = vadd.f32 0.0, %v1908
      %v1910 = vpop.f32.mrf.mxu0
      %1911 = vmatprep.mubr.bf16.mxu0 0
      %1912 = vmatmul.mubr.bf16.gmra.mxu0 %v1819
      %v1913 = vpop.f32.mrf.mxu0
      %v1914 = vadd.f32 0.0, %v1913
      %v1915 = vpop.f32.mrf.mxu0
      %v1916 = vpop.f32.mrf.mxu0
      %v1917 = vadd.f32 0.0, %v1916
      %v1918 = vpop.f32.mrf.mxu0
      %1919 = vmatprep.mubr.bf16.mxu0 0
      %1920 = vmatmul.mubr.bf16.gmra.mxu0 %v1822
      %v1921 = vpop.f32.mrf.mxu0
      %v1922 = vadd.f32 0.0, %v1921
      %v1923 = vpop.f32.mrf.mxu0
      %v1924 = vpop.f32.mrf.mxu0
      %v1925 = vadd.f32 0.0, %v1924
      %v1926 = vpop.f32.mrf.mxu0
      %1927 = vmatprep.mubr.bf16.mxu0 0
      %1928 = vmatmul.mubr.bf16.gmra.mxu0 %v1825
      %v1929 = vpop.f32.mrf.mxu0
      %v1930 = vadd.f32 0.0, %v1929
      %v1931 = vpop.f32.mrf.mxu0
      %v1932 = vpop.f32.mrf.mxu0
      %v1933 = vadd.f32 0.0, %v1932
      %v1934 = vpop.f32.mrf.mxu0
      %1935 = vmatprep.mubr.bf16.mxu0 0
      %1936 = vmatmul.mubr.bf16.gmra.mxu0 %v1828
      %v1937 = vpop.f32.mrf.mxu0
      %v1938 = vadd.f32 0.0, %v1937
      %v1939 = vpop.f32.mrf.mxu0
      %v1940 = vpop.f32.mrf.mxu0
      %v1941 = vadd.f32 0.0, %v1940
      %v1942 = vpop.f32.mrf.mxu0
      %1943 = vmatprep.mubr.bf16.mxu0 0
      %1944 = vmatmul.mubr.bf16.gmra.mxu0 %v1831
      %v1945 = vpop.f32.mrf.mxu0
      %v1946 = vadd.f32 0.0, %v1945
      %v1947 = vpop.f32.mrf.mxu0
      %v1948 = vpop.f32.mrf.mxu0
      %v1949 = vadd.f32 0.0, %v1948
      %v1950 = vpop.f32.mrf.mxu0
      %1951 = vmatprep.mubr.bf16.mxu0 0
      %1952 = vmatmul.mubr.bf16.gmra.mxu0 %v1834
      %v1953 = vpop.f32.mrf.mxu0
      %v1954 = vadd.f32 0.0, %v1953
      %v1955 = vpop.f32.mrf.mxu0
      %v1956 = vpop.f32.mrf.mxu0
      %v1957 = vadd.f32 0.0, %v1956
      %v1958 = vpop.f32.mrf.mxu0
      %1959 = vmatprep.mubr.bf16.mxu0 0
      %1960 = vmatmul.mubr.bf16.gmra.mxu0 %v1837
      %v1961 = vpop.f32.mrf.mxu0
      %v1962 = vadd.f32 0.0, %v1961
      %v1963 = vpop.f32.mrf.mxu0
      %v1964 = vpop.f32.mrf.mxu0
      %v1965 = vadd.f32 0.0, %v1964
      %v1966 = vpop.f32.mrf.mxu0
      %1967 = vmatprep.mubr.bf16.mxu0 0
      %1968 = vmatmul.mubr.bf16.gmra.mxu0 %v1840
      %v1969 = vpop.f32.mrf.mxu0
      %v1970 = vadd.f32 0.0, %v1969
      %v1971 = vpop.f32.mrf.mxu0
      %v1972 = vpop.f32.mrf.mxu0
      %v1973 = vadd.f32 0.0, %v1972
      %v1974 = vpop.f32.mrf.mxu0
      %1975 = vmatprep.mubr.bf16.mxu0 0
      %1976 = vmatmul.mubr.bf16.gmra.mxu0 %v1843
      %v1977 = vpop.f32.mrf.mxu0
      %v1978 = vadd.f32 0.0, %v1977
      %v1979 = vpop.f32.mrf.mxu0
      %v1980 = vpop.f32.mrf.mxu0
      %v1981 = vadd.f32 0.0, %v1980
      %v1982 = vpop.f32.mrf.mxu0
      %1983 = vmatprep.mubr.bf16.mxu0 0
      %1984 = vmatmul.mubr.bf16.gmra.mxu0 %v1846
      %v1985 = vpop.f32.mrf.mxu0
      %v1986 = vadd.f32 0.0, %v1985
      %v1987 = vpop.f32.mrf.mxu0
      %v1988 = vpop.f32.mrf.mxu0
      %v1989 = vadd.f32 0.0, %v1988
      %v1990 = vpop.f32.mrf.mxu0
      %1991 = vmatprep.mubr.bf16.mxu0 0
      %1992 = vmatmul.mubr.bf16.gmra.mxu0 %v1849
      %v1993 = vpop.f32.mrf.mxu0
      %v1994 = vadd.f32 0.0, %v1993
      %v1995 = vpop.f32.mrf.mxu0
      %v1996 = vpop.f32.mrf.mxu0
      %v1997 = vadd.f32 0.0, %v1996
      %v1998 = vpop.f32.mrf.mxu0
      %1999 = vmatprep.mubr.bf16.mxu0 0
      %2000 = vmatmul.mubr.bf16.gmra.mxu0 %v1852
      %v2001 = vpop.f32.mrf.mxu0
      %v2002 = vadd.f32 0.0, %v2001
      %v2003 = vpop.f32.mrf.mxu0
      %v2004 = vpop.f32.mrf.mxu0
      %v2005 = vadd.f32 0.0, %v2004
      %v2006 = vpop.f32.mrf.mxu0
      %2007 = vmatprep.mubr.bf16.mxu0 0
      %2008 = vmatmul.mubr.bf16.gmra.mxu0 %v1855
      %v2009 = vpop.f32.mrf.mxu0
      %v2010 = vadd.f32 0.0, %v2009
      %v2011 = vpop.f32.mrf.mxu0
      %v2012 = vpop.f32.mrf.mxu0
      %v2013 = vadd.f32 0.0, %v2012
      %v2014 = vpop.f32.mrf.mxu0
      %2015 = vmatprep.mubr.bf16.mxu0 0
      %2016 = vmatmul.mubr.bf16.gmra.mxu0 %v1858
      %v2017 = vpop.f32.mrf.mxu0
      %v2018 = vadd.f32 0.0, %v2017
      %v2019 = vpop.f32.mrf.mxu0
      %v2020 = vpop.f32.mrf.mxu0
      %v2021 = vadd.f32 0.0, %v2020
      %v2022 = vpop.f32.mrf.mxu0
      %2023 = vdwg.mxu0
      %v2024 = vadd.f32 %v1744, %v1898
      %v2025 = vadd.f32 %v1745, %v1901
      %v2026 = vadd.f32 %v1746, %v1906
      %v2027 = vadd.f32 %v1747, %v1909
      %v2028 = vadd.f32 %v1748, %v1914
      %v2029 = vadd.f32 %v1749, %v1917
      %v2030 = vadd.f32 %v1750, %v1922
      %v2031 = vadd.f32 %v1751, %v1925
      %v2032 = vadd.f32 %v1752, %v1930
      %v2033 = vadd.f32 %v1753, %v1933
      %v2034 = vadd.f32 %v1754, %v1938
      %v2035 = vadd.f32 %v1755, %v1941
      %v2036 = vadd.f32 %v1756, %v1946
      %v2037 = vadd.f32 %v1757, %v1949
      %v2038 = vadd.f32 %v1758, %v1954
      %v2039 = vadd.f32 %v1759, %v1957
      %v2040 = vadd.f32 %v1760, %v1962
      %v2041 = vadd.f32 %v1761, %v1965
      %v2042 = vadd.f32 %v1762, %v1970
      %v2043 = vadd.f32 %v1763, %v1973
      %v2044 = vadd.f32 %v1764, %v1978
      %v2045 = vadd.f32 %v1765, %v1981
      %v2046 = vadd.f32 %v1766, %v1986
      %v2047 = vadd.f32 %v1767, %v1989
      %v2048 = vadd.f32 %v1768, %v1994
      %v2049 = vadd.f32 %v1769, %v1997
      %v2050 = vadd.f32 %v1770, %v2002
      %v2051 = vadd.f32 %v1771, %v2005
      %v2052 = vadd.f32 %v1772, %v2010
      %v2053 = vadd.f32 %v1773, %v2013
      %v2054 = vadd.f32 %v1774, %v2018
      %v2055 = vadd.f32 %v1775, %v2021
      %s2056 = scalar_lea.vmem %s210, 10
      %v2057 = vld [vmem:[%s2056] sm:$0x3]
      %v2058 = vrot.slane %v346, 1
      %v2059 = vsel %vm1778, %v1808, %v2058
      %v2060 = vrot.slane %v347, 1
      %v2061 = vsel %vm1778, %v2058, %v2060
      %v2062 = vrot.slane %v1322, 1
      %v2063 = vsel %vm1778, %v2060, %v2062
      %v2065 = vsel %vm348, %v2059, 0
      %v2068 = vsel %vm348, %v2061, 0
      %v2071 = vsel %vm348, %v2063, 0
      %v2074 = vsel %vm397, %v2057, 0
      %2076 = vmatprep.subr.bf16.mxu0 0
      %2077 = vmatpush1.bf16.msra.mxu0 0
      %2078 = vmatprep.subr.bf16.mxu0 0
      %2079 = vmatpush1.bf16.msra.mxu0 0
      %2080 = vmatprep.subr.bf16.mxu0 0
      %2081 = vmatpush1.bf16.msra.mxu0 0
      %2082 = vmatprep.subr.bf16.mxu0 0
      %2083 = vmatpush1.bf16.msra.mxu0 0
      %2084 = vmatprep.subr.bf16.mxu0 0
      %2085 = vmatpush1.bf16.msra.mxu0 0
      %2086 = vmatprep.subr.bf16.mxu0 0
      %2087 = vmatpush1.bf16.msra.mxu0 0
      %2088 = vmatprep.subr.bf16.mxu0 0
      %2089 = vmatpush1.bf16.msra.mxu0 0
      %2090 = vmatprep.subr.bf16.mxu0 0
      %2091 = vmatpush1.bf16.msra.mxu0 %v2074
      %2092 = vmatprep.subr.bf16.mxu0 0
      %2093 = vmatpush2.bf16.msra.mxu0 0
      %2094 = vmatprep.subr.bf16.mxu0 0
      %2095 = vmatpush2.bf16.msra.mxu0 0
      %2096 = vmatprep.subr.bf16.mxu0 0
      %2097 = vmatpush2.bf16.msra.mxu0 0
      %2098 = vmatprep.subr.bf16.mxu0 0
      %2099 = vmatpush2.bf16.msra.mxu0 0
      %2100 = vmatprep.subr.bf16.mxu0 0
      %2101 = vmatpush2.bf16.msra.mxu0 0
      %2102 = vmatprep.subr.bf16.mxu0 0
      %2103 = vmatpush2.bf16.msra.mxu0 0
      %2104 = vmatprep.subr.bf16.mxu0 0
      %2105 = vmatpush2.bf16.msra.mxu0 0
      %2106 = vmatprep.subr.bf16.mxu0 0
      %2107 = vmatpush2.bf16.msra.mxu0 0
      %2108 = vmatprep.mubr.bf16.mxu0 0
      %2109 = vmatmul.mubr.bf16.gmra.mxu0 %v1819
      %v2110 = vpop.f32.mrf.mxu0
      %v2111 = vadd.f32 0.0, %v2110
      %v2112 = vpop.f32.mrf.mxu0
      %v2113 = vpop.f32.mrf.mxu0
      %v2114 = vadd.f32 0.0, %v2113
      %v2115 = vpop.f32.mrf.mxu0
      %2116 = vmatprep.mubr.bf16.mxu0 0
      %2117 = vmatmul.mubr.bf16.gmra.mxu0 %v1822
      %v2118 = vpop.f32.mrf.mxu0
      %v2119 = vadd.f32 0.0, %v2118
      %v2120 = vpop.f32.mrf.mxu0
      %v2121 = vpop.f32.mrf.mxu0
      %v2122 = vadd.f32 0.0, %v2121
      %v2123 = vpop.f32.mrf.mxu0
      %2124 = vmatprep.mubr.bf16.mxu0 0
      %2125 = vmatmul.mubr.bf16.gmra.mxu0 %v1825
      %v2126 = vpop.f32.mrf.mxu0
      %v2127 = vadd.f32 0.0, %v2126
      %v2128 = vpop.f32.mrf.mxu0
      %v2129 = vpop.f32.mrf.mxu0
      %v2130 = vadd.f32 0.0, %v2129
      %v2131 = vpop.f32.mrf.mxu0
      %2132 = vmatprep.mubr.bf16.mxu0 0
      %2133 = vmatmul.mubr.bf16.gmra.mxu0 %v1828
      %v2134 = vpop.f32.mrf.mxu0
      %v2135 = vadd.f32 0.0, %v2134
      %v2136 = vpop.f32.mrf.mxu0
      %v2137 = vpop.f32.mrf.mxu0
      %v2138 = vadd.f32 0.0, %v2137
      %v2139 = vpop.f32.mrf.mxu0
      %2140 = vmatprep.mubr.bf16.mxu0 0
      %2141 = vmatmul.mubr.bf16.gmra.mxu0 %v1831
      %v2142 = vpop.f32.mrf.mxu0
      %v2143 = vadd.f32 0.0, %v2142
      %v2144 = vpop.f32.mrf.mxu0
      %v2145 = vpop.f32.mrf.mxu0
      %v2146 = vadd.f32 0.0, %v2145
      %v2147 = vpop.f32.mrf.mxu0
      %2148 = vmatprep.mubr.bf16.mxu0 0
      %2149 = vmatmul.mubr.bf16.gmra.mxu0 %v1834
      %v2150 = vpop.f32.mrf.mxu0
      %v2151 = vadd.f32 0.0, %v2150
      %v2152 = vpop.f32.mrf.mxu0
      %v2153 = vpop.f32.mrf.mxu0
      %v2154 = vadd.f32 0.0, %v2153
      %v2155 = vpop.f32.mrf.mxu0
      %2156 = vmatprep.mubr.bf16.mxu0 0
      %2157 = vmatmul.mubr.bf16.gmra.mxu0 %v1837
      %v2158 = vpop.f32.mrf.mxu0
      %v2159 = vadd.f32 0.0, %v2158
      %v2160 = vpop.f32.mrf.mxu0
      %v2161 = vpop.f32.mrf.mxu0
      %v2162 = vadd.f32 0.0, %v2161
      %v2163 = vpop.f32.mrf.mxu0
      %2164 = vmatprep.mubr.bf16.mxu0 0
      %2165 = vmatmul.mubr.bf16.gmra.mxu0 %v1840
      %v2166 = vpop.f32.mrf.mxu0
      %v2167 = vadd.f32 0.0, %v2166
      %v2168 = vpop.f32.mrf.mxu0
      %v2169 = vpop.f32.mrf.mxu0
      %v2170 = vadd.f32 0.0, %v2169
      %v2171 = vpop.f32.mrf.mxu0
      %2172 = vmatprep.mubr.bf16.mxu0 0
      %2173 = vmatmul.mubr.bf16.gmra.mxu0 %v1843
      %v2174 = vpop.f32.mrf.mxu0
      %v2175 = vadd.f32 0.0, %v2174
      %v2176 = vpop.f32.mrf.mxu0
      %v2177 = vpop.f32.mrf.mxu0
      %v2178 = vadd.f32 0.0, %v2177
      %v2179 = vpop.f32.mrf.mxu0
      %2180 = vmatprep.mubr.bf16.mxu0 0
      %2181 = vmatmul.mubr.bf16.gmra.mxu0 %v1846
      %v2182 = vpop.f32.mrf.mxu0
      %v2183 = vadd.f32 0.0, %v2182
      %v2184 = vpop.f32.mrf.mxu0
      %v2185 = vpop.f32.mrf.mxu0
      %v2186 = vadd.f32 0.0, %v2185
      %v2187 = vpop.f32.mrf.mxu0
      %2188 = vmatprep.mubr.bf16.mxu0 0
      %2189 = vmatmul.mubr.bf16.gmra.mxu0 %v1849
      %v2190 = vpop.f32.mrf.mxu0
      %v2191 = vadd.f32 0.0, %v2190
      %v2192 = vpop.f32.mrf.mxu0
      %v2193 = vpop.f32.mrf.mxu0
      %v2194 = vadd.f32 0.0, %v2193
      %v2195 = vpop.f32.mrf.mxu0
      %2196 = vmatprep.mubr.bf16.mxu0 0
      %2197 = vmatmul.mubr.bf16.gmra.mxu0 %v1852
      %v2198 = vpop.f32.mrf.mxu0
      %v2199 = vadd.f32 0.0, %v2198
      %v2200 = vpop.f32.mrf.mxu0
      %v2201 = vpop.f32.mrf.mxu0
      %v2202 = vadd.f32 0.0, %v2201
      %v2203 = vpop.f32.mrf.mxu0
      %2204 = vmatprep.mubr.bf16.mxu0 0
      %2205 = vmatmul.mubr.bf16.gmra.mxu0 %v1855
      %v2206 = vpop.f32.mrf.mxu0
      %v2207 = vadd.f32 0.0, %v2206
      %v2208 = vpop.f32.mrf.mxu0
      %v2209 = vpop.f32.mrf.mxu0
      %v2210 = vadd.f32 0.0, %v2209
      %v2211 = vpop.f32.mrf.mxu0
      %2212 = vmatprep.mubr.bf16.mxu0 0
      %2213 = vmatmul.mubr.bf16.gmra.mxu0 %v2065
      %v2214 = vpop.f32.mrf.mxu0
      %v2215 = vadd.f32 0.0, %v2214
      %v2216 = vpop.f32.mrf.mxu0
      %v2217 = vpop.f32.mrf.mxu0
      %v2218 = vadd.f32 0.0, %v2217
      %v2219 = vpop.f32.mrf.mxu0
      %2220 = vmatprep.mubr.bf16.mxu0 0
      %2221 = vmatmul.mubr.bf16.gmra.mxu0 %v2068
      %v2222 = vpop.f32.mrf.mxu0
      %v2223 = vadd.f32 0.0, %v2222
      %v2224 = vpop.f32.mrf.mxu0
      %v2225 = vpop.f32.mrf.mxu0
      %v2226 = vadd.f32 0.0, %v2225
      %v2227 = vpop.f32.mrf.mxu0
      %2228 = vmatprep.mubr.bf16.mxu0 0
      %2229 = vmatmul.mubr.bf16.gmra.mxu0 %v2071
      %v2230 = vpop.f32.mrf.mxu0
      %v2231 = vadd.f32 0.0, %v2230
      %v2232 = vpop.f32.mrf.mxu0
      %v2233 = vpop.f32.mrf.mxu0
      %v2234 = vadd.f32 0.0, %v2233
      %v2235 = vpop.f32.mrf.mxu0
      %2236 = vdwg.mxu0
      %v2237 = vadd.f32 %v2024, %v2111
      %v2238 = vadd.f32 %v2025, %v2114
      %v2239 = vadd.f32 %v2026, %v2119
      %v2240 = vadd.f32 %v2027, %v2122
      %v2241 = vadd.f32 %v2028, %v2127
      %v2242 = vadd.f32 %v2029, %v2130
      %v2243 = vadd.f32 %v2030, %v2135
      %v2244 = vadd.f32 %v2031, %v2138
      %v2245 = vadd.f32 %v2032, %v2143
      %v2246 = vadd.f32 %v2033, %v2146
      %v2247 = vadd.f32 %v2034, %v2151
      %v2248 = vadd.f32 %v2035, %v2154
      %v2249 = vadd.f32 %v2036, %v2159
      %v2250 = vadd.f32 %v2037, %v2162
      %v2251 = vadd.f32 %v2038, %v2167
      %v2252 = vadd.f32 %v2039, %v2170
      %v2253 = vadd.f32 %v2040, %v2175
      %v2254 = vadd.f32 %v2041, %v2178
      %v2255 = vadd.f32 %v2042, %v2183
      %v2256 = vadd.f32 %v2043, %v2186
      %v2257 = vadd.f32 %v2044, %v2191
      %v2258 = vadd.f32 %v2045, %v2194
      %v2259 = vadd.f32 %v2046, %v2199
      %v2260 = vadd.f32 %v2047, %v2202
      %v2261 = vadd.f32 %v2048, %v2207
      %v2262 = vadd.f32 %v2049, %v2210
      %v2263 = vadd.f32 %v2050, %v2215
      %v2264 = vadd.f32 %v2051, %v2218
      %v2265 = vadd.f32 %v2052, %v2223
      %v2266 = vadd.f32 %v2053, %v2226
      %v2267 = vadd.f32 %v2054, %v2231
      %v2268 = vadd.f32 %v2055, %v2234
      %s2269 = scalar_lea.vmem %s210, 16
      %v2270 = vld [vmem:[%s2269] sm:$0x3]
      %v2271 = vrot.slane %v752, 1
      %v2272 = vsel %vm1778, %v2060, %v2271
      %v2273 = vrot.slane %v753, 1
      %v2274 = vsel %vm1778, %v2271, %v2273
      %v2275 = vrot.slane %v1551, 1
      %v2276 = vsel %vm1778, %v2273, %v2275
      %v2278 = vsel %vm348, %v2272, 0
      %v2281 = vsel %vm348, %v2274, 0
      %v2284 = vsel %vm348, %v2276, 0
      %v2287 = vsel %vm397, %v2270, 0
      %2289 = vmatprep.subr.bf16.mxu0 0
      %2290 = vmatpush1.bf16.msra.mxu0 0
      %2291 = vmatprep.subr.bf16.mxu0 0
      %2292 = vmatpush1.bf16.msra.mxu0 0
      %2293 = vmatprep.subr.bf16.mxu0 0
      %2294 = vmatpush1.bf16.msra.mxu0 0
      %2295 = vmatprep.subr.bf16.mxu0 0
      %2296 = vmatpush1.bf16.msra.mxu0 0
      %2297 = vmatprep.subr.bf16.mxu0 0
      %2298 = vmatpush1.bf16.msra.mxu0 0
      %2299 = vmatprep.subr.bf16.mxu0 0
      %2300 = vmatpush1.bf16.msra.mxu0 0
      %2301 = vmatprep.subr.bf16.mxu0 0
      %2302 = vmatpush1.bf16.msra.mxu0 0
      %2303 = vmatprep.subr.bf16.mxu0 0
      %2304 = vmatpush1.bf16.msra.mxu0 %v2287
      %2305 = vmatprep.subr.bf16.mxu0 0
      %2306 = vmatpush2.bf16.msra.mxu0 0
      %2307 = vmatprep.subr.bf16.mxu0 0
      %2308 = vmatpush2.bf16.msra.mxu0 0
      %2309 = vmatprep.subr.bf16.mxu0 0
      %2310 = vmatpush2.bf16.msra.mxu0 0
      %2311 = vmatprep.subr.bf16.mxu0 0
      %2312 = vmatpush2.bf16.msra.mxu0 0
      %2313 = vmatprep.subr.bf16.mxu0 0
      %2314 = vmatpush2.bf16.msra.mxu0 0
      %2315 = vmatprep.subr.bf16.mxu0 0
      %2316 = vmatpush2.bf16.msra.mxu0 0
      %2317 = vmatprep.subr.bf16.mxu0 0
      %2318 = vmatpush2.bf16.msra.mxu0 0
      %2319 = vmatprep.subr.bf16.mxu0 0
      %2320 = vmatpush2.bf16.msra.mxu0 0
      %2321 = vmatprep.mubr.bf16.mxu0 0
      %2322 = vmatmul.mubr.bf16.gmra.mxu0 %v1825
      %v2323 = vpop.f32.mrf.mxu0
      %v2324 = vadd.f32 0.0, %v2323
      %v2325 = vpop.f32.mrf.mxu0
      %v2326 = vpop.f32.mrf.mxu0
      %v2327 = vadd.f32 0.0, %v2326
      %v2328 = vpop.f32.mrf.mxu0
      %2329 = vmatprep.mubr.bf16.mxu0 0
      %2330 = vmatmul.mubr.bf16.gmra.mxu0 %v1828
      %v2331 = vpop.f32.mrf.mxu0
      %v2332 = vadd.f32 0.0, %v2331
      %v2333 = vpop.f32.mrf.mxu0
      %v2334 = vpop.f32.mrf.mxu0
      %v2335 = vadd.f32 0.0, %v2334
      %v2336 = vpop.f32.mrf.mxu0
      %2337 = vmatprep.mubr.bf16.mxu0 0
      %2338 = vmatmul.mubr.bf16.gmra.mxu0 %v1831
      %v2339 = vpop.f32.mrf.mxu0
      %v2340 = vadd.f32 0.0, %v2339
      %v2341 = vpop.f32.mrf.mxu0
      %v2342 = vpop.f32.mrf.mxu0
      %v2343 = vadd.f32 0.0, %v2342
      %v2344 = vpop.f32.mrf.mxu0
      %2345 = vmatprep.mubr.bf16.mxu0 0
      %2346 = vmatmul.mubr.bf16.gmra.mxu0 %v1834
      %v2347 = vpop.f32.mrf.mxu0
      %v2348 = vadd.f32 0.0, %v2347
      %v2349 = vpop.f32.mrf.mxu0
      %v2350 = vpop.f32.mrf.mxu0
      %v2351 = vadd.f32 0.0, %v2350
      %v2352 = vpop.f32.mrf.mxu0
      %2353 = vmatprep.mubr.bf16.mxu0 0
      %2354 = vmatmul.mubr.bf16.gmra.mxu0 %v1837
      %v2355 = vpop.f32.mrf.mxu0
      %v2356 = vadd.f32 0.0, %v2355
      %v2357 = vpop.f32.mrf.mxu0
      %v2358 = vpop.f32.mrf.mxu0
      %v2359 = vadd.f32 0.0, %v2358
      %v2360 = vpop.f32.mrf.mxu0
      %2361 = vmatprep.mubr.bf16.mxu0 0
      %2362 = vmatmul.mubr.bf16.gmra.mxu0 %v1840
      %v2363 = vpop.f32.mrf.mxu0
      %v2364 = vadd.f32 0.0, %v2363
      %v2365 = vpop.f32.mrf.mxu0
      %v2366 = vpop.f32.mrf.mxu0
      %v2367 = vadd.f32 0.0, %v2366
      %v2368 = vpop.f32.mrf.mxu0
      %2369 = vmatprep.mubr.bf16.mxu0 0
      %2370 = vmatmul.mubr.bf16.gmra.mxu0 %v1843
      %v2371 = vpop.f32.mrf.mxu0
      %v2372 = vadd.f32 0.0, %v2371
      %v2373 = vpop.f32.mrf.mxu0
      %v2374 = vpop.f32.mrf.mxu0
      %v2375 = vadd.f32 0.0, %v2374
      %v2376 = vpop.f32.mrf.mxu0
      %2377 = vmatprep.mubr.bf16.mxu0 0
      %2378 = vmatmul.mubr.bf16.gmra.mxu0 %v1846
      %v2379 = vpop.f32.mrf.mxu0
      %v2380 = vadd.f32 0.0, %v2379
      %v2381 = vpop.f32.mrf.mxu0
      %v2382 = vpop.f32.mrf.mxu0
      %v2383 = vadd.f32 0.0, %v2382
      %v2384 = vpop.f32.mrf.mxu0
      %2385 = vmatprep.mubr.bf16.mxu0 0
      %2386 = vmatmul.mubr.bf16.gmra.mxu0 %v1849
      %v2387 = vpop.f32.mrf.mxu0
      %v2388 = vadd.f32 0.0, %v2387
      %v2389 = vpop.f32.mrf.mxu0
      %v2390 = vpop.f32.mrf.mxu0
      %v2391 = vadd.f32 0.0, %v2390
      %v2392 = vpop.f32.mrf.mxu0
      %2393 = vmatprep.mubr.bf16.mxu0 0
      %2394 = vmatmul.mubr.bf16.gmra.mxu0 %v1852
      %v2395 = vpop.f32.mrf.mxu0
      %v2396 = vadd.f32 0.0, %v2395
      %v2397 = vpop.f32.mrf.mxu0
      %v2398 = vpop.f32.mrf.mxu0
      %v2399 = vadd.f32 0.0, %v2398
      %v2400 = vpop.f32.mrf.mxu0
      %2401 = vmatprep.mubr.bf16.mxu0 0
      %2402 = vmatmul.mubr.bf16.gmra.mxu0 %v1855
      %v2403 = vpop.f32.mrf.mxu0
      %v2404 = vadd.f32 0.0, %v2403
      %v2405 = vpop.f32.mrf.mxu0
      %v2406 = vpop.f32.mrf.mxu0
      %v2407 = vadd.f32 0.0, %v2406
      %v2408 = vpop.f32.mrf.mxu0
      %2409 = vmatprep.mubr.bf16.mxu0 0
      %2410 = vmatmul.mubr.bf16.gmra.mxu0 %v2065
      %v2411 = vpop.f32.mrf.mxu0
      %v2412 = vadd.f32 0.0, %v2411
      %v2413 = vpop.f32.mrf.mxu0
      %v2414 = vpop.f32.mrf.mxu0
      %v2415 = vadd.f32 0.0, %v2414
      %v2416 = vpop.f32.mrf.mxu0
      %2417 = vmatprep.mubr.bf16.mxu0 0
      %2418 = vmatmul.mubr.bf16.gmra.mxu0 %v2068
      %v2419 = vpop.f32.mrf.mxu0
      %v2420 = vadd.f32 0.0, %v2419
      %v2421 = vpop.f32.mrf.mxu0
      %v2422 = vpop.f32.mrf.mxu0
      %v2423 = vadd.f32 0.0, %v2422
      %v2424 = vpop.f32.mrf.mxu0
      %2425 = vmatprep.mubr.bf16.mxu0 0
      %2426 = vmatmul.mubr.bf16.gmra.mxu0 %v2278
      %v2427 = vpop.f32.mrf.mxu0
      %v2428 = vadd.f32 0.0, %v2427
      %v2429 = vpop.f32.mrf.mxu0
      %v2430 = vpop.f32.mrf.mxu0
      %v2431 = vadd.f32 0.0, %v2430
      %v2432 = vpop.f32.mrf.mxu0
      %2433 = vmatprep.mubr.bf16.mxu0 0
      %2434 = vmatmul.mubr.bf16.gmra.mxu0 %v2281
      %v2435 = vpop.f32.mrf.mxu0
      %v2436 = vadd.f32 0.0, %v2435
      %v2437 = vpop.f32.mrf.mxu0
      %v2438 = vpop.f32.mrf.mxu0
      %v2439 = vadd.f32 0.0, %v2438
      %v2440 = vpop.f32.mrf.mxu0
      %2441 = vmatprep.mubr.bf16.mxu0 0
      %2442 = vmatmul.mubr.bf16.gmra.mxu0 %v2284
      %v2443 = vpop.f32.mrf.mxu0
      %v2444 = vadd.f32 0.0, %v2443
      %v2445 = vpop.f32.mrf.mxu0
      %v2446 = vpop.f32.mrf.mxu0
      %v2447 = vadd.f32 0.0, %v2446
      %v2448 = vpop.f32.mrf.mxu0
      %2449 = vdwg.mxu0
      %v2450 = vadd.f32 %v2237, %v2324
      %v2451 = vadd.f32 %v2238, %v2327
      %v2452 = vadd.f32 %v2239, %v2332
      %v2453 = vadd.f32 %v2240, %v2335
      %v2454 = vadd.f32 %v2241, %v2340
      %v2455 = vadd.f32 %v2242, %v2343
      %v2456 = vadd.f32 %v2243, %v2348
      %v2457 = vadd.f32 %v2244, %v2351
      %v2458 = vadd.f32 %v2245, %v2356
      %v2459 = vadd.f32 %v2246, %v2359
      %v2460 = vadd.f32 %v2247, %v2364
      %v2461 = vadd.f32 %v2248, %v2367
      %v2462 = vadd.f32 %v2249, %v2372
      %v2463 = vadd.f32 %v2250, %v2375
      %v2464 = vadd.f32 %v2251, %v2380
      %v2465 = vadd.f32 %v2252, %v2383
      %v2466 = vadd.f32 %v2253, %v2388
      %v2467 = vadd.f32 %v2254, %v2391
      %v2468 = vadd.f32 %v2255, %v2396
      %v2469 = vadd.f32 %v2256, %v2399
      %v2470 = vadd.f32 %v2257, %v2404
      %v2471 = vadd.f32 %v2258, %v2407
      %v2472 = vadd.f32 %v2259, %v2412
      %v2473 = vadd.f32 %v2260, %v2415
      %v2474 = vadd.f32 %v2261, %v2420
      %v2475 = vadd.f32 %v2262, %v2423
      %v2476 = vadd.f32 %v2263, %v2428
      %v2477 = vadd.f32 %v2264, %v2431
      %v2478 = vadd.f32 %v2265, %v2436
      %v2479 = vadd.f32 %v2266, %v2439
      %v2480 = vadd.f32 %v2267, %v2444
      %v2481 = vadd.f32 %v2268, %v2447
      %v2483 = vlaneseq
      %v2484 = vshrl.u32 %v2483, 7
      %v2485 = vsub.s32 0, %v2484
      %v2486 = vrot.slane %v223, %v2485
      %v2488 = vadd.f32 %v2450, %v2486
      %v2489 = vadd.f32 %v2451, %v2486
      %v2490 = vadd.f32 %v2452, %v2486
      %v2491 = vadd.f32 %v2453, %v2486
      %v2492 = vadd.f32 %v2454, %v2486
      %v2493 = vadd.f32 %v2455, %v2486
      %v2494 = vadd.f32 %v2456, %v2486
      %v2495 = vadd.f32 %v2457, %v2486
      %v2496 = vadd.f32 %v2458, %v2486
      %v2497 = vadd.f32 %v2459, %v2486
      %v2498 = vadd.f32 %v2460, %v2486
      %v2499 = vadd.f32 %v2461, %v2486
      %v2500 = vadd.f32 %v2462, %v2486
      %v2501 = vadd.f32 %v2463, %v2486
      %v2502 = vadd.f32 %v2464, %v2486
      %v2503 = vadd.f32 %v2465, %v2486
      %v2504 = vadd.f32 %v2466, %v2486
      %v2505 = vadd.f32 %v2467, %v2486
      %v2506 = vadd.f32 %v2468, %v2486
      %v2507 = vadd.f32 %v2469, %v2486
      %v2508 = vadd.f32 %v2470, %v2486
      %v2509 = vadd.f32 %v2471, %v2486
      %v2510 = vadd.f32 %v2472, %v2486
      %v2511 = vadd.f32 %v2473, %v2486
      %v2512 = vadd.f32 %v2474, %v2486
      %v2513 = vadd.f32 %v2475, %v2486
      %v2514 = vadd.f32 %v2476, %v2486
      %v2515 = vadd.f32 %v2477, %v2486
      %v2516 = vadd.f32 %v2478, %v2486
      %v2517 = vadd.f32 %v2479, %v2486
      %v2518 = vadd.f32 %v2480, %v2486
      %v2519 = vadd.f32 %v2481, %v2486
      %v2520 = vmax.f32 %v2488, 0.0
      %v2521 = vmax.f32 %v2489, 0.0
      %v2522 = vmax.f32 %v2490, 0.0
      %v2523 = vmax.f32 %v2491, 0.0
      %v2524 = vmax.f32 %v2492, 0.0
      %v2525 = vmax.f32 %v2493, 0.0
      %v2526 = vmax.f32 %v2494, 0.0
      %v2527 = vmax.f32 %v2495, 0.0
      %v2528 = vmax.f32 %v2496, 0.0
      %v2529 = vmax.f32 %v2497, 0.0
      %v2530 = vmax.f32 %v2498, 0.0
      %v2531 = vmax.f32 %v2499, 0.0
      %v2532 = vmax.f32 %v2500, 0.0
      %v2533 = vmax.f32 %v2501, 0.0
      %v2534 = vmax.f32 %v2502, 0.0
      %v2535 = vmax.f32 %v2503, 0.0
      %v2536 = vmax.f32 %v2504, 0.0
      %v2537 = vmax.f32 %v2505, 0.0
      %v2538 = vmax.f32 %v2506, 0.0
      %v2539 = vmax.f32 %v2507, 0.0
      %v2540 = vmax.f32 %v2508, 0.0
      %v2541 = vmax.f32 %v2509, 0.0
      %v2542 = vmax.f32 %v2510, 0.0
      %v2543 = vmax.f32 %v2511, 0.0
      %v2544 = vmax.f32 %v2512, 0.0
      %v2545 = vmax.f32 %v2513, 0.0
      %v2546 = vmax.f32 %v2514, 0.0
      %v2547 = vmax.f32 %v2515, 0.0
      %v2548 = vmax.f32 %v2516, 0.0
      %v2549 = vmax.f32 %v2517, 0.0
      %v2550 = vmax.f32 %v2518, 0.0
      %v2551 = vmax.f32 %v2519, 0.0
      %v2552 = vpack.c.bf16 %v2521, %v2520
      %v2553 = vpack.c.bf16 %v2523, %v2522
      %v2554 = vpack.c.bf16 %v2525, %v2524
      %v2555 = vpack.c.bf16 %v2527, %v2526
      %v2556 = vpack.c.bf16 %v2529, %v2528
      %v2557 = vpack.c.bf16 %v2531, %v2530
      %v2558 = vpack.c.bf16 %v2533, %v2532
      %v2559 = vpack.c.bf16 %v2535, %v2534
      %v2560 = vpack.c.bf16 %v2537, %v2536
      %v2561 = vpack.c.bf16 %v2539, %v2538
      %v2562 = vpack.c.bf16 %v2541, %v2540
      %v2563 = vpack.c.bf16 %v2543, %v2542
      %v2564 = vpack.c.bf16 %v2545, %v2544
      %v2565 = vpack.c.bf16 %v2547, %v2546
      %v2566 = vpack.c.bf16 %v2549, %v2548
      %v2567 = vpack.c.bf16 %v2551, %v2550
      %v2584 = vunpack.c.l.b16 %v2552
      %v2585 = vunpack.c.h.b16 %v2552
      %v2586 = vunpack.c.l.b16 %v2553
      %v2587 = vunpack.c.h.b16 %v2553
      %v2588 = vunpack.c.l.b16 %v2554
      %v2589 = vunpack.c.h.b16 %v2554
      %v2590 = vunpack.c.l.b16 %v2555
      %v2591 = vunpack.c.h.b16 %v2555
      %v2592 = vunpack.c.l.b16 %v2556
      %v2593 = vunpack.c.h.b16 %v2556
      %v2594 = vunpack.c.l.b16 %v2557
      %v2595 = vunpack.c.h.b16 %v2557
      %v2596 = vunpack.c.l.b16 %v2558
      %v2597 = vunpack.c.h.b16 %v2558
      %v2598 = vunpack.c.l.b16 %v2559
      %v2599 = vunpack.c.h.b16 %v2559
      %v2600 = vunpack.c.l.b16 %v2560
      %v2601 = vunpack.c.h.b16 %v2560
      %v2602 = vunpack.c.l.b16 %v2561
      %v2603 = vunpack.c.h.b16 %v2561
      %v2604 = vunpack.c.l.b16 %v2562
      %v2605 = vunpack.c.h.b16 %v2562
      %v2606 = vunpack.c.l.b16 %v2563
      %v2607 = vunpack.c.h.b16 %v2563
      %v2608 = vunpack.c.l.b16 %v2564
      %v2609 = vunpack.c.h.b16 %v2564
      %v2610 = vunpack.c.l.b16 %v2565
      %v2611 = vunpack.c.h.b16 %v2565
      %v2612 = vunpack.c.l.b16 %v2566
      %v2613 = vunpack.c.h.b16 %v2566
      %v2614 = vunpack.c.l.b16 %v2567
      %v2615 = vunpack.c.h.b16 %v2567
      %v2616 = vpack.c.b16 %v2584, %v2584
      %v2617 = vpack.c.b16 %v2585, %v2585
      %v2618 = vpack.c.b16 %v2586, %v2586
      %v2619 = vpack.c.b16 %v2587, %v2587
      %v2620 = vpack.c.b16 %v2588, %v2588
      %v2621 = vpack.c.b16 %v2589, %v2589
      %v2622 = vpack.c.b16 %v2590, %v2590
      %v2623 = vpack.c.b16 %v2591, %v2591
      %v2624 = vpack.c.b16 %v2592, %v2592
      %v2625 = vpack.c.b16 %v2593, %v2593
      %v2626 = vpack.c.b16 %v2594, %v2594
      %v2627 = vpack.c.b16 %v2595, %v2595
      %v2628 = vpack.c.b16 %v2596, %v2596
      %v2629 = vpack.c.b16 %v2597, %v2597
      %v2630 = vpack.c.b16 %v2598, %v2598
      %v2631 = vpack.c.b16 %v2599, %v2599
      %v2632 = vpack.c.b16 %v2600, %v2600
      %v2633 = vpack.c.b16 %v2601, %v2601
      %v2634 = vpack.c.b16 %v2602, %v2602
      %v2635 = vpack.c.b16 %v2603, %v2603
      %v2636 = vpack.c.b16 %v2604, %v2604
      %v2637 = vpack.c.b16 %v2605, %v2605
      %v2638 = vpack.c.b16 %v2606, %v2606
      %v2639 = vpack.c.b16 %v2607, %v2607
      %v2640 = vpack.c.b16 %v2608, %v2608
      %v2641 = vpack.c.b16 %v2609, %v2609
      %v2642 = vpack.c.b16 %v2610, %v2610
      %v2643 = vpack.c.b16 %v2611, %v2611
      %v2644 = vpack.c.b16 %v2612, %v2612
      %v2645 = vpack.c.b16 %v2613, %v2613
      %v2646 = vpack.c.b16 %v2614, %v2614
      %v2647 = vpack.c.b16 %v2615, %v2615
      %2680 = vst [vmem:[%s221] sm:$0xf] %v2616
      %2681 = vst [vmem:[%s221 + $0x4] sm:$0xf] %v2617
      %2682 = vst [vmem:[%s221 + $0x8] sm:$0xf] %v2618
      %2683 = vst [vmem:[%s221 + $0xc] sm:$0xf] %v2619
      %2684 = vst [vmem:[%s221 + $0x10] sm:$0xf] %v2620
      %2685 = vst [vmem:[%s221 + $0x14] sm:$0xf] %v2621
      %2686 = vst [vmem:[%s221 + $0x18] sm:$0xf] %v2622
      %2687 = vst [vmem:[%s221 + $0x1c] sm:$0xf] %v2623
      %2688 = vst [vmem:[%s221 + $0x20] sm:$0xf] %v2624
      %2689 = vst [vmem:[%s221 + $0x24] sm:$0xf] %v2625
      %2690 = vst [vmem:[%s221 + $0x28] sm:$0xf] %v2626
      %2691 = vst [vmem:[%s221 + $0x2c] sm:$0xf] %v2627
      %2692 = vst [vmem:[%s221 + $0x30] sm:$0xf] %v2628
      %2693 = vst [vmem:[%s221 + $0x34] sm:$0xf] %v2629
      %2694 = vst [vmem:[%s221 + $0x38] sm:$0xf] %v2630
      %2695 = vst [vmem:[%s221 + $0x3c] sm:$0xf] %v2631
      %2696 = vst [vmem:[%s221 + $0x40] sm:$0xf] %v2632
      %2697 = vst [vmem:[%s221 + $0x44] sm:$0xf] %v2633
      %2698 = vst [vmem:[%s221 + $0x48] sm:$0xf] %v2634
      %2699 = vst [vmem:[%s221 + $0x4c] sm:$0xf] %v2635
      %2700 = vst [vmem:[%s221 + $0x50] sm:$0xf] %v2636
      %2701 = vst [vmem:[%s221 + $0x54] sm:$0xf] %v2637
      %2702 = vst [vmem:[%s221 + $0x58] sm:$0xf] %v2638
      %2703 = vst [vmem:[%s221 + $0x5c] sm:$0xf] %v2639
      %2704 = vst [vmem:[%s221 + $0x60] sm:$0xf] %v2640
      %2705 = vst [vmem:[%s221 + $0x64] sm:$0xf] %v2641
      %2706 = vst [vmem:[%s221 + $0x68] sm:$0xf] %v2642
      %2707 = vst [vmem:[%s221 + $0x6c] sm:$0xf] %v2643
      %2708 = vst [vmem:[%s221 + $0x70] sm:$0xf] %v2644
      %2709 = vst [vmem:[%s221 + $0x74] sm:$0xf] %v2645
      %2710 = vst [vmem:[%s221 + $0x78] sm:$0xf] %v2646
      %2711 = vst [vmem:[%s221 + $0x7c] sm:$0xf] %v2647
      %v2712 = vld [vmem:[%s206 + $0x80] sm:$0xf]
      %v2713 = vld [vmem:[%s206 + $0x84] sm:$0xf]
      %v2714 = vld [vmem:[%s206 + $0x88] sm:$0xf]
      %v2715 = vld [vmem:[%s206 + $0x8c] sm:$0xf]
      %v2716 = vld [vmem:[%s206 + $0x90] sm:$0xf]
      %v2717 = vld [vmem:[%s206 + $0x94] sm:$0xf]
      %v2718 = vld [vmem:[%s206 + $0x98] sm:$0xf]
      %v2719 = vld [vmem:[%s206 + $0x9c] sm:$0xf]
      %v2720 = vld [vmem:[%s206 + $0xa0] sm:$0xf]
      %v2721 = vld [vmem:[%s206 + $0xa4] sm:$0xf]
      %v2722 = vld [vmem:[%s206 + $0xa8] sm:$0xf]
      %v2723 = vld [vmem:[%s206 + $0xac] sm:$0xf]
      %v2724 = vld [vmem:[%s206 + $0xb0] sm:$0xf]
      %v2725 = vld [vmem:[%s206 + $0xb4] sm:$0xf]
      %v2726 = vld [vmem:[%s206 + $0xb8] sm:$0xf]
      %v2727 = vld [vmem:[%s206 + $0xbc] sm:$0xf]
      %v2728 = vld [vmem:[%s206 + $0xc0] sm:$0xf]
      %v2729 = vld [vmem:[%s206 + $0xc4] sm:$0xf]
      %v2730 = vld [vmem:[%s206 + $0xc8] sm:$0xf]
      %v2731 = vld [vmem:[%s206 + $0xcc] sm:$0xf]
      %v2732 = vld [vmem:[%s206 + $0xd0] sm:$0xf]
      %v2733 = vld [vmem:[%s206 + $0xd4] sm:$0xf]
      %v2734 = vld [vmem:[%s206 + $0xd8] sm:$0xf]
      %v2735 = vld [vmem:[%s206 + $0xdc] sm:$0xf]
      %v2736 = vld [vmem:[%s206 + $0xe0] sm:$0xf]
      %v2737 = vld [vmem:[%s206 + $0xe4] sm:$0xf]
      %v2738 = vld [vmem:[%s206 + $0xe8] sm:$0xf]
      %v2739 = vld [vmem:[%s206 + $0xec] sm:$0xf]
      %v2740 = vld [vmem:[%s206 + $0xf0] sm:$0xf]
      %v2741 = vld [vmem:[%s206 + $0xf4] sm:$0xf]
      %v2742 = vld [vmem:[%s206 + $0xf8] sm:$0xf]
      %v2743 = vld [vmem:[%s206 + $0xfc] sm:$0xf]
      %v2744 = vld [vmem:[%s206 + $0x100] sm:$0xf]
      %v2745 = vld [vmem:[%s206 + $0x104] sm:$0xf]
      %v2746 = vld [vmem:[%s206 + $0x108] sm:$0xf]
      %v2747 = vld [vmem:[%s206 + $0x10c] sm:$0xf]
      %v2748 = vld [vmem:[%s206 + $0x110] sm:$0xf]
      %v2749 = vld [vmem:[%s206 + $0x114] sm:$0xf]
      %v2750 = vld [vmem:[%s206 + $0x118] sm:$0xf]
      %v2751 = vld [vmem:[%s206 + $0x11c] sm:$0xf]
      %v2752 = vld [vmem:[%s206 + $0x120] sm:$0xf]
      %v2753 = vld [vmem:[%s210] sm:$0x3]
      %v2754 = vld [vmem:[%s266] sm:$0x3]
      %v2787 = vunpack.c.l.b16 %v2716
      %v2788 = vunpack.c.l.b16 %v2717
      %v2789 = vunpack.c.l.b16 %v2718
      %v2790 = vunpack.c.l.b16 %v2719
      %v2791 = vunpack.c.l.b16 %v2720
      %v2792 = vunpack.c.l.b16 %v2721
      %v2793 = vunpack.c.l.b16 %v2722
      %v2794 = vunpack.c.l.b16 %v2723
      %v2795 = vunpack.c.l.b16 %v2724
      %v2796 = vunpack.c.l.b16 %v2725
      %v2797 = vunpack.c.l.b16 %v2726
      %v2798 = vunpack.c.l.b16 %v2727
      %v2799 = vunpack.c.l.b16 %v2728
      %v2800 = vunpack.c.l.b16 %v2729
      %v2801 = vunpack.c.l.b16 %v2730
      %v2802 = vunpack.c.l.b16 %v2731
      %v2803 = vunpack.c.l.b16 %v2732
      %v2804 = vunpack.c.l.b16 %v2733
      %v2805 = vunpack.c.l.b16 %v2734
      %v2806 = vunpack.c.l.b16 %v2735
      %v2807 = vunpack.c.l.b16 %v2736
      %v2808 = vunpack.c.l.b16 %v2737
      %v2809 = vunpack.c.l.b16 %v2738
      %v2810 = vunpack.c.l.b16 %v2739
      %v2811 = vunpack.c.l.b16 %v2740
      %v2812 = vunpack.c.l.b16 %v2741
      %v2813 = vunpack.c.l.b16 %v2742
      %v2814 = vunpack.c.l.b16 %v2743
      %v2815 = vunpack.c.l.b16 %v2744
      %v2816 = vunpack.c.l.b16 %v2745
      %v2817 = vunpack.c.l.b16 %v2746
      %v2818 = vunpack.c.l.b16 %v2747
      %v2819 = vpack.c.b16 %v2788, %v2787
      %v2820 = vpack.c.b16 %v2790, %v2789
      %v2821 = vpack.c.b16 %v2792, %v2791
      %v2822 = vpack.c.b16 %v2794, %v2793
      %v2823 = vpack.c.b16 %v2796, %v2795
      %v2824 = vpack.c.b16 %v2798, %v2797
      %v2825 = vpack.c.b16 %v2800, %v2799
      %v2826 = vpack.c.b16 %v2802, %v2801
      %v2827 = vpack.c.b16 %v2804, %v2803
      %v2828 = vpack.c.b16 %v2806, %v2805
      %v2829 = vpack.c.b16 %v2808, %v2807
      %v2830 = vpack.c.b16 %v2810, %v2809
      %v2831 = vpack.c.b16 %v2812, %v2811
      %v2832 = vpack.c.b16 %v2814, %v2813
      %v2833 = vpack.c.b16 %v2816, %v2815
      %v2834 = vpack.c.b16 %v2818, %v2817
      %v2836 = vsel %vm348, %v2819, 0
      %v2839 = vsel %vm348, %v2820, 0
      %v2842 = vsel %vm348, %v2821, 0
      %v2845 = vsel %vm348, %v2822, 0
      %v2848 = vsel %vm348, %v2823, 0
      %v2851 = vsel %vm348, %v2824, 0
      %v2854 = vsel %vm348, %v2825, 0
      %v2857 = vsel %vm348, %v2826, 0
      %v2860 = vsel %vm348, %v2827, 0
      %v2863 = vsel %vm348, %v2828, 0
      %v2866 = vsel %vm348, %v2829, 0
      %v2869 = vsel %vm348, %v2830, 0
      %v2872 = vsel %vm348, %v2831, 0
      %v2875 = vsel %vm348, %v2832, 0
      %v2878 = vsel %vm348, %v2833, 0
      %v2881 = vsel %vm348, %v2834, 0
      %v2884 = vsel %vm397, %v2754, 0
      %2886 = vmatprep.subr.bf16.mxu0 0
      %2887 = vmatpush1.bf16.msra.mxu0 0
      %2888 = vmatprep.subr.bf16.mxu0 0
      %2889 = vmatpush1.bf16.msra.mxu0 0
      %2890 = vmatprep.subr.bf16.mxu0 0
      %2891 = vmatpush1.bf16.msra.mxu0 0
      %2892 = vmatprep.subr.bf16.mxu0 0
      %2893 = vmatpush1.bf16.msra.mxu0 0
      %2894 = vmatprep.subr.bf16.mxu0 0
      %2895 = vmatpush1.bf16.msra.mxu0 0
      %2896 = vmatprep.subr.bf16.mxu0 0
      %2897 = vmatpush1.bf16.msra.mxu0 0
      %2898 = vmatprep.subr.bf16.mxu0 0
      %2899 = vmatpush1.bf16.msra.mxu0 0
      %2900 = vmatprep.subr.bf16.mxu0 0
      %2901 = vmatpush1.bf16.msra.mxu0 %v2884
      %2902 = vmatprep.subr.bf16.mxu0 0
      %2903 = vmatpush2.bf16.msra.mxu0 0
      %2904 = vmatprep.subr.bf16.mxu0 0
      %2905 = vmatpush2.bf16.msra.mxu0 0
      %2906 = vmatprep.subr.bf16.mxu0 0
      %2907 = vmatpush2.bf16.msra.mxu0 0
      %2908 = vmatprep.subr.bf16.mxu0 0
      %2909 = vmatpush2.bf16.msra.mxu0 0
      %2910 = vmatprep.subr.bf16.mxu0 0
      %2911 = vmatpush2.bf16.msra.mxu0 0
      %2912 = vmatprep.subr.bf16.mxu0 0
      %2913 = vmatpush2.bf16.msra.mxu0 0
      %2914 = vmatprep.subr.bf16.mxu0 0
      %2915 = vmatpush2.bf16.msra.mxu0 0
      %2916 = vmatprep.subr.bf16.mxu0 0
      %2917 = vmatpush2.bf16.msra.mxu0 0
      %2918 = vmatprep.mubr.bf16.mxu0 0
      %2919 = vmatmul.mubr.bf16.gmra.mxu0 %v2836
      %v2920 = vpop.f32.mrf.mxu0
      %v2921 = vadd.f32 0.0, %v2920
      %v2922 = vpop.f32.mrf.mxu0
      %v2923 = vpop.f32.mrf.mxu0
      %v2924 = vadd.f32 0.0, %v2923
      %v2925 = vpop.f32.mrf.mxu0
      %2926 = vmatprep.mubr.bf16.mxu0 0
      %2927 = vmatmul.mubr.bf16.gmra.mxu0 %v2839
      %v2928 = vpop.f32.mrf.mxu0
      %v2929 = vadd.f32 0.0, %v2928
      %v2930 = vpop.f32.mrf.mxu0
      %v2931 = vpop.f32.mrf.mxu0
      %v2932 = vadd.f32 0.0, %v2931
      %v2933 = vpop.f32.mrf.mxu0
      %2934 = vmatprep.mubr.bf16.mxu0 0
      %2935 = vmatmul.mubr.bf16.gmra.mxu0 %v2842
      %v2936 = vpop.f32.mrf.mxu0
      %v2937 = vadd.f32 0.0, %v2936
      %v2938 = vpop.f32.mrf.mxu0
      %v2939 = vpop.f32.mrf.mxu0
      %v2940 = vadd.f32 0.0, %v2939
      %v2941 = vpop.f32.mrf.mxu0
      %2942 = vmatprep.mubr.bf16.mxu0 0
      %2943 = vmatmul.mubr.bf16.gmra.mxu0 %v2845
      %v2944 = vpop.f32.mrf.mxu0
      %v2945 = vadd.f32 0.0, %v2944
      %v2946 = vpop.f32.mrf.mxu0
      %v2947 = vpop.f32.mrf.mxu0
      %v2948 = vadd.f32 0.0, %v2947
      %v2949 = vpop.f32.mrf.mxu0
      %2950 = vmatprep.mubr.bf16.mxu0 0
      %2951 = vmatmul.mubr.bf16.gmra.mxu0 %v2848
      %v2952 = vpop.f32.mrf.mxu0
      %v2953 = vadd.f32 0.0, %v2952
      %v2954 = vpop.f32.mrf.mxu0
      %v2955 = vpop.f32.mrf.mxu0
      %v2956 = vadd.f32 0.0, %v2955
      %v2957 = vpop.f32.mrf.mxu0
      %2958 = vmatprep.mubr.bf16.mxu0 0
      %2959 = vmatmul.mubr.bf16.gmra.mxu0 %v2851
      %v2960 = vpop.f32.mrf.mxu0
      %v2961 = vadd.f32 0.0, %v2960
      %v2962 = vpop.f32.mrf.mxu0
      %v2963 = vpop.f32.mrf.mxu0
      %v2964 = vadd.f32 0.0, %v2963
      %v2965 = vpop.f32.mrf.mxu0
      %2966 = vmatprep.mubr.bf16.mxu0 0
      %2967 = vmatmul.mubr.bf16.gmra.mxu0 %v2854
      %v2968 = vpop.f32.mrf.mxu0
      %v2969 = vadd.f32 0.0, %v2968
      %v2970 = vpop.f32.mrf.mxu0
      %v2971 = vpop.f32.mrf.mxu0
      %v2972 = vadd.f32 0.0, %v2971
      %v2973 = vpop.f32.mrf.mxu0
      %2974 = vmatprep.mubr.bf16.mxu0 0
      %2975 = vmatmul.mubr.bf16.gmra.mxu0 %v2857
      %v2976 = vpop.f32.mrf.mxu0
      %v2977 = vadd.f32 0.0, %v2976
      %v2978 = vpop.f32.mrf.mxu0
      %v2979 = vpop.f32.mrf.mxu0
      %v2980 = vadd.f32 0.0, %v2979
      %v2981 = vpop.f32.mrf.mxu0
      %2982 = vmatprep.mubr.bf16.mxu0 0
      %2983 = vmatmul.mubr.bf16.gmra.mxu0 %v2860
      %v2984 = vpop.f32.mrf.mxu0
      %v2985 = vadd.f32 0.0, %v2984
      %v2986 = vpop.f32.mrf.mxu0
      %v2987 = vpop.f32.mrf.mxu0
      %v2988 = vadd.f32 0.0, %v2987
      %v2989 = vpop.f32.mrf.mxu0
      %2990 = vmatprep.mubr.bf16.mxu0 0
      %2991 = vmatmul.mubr.bf16.gmra.mxu0 %v2863
      %v2992 = vpop.f32.mrf.mxu0
      %v2993 = vadd.f32 0.0, %v2992
      %v2994 = vpop.f32.mrf.mxu0
      %v2995 = vpop.f32.mrf.mxu0
      %v2996 = vadd.f32 0.0, %v2995
      %v2997 = vpop.f32.mrf.mxu0
      %2998 = vmatprep.mubr.bf16.mxu0 0
      %2999 = vmatmul.mubr.bf16.gmra.mxu0 %v2866
      %v3000 = vpop.f32.mrf.mxu0
      %v3001 = vadd.f32 0.0, %v3000
      %v3002 = vpop.f32.mrf.mxu0
      %v3003 = vpop.f32.mrf.mxu0
      %v3004 = vadd.f32 0.0, %v3003
      %v3005 = vpop.f32.mrf.mxu0
      %3006 = vmatprep.mubr.bf16.mxu0 0
      %3007 = vmatmul.mubr.bf16.gmra.mxu0 %v2869
      %v3008 = vpop.f32.mrf.mxu0
      %v3009 = vadd.f32 0.0, %v3008
      %v3010 = vpop.f32.mrf.mxu0
      %v3011 = vpop.f32.mrf.mxu0
      %v3012 = vadd.f32 0.0, %v3011
      %v3013 = vpop.f32.mrf.mxu0
      %3014 = vmatprep.mubr.bf16.mxu0 0
      %3015 = vmatmul.mubr.bf16.gmra.mxu0 %v2872
      %v3016 = vpop.f32.mrf.mxu0
      %v3017 = vadd.f32 0.0, %v3016
      %v3018 = vpop.f32.mrf.mxu0
      %v3019 = vpop.f32.mrf.mxu0
      %v3020 = vadd.f32 0.0, %v3019
      %v3021 = vpop.f32.mrf.mxu0
      %3022 = vmatprep.mubr.bf16.mxu0 0
      %3023 = vmatmul.mubr.bf16.gmra.mxu0 %v2875
      %v3024 = vpop.f32.mrf.mxu0
      %v3025 = vadd.f32 0.0, %v3024
      %v3026 = vpop.f32.mrf.mxu0
      %v3027 = vpop.f32.mrf.mxu0
      %v3028 = vadd.f32 0.0, %v3027
      %v3029 = vpop.f32.mrf.mxu0
      %3030 = vmatprep.mubr.bf16.mxu0 0
      %3031 = vmatmul.mubr.bf16.gmra.mxu0 %v2878
      %v3032 = vpop.f32.mrf.mxu0
      %v3033 = vadd.f32 0.0, %v3032
      %v3034 = vpop.f32.mrf.mxu0
      %v3035 = vpop.f32.mrf.mxu0
      %v3036 = vadd.f32 0.0, %v3035
      %v3037 = vpop.f32.mrf.mxu0
      %3038 = vmatprep.mubr.bf16.mxu0 0
      %3039 = vmatmul.mubr.bf16.gmra.mxu0 %v2881
      %v3040 = vpop.f32.mrf.mxu0
      %v3041 = vadd.f32 0.0, %v3040
      %v3042 = vpop.f32.mrf.mxu0
      %v3043 = vpop.f32.mrf.mxu0
      %v3044 = vadd.f32 0.0, %v3043
      %v3045 = vpop.f32.mrf.mxu0
      %3046 = vdwg.mxu0
      %v3051 = vunpack.c.l.b16 %v2712
      %v3052 = vunpack.c.l.b16 %v2713
      %v3053 = vunpack.c.l.b16 %v2714
      %v3054 = vunpack.c.l.b16 %v2715
      %v3055 = vpack.c.b16 %v3052, %v3051
      %v3056 = vpack.c.b16 %v3054, %v3053
      %v3058 = vsel %vm348, %v3055, 0
      %v3061 = vsel %vm348, %v3056, 0
      %v3064 = vsel %vm397, %v2753, 0
      %3066 = vmatprep.subr.bf16.mxu0 0
      %3067 = vmatpush1.bf16.msra.mxu0 0
      %3068 = vmatprep.subr.bf16.mxu0 0
      %3069 = vmatpush1.bf16.msra.mxu0 0
      %3070 = vmatprep.subr.bf16.mxu0 0
      %3071 = vmatpush1.bf16.msra.mxu0 0
      %3072 = vmatprep.subr.bf16.mxu0 0
      %3073 = vmatpush1.bf16.msra.mxu0 0
      %3074 = vmatprep.subr.bf16.mxu0 0
      %3075 = vmatpush1.bf16.msra.mxu0 0
      %3076 = vmatprep.subr.bf16.mxu0 0
      %3077 = vmatpush1.bf16.msra.mxu0 0
      %3078 = vmatprep.subr.bf16.mxu0 0
      %3079 = vmatpush1.bf16.msra.mxu0 0
      %3080 = vmatprep.subr.bf16.mxu0 0
      %3081 = vmatpush1.bf16.msra.mxu0 %v3064
      %3082 = vmatprep.subr.bf16.mxu0 0
      %3083 = vmatpush2.bf16.msra.mxu0 0
      %3084 = vmatprep.subr.bf16.mxu0 0
      %3085 = vmatpush2.bf16.msra.mxu0 0
      %3086 = vmatprep.subr.bf16.mxu0 0
      %3087 = vmatpush2.bf16.msra.mxu0 0
      %3088 = vmatprep.subr.bf16.mxu0 0
      %3089 = vmatpush2.bf16.msra.mxu0 0
      %3090 = vmatprep.subr.bf16.mxu0 0
      %3091 = vmatpush2.bf16.msra.mxu0 0
      %3092 = vmatprep.subr.bf16.mxu0 0
      %3093 = vmatpush2.bf16.msra.mxu0 0
      %3094 = vmatprep.subr.bf16.mxu0 0
      %3095 = vmatpush2.bf16.msra.mxu0 0
      %3096 = vmatprep.subr.bf16.mxu0 0
      %3097 = vmatpush2.bf16.msra.mxu0 0
      %3098 = vmatprep.mubr.bf16.mxu0 0
      %3099 = vmatmul.mubr.bf16.gmra.mxu0 %v3058
      %v3100 = vpop.f32.mrf.mxu0
      %v3101 = vadd.f32 %v2921, %v3100
      %v3102 = vpop.f32.mrf.mxu0
      %v3103 = vpop.f32.mrf.mxu0
      %v3104 = vadd.f32 %v2924, %v3103
      %v3105 = vpop.f32.mrf.mxu0
      %3106 = vmatprep.mubr.bf16.mxu0 0
      %3107 = vmatmul.mubr.bf16.gmra.mxu0 %v3061
      %v3108 = vpop.f32.mrf.mxu0
      %v3109 = vadd.f32 %v2929, %v3108
      %v3110 = vpop.f32.mrf.mxu0
      %v3111 = vpop.f32.mrf.mxu0
      %v3112 = vadd.f32 %v2932, %v3111
      %v3113 = vpop.f32.mrf.mxu0
      %3114 = vmatprep.mubr.bf16.mxu0 0
      %3115 = vmatmul.mubr.bf16.gmra.mxu0 %v2836
      %v3116 = vpop.f32.mrf.mxu0
      %v3117 = vadd.f32 %v2937, %v3116
      %v3118 = vpop.f32.mrf.mxu0
      %v3119 = vpop.f32.mrf.mxu0
      %v3120 = vadd.f32 %v2940, %v3119
      %v3121 = vpop.f32.mrf.mxu0
      %3122 = vmatprep.mubr.bf16.mxu0 0
      %3123 = vmatmul.mubr.bf16.gmra.mxu0 %v2839
      %v3124 = vpop.f32.mrf.mxu0
      %v3125 = vadd.f32 %v2945, %v3124
      %v3126 = vpop.f32.mrf.mxu0
      %v3127 = vpop.f32.mrf.mxu0
      %v3128 = vadd.f32 %v2948, %v3127
      %v3129 = vpop.f32.mrf.mxu0
      %3130 = vmatprep.mubr.bf16.mxu0 0
      %3131 = vmatmul.mubr.bf16.gmra.mxu0 %v2842
      %v3132 = vpop.f32.mrf.mxu0
      %v3133 = vadd.f32 %v2953, %v3132
      %v3134 = vpop.f32.mrf.mxu0
      %v3135 = vpop.f32.mrf.mxu0
      %v3136 = vadd.f32 %v2956, %v3135
      %v3137 = vpop.f32.mrf.mxu0
      %3138 = vmatprep.mubr.bf16.mxu0 0
      %3139 = vmatmul.mubr.bf16.gmra.mxu0 %v2845
      %v3140 = vpop.f32.mrf.mxu0
      %v3141 = vadd.f32 %v2961, %v3140
      %v3142 = vpop.f32.mrf.mxu0
      %v3143 = vpop.f32.mrf.mxu0
      %v3144 = vadd.f32 %v2964, %v3143
      %v3145 = vpop.f32.mrf.mxu0
      %3146 = vmatprep.mubr.bf16.mxu0 0
      %3147 = vmatmul.mubr.bf16.gmra.mxu0 %v2848
      %v3148 = vpop.f32.mrf.mxu0
      %v3149 = vadd.f32 %v2969, %v3148
      %v3150 = vpop.f32.mrf.mxu0
      %v3151 = vpop.f32.mrf.mxu0
      %v3152 = vadd.f32 %v2972, %v3151
      %v3153 = vpop.f32.mrf.mxu0
      %3154 = vmatprep.mubr.bf16.mxu0 0
      %3155 = vmatmul.mubr.bf16.gmra.mxu0 %v2851
      %v3156 = vpop.f32.mrf.mxu0
      %v3157 = vadd.f32 %v2977, %v3156
      %v3158 = vpop.f32.mrf.mxu0
      %v3159 = vpop.f32.mrf.mxu0
      %v3160 = vadd.f32 %v2980, %v3159
      %v3161 = vpop.f32.mrf.mxu0
      %3162 = vmatprep.mubr.bf16.mxu0 0
      %3163 = vmatmul.mubr.bf16.gmra.mxu0 %v2854
      %v3164 = vpop.f32.mrf.mxu0
      %v3165 = vadd.f32 %v2985, %v3164
      %v3166 = vpop.f32.mrf.mxu0
      %v3167 = vpop.f32.mrf.mxu0
      %v3168 = vadd.f32 %v2988, %v3167
      %v3169 = vpop.f32.mrf.mxu0
      %3170 = vmatprep.mubr.bf16.mxu0 0
      %3171 = vmatmul.mubr.bf16.gmra.mxu0 %v2857
      %v3172 = vpop.f32.mrf.mxu0
      %v3173 = vadd.f32 %v2993, %v3172
      %v3174 = vpop.f32.mrf.mxu0
      %v3175 = vpop.f32.mrf.mxu0
      %v3176 = vadd.f32 %v2996, %v3175
      %v3177 = vpop.f32.mrf.mxu0
      %3178 = vmatprep.mubr.bf16.mxu0 0
      %3179 = vmatmul.mubr.bf16.gmra.mxu0 %v2860
      %v3180 = vpop.f32.mrf.mxu0
      %v3181 = vadd.f32 %v3001, %v3180
      %v3182 = vpop.f32.mrf.mxu0
      %v3183 = vpop.f32.mrf.mxu0
      %v3184 = vadd.f32 %v3004, %v3183
      %v3185 = vpop.f32.mrf.mxu0
      %3186 = vmatprep.mubr.bf16.mxu0 0
      %3187 = vmatmul.mubr.bf16.gmra.mxu0 %v2863
      %v3188 = vpop.f32.mrf.mxu0
      %v3189 = vadd.f32 %v3009, %v3188
      %v3190 = vpop.f32.mrf.mxu0
      %v3191 = vpop.f32.mrf.mxu0
      %v3192 = vadd.f32 %v3012, %v3191
      %v3193 = vpop.f32.mrf.mxu0
      %3194 = vmatprep.mubr.bf16.mxu0 0
      %3195 = vmatmul.mubr.bf16.gmra.mxu0 %v2866
      %v3196 = vpop.f32.mrf.mxu0
      %v3197 = vadd.f32 %v3017, %v3196
      %v3198 = vpop.f32.mrf.mxu0
      %v3199 = vpop.f32.mrf.mxu0
      %v3200 = vadd.f32 %v3020, %v3199
      %v3201 = vpop.f32.mrf.mxu0
      %3202 = vmatprep.mubr.bf16.mxu0 0
      %3203 = vmatmul.mubr.bf16.gmra.mxu0 %v2869
      %v3204 = vpop.f32.mrf.mxu0
      %v3205 = vadd.f32 %v3025, %v3204
      %v3206 = vpop.f32.mrf.mxu0
      %v3207 = vpop.f32.mrf.mxu0
      %v3208 = vadd.f32 %v3028, %v3207
      %v3209 = vpop.f32.mrf.mxu0
      %3210 = vmatprep.mubr.bf16.mxu0 0
      %3211 = vmatmul.mubr.bf16.gmra.mxu0 %v2872
      %v3212 = vpop.f32.mrf.mxu0
      %v3213 = vadd.f32 %v3033, %v3212
      %v3214 = vpop.f32.mrf.mxu0
      %v3215 = vpop.f32.mrf.mxu0
      %v3216 = vadd.f32 %v3036, %v3215
      %v3217 = vpop.f32.mrf.mxu0
      %3218 = vmatprep.mubr.bf16.mxu0 0
      %3219 = vmatmul.mubr.bf16.gmra.mxu0 %v2875
      %v3220 = vpop.f32.mrf.mxu0
      %v3221 = vadd.f32 %v3041, %v3220
      %v3222 = vpop.f32.mrf.mxu0
      %v3223 = vpop.f32.mrf.mxu0
      %v3224 = vadd.f32 %v3044, %v3223
      %v3225 = vpop.f32.mrf.mxu0
      %3226 = vdwg.mxu0
      %v3227 = vld [vmem:[%s742] sm:$0x3]
      %v3232 = vunpack.c.l.b16 %v2748
      %v3233 = vunpack.c.l.b16 %v2749
      %v3234 = vunpack.c.l.b16 %v2750
      %v3235 = vunpack.c.l.b16 %v2751
      %v3236 = vpack.c.b16 %v3233, %v3232
      %v3237 = vpack.c.b16 %v3235, %v3234
      %v3239 = vsel %vm348, %v3236, 0
      %v3242 = vsel %vm348, %v3237, 0
      %v3245 = vsel %vm397, %v3227, 0
      %3247 = vmatprep.subr.bf16.mxu0 0
      %3248 = vmatpush1.bf16.msra.mxu0 0
      %3249 = vmatprep.subr.bf16.mxu0 0
      %3250 = vmatpush1.bf16.msra.mxu0 0
      %3251 = vmatprep.subr.bf16.mxu0 0
      %3252 = vmatpush1.bf16.msra.mxu0 0
      %3253 = vmatprep.subr.bf16.mxu0 0
      %3254 = vmatpush1.bf16.msra.mxu0 0
      %3255 = vmatprep.subr.bf16.mxu0 0
      %3256 = vmatpush1.bf16.msra.mxu0 0
      %3257 = vmatprep.subr.bf16.mxu0 0
      %3258 = vmatpush1.bf16.msra.mxu0 0
      %3259 = vmatprep.subr.bf16.mxu0 0
      %3260 = vmatpush1.bf16.msra.mxu0 0
      %3261 = vmatprep.subr.bf16.mxu0 0
      %3262 = vmatpush1.bf16.msra.mxu0 %v3245
      %3263 = vmatprep.subr.bf16.mxu0 0
      %3264 = vmatpush2.bf16.msra.mxu0 0
      %3265 = vmatprep.subr.bf16.mxu0 0
      %3266 = vmatpush2.bf16.msra.mxu0 0
      %3267 = vmatprep.subr.bf16.mxu0 0
      %3268 = vmatpush2.bf16.msra.mxu0 0
      %3269 = vmatprep.subr.bf16.mxu0 0
      %3270 = vmatpush2.bf16.msra.mxu0 0
      %3271 = vmatprep.subr.bf16.mxu0 0
      %3272 = vmatpush2.bf16.msra.mxu0 0
      %3273 = vmatprep.subr.bf16.mxu0 0
      %3274 = vmatpush2.bf16.msra.mxu0 0
      %3275 = vmatprep.subr.bf16.mxu0 0
      %3276 = vmatpush2.bf16.msra.mxu0 0
      %3277 = vmatprep.subr.bf16.mxu0 0
      %3278 = vmatpush2.bf16.msra.mxu0 0
      %3279 = vmatprep.mubr.bf16.mxu0 0
      %3280 = vmatmul.mubr.bf16.gmra.mxu0 %v2842
      %v3281 = vpop.f32.mrf.mxu0
      %v3282 = vadd.f32 0.0, %v3281
      %v3283 = vpop.f32.mrf.mxu0
      %v3284 = vpop.f32.mrf.mxu0
      %v3285 = vadd.f32 0.0, %v3284
      %v3286 = vpop.f32.mrf.mxu0
      %3287 = vmatprep.mubr.bf16.mxu0 0
      %3288 = vmatmul.mubr.bf16.gmra.mxu0 %v2845
      %v3289 = vpop.f32.mrf.mxu0
      %v3290 = vadd.f32 0.0, %v3289
      %v3291 = vpop.f32.mrf.mxu0
      %v3292 = vpop.f32.mrf.mxu0
      %v3293 = vadd.f32 0.0, %v3292
      %v3294 = vpop.f32.mrf.mxu0
      %3295 = vmatprep.mubr.bf16.mxu0 0
      %3296 = vmatmul.mubr.bf16.gmra.mxu0 %v2848
      %v3297 = vpop.f32.mrf.mxu0
      %v3298 = vadd.f32 0.0, %v3297
      %v3299 = vpop.f32.mrf.mxu0
      %v3300 = vpop.f32.mrf.mxu0
      %v3301 = vadd.f32 0.0, %v3300
      %v3302 = vpop.f32.mrf.mxu0
      %3303 = vmatprep.mubr.bf16.mxu0 0
      %3304 = vmatmul.mubr.bf16.gmra.mxu0 %v2851
      %v3305 = vpop.f32.mrf.mxu0
      %v3306 = vadd.f32 0.0, %v3305
      %v3307 = vpop.f32.mrf.mxu0
      %v3308 = vpop.f32.mrf.mxu0
      %v3309 = vadd.f32 0.0, %v3308
      %v3310 = vpop.f32.mrf.mxu0
      %3311 = vmatprep.mubr.bf16.mxu0 0
      %3312 = vmatmul.mubr.bf16.gmra.mxu0 %v2854
      %v3313 = vpop.f32.mrf.mxu0
      %v3314 = vadd.f32 0.0, %v3313
      %v3315 = vpop.f32.mrf.mxu0
      %v3316 = vpop.f32.mrf.mxu0
      %v3317 = vadd.f32 0.0, %v3316
      %v3318 = vpop.f32.mrf.mxu0
      %3319 = vmatprep.mubr.bf16.mxu0 0
      %3320 = vmatmul.mubr.bf16.gmra.mxu0 %v2857
      %v3321 = vpop.f32.mrf.mxu0
      %v3322 = vadd.f32 0.0, %v3321
      %v3323 = vpop.f32.mrf.mxu0
      %v3324 = vpop.f32.mrf.mxu0
      %v3325 = vadd.f32 0.0, %v3324
      %v3326 = vpop.f32.mrf.mxu0
      %3327 = vmatprep.mubr.bf16.mxu0 0
      %3328 = vmatmul.mubr.bf16.gmra.mxu0 %v2860
      %v3329 = vpop.f32.mrf.mxu0
      %v3330 = vadd.f32 0.0, %v3329
      %v3331 = vpop.f32.mrf.mxu0
      %v3332 = vpop.f32.mrf.mxu0
      %v3333 = vadd.f32 0.0, %v3332
      %v3334 = vpop.f32.mrf.mxu0
      %3335 = vmatprep.mubr.bf16.mxu0 0
      %3336 = vmatmul.mubr.bf16.gmra.mxu0 %v2863
      %v3337 = vpop.f32.mrf.mxu0
      %v3338 = vadd.f32 0.0, %v3337
      %v3339 = vpop.f32.mrf.mxu0
      %v3340 = vpop.f32.mrf.mxu0
      %v3341 = vadd.f32 0.0, %v3340
      %v3342 = vpop.f32.mrf.mxu0
      %3343 = vmatprep.mubr.bf16.mxu0 0
      %3344 = vmatmul.mubr.bf16.gmra.mxu0 %v2866
      %v3345 = vpop.f32.mrf.mxu0
      %v3346 = vadd.f32 0.0, %v3345
      %v3347 = vpop.f32.mrf.mxu0
      %v3348 = vpop.f32.mrf.mxu0
      %v3349 = vadd.f32 0.0, %v3348
      %v3350 = vpop.f32.mrf.mxu0
      %3351 = vmatprep.mubr.bf16.mxu0 0
      %3352 = vmatmul.mubr.bf16.gmra.mxu0 %v2869
      %v3353 = vpop.f32.mrf.mxu0
      %v3354 = vadd.f32 0.0, %v3353
      %v3355 = vpop.f32.mrf.mxu0
      %v3356 = vpop.f32.mrf.mxu0
      %v3357 = vadd.f32 0.0, %v3356
      %v3358 = vpop.f32.mrf.mxu0
      %3359 = vmatprep.mubr.bf16.mxu0 0
      %3360 = vmatmul.mubr.bf16.gmra.mxu0 %v2872
      %v3361 = vpop.f32.mrf.mxu0
      %v3362 = vadd.f32 0.0, %v3361
      %v3363 = vpop.f32.mrf.mxu0
      %v3364 = vpop.f32.mrf.mxu0
      %v3365 = vadd.f32 0.0, %v3364
      %v3366 = vpop.f32.mrf.mxu0
      %3367 = vmatprep.mubr.bf16.mxu0 0
      %3368 = vmatmul.mubr.bf16.gmra.mxu0 %v2875
      %v3369 = vpop.f32.mrf.mxu0
      %v3370 = vadd.f32 0.0, %v3369
      %v3371 = vpop.f32.mrf.mxu0
      %v3372 = vpop.f32.mrf.mxu0
      %v3373 = vadd.f32 0.0, %v3372
      %v3374 = vpop.f32.mrf.mxu0
      %3375 = vmatprep.mubr.bf16.mxu0 0
      %3376 = vmatmul.mubr.bf16.gmra.mxu0 %v2878
      %v3377 = vpop.f32.mrf.mxu0
      %v3378 = vadd.f32 0.0, %v3377
      %v3379 = vpop.f32.mrf.mxu0
      %v3380 = vpop.f32.mrf.mxu0
      %v3381 = vadd.f32 0.0, %v3380
      %v3382 = vpop.f32.mrf.mxu0
      %3383 = vmatprep.mubr.bf16.mxu0 0
      %3384 = vmatmul.mubr.bf16.gmra.mxu0 %v2881
      %v3385 = vpop.f32.mrf.mxu0
      %v3386 = vadd.f32 0.0, %v3385
      %v3387 = vpop.f32.mrf.mxu0
      %v3388 = vpop.f32.mrf.mxu0
      %v3389 = vadd.f32 0.0, %v3388
      %v3390 = vpop.f32.mrf.mxu0
      %3391 = vmatprep.mubr.bf16.mxu0 0
      %3392 = vmatmul.mubr.bf16.gmra.mxu0 %v3239
      %v3393 = vpop.f32.mrf.mxu0
      %v3394 = vadd.f32 0.0, %v3393
      %v3395 = vpop.f32.mrf.mxu0
      %v3396 = vpop.f32.mrf.mxu0
      %v3397 = vadd.f32 0.0, %v3396
      %v3398 = vpop.f32.mrf.mxu0
      %3399 = vmatprep.mubr.bf16.mxu0 0
      %3400 = vmatmul.mubr.bf16.gmra.mxu0 %v3242
      %v3401 = vpop.f32.mrf.mxu0
      %v3402 = vadd.f32 0.0, %v3401
      %v3403 = vpop.f32.mrf.mxu0
      %v3404 = vpop.f32.mrf.mxu0
      %v3405 = vadd.f32 0.0, %v3404
      %v3406 = vpop.f32.mrf.mxu0
      %3407 = vdwg.mxu0
      %v3408 = vadd.f32 %v3101, %v3282
      %v3409 = vadd.f32 %v3104, %v3285
      %v3410 = vadd.f32 %v3109, %v3290
      %v3411 = vadd.f32 %v3112, %v3293
      %v3412 = vadd.f32 %v3117, %v3298
      %v3413 = vadd.f32 %v3120, %v3301
      %v3414 = vadd.f32 %v3125, %v3306
      %v3415 = vadd.f32 %v3128, %v3309
      %v3416 = vadd.f32 %v3133, %v3314
      %v3417 = vadd.f32 %v3136, %v3317
      %v3418 = vadd.f32 %v3141, %v3322
      %v3419 = vadd.f32 %v3144, %v3325
      %v3420 = vadd.f32 %v3149, %v3330
      %v3421 = vadd.f32 %v3152, %v3333
      %v3422 = vadd.f32 %v3157, %v3338
      %v3423 = vadd.f32 %v3160, %v3341
      %v3424 = vadd.f32 %v3165, %v3346
      %v3425 = vadd.f32 %v3168, %v3349
      %v3426 = vadd.f32 %v3173, %v3354
      %v3427 = vadd.f32 %v3176, %v3357
      %v3428 = vadd.f32 %v3181, %v3362
      %v3429 = vadd.f32 %v3184, %v3365
      %v3430 = vadd.f32 %v3189, %v3370
      %v3431 = vadd.f32 %v3192, %v3373
      %v3432 = vadd.f32 %v3197, %v3378
      %v3433 = vadd.f32 %v3200, %v3381
      %v3434 = vadd.f32 %v3205, %v3386
      %v3435 = vadd.f32 %v3208, %v3389
      %v3436 = vadd.f32 %v3213, %v3394
      %v3437 = vadd.f32 %v3216, %v3397
      %v3438 = vadd.f32 %v3221, %v3402
      %v3439 = vadd.f32 %v3224, %v3405
      %v3440 = vld [vmem:[%s956] sm:$0x3]
      %v3441 = vpack.c.b16 %v2815, %v2815
      %v3442 = vshrl.u32 %v3055, 16
      %v3444 = vshll.u32 %v3055, 16
      %v3446 = vrot.slane %v3444, 1
      %v3447 = vor.u32 %v3442, %v3446
      %v3448 = vshll.u32 %v3056, 16
      %v3450 = vrot.slane %v3448, 1
      %v3451 = vsel %vm959, %v3447, %v3450
      %v3452 = vshrl.u32 %v3056, 16
      %v3454 = vor.u32 %v3452, %v3450
      %v3455 = vshll.u32 %v2819, 16
      %v3457 = vrot.slane %v3455, 1
      %v3458 = vsel %vm959, %v3454, %v3457
      %v3459 = vshrl.u32 %v2819, 16
      %v3461 = vor.u32 %v3459, %v3457
      %v3462 = vshll.u32 %v2820, 16
      %v3464 = vrot.slane %v3462, 1
      %v3465 = vsel %vm959, %v3461, %v3464
      %v3466 = vshrl.u32 %v2820, 16
      %v3468 = vor.u32 %v3466, %v3464
      %v3469 = vshll.u32 %v2821, 16
      %v3471 = vrot.slane %v3469, 1
      %v3472 = vsel %vm959, %v3468, %v3471
      %v3473 = vshrl.u32 %v2821, 16
      %v3475 = vor.u32 %v3473, %v3471
      %v3476 = vshll.u32 %v2822, 16
      %v3478 = vrot.slane %v3476, 1
      %v3479 = vsel %vm959, %v3475, %v3478
      %v3480 = vshrl.u32 %v2822, 16
      %v3482 = vor.u32 %v3480, %v3478
      %v3483 = vshll.u32 %v2823, 16
      %v3485 = vrot.slane %v3483, 1
      %v3486 = vsel %vm959, %v3482, %v3485
      %v3487 = vshrl.u32 %v2823, 16
      %v3489 = vor.u32 %v3487, %v3485
      %v3490 = vshll.u32 %v2824, 16
      %v3492 = vrot.slane %v3490, 1
      %v3493 = vsel %vm959, %v3489, %v3492
      %v3494 = vshrl.u32 %v2824, 16
      %v3496 = vor.u32 %v3494, %v3492
      %v3497 = vshll.u32 %v2825, 16
      %v3499 = vrot.slane %v3497, 1
      %v3500 = vsel %vm959, %v3496, %v3499
      %v3501 = vshrl.u32 %v2825, 16
      %v3503 = vor.u32 %v3501, %v3499
      %v3504 = vshll.u32 %v2826, 16
      %v3506 = vrot.slane %v3504, 1
      %v3507 = vsel %vm959, %v3503, %v3506
      %v3508 = vshrl.u32 %v2826, 16
      %v3510 = vor.u32 %v3508, %v3506
      %v3511 = vshll.u32 %v2827, 16
      %v3513 = vrot.slane %v3511, 1
      %v3514 = vsel %vm959, %v3510, %v3513
      %v3515 = vshrl.u32 %v2827, 16
      %v3517 = vor.u32 %v3515, %v3513
      %v3518 = vshll.u32 %v2828, 16
      %v3520 = vrot.slane %v3518, 1
      %v3521 = vsel %vm959, %v3517, %v3520
      %v3522 = vshrl.u32 %v2828, 16
      %v3524 = vor.u32 %v3522, %v3520
      %v3525 = vshll.u32 %v2829, 16
      %v3527 = vrot.slane %v3525, 1
      %v3528 = vsel %vm959, %v3524, %v3527
      %v3529 = vshrl.u32 %v2829, 16
      %v3531 = vor.u32 %v3529, %v3527
      %v3532 = vshll.u32 %v2830, 16
      %v3534 = vrot.slane %v3532, 1
      %v3535 = vsel %vm959, %v3531, %v3534
      %v3536 = vshrl.u32 %v2830, 16
      %v3538 = vor.u32 %v3536, %v3534
      %v3539 = vshll.u32 %v2831, 16
      %v3541 = vrot.slane %v3539, 1
      %v3542 = vsel %vm959, %v3538, %v3541
      %v3543 = vshrl.u32 %v2831, 16
      %v3545 = vor.u32 %v3543, %v3541
      %v3546 = vshll.u32 %v2832, 16
      %v3548 = vrot.slane %v3546, 1
      %v3549 = vsel %vm959, %v3545, %v3548
      %v3550 = vshrl.u32 %v2832, 16
      %v3552 = vor.u32 %v3550, %v3548
      %v3554 = vshll.u32 %v3441, 16
      %v3556 = vrot.slane %v3554, 1
      %v3557 = vsel %vm959, %v3552, %v3556
      %v3559 = vsel %vm348, %v3451, 0
      %v3562 = vsel %vm348, %v3458, 0
      %v3565 = vsel %vm348, %v3465, 0
      %v3568 = vsel %vm348, %v3472, 0
      %v3571 = vsel %vm348, %v3479, 0
      %v3574 = vsel %vm348, %v3486, 0
      %v3577 = vsel %vm348, %v3493, 0
      %v3580 = vsel %vm348, %v3500, 0
      %v3583 = vsel %vm348, %v3507, 0
      %v3586 = vsel %vm348, %v3514, 0
      %v3589 = vsel %vm348, %v3521, 0
      %v3592 = vsel %vm348, %v3528, 0
      %v3595 = vsel %vm348, %v3535, 0
      %v3598 = vsel %vm348, %v3542, 0
      %v3601 = vsel %vm348, %v3549, 0
      %v3604 = vsel %vm348, %v3557, 0
      %v3607 = vsel %vm397, %v3440, 0
      %3609 = vmatprep.subr.bf16.mxu0 0
      %3610 = vmatpush1.bf16.msra.mxu0 0
      %3611 = vmatprep.subr.bf16.mxu0 0
      %3612 = vmatpush1.bf16.msra.mxu0 0
      %3613 = vmatprep.subr.bf16.mxu0 0
      %3614 = vmatpush1.bf16.msra.mxu0 0
      %3615 = vmatprep.subr.bf16.mxu0 0
      %3616 = vmatpush1.bf16.msra.mxu0 0
      %3617 = vmatprep.subr.bf16.mxu0 0
      %3618 = vmatpush1.bf16.msra.mxu0 0
      %3619 = vmatprep.subr.bf16.mxu0 0
      %3620 = vmatpush1.bf16.msra.mxu0 0
      %3621 = vmatprep.subr.bf16.mxu0 0
      %3622 = vmatpush1.bf16.msra.mxu0 0
      %3623 = vmatprep.subr.bf16.mxu0 0
      %3624 = vmatpush1.bf16.msra.mxu0 %v3607
      %3625 = vmatprep.subr.bf16.mxu0 0
      %3626 = vmatpush2.bf16.msra.mxu0 0
      %3627 = vmatprep.subr.bf16.mxu0 0
      %3628 = vmatpush2.bf16.msra.mxu0 0
      %3629 = vmatprep.subr.bf16.mxu0 0
      %3630 = vmatpush2.bf16.msra.mxu0 0
      %3631 = vmatprep.subr.bf16.mxu0 0
      %3632 = vmatpush2.bf16.msra.mxu0 0
      %3633 = vmatprep.subr.bf16.mxu0 0
      %3634 = vmatpush2.bf16.msra.mxu0 0
      %3635 = vmatprep.subr.bf16.mxu0 0
      %3636 = vmatpush2.bf16.msra.mxu0 0
      %3637 = vmatprep.subr.bf16.mxu0 0
      %3638 = vmatpush2.bf16.msra.mxu0 0
      %3639 = vmatprep.subr.bf16.mxu0 0
      %3640 = vmatpush2.bf16.msra.mxu0 0
      %3641 = vmatprep.mubr.bf16.mxu0 0
      %3642 = vmatmul.mubr.bf16.gmra.mxu0 %v3559
      %v3643 = vpop.f32.mrf.mxu0
      %v3644 = vadd.f32 0.0, %v3643
      %v3645 = vpop.f32.mrf.mxu0
      %v3646 = vpop.f32.mrf.mxu0
      %v3647 = vadd.f32 0.0, %v3646
      %v3648 = vpop.f32.mrf.mxu0
      %3649 = vmatprep.mubr.bf16.mxu0 0
      %3650 = vmatmul.mubr.bf16.gmra.mxu0 %v3562
      %v3651 = vpop.f32.mrf.mxu0
      %v3652 = vadd.f32 0.0, %v3651
      %v3653 = vpop.f32.mrf.mxu0
      %v3654 = vpop.f32.mrf.mxu0
      %v3655 = vadd.f32 0.0, %v3654
      %v3656 = vpop.f32.mrf.mxu0
      %3657 = vmatprep.mubr.bf16.mxu0 0
      %3658 = vmatmul.mubr.bf16.gmra.mxu0 %v3565
      %v3659 = vpop.f32.mrf.mxu0
      %v3660 = vadd.f32 0.0, %v3659
      %v3661 = vpop.f32.mrf.mxu0
      %v3662 = vpop.f32.mrf.mxu0
      %v3663 = vadd.f32 0.0, %v3662
      %v3664 = vpop.f32.mrf.mxu0
      %3665 = vmatprep.mubr.bf16.mxu0 0
      %3666 = vmatmul.mubr.bf16.gmra.mxu0 %v3568
      %v3667 = vpop.f32.mrf.mxu0
      %v3668 = vadd.f32 0.0, %v3667
      %v3669 = vpop.f32.mrf.mxu0
      %v3670 = vpop.f32.mrf.mxu0
      %v3671 = vadd.f32 0.0, %v3670
      %v3672 = vpop.f32.mrf.mxu0
      %3673 = vmatprep.mubr.bf16.mxu0 0
      %3674 = vmatmul.mubr.bf16.gmra.mxu0 %v3571
      %v3675 = vpop.f32.mrf.mxu0
      %v3676 = vadd.f32 0.0, %v3675
      %v3677 = vpop.f32.mrf.mxu0
      %v3678 = vpop.f32.mrf.mxu0
      %v3679 = vadd.f32 0.0, %v3678
      %v3680 = vpop.f32.mrf.mxu0
      %3681 = vmatprep.mubr.bf16.mxu0 0
      %3682 = vmatmul.mubr.bf16.gmra.mxu0 %v3574
      %v3683 = vpop.f32.mrf.mxu0
      %v3684 = vadd.f32 0.0, %v3683
      %v3685 = vpop.f32.mrf.mxu0
      %v3686 = vpop.f32.mrf.mxu0
      %v3687 = vadd.f32 0.0, %v3686
      %v3688 = vpop.f32.mrf.mxu0
      %3689 = vmatprep.mubr.bf16.mxu0 0
      %3690 = vmatmul.mubr.bf16.gmra.mxu0 %v3577
      %v3691 = vpop.f32.mrf.mxu0
      %v3692 = vadd.f32 0.0, %v3691
      %v3693 = vpop.f32.mrf.mxu0
      %v3694 = vpop.f32.mrf.mxu0
      %v3695 = vadd.f32 0.0, %v3694
      %v3696 = vpop.f32.mrf.mxu0
      %3697 = vmatprep.mubr.bf16.mxu0 0
      %3698 = vmatmul.mubr.bf16.gmra.mxu0 %v3580
      %v3699 = vpop.f32.mrf.mxu0
      %v3700 = vadd.f32 0.0, %v3699
      %v3701 = vpop.f32.mrf.mxu0
      %v3702 = vpop.f32.mrf.mxu0
      %v3703 = vadd.f32 0.0, %v3702
      %v3704 = vpop.f32.mrf.mxu0
      %3705 = vmatprep.mubr.bf16.mxu0 0
      %3706 = vmatmul.mubr.bf16.gmra.mxu0 %v3583
      %v3707 = vpop.f32.mrf.mxu0
      %v3708 = vadd.f32 0.0, %v3707
      %v3709 = vpop.f32.mrf.mxu0
      %v3710 = vpop.f32.mrf.mxu0
      %v3711 = vadd.f32 0.0, %v3710
      %v3712 = vpop.f32.mrf.mxu0
      %3713 = vmatprep.mubr.bf16.mxu0 0
      %3714 = vmatmul.mubr.bf16.gmra.mxu0 %v3586
      %v3715 = vpop.f32.mrf.mxu0
      %v3716 = vadd.f32 0.0, %v3715
      %v3717 = vpop.f32.mrf.mxu0
      %v3718 = vpop.f32.mrf.mxu0
      %v3719 = vadd.f32 0.0, %v3718
      %v3720 = vpop.f32.mrf.mxu0
      %3721 = vmatprep.mubr.bf16.mxu0 0
      %3722 = vmatmul.mubr.bf16.gmra.mxu0 %v3589
      %v3723 = vpop.f32.mrf.mxu0
      %v3724 = vadd.f32 0.0, %v3723
      %v3725 = vpop.f32.mrf.mxu0
      %v3726 = vpop.f32.mrf.mxu0
      %v3727 = vadd.f32 0.0, %v3726
      %v3728 = vpop.f32.mrf.mxu0
      %3729 = vmatprep.mubr.bf16.mxu0 0
      %3730 = vmatmul.mubr.bf16.gmra.mxu0 %v3592
      %v3731 = vpop.f32.mrf.mxu0
      %v3732 = vadd.f32 0.0, %v3731
      %v3733 = vpop.f32.mrf.mxu0
      %v3734 = vpop.f32.mrf.mxu0
      %v3735 = vadd.f32 0.0, %v3734
      %v3736 = vpop.f32.mrf.mxu0
      %3737 = vmatprep.mubr.bf16.mxu0 0
      %3738 = vmatmul.mubr.bf16.gmra.mxu0 %v3595
      %v3739 = vpop.f32.mrf.mxu0
      %v3740 = vadd.f32 0.0, %v3739
      %v3741 = vpop.f32.mrf.mxu0
      %v3742 = vpop.f32.mrf.mxu0
      %v3743 = vadd.f32 0.0, %v3742
      %v3744 = vpop.f32.mrf.mxu0
      %3745 = vmatprep.mubr.bf16.mxu0 0
      %3746 = vmatmul.mubr.bf16.gmra.mxu0 %v3598
      %v3747 = vpop.f32.mrf.mxu0
      %v3748 = vadd.f32 0.0, %v3747
      %v3749 = vpop.f32.mrf.mxu0
      %v3750 = vpop.f32.mrf.mxu0
      %v3751 = vadd.f32 0.0, %v3750
      %v3752 = vpop.f32.mrf.mxu0
      %3753 = vmatprep.mubr.bf16.mxu0 0
      %3754 = vmatmul.mubr.bf16.gmra.mxu0 %v3601
      %v3755 = vpop.f32.mrf.mxu0
      %v3756 = vadd.f32 0.0, %v3755
      %v3757 = vpop.f32.mrf.mxu0
      %v3758 = vpop.f32.mrf.mxu0
      %v3759 = vadd.f32 0.0, %v3758
      %v3760 = vpop.f32.mrf.mxu0
      %3761 = vmatprep.mubr.bf16.mxu0 0
      %3762 = vmatmul.mubr.bf16.gmra.mxu0 %v3604
      %v3763 = vpop.f32.mrf.mxu0
      %v3764 = vadd.f32 0.0, %v3763
      %v3765 = vpop.f32.mrf.mxu0
      %v3766 = vpop.f32.mrf.mxu0
      %v3767 = vadd.f32 0.0, %v3766
      %v3768 = vpop.f32.mrf.mxu0
      %3769 = vdwg.mxu0
      %v3770 = vadd.f32 %v3408, %v3644
      %v3771 = vadd.f32 %v3409, %v3647
      %v3772 = vadd.f32 %v3410, %v3652
      %v3773 = vadd.f32 %v3411, %v3655
      %v3774 = vadd.f32 %v3412, %v3660
      %v3775 = vadd.f32 %v3413, %v3663
      %v3776 = vadd.f32 %v3414, %v3668
      %v3777 = vadd.f32 %v3415, %v3671
      %v3778 = vadd.f32 %v3416, %v3676
      %v3779 = vadd.f32 %v3417, %v3679
      %v3780 = vadd.f32 %v3418, %v3684
      %v3781 = vadd.f32 %v3419, %v3687
      %v3782 = vadd.f32 %v3420, %v3692
      %v3783 = vadd.f32 %v3421, %v3695
      %v3784 = vadd.f32 %v3422, %v3700
      %v3785 = vadd.f32 %v3423, %v3703
      %v3786 = vadd.f32 %v3424, %v3708
      %v3787 = vadd.f32 %v3425, %v3711
      %v3788 = vadd.f32 %v3426, %v3716
      %v3789 = vadd.f32 %v3427, %v3719
      %v3790 = vadd.f32 %v3428, %v3724
      %v3791 = vadd.f32 %v3429, %v3727
      %v3792 = vadd.f32 %v3430, %v3732
      %v3793 = vadd.f32 %v3431, %v3735
      %v3794 = vadd.f32 %v3432, %v3740
      %v3795 = vadd.f32 %v3433, %v3743
      %v3796 = vadd.f32 %v3434, %v3748
      %v3797 = vadd.f32 %v3435, %v3751
      %v3798 = vadd.f32 %v3436, %v3756
      %v3799 = vadd.f32 %v3437, %v3759
      %v3800 = vadd.f32 %v3438, %v3764
      %v3801 = vadd.f32 %v3439, %v3767
      %v3802 = vld [vmem:[%s1320] sm:$0x3]
      %v3803 = vpack.c.b16 %v3232, %v3232
      %v3804 = vshll.u32 %v2833, 16
      %v3806 = vrot.slane %v3804, 1
      %v3807 = vsel %vm959, %v3552, %v3806
      %v3808 = vshrl.u32 %v2833, 16
      %v3810 = vor.u32 %v3808, %v3806
      %v3811 = vshll.u32 %v2834, 16
      %v3813 = vrot.slane %v3811, 1
      %v3814 = vsel %vm959, %v3810, %v3813
      %v3815 = vshrl.u32 %v2834, 16
      %v3817 = vor.u32 %v3815, %v3813
      %v3819 = vshll.u32 %v3803, 16
      %v3821 = vrot.slane %v3819, 1
      %v3822 = vsel %vm959, %v3817, %v3821
      %v3824 = vsel %vm348, %v3807, 0
      %v3827 = vsel %vm348, %v3814, 0
      %v3830 = vsel %vm348, %v3822, 0
      %v3833 = vsel %vm397, %v3802, 0
      %3835 = vmatprep.subr.bf16.mxu0 0
      %3836 = vmatpush1.bf16.msra.mxu0 0
      %3837 = vmatprep.subr.bf16.mxu0 0
      %3838 = vmatpush1.bf16.msra.mxu0 0
      %3839 = vmatprep.subr.bf16.mxu0 0
      %3840 = vmatpush1.bf16.msra.mxu0 0
      %3841 = vmatprep.subr.bf16.mxu0 0
      %3842 = vmatpush1.bf16.msra.mxu0 0
      %3843 = vmatprep.subr.bf16.mxu0 0
      %3844 = vmatpush1.bf16.msra.mxu0 0
      %3845 = vmatprep.subr.bf16.mxu0 0
      %3846 = vmatpush1.bf16.msra.mxu0 0
      %3847 = vmatprep.subr.bf16.mxu0 0
      %3848 = vmatpush1.bf16.msra.mxu0 0
      %3849 = vmatprep.subr.bf16.mxu0 0
      %3850 = vmatpush1.bf16.msra.mxu0 %v3833
      %3851 = vmatprep.subr.bf16.mxu0 0
      %3852 = vmatpush2.bf16.msra.mxu0 0
      %3853 = vmatprep.subr.bf16.mxu0 0
      %3854 = vmatpush2.bf16.msra.mxu0 0
      %3855 = vmatprep.subr.bf16.mxu0 0
      %3856 = vmatpush2.bf16.msra.mxu0 0
      %3857 = vmatprep.subr.bf16.mxu0 0
      %3858 = vmatpush2.bf16.msra.mxu0 0
      %3859 = vmatprep.subr.bf16.mxu0 0
      %3860 = vmatpush2.bf16.msra.mxu0 0
      %3861 = vmatprep.subr.bf16.mxu0 0
      %3862 = vmatpush2.bf16.msra.mxu0 0
      %3863 = vmatprep.subr.bf16.mxu0 0
      %3864 = vmatpush2.bf16.msra.mxu0 0
      %3865 = vmatprep.subr.bf16.mxu0 0
      %3866 = vmatpush2.bf16.msra.mxu0 0
      %3867 = vmatprep.mubr.bf16.mxu0 0
      %3868 = vmatmul.mubr.bf16.gmra.mxu0 %v3565
      %v3869 = vpop.f32.mrf.mxu0
      %v3870 = vadd.f32 0.0, %v3869
      %v3871 = vpop.f32.mrf.mxu0
      %v3872 = vpop.f32.mrf.mxu0
      %v3873 = vadd.f32 0.0, %v3872
      %v3874 = vpop.f32.mrf.mxu0
      %3875 = vmatprep.mubr.bf16.mxu0 0
      %3876 = vmatmul.mubr.bf16.gmra.mxu0 %v3568
      %v3877 = vpop.f32.mrf.mxu0
      %v3878 = vadd.f32 0.0, %v3877
      %v3879 = vpop.f32.mrf.mxu0
      %v3880 = vpop.f32.mrf.mxu0
      %v3881 = vadd.f32 0.0, %v3880
      %v3882 = vpop.f32.mrf.mxu0
      %3883 = vmatprep.mubr.bf16.mxu0 0
      %3884 = vmatmul.mubr.bf16.gmra.mxu0 %v3571
      %v3885 = vpop.f32.mrf.mxu0
      %v3886 = vadd.f32 0.0, %v3885
      %v3887 = vpop.f32.mrf.mxu0
      %v3888 = vpop.f32.mrf.mxu0
      %v3889 = vadd.f32 0.0, %v3888
      %v3890 = vpop.f32.mrf.mxu0
      %3891 = vmatprep.mubr.bf16.mxu0 0
      %3892 = vmatmul.mubr.bf16.gmra.mxu0 %v3574
      %v3893 = vpop.f32.mrf.mxu0
      %v3894 = vadd.f32 0.0, %v3893
      %v3895 = vpop.f32.mrf.mxu0
      %v3896 = vpop.f32.mrf.mxu0
      %v3897 = vadd.f32 0.0, %v3896
      %v3898 = vpop.f32.mrf.mxu0
      %3899 = vmatprep.mubr.bf16.mxu0 0
      %3900 = vmatmul.mubr.bf16.gmra.mxu0 %v3577
      %v3901 = vpop.f32.mrf.mxu0
      %v3902 = vadd.f32 0.0, %v3901
      %v3903 = vpop.f32.mrf.mxu0
      %v3904 = vpop.f32.mrf.mxu0
      %v3905 = vadd.f32 0.0, %v3904
      %v3906 = vpop.f32.mrf.mxu0
      %3907 = vmatprep.mubr.bf16.mxu0 0
      %3908 = vmatmul.mubr.bf16.gmra.mxu0 %v3580
      %v3909 = vpop.f32.mrf.mxu0
      %v3910 = vadd.f32 0.0, %v3909
      %v3911 = vpop.f32.mrf.mxu0
      %v3912 = vpop.f32.mrf.mxu0
      %v3913 = vadd.f32 0.0, %v3912
      %v3914 = vpop.f32.mrf.mxu0
      %3915 = vmatprep.mubr.bf16.mxu0 0
      %3916 = vmatmul.mubr.bf16.gmra.mxu0 %v3583
      %v3917 = vpop.f32.mrf.mxu0
      %v3918 = vadd.f32 0.0, %v3917
      %v3919 = vpop.f32.mrf.mxu0
      %v3920 = vpop.f32.mrf.mxu0
      %v3921 = vadd.f32 0.0, %v3920
      %v3922 = vpop.f32.mrf.mxu0
      %3923 = vmatprep.mubr.bf16.mxu0 0
      %3924 = vmatmul.mubr.bf16.gmra.mxu0 %v3586
      %v3925 = vpop.f32.mrf.mxu0
      %v3926 = vadd.f32 0.0, %v3925
      %v3927 = vpop.f32.mrf.mxu0
      %v3928 = vpop.f32.mrf.mxu0
      %v3929 = vadd.f32 0.0, %v3928
      %v3930 = vpop.f32.mrf.mxu0
      %3931 = vmatprep.mubr.bf16.mxu0 0
      %3932 = vmatmul.mubr.bf16.gmra.mxu0 %v3589
      %v3933 = vpop.f32.mrf.mxu0
      %v3934 = vadd.f32 0.0, %v3933
      %v3935 = vpop.f32.mrf.mxu0
      %v3936 = vpop.f32.mrf.mxu0
      %v3937 = vadd.f32 0.0, %v3936
      %v3938 = vpop.f32.mrf.mxu0
      %3939 = vmatprep.mubr.bf16.mxu0 0
      %3940 = vmatmul.mubr.bf16.gmra.mxu0 %v3592
      %v3941 = vpop.f32.mrf.mxu0
      %v3942 = vadd.f32 0.0, %v3941
      %v3943 = vpop.f32.mrf.mxu0
      %v3944 = vpop.f32.mrf.mxu0
      %v3945 = vadd.f32 0.0, %v3944
      %v3946 = vpop.f32.mrf.mxu0
      %3947 = vmatprep.mubr.bf16.mxu0 0
      %3948 = vmatmul.mubr.bf16.gmra.mxu0 %v3595
      %v3949 = vpop.f32.mrf.mxu0
      %v3950 = vadd.f32 0.0, %v3949
      %v3951 = vpop.f32.mrf.mxu0
      %v3952 = vpop.f32.mrf.mxu0
      %v3953 = vadd.f32 0.0, %v3952
      %v3954 = vpop.f32.mrf.mxu0
      %3955 = vmatprep.mubr.bf16.mxu0 0
      %3956 = vmatmul.mubr.bf16.gmra.mxu0 %v3598
      %v3957 = vpop.f32.mrf.mxu0
      %v3958 = vadd.f32 0.0, %v3957
      %v3959 = vpop.f32.mrf.mxu0
      %v3960 = vpop.f32.mrf.mxu0
      %v3961 = vadd.f32 0.0, %v3960
      %v3962 = vpop.f32.mrf.mxu0
      %3963 = vmatprep.mubr.bf16.mxu0 0
      %3964 = vmatmul.mubr.bf16.gmra.mxu0 %v3601
      %v3965 = vpop.f32.mrf.mxu0
      %v3966 = vadd.f32 0.0, %v3965
      %v3967 = vpop.f32.mrf.mxu0
      %v3968 = vpop.f32.mrf.mxu0
      %v3969 = vadd.f32 0.0, %v3968
      %v3970 = vpop.f32.mrf.mxu0
      %3971 = vmatprep.mubr.bf16.mxu0 0
      %3972 = vmatmul.mubr.bf16.gmra.mxu0 %v3824
      %v3973 = vpop.f32.mrf.mxu0
      %v3974 = vadd.f32 0.0, %v3973
      %v3975 = vpop.f32.mrf.mxu0
      %v3976 = vpop.f32.mrf.mxu0
      %v3977 = vadd.f32 0.0, %v3976
      %v3978 = vpop.f32.mrf.mxu0
      %3979 = vmatprep.mubr.bf16.mxu0 0
      %3980 = vmatmul.mubr.bf16.gmra.mxu0 %v3827
      %v3981 = vpop.f32.mrf.mxu0
      %v3982 = vadd.f32 0.0, %v3981
      %v3983 = vpop.f32.mrf.mxu0
      %v3984 = vpop.f32.mrf.mxu0
      %v3985 = vadd.f32 0.0, %v3984
      %v3986 = vpop.f32.mrf.mxu0
      %3987 = vmatprep.mubr.bf16.mxu0 0
      %3988 = vmatmul.mubr.bf16.gmra.mxu0 %v3830
      %v3989 = vpop.f32.mrf.mxu0
      %v3990 = vadd.f32 0.0, %v3989
      %v3991 = vpop.f32.mrf.mxu0
      %v3992 = vpop.f32.mrf.mxu0
      %v3993 = vadd.f32 0.0, %v3992
      %v3994 = vpop.f32.mrf.mxu0
      %3995 = vdwg.mxu0
      %v3996 = vadd.f32 %v3770, %v3870
      %v3997 = vadd.f32 %v3771, %v3873
      %v3998 = vadd.f32 %v3772, %v3878
      %v3999 = vadd.f32 %v3773, %v3881
      %v4000 = vadd.f32 %v3774, %v3886
      %v4001 = vadd.f32 %v3775, %v3889
      %v4002 = vadd.f32 %v3776, %v3894
      %v4003 = vadd.f32 %v3777, %v3897
      %v4004 = vadd.f32 %v3778, %v3902
      %v4005 = vadd.f32 %v3779, %v3905
      %v4006 = vadd.f32 %v3780, %v3910
      %v4007 = vadd.f32 %v3781, %v3913
      %v4008 = vadd.f32 %v3782, %v3918
      %v4009 = vadd.f32 %v3783, %v3921
      %v4010 = vadd.f32 %v3784, %v3926
      %v4011 = vadd.f32 %v3785, %v3929
      %v4012 = vadd.f32 %v3786, %v3934
      %v4013 = vadd.f32 %v3787, %v3937
      %v4014 = vadd.f32 %v3788, %v3942
      %v4015 = vadd.f32 %v3789, %v3945
      %v4016 = vadd.f32 %v3790, %v3950
      %v4017 = vadd.f32 %v3791, %v3953
      %v4018 = vadd.f32 %v3792, %v3958
      %v4019 = vadd.f32 %v3793, %v3961
      %v4020 = vadd.f32 %v3794, %v3966
      %v4021 = vadd.f32 %v3795, %v3969
      %v4022 = vadd.f32 %v3796, %v3974
      %v4023 = vadd.f32 %v3797, %v3977
      %v4024 = vadd.f32 %v3798, %v3982
      %v4025 = vadd.f32 %v3799, %v3985
      %v4026 = vadd.f32 %v3800, %v3990
      %v4027 = vadd.f32 %v3801, %v3993
      %v4028 = vld [vmem:[%s1547] sm:$0x3]
      %v4030 = vunpack.c.l.b16 %v2752
      %v4031 = vpack.c.b16 %v4030, %v4030
      %v4032 = vshll.u32 %v3236, 16
      %v4034 = vrot.slane %v4032, 1
      %v4035 = vsel %vm959, %v3817, %v4034
      %v4036 = vshrl.u32 %v3236, 16
      %v4038 = vor.u32 %v4036, %v4034
      %v4039 = vshll.u32 %v3237, 16
      %v4041 = vrot.slane %v4039, 1
      %v4042 = vsel %vm959, %v4038, %v4041
      %v4043 = vshrl.u32 %v3237, 16
      %v4045 = vor.u32 %v4043, %v4041
      %v4047 = vshll.u32 %v4031, 16
      %v4049 = vrot.slane %v4047, 1
      %v4050 = vsel %vm959, %v4045, %v4049
      %v4052 = vsel %vm348, %v4035, 0
      %v4055 = vsel %vm348, %v4042, 0
      %v4058 = vsel %vm348, %v4050, 0
      %v4061 = vsel %vm397, %v4028, 0
      %4063 = vmatprep.subr.bf16.mxu0 0
      %4064 = vmatpush1.bf16.msra.mxu0 0
      %4065 = vmatprep.subr.bf16.mxu0 0
      %4066 = vmatpush1.bf16.msra.mxu0 0
      %4067 = vmatprep.subr.bf16.mxu0 0
      %4068 = vmatpush1.bf16.msra.mxu0 0
      %4069 = vmatprep.subr.bf16.mxu0 0
      %4070 = vmatpush1.bf16.msra.mxu0 0
      %4071 = vmatprep.subr.bf16.mxu0 0
      %4072 = vmatpush1.bf16.msra.mxu0 0
      %4073 = vmatprep.subr.bf16.mxu0 0
      %4074 = vmatpush1.bf16.msra.mxu0 0
      %4075 = vmatprep.subr.bf16.mxu0 0
      %4076 = vmatpush1.bf16.msra.mxu0 0
      %4077 = vmatprep.subr.bf16.mxu0 0
      %4078 = vmatpush1.bf16.msra.mxu0 %v4061
      %4079 = vmatprep.subr.bf16.mxu0 0
      %4080 = vmatpush2.bf16.msra.mxu0 0
      %4081 = vmatprep.subr.bf16.mxu0 0
      %4082 = vmatpush2.bf16.msra.mxu0 0
      %4083 = vmatprep.subr.bf16.mxu0 0
      %4084 = vmatpush2.bf16.msra.mxu0 0
      %4085 = vmatprep.subr.bf16.mxu0 0
      %4086 = vmatpush2.bf16.msra.mxu0 0
      %4087 = vmatprep.subr.bf16.mxu0 0
      %4088 = vmatpush2.bf16.msra.mxu0 0
      %4089 = vmatprep.subr.bf16.mxu0 0
      %4090 = vmatpush2.bf16.msra.mxu0 0
      %4091 = vmatprep.subr.bf16.mxu0 0
      %4092 = vmatpush2.bf16.msra.mxu0 0
      %4093 = vmatprep.subr.bf16.mxu0 0
      %4094 = vmatpush2.bf16.msra.mxu0 0
      %4095 = vmatprep.mubr.bf16.mxu0 0
      %4096 = vmatmul.mubr.bf16.gmra.mxu0 %v3571
      %v4097 = vpop.f32.mrf.mxu0
      %v4098 = vadd.f32 0.0, %v4097
      %v4099 = vpop.f32.mrf.mxu0
      %v4100 = vpop.f32.mrf.mxu0
      %v4101 = vadd.f32 0.0, %v4100
      %v4102 = vpop.f32.mrf.mxu0
      %4103 = vmatprep.mubr.bf16.mxu0 0
      %4104 = vmatmul.mubr.bf16.gmra.mxu0 %v3574
      %v4105 = vpop.f32.mrf.mxu0
      %v4106 = vadd.f32 0.0, %v4105
      %v4107 = vpop.f32.mrf.mxu0
      %v4108 = vpop.f32.mrf.mxu0
      %v4109 = vadd.f32 0.0, %v4108
      %v4110 = vpop.f32.mrf.mxu0
      %4111 = vmatprep.mubr.bf16.mxu0 0
      %4112 = vmatmul.mubr.bf16.gmra.mxu0 %v3577
      %v4113 = vpop.f32.mrf.mxu0
      %v4114 = vadd.f32 0.0, %v4113
      %v4115 = vpop.f32.mrf.mxu0
      %v4116 = vpop.f32.mrf.mxu0
      %v4117 = vadd.f32 0.0, %v4116
      %v4118 = vpop.f32.mrf.mxu0
      %4119 = vmatprep.mubr.bf16.mxu0 0
      %4120 = vmatmul.mubr.bf16.gmra.mxu0 %v3580
      %v4121 = vpop.f32.mrf.mxu0
      %v4122 = vadd.f32 0.0, %v4121
      %v4123 = vpop.f32.mrf.mxu0
      %v4124 = vpop.f32.mrf.mxu0
      %v4125 = vadd.f32 0.0, %v4124
      %v4126 = vpop.f32.mrf.mxu0
      %4127 = vmatprep.mubr.bf16.mxu0 0
      %4128 = vmatmul.mubr.bf16.gmra.mxu0 %v3583
      %v4129 = vpop.f32.mrf.mxu0
      %v4130 = vadd.f32 0.0, %v4129
      %v4131 = vpop.f32.mrf.mxu0
      %v4132 = vpop.f32.mrf.mxu0
      %v4133 = vadd.f32 0.0, %v4132
      %v4134 = vpop.f32.mrf.mxu0
      %4135 = vmatprep.mubr.bf16.mxu0 0
      %4136 = vmatmul.mubr.bf16.gmra.mxu0 %v3586
      %v4137 = vpop.f32.mrf.mxu0
      %v4138 = vadd.f32 0.0, %v4137
      %v4139 = vpop.f32.mrf.mxu0
      %v4140 = vpop.f32.mrf.mxu0
      %v4141 = vadd.f32 0.0, %v4140
      %v4142 = vpop.f32.mrf.mxu0
      %4143 = vmatprep.mubr.bf16.mxu0 0
      %4144 = vmatmul.mubr.bf16.gmra.mxu0 %v3589
      %v4145 = vpop.f32.mrf.mxu0
      %v4146 = vadd.f32 0.0, %v4145
      %v4147 = vpop.f32.mrf.mxu0
      %v4148 = vpop.f32.mrf.mxu0
      %v4149 = vadd.f32 0.0, %v4148
      %v4150 = vpop.f32.mrf.mxu0
      %4151 = vmatprep.mubr.bf16.mxu0 0
      %4152 = vmatmul.mubr.bf16.gmra.mxu0 %v3592
      %v4153 = vpop.f32.mrf.mxu0
      %v4154 = vadd.f32 0.0, %v4153
      %v4155 = vpop.f32.mrf.mxu0
      %v4156 = vpop.f32.mrf.mxu0
      %v4157 = vadd.f32 0.0, %v4156
      %v4158 = vpop.f32.mrf.mxu0
      %4159 = vmatprep.mubr.bf16.mxu0 0
      %4160 = vmatmul.mubr.bf16.gmra.mxu0 %v3595
      %v4161 = vpop.f32.mrf.mxu0
      %v4162 = vadd.f32 0.0, %v4161
      %v4163 = vpop.f32.mrf.mxu0
      %v4164 = vpop.f32.mrf.mxu0
      %v4165 = vadd.f32 0.0, %v4164
      %v4166 = vpop.f32.mrf.mxu0
      %4167 = vmatprep.mubr.bf16.mxu0 0
      %4168 = vmatmul.mubr.bf16.gmra.mxu0 %v3598
      %v4169 = vpop.f32.mrf.mxu0
      %v4170 = vadd.f32 0.0, %v4169
      %v4171 = vpop.f32.mrf.mxu0
      %v4172 = vpop.f32.mrf.mxu0
      %v4173 = vadd.f32 0.0, %v4172
      %v4174 = vpop.f32.mrf.mxu0
      %4175 = vmatprep.mubr.bf16.mxu0 0
      %4176 = vmatmul.mubr.bf16.gmra.mxu0 %v3601
      %v4177 = vpop.f32.mrf.mxu0
      %v4178 = vadd.f32 0.0, %v4177
      %v4179 = vpop.f32.mrf.mxu0
      %v4180 = vpop.f32.mrf.mxu0
      %v4181 = vadd.f32 0.0, %v4180
      %v4182 = vpop.f32.mrf.mxu0
      %4183 = vmatprep.mubr.bf16.mxu0 0
      %4184 = vmatmul.mubr.bf16.gmra.mxu0 %v3824
      %v4185 = vpop.f32.mrf.mxu0
      %v4186 = vadd.f32 0.0, %v4185
      %v4187 = vpop.f32.mrf.mxu0
      %v4188 = vpop.f32.mrf.mxu0
      %v4189 = vadd.f32 0.0, %v4188
      %v4190 = vpop.f32.mrf.mxu0
      %4191 = vmatprep.mubr.bf16.mxu0 0
      %4192 = vmatmul.mubr.bf16.gmra.mxu0 %v3827
      %v4193 = vpop.f32.mrf.mxu0
      %v4194 = vadd.f32 0.0, %v4193
      %v4195 = vpop.f32.mrf.mxu0
      %v4196 = vpop.f32.mrf.mxu0
      %v4197 = vadd.f32 0.0, %v4196
      %v4198 = vpop.f32.mrf.mxu0
      %4199 = vmatprep.mubr.bf16.mxu0 0
      %4200 = vmatmul.mubr.bf16.gmra.mxu0 %v4052
      %v4201 = vpop.f32.mrf.mxu0
      %v4202 = vadd.f32 0.0, %v4201
      %v4203 = vpop.f32.mrf.mxu0
      %v4204 = vpop.f32.mrf.mxu0
      %v4205 = vadd.f32 0.0, %v4204
      %v4206 = vpop.f32.mrf.mxu0
      %4207 = vmatprep.mubr.bf16.mxu0 0
      %4208 = vmatmul.mubr.bf16.gmra.mxu0 %v4055
      %v4209 = vpop.f32.mrf.mxu0
      %v4210 = vadd.f32 0.0, %v4209
      %v4211 = vpop.f32.mrf.mxu0
      %v4212 = vpop.f32.mrf.mxu0
      %v4213 = vadd.f32 0.0, %v4212
      %v4214 = vpop.f32.mrf.mxu0
      %4215 = vmatprep.mubr.bf16.mxu0 0
      %4216 = vmatmul.mubr.bf16.gmra.mxu0 %v4058
      %v4217 = vpop.f32.mrf.mxu0
      %v4218 = vadd.f32 0.0, %v4217
      %v4219 = vpop.f32.mrf.mxu0
      %v4220 = vpop.f32.mrf.mxu0
      %v4221 = vadd.f32 0.0, %v4220
      %v4222 = vpop.f32.mrf.mxu0
      %4223 = vdwg.mxu0
      %v4224 = vadd.f32 %v3996, %v4098
      %v4225 = vadd.f32 %v3997, %v4101
      %v4226 = vadd.f32 %v3998, %v4106
      %v4227 = vadd.f32 %v3999, %v4109
      %v4228 = vadd.f32 %v4000, %v4114
      %v4229 = vadd.f32 %v4001, %v4117
      %v4230 = vadd.f32 %v4002, %v4122
      %v4231 = vadd.f32 %v4003, %v4125
      %v4232 = vadd.f32 %v4004, %v4130
      %v4233 = vadd.f32 %v4005, %v4133
      %v4234 = vadd.f32 %v4006, %v4138
      %v4235 = vadd.f32 %v4007, %v4141
      %v4236 = vadd.f32 %v4008, %v4146
      %v4237 = vadd.f32 %v4009, %v4149
      %v4238 = vadd.f32 %v4010, %v4154
      %v4239 = vadd.f32 %v4011, %v4157
      %v4240 = vadd.f32 %v4012, %v4162
      %v4241 = vadd.f32 %v4013, %v4165
      %v4242 = vadd.f32 %v4014, %v4170
      %v4243 = vadd.f32 %v4015, %v4173
      %v4244 = vadd.f32 %v4016, %v4178
      %v4245 = vadd.f32 %v4017, %v4181
      %v4246 = vadd.f32 %v4018, %v4186
      %v4247 = vadd.f32 %v4019, %v4189
      %v4248 = vadd.f32 %v4020, %v4194
      %v4249 = vadd.f32 %v4021, %v4197
      %v4250 = vadd.f32 %v4022, %v4202
      %v4251 = vadd.f32 %v4023, %v4205
      %v4252 = vadd.f32 %v4024, %v4210
      %v4253 = vadd.f32 %v4025, %v4213
      %v4254 = vadd.f32 %v4026, %v4218
      %v4255 = vadd.f32 %v4027, %v4221
      %v4256 = vld [vmem:[%s1776] sm:$0x3]
      %v4257 = vrot.slane %v3055, 1
      %v4258 = vrot.slane %v3056, 1
      %v4259 = vsel %vm1778, %v4257, %v4258
      %v4260 = vrot.slane %v2819, 1
      %v4261 = vsel %vm1778, %v4258, %v4260
      %v4262 = vrot.slane %v2820, 1
      %v4263 = vsel %vm1778, %v4260, %v4262
      %v4264 = vrot.slane %v2821, 1
      %v4265 = vsel %vm1778, %v4262, %v4264
      %v4266 = vrot.slane %v2822, 1
      %v4267 = vsel %vm1778, %v4264, %v4266
      %v4268 = vrot.slane %v2823, 1
      %v4269 = vsel %vm1778, %v4266, %v4268
      %v4270 = vrot.slane %v2824, 1
      %v4271 = vsel %vm1778, %v4268, %v4270
      %v4272 = vrot.slane %v2825, 1
      %v4273 = vsel %vm1778, %v4270, %v4272
      %v4274 = vrot.slane %v2826, 1
      %v4275 = vsel %vm1778, %v4272, %v4274
      %v4276 = vrot.slane %v2827, 1
      %v4277 = vsel %vm1778, %v4274, %v4276
      %v4278 = vrot.slane %v2828, 1
      %v4279 = vsel %vm1778, %v4276, %v4278
      %v4280 = vrot.slane %v2829, 1
      %v4281 = vsel %vm1778, %v4278, %v4280
      %v4282 = vrot.slane %v2830, 1
      %v4283 = vsel %vm1778, %v4280, %v4282
      %v4284 = vrot.slane %v2831, 1
      %v4285 = vsel %vm1778, %v4282, %v4284
      %v4286 = vrot.slane %v2832, 1
      %v4287 = vsel %vm1778, %v4284, %v4286
      %v4288 = vrot.slane %v3441, 1
      %v4289 = vsel %vm1778, %v4286, %v4288
      %v4291 = vsel %vm348, %v4259, 0
      %v4294 = vsel %vm348, %v4261, 0
      %v4297 = vsel %vm348, %v4263, 0
      %v4300 = vsel %vm348, %v4265, 0
      %v4303 = vsel %vm348, %v4267, 0
      %v4306 = vsel %vm348, %v4269, 0
      %v4309 = vsel %vm348, %v4271, 0
      %v4312 = vsel %vm348, %v4273, 0
      %v4315 = vsel %vm348, %v4275, 0
      %v4318 = vsel %vm348, %v4277, 0
      %v4321 = vsel %vm348, %v4279, 0
      %v4324 = vsel %vm348, %v4281, 0
      %v4327 = vsel %vm348, %v4283, 0
      %v4330 = vsel %vm348, %v4285, 0
      %v4333 = vsel %vm348, %v4287, 0
      %v4336 = vsel %vm348, %v4289, 0
      %v4339 = vsel %vm397, %v4256, 0
      %4341 = vmatprep.subr.bf16.mxu0 0
      %4342 = vmatpush1.bf16.msra.mxu0 0
      %4343 = vmatprep.subr.bf16.mxu0 0
      %4344 = vmatpush1.bf16.msra.mxu0 0
      %4345 = vmatprep.subr.bf16.mxu0 0
      %4346 = vmatpush1.bf16.msra.mxu0 0
      %4347 = vmatprep.subr.bf16.mxu0 0
      %4348 = vmatpush1.bf16.msra.mxu0 0
      %4349 = vmatprep.subr.bf16.mxu0 0
      %4350 = vmatpush1.bf16.msra.mxu0 0
      %4351 = vmatprep.subr.bf16.mxu0 0
      %4352 = vmatpush1.bf16.msra.mxu0 0
      %4353 = vmatprep.subr.bf16.mxu0 0
      %4354 = vmatpush1.bf16.msra.mxu0 0
      %4355 = vmatprep.subr.bf16.mxu0 0
      %4356 = vmatpush1.bf16.msra.mxu0 %v4339
      %4357 = vmatprep.subr.bf16.mxu0 0
      %4358 = vmatpush2.bf16.msra.mxu0 0
      %4359 = vmatprep.subr.bf16.mxu0 0
      %4360 = vmatpush2.bf16.msra.mxu0 0
      %4361 = vmatprep.subr.bf16.mxu0 0
      %4362 = vmatpush2.bf16.msra.mxu0 0
      %4363 = vmatprep.subr.bf16.mxu0 0
      %4364 = vmatpush2.bf16.msra.mxu0 0
      %4365 = vmatprep.subr.bf16.mxu0 0
      %4366 = vmatpush2.bf16.msra.mxu0 0
      %4367 = vmatprep.subr.bf16.mxu0 0
      %4368 = vmatpush2.bf16.msra.mxu0 0
      %4369 = vmatprep.subr.bf16.mxu0 0
      %4370 = vmatpush2.bf16.msra.mxu0 0
      %4371 = vmatprep.subr.bf16.mxu0 0
      %4372 = vmatpush2.bf16.msra.mxu0 0
      %4373 = vmatprep.mubr.bf16.mxu0 0
      %4374 = vmatmul.mubr.bf16.gmra.mxu0 %v4291
      %v4375 = vpop.f32.mrf.mxu0
      %v4376 = vadd.f32 0.0, %v4375
      %v4377 = vpop.f32.mrf.mxu0
      %v4378 = vpop.f32.mrf.mxu0
      %v4379 = vadd.f32 0.0, %v4378
      %v4380 = vpop.f32.mrf.mxu0
      %4381 = vmatprep.mubr.bf16.mxu0 0
      %4382 = vmatmul.mubr.bf16.gmra.mxu0 %v4294
      %v4383 = vpop.f32.mrf.mxu0
      %v4384 = vadd.f32 0.0, %v4383
      %v4385 = vpop.f32.mrf.mxu0
      %v4386 = vpop.f32.mrf.mxu0
      %v4387 = vadd.f32 0.0, %v4386
      %v4388 = vpop.f32.mrf.mxu0
      %4389 = vmatprep.mubr.bf16.mxu0 0
      %4390 = vmatmul.mubr.bf16.gmra.mxu0 %v4297
      %v4391 = vpop.f32.mrf.mxu0
      %v4392 = vadd.f32 0.0, %v4391
      %v4393 = vpop.f32.mrf.mxu0
      %v4394 = vpop.f32.mrf.mxu0
      %v4395 = vadd.f32 0.0, %v4394
      %v4396 = vpop.f32.mrf.mxu0
      %4397 = vmatprep.mubr.bf16.mxu0 0
      %4398 = vmatmul.mubr.bf16.gmra.mxu0 %v4300
      %v4399 = vpop.f32.mrf.mxu0
      %v4400 = vadd.f32 0.0, %v4399
      %v4401 = vpop.f32.mrf.mxu0
      %v4402 = vpop.f32.mrf.mxu0
      %v4403 = vadd.f32 0.0, %v4402
      %v4404 = vpop.f32.mrf.mxu0
      %4405 = vmatprep.mubr.bf16.mxu0 0
      %4406 = vmatmul.mubr.bf16.gmra.mxu0 %v4303
      %v4407 = vpop.f32.mrf.mxu0
      %v4408 = vadd.f32 0.0, %v4407
      %v4409 = vpop.f32.mrf.mxu0
      %v4410 = vpop.f32.mrf.mxu0
      %v4411 = vadd.f32 0.0, %v4410
      %v4412 = vpop.f32.mrf.mxu0
      %4413 = vmatprep.mubr.bf16.mxu0 0
      %4414 = vmatmul.mubr.bf16.gmra.mxu0 %v4306
      %v4415 = vpop.f32.mrf.mxu0
      %v4416 = vadd.f32 0.0, %v4415
      %v4417 = vpop.f32.mrf.mxu0
      %v4418 = vpop.f32.mrf.mxu0
      %v4419 = vadd.f32 0.0, %v4418
      %v4420 = vpop.f32.mrf.mxu0
      %4421 = vmatprep.mubr.bf16.mxu0 0
      %4422 = vmatmul.mubr.bf16.gmra.mxu0 %v4309
      %v4423 = vpop.f32.mrf.mxu0
      %v4424 = vadd.f32 0.0, %v4423
      %v4425 = vpop.f32.mrf.mxu0
      %v4426 = vpop.f32.mrf.mxu0
      %v4427 = vadd.f32 0.0, %v4426
      %v4428 = vpop.f32.mrf.mxu0
      %4429 = vmatprep.mubr.bf16.mxu0 0
      %4430 = vmatmul.mubr.bf16.gmra.mxu0 %v4312
      %v4431 = vpop.f32.mrf.mxu0
      %v4432 = vadd.f32 0.0, %v4431
      %v4433 = vpop.f32.mrf.mxu0
      %v4434 = vpop.f32.mrf.mxu0
      %v4435 = vadd.f32 0.0, %v4434
      %v4436 = vpop.f32.mrf.mxu0
      %4437 = vmatprep.mubr.bf16.mxu0 0
      %4438 = vmatmul.mubr.bf16.gmra.mxu0 %v4315
      %v4439 = vpop.f32.mrf.mxu0
      %v4440 = vadd.f32 0.0, %v4439
      %v4441 = vpop.f32.mrf.mxu0
      %v4442 = vpop.f32.mrf.mxu0
      %v4443 = vadd.f32 0.0, %v4442
      %v4444 = vpop.f32.mrf.mxu0
      %4445 = vmatprep.mubr.bf16.mxu0 0
      %4446 = vmatmul.mubr.bf16.gmra.mxu0 %v4318
      %v4447 = vpop.f32.mrf.mxu0
      %v4448 = vadd.f32 0.0, %v4447
      %v4449 = vpop.f32.mrf.mxu0
      %v4450 = vpop.f32.mrf.mxu0
      %v4451 = vadd.f32 0.0, %v4450
      %v4452 = vpop.f32.mrf.mxu0
      %4453 = vmatprep.mubr.bf16.mxu0 0
      %4454 = vmatmul.mubr.bf16.gmra.mxu0 %v4321
      %v4455 = vpop.f32.mrf.mxu0
      %v4456 = vadd.f32 0.0, %v4455
      %v4457 = vpop.f32.mrf.mxu0
      %v4458 = vpop.f32.mrf.mxu0
      %v4459 = vadd.f32 0.0, %v4458
      %v4460 = vpop.f32.mrf.mxu0
      %4461 = vmatprep.mubr.bf16.mxu0 0
      %4462 = vmatmul.mubr.bf16.gmra.mxu0 %v4324
      %v4463 = vpop.f32.mrf.mxu0
      %v4464 = vadd.f32 0.0, %v4463
      %v4465 = vpop.f32.mrf.mxu0
      %v4466 = vpop.f32.mrf.mxu0
      %v4467 = vadd.f32 0.0, %v4466
      %v4468 = vpop.f32.mrf.mxu0
      %4469 = vmatprep.mubr.bf16.mxu0 0
      %4470 = vmatmul.mubr.bf16.gmra.mxu0 %v4327
      %v4471 = vpop.f32.mrf.mxu0
      %v4472 = vadd.f32 0.0, %v4471
      %v4473 = vpop.f32.mrf.mxu0
      %v4474 = vpop.f32.mrf.mxu0
      %v4475 = vadd.f32 0.0, %v4474
      %v4476 = vpop.f32.mrf.mxu0
      %4477 = vmatprep.mubr.bf16.mxu0 0
      %4478 = vmatmul.mubr.bf16.gmra.mxu0 %v4330
      %v4479 = vpop.f32.mrf.mxu0
      %v4480 = vadd.f32 0.0, %v4479
      %v4481 = vpop.f32.mrf.mxu0
      %v4482 = vpop.f32.mrf.mxu0
      %v4483 = vadd.f32 0.0, %v4482
      %v4484 = vpop.f32.mrf.mxu0
      %4485 = vmatprep.mubr.bf16.mxu0 0
      %4486 = vmatmul.mubr.bf16.gmra.mxu0 %v4333
      %v4487 = vpop.f32.mrf.mxu0
      %v4488 = vadd.f32 0.0, %v4487
      %v4489 = vpop.f32.mrf.mxu0
      %v4490 = vpop.f32.mrf.mxu0
      %v4491 = vadd.f32 0.0, %v4490
      %v4492 = vpop.f32.mrf.mxu0
      %4493 = vmatprep.mubr.bf16.mxu0 0
      %4494 = vmatmul.mubr.bf16.gmra.mxu0 %v4336
      %v4495 = vpop.f32.mrf.mxu0
      %v4496 = vadd.f32 0.0, %v4495
      %v4497 = vpop.f32.mrf.mxu0
      %v4498 = vpop.f32.mrf.mxu0
      %v4499 = vadd.f32 0.0, %v4498
      %v4500 = vpop.f32.mrf.mxu0
      %4501 = vdwg.mxu0
      %v4502 = vadd.f32 %v4224, %v4376
      %v4503 = vadd.f32 %v4225, %v4379
      %v4504 = vadd.f32 %v4226, %v4384
      %v4505 = vadd.f32 %v4227, %v4387
      %v4506 = vadd.f32 %v4228, %v4392
      %v4507 = vadd.f32 %v4229, %v4395
      %v4508 = vadd.f32 %v4230, %v4400
      %v4509 = vadd.f32 %v4231, %v4403
      %v4510 = vadd.f32 %v4232, %v4408
      %v4511 = vadd.f32 %v4233, %v4411
      %v4512 = vadd.f32 %v4234, %v4416
      %v4513 = vadd.f32 %v4235, %v4419
      %v4514 = vadd.f32 %v4236, %v4424
      %v4515 = vadd.f32 %v4237, %v4427
      %v4516 = vadd.f32 %v4238, %v4432
      %v4517 = vadd.f32 %v4239, %v4435
      %v4518 = vadd.f32 %v4240, %v4440
      %v4519 = vadd.f32 %v4241, %v4443
      %v4520 = vadd.f32 %v4242, %v4448
      %v4521 = vadd.f32 %v4243, %v4451
      %v4522 = vadd.f32 %v4244, %v4456
      %v4523 = vadd.f32 %v4245, %v4459
      %v4524 = vadd.f32 %v4246, %v4464
      %v4525 = vadd.f32 %v4247, %v4467
      %v4526 = vadd.f32 %v4248, %v4472
      %v4527 = vadd.f32 %v4249, %v4475
      %v4528 = vadd.f32 %v4250, %v4480
      %v4529 = vadd.f32 %v4251, %v4483
      %v4530 = vadd.f32 %v4252, %v4488
      %v4531 = vadd.f32 %v4253, %v4491
      %v4532 = vadd.f32 %v4254, %v4496
      %v4533 = vadd.f32 %v4255, %v4499
      %v4534 = vld [vmem:[%s2056] sm:$0x3]
      %v4535 = vrot.slane %v2833, 1
      %v4536 = vsel %vm1778, %v4286, %v4535
      %v4537 = vrot.slane %v2834, 1
      %v4538 = vsel %vm1778, %v4535, %v4537
      %v4539 = vrot.slane %v3803, 1
      %v4540 = vsel %vm1778, %v4537, %v4539
      %v4542 = vsel %vm348, %v4536, 0
      %v4545 = vsel %vm348, %v4538, 0
      %v4548 = vsel %vm348, %v4540, 0
      %v4551 = vsel %vm397, %v4534, 0
      %4553 = vmatprep.subr.bf16.mxu0 0
      %4554 = vmatpush1.bf16.msra.mxu0 0
      %4555 = vmatprep.subr.bf16.mxu0 0
      %4556 = vmatpush1.bf16.msra.mxu0 0
      %4557 = vmatprep.subr.bf16.mxu0 0
      %4558 = vmatpush1.bf16.msra.mxu0 0
      %4559 = vmatprep.subr.bf16.mxu0 0
      %4560 = vmatpush1.bf16.msra.mxu0 0
      %4561 = vmatprep.subr.bf16.mxu0 0
      %4562 = vmatpush1.bf16.msra.mxu0 0
      %4563 = vmatprep.subr.bf16.mxu0 0
      %4564 = vmatpush1.bf16.msra.mxu0 0
      %4565 = vmatprep.subr.bf16.mxu0 0
      %4566 = vmatpush1.bf16.msra.mxu0 0
      %4567 = vmatprep.subr.bf16.mxu0 0
      %4568 = vmatpush1.bf16.msra.mxu0 %v4551
      %4569 = vmatprep.subr.bf16.mxu0 0
      %4570 = vmatpush2.bf16.msra.mxu0 0
      %4571 = vmatprep.subr.bf16.mxu0 0
      %4572 = vmatpush2.bf16.msra.mxu0 0
      %4573 = vmatprep.subr.bf16.mxu0 0
      %4574 = vmatpush2.bf16.msra.mxu0 0
      %4575 = vmatprep.subr.bf16.mxu0 0
      %4576 = vmatpush2.bf16.msra.mxu0 0
      %4577 = vmatprep.subr.bf16.mxu0 0
      %4578 = vmatpush2.bf16.msra.mxu0 0
      %4579 = vmatprep.subr.bf16.mxu0 0
      %4580 = vmatpush2.bf16.msra.mxu0 0
      %4581 = vmatprep.subr.bf16.mxu0 0
      %4582 = vmatpush2.bf16.msra.mxu0 0
      %4583 = vmatprep.subr.bf16.mxu0 0
      %4584 = vmatpush2.bf16.msra.mxu0 0
      %4585 = vmatprep.mubr.bf16.mxu0 0
      %4586 = vmatmul.mubr.bf16.gmra.mxu0 %v4297
      %v4587 = vpop.f32.mrf.mxu0
      %v4588 = vadd.f32 0.0, %v4587
      %v4589 = vpop.f32.mrf.mxu0
      %v4590 = vpop.f32.mrf.mxu0
      %v4591 = vadd.f32 0.0, %v4590
      %v4592 = vpop.f32.mrf.mxu0
      %4593 = vmatprep.mubr.bf16.mxu0 0
      %4594 = vmatmul.mubr.bf16.gmra.mxu0 %v4300
      %v4595 = vpop.f32.mrf.mxu0
      %v4596 = vadd.f32 0.0, %v4595
      %v4597 = vpop.f32.mrf.mxu0
      %v4598 = vpop.f32.mrf.mxu0
      %v4599 = vadd.f32 0.0, %v4598
      %v4600 = vpop.f32.mrf.mxu0
      %4601 = vmatprep.mubr.bf16.mxu0 0
      %4602 = vmatmul.mubr.bf16.gmra.mxu0 %v4303
      %v4603 = vpop.f32.mrf.mxu0
      %v4604 = vadd.f32 0.0, %v4603
      %v4605 = vpop.f32.mrf.mxu0
      %v4606 = vpop.f32.mrf.mxu0
      %v4607 = vadd.f32 0.0, %v4606
      %v4608 = vpop.f32.mrf.mxu0
      %4609 = vmatprep.mubr.bf16.mxu0 0
      %4610 = vmatmul.mubr.bf16.gmra.mxu0 %v4306
      %v4611 = vpop.f32.mrf.mxu0
      %v4612 = vadd.f32 0.0, %v4611
      %v4613 = vpop.f32.mrf.mxu0
      %v4614 = vpop.f32.mrf.mxu0
      %v4615 = vadd.f32 0.0, %v4614
      %v4616 = vpop.f32.mrf.mxu0
      %4617 = vmatprep.mubr.bf16.mxu0 0
      %4618 = vmatmul.mubr.bf16.gmra.mxu0 %v4309
      %v4619 = vpop.f32.mrf.mxu0
      %v4620 = vadd.f32 0.0, %v4619
      %v4621 = vpop.f32.mrf.mxu0
      %v4622 = vpop.f32.mrf.mxu0
      %v4623 = vadd.f32 0.0, %v4622
      %v4624 = vpop.f32.mrf.mxu0
      %4625 = vmatprep.mubr.bf16.mxu0 0
      %4626 = vmatmul.mubr.bf16.gmra.mxu0 %v4312
      %v4627 = vpop.f32.mrf.mxu0
      %v4628 = vadd.f32 0.0, %v4627
      %v4629 = vpop.f32.mrf.mxu0
      %v4630 = vpop.f32.mrf.mxu0
      %v4631 = vadd.f32 0.0, %v4630
      %v4632 = vpop.f32.mrf.mxu0
      %4633 = vmatprep.mubr.bf16.mxu0 0
      %4634 = vmatmul.mubr.bf16.gmra.mxu0 %v4315
      %v4635 = vpop.f32.mrf.mxu0
      %v4636 = vadd.f32 0.0, %v4635
      %v4637 = vpop.f32.mrf.mxu0
      %v4638 = vpop.f32.mrf.mxu0
      %v4639 = vadd.f32 0.0, %v4638
      %v4640 = vpop.f32.mrf.mxu0
      %4641 = vmatprep.mubr.bf16.mxu0 0
      %4642 = vmatmul.mubr.bf16.gmra.mxu0 %v4318
      %v4643 = vpop.f32.mrf.mxu0
      %v4644 = vadd.f32 0.0, %v4643
      %v4645 = vpop.f32.mrf.mxu0
      %v4646 = vpop.f32.mrf.mxu0
      %v4647 = vadd.f32 0.0, %v4646
      %v4648 = vpop.f32.mrf.mxu0
      %4649 = vmatprep.mubr.bf16.mxu0 0
      %4650 = vmatmul.mubr.bf16.gmra.mxu0 %v4321
      %v4651 = vpop.f32.mrf.mxu0
      %v4652 = vadd.f32 0.0, %v4651
      %v4653 = vpop.f32.mrf.mxu0
      %v4654 = vpop.f32.mrf.mxu0
      %v4655 = vadd.f32 0.0, %v4654
      %v4656 = vpop.f32.mrf.mxu0
      %4657 = vmatprep.mubr.bf16.mxu0 0
      %4658 = vmatmul.mubr.bf16.gmra.mxu0 %v4324
      %v4659 = vpop.f32.mrf.mxu0
      %v4660 = vadd.f32 0.0, %v4659
      %v4661 = vpop.f32.mrf.mxu0
      %v4662 = vpop.f32.mrf.mxu0
      %v4663 = vadd.f32 0.0, %v4662
      %v4664 = vpop.f32.mrf.mxu0
      %4665 = vmatprep.mubr.bf16.mxu0 0
      %4666 = vmatmul.mubr.bf16.gmra.mxu0 %v4327
      %v4667 = vpop.f32.mrf.mxu0
      %v4668 = vadd.f32 0.0, %v4667
      %v4669 = vpop.f32.mrf.mxu0
      %v4670 = vpop.f32.mrf.mxu0
      %v4671 = vadd.f32 0.0, %v4670
      %v4672 = vpop.f32.mrf.mxu0
      %4673 = vmatprep.mubr.bf16.mxu0 0
      %4674 = vmatmul.mubr.bf16.gmra.mxu0 %v4330
      %v4675 = vpop.f32.mrf.mxu0
      %v4676 = vadd.f32 0.0, %v4675
      %v4677 = vpop.f32.mrf.mxu0
      %v4678 = vpop.f32.mrf.mxu0
      %v4679 = vadd.f32 0.0, %v4678
      %v4680 = vpop.f32.mrf.mxu0
      %4681 = vmatprep.mubr.bf16.mxu0 0
      %4682 = vmatmul.mubr.bf16.gmra.mxu0 %v4333
      %v4683 = vpop.f32.mrf.mxu0
      %v4684 = vadd.f32 0.0, %v4683
      %v4685 = vpop.f32.mrf.mxu0
      %v4686 = vpop.f32.mrf.mxu0
      %v4687 = vadd.f32 0.0, %v4686
      %v4688 = vpop.f32.mrf.mxu0
      %4689 = vmatprep.mubr.bf16.mxu0 0
      %4690 = vmatmul.mubr.bf16.gmra.mxu0 %v4542
      %v4691 = vpop.f32.mrf.mxu0
      %v4692 = vadd.f32 0.0, %v4691
      %v4693 = vpop.f32.mrf.mxu0
      %v4694 = vpop.f32.mrf.mxu0
      %v4695 = vadd.f32 0.0, %v4694
      %v4696 = vpop.f32.mrf.mxu0
      %4697 = vmatprep.mubr.bf16.mxu0 0
      %4698 = vmatmul.mubr.bf16.gmra.mxu0 %v4545
      %v4699 = vpop.f32.mrf.mxu0
      %v4700 = vadd.f32 0.0, %v4699
      %v4701 = vpop.f32.mrf.mxu0
      %v4702 = vpop.f32.mrf.mxu0
      %v4703 = vadd.f32 0.0, %v4702
      %v4704 = vpop.f32.mrf.mxu0
      %4705 = vmatprep.mubr.bf16.mxu0 0
      %4706 = vmatmul.mubr.bf16.gmra.mxu0 %v4548
      %v4707 = vpop.f32.mrf.mxu0
      %v4708 = vadd.f32 0.0, %v4707
      %v4709 = vpop.f32.mrf.mxu0
      %v4710 = vpop.f32.mrf.mxu0
      %v4711 = vadd.f32 0.0, %v4710
      %v4712 = vpop.f32.mrf.mxu0
      %4713 = vdwg.mxu0
      %v4714 = vadd.f32 %v4502, %v4588
      %v4715 = vadd.f32 %v4503, %v4591
      %v4716 = vadd.f32 %v4504, %v4596
      %v4717 = vadd.f32 %v4505, %v4599
      %v4718 = vadd.f32 %v4506, %v4604
      %v4719 = vadd.f32 %v4507, %v4607
      %v4720 = vadd.f32 %v4508, %v4612
      %v4721 = vadd.f32 %v4509, %v4615
      %v4722 = vadd.f32 %v4510, %v4620
      %v4723 = vadd.f32 %v4511, %v4623
      %v4724 = vadd.f32 %v4512, %v4628
      %v4725 = vadd.f32 %v4513, %v4631
      %v4726 = vadd.f32 %v4514, %v4636
      %v4727 = vadd.f32 %v4515, %v4639
      %v4728 = vadd.f32 %v4516, %v4644
      %v4729 = vadd.f32 %v4517, %v4647
      %v4730 = vadd.f32 %v4518, %v4652
      %v4731 = vadd.f32 %v4519, %v4655
      %v4732 = vadd.f32 %v4520, %v4660
      %v4733 = vadd.f32 %v4521, %v4663
      %v4734 = vadd.f32 %v4522, %v4668
      %v4735 = vadd.f32 %v4523, %v4671
      %v4736 = vadd.f32 %v4524, %v4676
      %v4737 = vadd.f32 %v4525, %v4679
      %v4738 = vadd.f32 %v4526, %v4684
      %v4739 = vadd.f32 %v4527, %v4687
      %v4740 = vadd.f32 %v4528, %v4692
      %v4741 = vadd.f32 %v4529, %v4695
      %v4742 = vadd.f32 %v4530, %v4700
      %v4743 = vadd.f32 %v4531, %v4703
      %v4744 = vadd.f32 %v4532, %v4708
      %v4745 = vadd.f32 %v4533, %v4711
      %v4746 = vld [vmem:[%s2269] sm:$0x3]
      %v4747 = vrot.slane %v3236, 1
      %v4748 = vsel %vm1778, %v4537, %v4747
      %v4749 = vrot.slane %v3237, 1
      %v4750 = vsel %vm1778, %v4747, %v4749
      %v4751 = vrot.slane %v4031, 1
      %v4752 = vsel %vm1778, %v4749, %v4751
      %v4754 = vsel %vm348, %v4748, 0
      %v4757 = vsel %vm348, %v4750, 0
      %v4760 = vsel %vm348, %v4752, 0
      %v4763 = vsel %vm397, %v4746, 0
      %4765 = vmatprep.subr.bf16.mxu0 0
      %4766 = vmatpush1.bf16.msra.mxu0 0
      %4767 = vmatprep.subr.bf16.mxu0 0
      %4768 = vmatpush1.bf16.msra.mxu0 0
      %4769 = vmatprep.subr.bf16.mxu0 0
      %4770 = vmatpush1.bf16.msra.mxu0 0
      %4771 = vmatprep.subr.bf16.mxu0 0
      %4772 = vmatpush1.bf16.msra.mxu0 0
      %4773 = vmatprep.subr.bf16.mxu0 0
      %4774 = vmatpush1.bf16.msra.mxu0 0
      %4775 = vmatprep.subr.bf16.mxu0 0
      %4776 = vmatpush1.bf16.msra.mxu0 0
      %4777 = vmatprep.subr.bf16.mxu0 0
      %4778 = vmatpush1.bf16.msra.mxu0 0
      %4779 = vmatprep.subr.bf16.mxu0 0
      %4780 = vmatpush1.bf16.msra.mxu0 %v4763
      %4781 = vmatprep.subr.bf16.mxu0 0
      %4782 = vmatpush2.bf16.msra.mxu0 0
      %4783 = vmatprep.subr.bf16.mxu0 0
      %4784 = vmatpush2.bf16.msra.mxu0 0
      %4785 = vmatprep.subr.bf16.mxu0 0
      %4786 = vmatpush2.bf16.msra.mxu0 0
      %4787 = vmatprep.subr.bf16.mxu0 0
      %4788 = vmatpush2.bf16.msra.mxu0 0
      %4789 = vmatprep.subr.bf16.mxu0 0
      %4790 = vmatpush2.bf16.msra.mxu0 0
      %4791 = vmatprep.subr.bf16.mxu0 0
      %4792 = vmatpush2.bf16.msra.mxu0 0
      %4793 = vmatprep.subr.bf16.mxu0 0
      %4794 = vmatpush2.bf16.msra.mxu0 0
      %4795 = vmatprep.subr.bf16.mxu0 0
      %4796 = vmatpush2.bf16.msra.mxu0 0
      %4797 = vmatprep.mubr.bf16.mxu0 0
      %4798 = vmatmul.mubr.bf16.gmra.mxu0 %v4303
      %v4799 = vpop.f32.mrf.mxu0
      %v4800 = vadd.f32 0.0, %v4799
      %v4801 = vpop.f32.mrf.mxu0
      %v4802 = vpop.f32.mrf.mxu0
      %v4803 = vadd.f32 0.0, %v4802
      %v4804 = vpop.f32.mrf.mxu0
      %4805 = vmatprep.mubr.bf16.mxu0 0
      %4806 = vmatmul.mubr.bf16.gmra.mxu0 %v4306
      %v4807 = vpop.f32.mrf.mxu0
      %v4808 = vadd.f32 0.0, %v4807
      %v4809 = vpop.f32.mrf.mxu0
      %v4810 = vpop.f32.mrf.mxu0
      %v4811 = vadd.f32 0.0, %v4810
      %v4812 = vpop.f32.mrf.mxu0
      %4813 = vmatprep.mubr.bf16.mxu0 0
      %4814 = vmatmul.mubr.bf16.gmra.mxu0 %v4309
      %v4815 = vpop.f32.mrf.mxu0
      %v4816 = vadd.f32 0.0, %v4815
      %v4817 = vpop.f32.mrf.mxu0
      %v4818 = vpop.f32.mrf.mxu0
      %v4819 = vadd.f32 0.0, %v4818
      %v4820 = vpop.f32.mrf.mxu0
      %4821 = vmatprep.mubr.bf16.mxu0 0
      %4822 = vmatmul.mubr.bf16.gmra.mxu0 %v4312
      %v4823 = vpop.f32.mrf.mxu0
      %v4824 = vadd.f32 0.0, %v4823
      %v4825 = vpop.f32.mrf.mxu0
      %v4826 = vpop.f32.mrf.mxu0
      %v4827 = vadd.f32 0.0, %v4826
      %v4828 = vpop.f32.mrf.mxu0
      %4829 = vmatprep.mubr.bf16.mxu0 0
      %4830 = vmatmul.mubr.bf16.gmra.mxu0 %v4315
      %v4831 = vpop.f32.mrf.mxu0
      %v4832 = vadd.f32 0.0, %v4831
      %v4833 = vpop.f32.mrf.mxu0
      %v4834 = vpop.f32.mrf.mxu0
      %v4835 = vadd.f32 0.0, %v4834
      %v4836 = vpop.f32.mrf.mxu0
      %4837 = vmatprep.mubr.bf16.mxu0 0
      %4838 = vmatmul.mubr.bf16.gmra.mxu0 %v4318
      %v4839 = vpop.f32.mrf.mxu0
      %v4840 = vadd.f32 0.0, %v4839
      %v4841 = vpop.f32.mrf.mxu0
      %v4842 = vpop.f32.mrf.mxu0
      %v4843 = vadd.f32 0.0, %v4842
      %v4844 = vpop.f32.mrf.mxu0
      %4845 = vmatprep.mubr.bf16.mxu0 0
      %4846 = vmatmul.mubr.bf16.gmra.mxu0 %v4321
      %v4847 = vpop.f32.mrf.mxu0
      %v4848 = vadd.f32 0.0, %v4847
      %v4849 = vpop.f32.mrf.mxu0
      %v4850 = vpop.f32.mrf.mxu0
      %v4851 = vadd.f32 0.0, %v4850
      %v4852 = vpop.f32.mrf.mxu0
      %4853 = vmatprep.mubr.bf16.mxu0 0
      %4854 = vmatmul.mubr.bf16.gmra.mxu0 %v4324
      %v4855 = vpop.f32.mrf.mxu0
      %v4856 = vadd.f32 0.0, %v4855
      %v4857 = vpop.f32.mrf.mxu0
      %v4858 = vpop.f32.mrf.mxu0
      %v4859 = vadd.f32 0.0, %v4858
      %v4860 = vpop.f32.mrf.mxu0
      %4861 = vmatprep.mubr.bf16.mxu0 0
      %4862 = vmatmul.mubr.bf16.gmra.mxu0 %v4327
      %v4863 = vpop.f32.mrf.mxu0
      %v4864 = vadd.f32 0.0, %v4863
      %v4865 = vpop.f32.mrf.mxu0
      %v4866 = vpop.f32.mrf.mxu0
      %v4867 = vadd.f32 0.0, %v4866
      %v4868 = vpop.f32.mrf.mxu0
      %4869 = vmatprep.mubr.bf16.mxu0 0
      %4870 = vmatmul.mubr.bf16.gmra.mxu0 %v4330
      %v4871 = vpop.f32.mrf.mxu0
      %v4872 = vadd.f32 0.0, %v4871
      %v4873 = vpop.f32.mrf.mxu0
      %v4874 = vpop.f32.mrf.mxu0
      %v4875 = vadd.f32 0.0, %v4874
      %v4876 = vpop.f32.mrf.mxu0
      %4877 = vmatprep.mubr.bf16.mxu0 0
      %4878 = vmatmul.mubr.bf16.gmra.mxu0 %v4333
      %v4879 = vpop.f32.mrf.mxu0
      %v4880 = vadd.f32 0.0, %v4879
      %v4881 = vpop.f32.mrf.mxu0
      %v4882 = vpop.f32.mrf.mxu0
      %v4883 = vadd.f32 0.0, %v4882
      %v4884 = vpop.f32.mrf.mxu0
      %4885 = vmatprep.mubr.bf16.mxu0 0
      %4886 = vmatmul.mubr.bf16.gmra.mxu0 %v4542
      %v4887 = vpop.f32.mrf.mxu0
      %v4888 = vadd.f32 0.0, %v4887
      %v4889 = vpop.f32.mrf.mxu0
      %v4890 = vpop.f32.mrf.mxu0
      %v4891 = vadd.f32 0.0, %v4890
      %v4892 = vpop.f32.mrf.mxu0
      %4893 = vmatprep.mubr.bf16.mxu0 0
      %4894 = vmatmul.mubr.bf16.gmra.mxu0 %v4545
      %v4895 = vpop.f32.mrf.mxu0
      %v4896 = vadd.f32 0.0, %v4895
      %v4897 = vpop.f32.mrf.mxu0
      %v4898 = vpop.f32.mrf.mxu0
      %v4899 = vadd.f32 0.0, %v4898
      %v4900 = vpop.f32.mrf.mxu0
      %4901 = vmatprep.mubr.bf16.mxu0 0
      %4902 = vmatmul.mubr.bf16.gmra.mxu0 %v4754
      %v4903 = vpop.f32.mrf.mxu0
      %v4904 = vadd.f32 0.0, %v4903
      %v4905 = vpop.f32.mrf.mxu0
      %v4906 = vpop.f32.mrf.mxu0
      %v4907 = vadd.f32 0.0, %v4906
      %v4908 = vpop.f32.mrf.mxu0
      %4909 = vmatprep.mubr.bf16.mxu0 0
      %4910 = vmatmul.mubr.bf16.gmra.mxu0 %v4757
      %v4911 = vpop.f32.mrf.mxu0
      %v4912 = vadd.f32 0.0, %v4911
      %v4913 = vpop.f32.mrf.mxu0
      %v4914 = vpop.f32.mrf.mxu0
      %v4915 = vadd.f32 0.0, %v4914
      %v4916 = vpop.f32.mrf.mxu0
      %4917 = vmatprep.mubr.bf16.mxu0 0
      %4918 = vmatmul.mubr.bf16.gmra.mxu0 %v4760
      %v4919 = vpop.f32.mrf.mxu0
      %v4920 = vadd.f32 0.0, %v4919
      %v4921 = vpop.f32.mrf.mxu0
      %v4922 = vpop.f32.mrf.mxu0
      %v4923 = vadd.f32 0.0, %v4922
      %v4924 = vpop.f32.mrf.mxu0
      %4925 = vdwg.mxu0
      %v4926 = vadd.f32 %v4714, %v4800
      %v4927 = vadd.f32 %v4715, %v4803
      %v4928 = vadd.f32 %v4716, %v4808
      %v4929 = vadd.f32 %v4717, %v4811
      %v4930 = vadd.f32 %v4718, %v4816
      %v4931 = vadd.f32 %v4719, %v4819
      %v4932 = vadd.f32 %v4720, %v4824
      %v4933 = vadd.f32 %v4721, %v4827
      %v4934 = vadd.f32 %v4722, %v4832
      %v4935 = vadd.f32 %v4723, %v4835
      %v4936 = vadd.f32 %v4724, %v4840
      %v4937 = vadd.f32 %v4725, %v4843
      %v4938 = vadd.f32 %v4726, %v4848
      %v4939 = vadd.f32 %v4727, %v4851
      %v4940 = vadd.f32 %v4728, %v4856
      %v4941 = vadd.f32 %v4729, %v4859
      %v4942 = vadd.f32 %v4730, %v4864
      %v4943 = vadd.f32 %v4731, %v4867
      %v4944 = vadd.f32 %v4732, %v4872
      %v4945 = vadd.f32 %v4733, %v4875
      %v4946 = vadd.f32 %v4734, %v4880
      %v4947 = vadd.f32 %v4735, %v4883
      %v4948 = vadd.f32 %v4736, %v4888
      %v4949 = vadd.f32 %v4737, %v4891
      %v4950 = vadd.f32 %v4738, %v4896
      %v4951 = vadd.f32 %v4739, %v4899
      %v4952 = vadd.f32 %v4740, %v4904
      %v4953 = vadd.f32 %v4741, %v4907
      %v4954 = vadd.f32 %v4742, %v4912
      %v4955 = vadd.f32 %v4743, %v4915
      %v4956 = vadd.f32 %v4744, %v4920
      %v4957 = vadd.f32 %v4745, %v4923
      %v4958 = vadd.f32 %v4926, %v2486
      %v4959 = vadd.f32 %v4927, %v2486
      %v4960 = vadd.f32 %v4928, %v2486
      %v4961 = vadd.f32 %v4929, %v2486
      %v4962 = vadd.f32 %v4930, %v2486
      %v4963 = vadd.f32 %v4931, %v2486
      %v4964 = vadd.f32 %v4932, %v2486
      %v4965 = vadd.f32 %v4933, %v2486
      %v4966 = vadd.f32 %v4934, %v2486
      %v4967 = vadd.f32 %v4935, %v2486
      %v4968 = vadd.f32 %v4936, %v2486
      %v4969 = vadd.f32 %v4937, %v2486
      %v4970 = vadd.f32 %v4938, %v2486
      %v4971 = vadd.f32 %v4939, %v2486
      %v4972 = vadd.f32 %v4940, %v2486
      %v4973 = vadd.f32 %v4941, %v2486
      %v4974 = vadd.f32 %v4942, %v2486
      %v4975 = vadd.f32 %v4943, %v2486
      %v4976 = vadd.f32 %v4944, %v2486
      %v4977 = vadd.f32 %v4945, %v2486
      %v4978 = vadd.f32 %v4946, %v2486
      %v4979 = vadd.f32 %v4947, %v2486
      %v4980 = vadd.f32 %v4948, %v2486
      %v4981 = vadd.f32 %v4949, %v2486
      %v4982 = vadd.f32 %v4950, %v2486
      %v4983 = vadd.f32 %v4951, %v2486
      %v4984 = vadd.f32 %v4952, %v2486
      %v4985 = vadd.f32 %v4953, %v2486
      %v4986 = vadd.f32 %v4954, %v2486
      %v4987 = vadd.f32 %v4955, %v2486
      %v4988 = vadd.f32 %v4956, %v2486
      %v4989 = vadd.f32 %v4957, %v2486
      %v4990 = vmax.f32 %v4958, 0.0
      %v4991 = vmax.f32 %v4959, 0.0
      %v4992 = vmax.f32 %v4960, 0.0
      %v4993 = vmax.f32 %v4961, 0.0
      %v4994 = vmax.f32 %v4962, 0.0
      %v4995 = vmax.f32 %v4963, 0.0
      %v4996 = vmax.f32 %v4964, 0.0
      %v4997 = vmax.f32 %v4965, 0.0
      %v4998 = vmax.f32 %v4966, 0.0
      %v4999 = vmax.f32 %v4967, 0.0
      %v5000 = vmax.f32 %v4968, 0.0
      %v5001 = vmax.f32 %v4969, 0.0
      %v5002 = vmax.f32 %v4970, 0.0
      %v5003 = vmax.f32 %v4971, 0.0
      %v5004 = vmax.f32 %v4972, 0.0
      %v5005 = vmax.f32 %v4973, 0.0
      %v5006 = vmax.f32 %v4974, 0.0
      %v5007 = vmax.f32 %v4975, 0.0
      %v5008 = vmax.f32 %v4976, 0.0
      %v5009 = vmax.f32 %v4977, 0.0
      %v5010 = vmax.f32 %v4978, 0.0
      %v5011 = vmax.f32 %v4979, 0.0
      %v5012 = vmax.f32 %v4980, 0.0
      %v5013 = vmax.f32 %v4981, 0.0
      %v5014 = vmax.f32 %v4982, 0.0
      %v5015 = vmax.f32 %v4983, 0.0
      %v5016 = vmax.f32 %v4984, 0.0
      %v5017 = vmax.f32 %v4985, 0.0
      %v5018 = vmax.f32 %v4986, 0.0
      %v5019 = vmax.f32 %v4987, 0.0
      %v5020 = vmax.f32 %v4988, 0.0
      %v5021 = vmax.f32 %v4989, 0.0
      %v5022 = vpack.c.bf16 %v4991, %v4990
      %v5023 = vpack.c.bf16 %v4993, %v4992
      %v5024 = vpack.c.bf16 %v4995, %v4994
      %v5025 = vpack.c.bf16 %v4997, %v4996
      %v5026 = vpack.c.bf16 %v4999, %v4998
      %v5027 = vpack.c.bf16 %v5001, %v5000
      %v5028 = vpack.c.bf16 %v5003, %v5002
      %v5029 = vpack.c.bf16 %v5005, %v5004
      %v5030 = vpack.c.bf16 %v5007, %v5006
      %v5031 = vpack.c.bf16 %v5009, %v5008
      %v5032 = vpack.c.bf16 %v5011, %v5010
      %v5033 = vpack.c.bf16 %v5013, %v5012
      %v5034 = vpack.c.bf16 %v5015, %v5014
      %v5035 = vpack.c.bf16 %v5017, %v5016
      %v5036 = vpack.c.bf16 %v5019, %v5018
      %v5037 = vpack.c.bf16 %v5021, %v5020
      %v5054 = vunpack.c.l.b16 %v5022
      %v5055 = vunpack.c.h.b16 %v5022
      %v5056 = vunpack.c.l.b16 %v5023
      %v5057 = vunpack.c.h.b16 %v5023
      %v5058 = vunpack.c.l.b16 %v5024
      %v5059 = vunpack.c.h.b16 %v5024
      %v5060 = vunpack.c.l.b16 %v5025
      %v5061 = vunpack.c.h.b16 %v5025
      %v5062 = vunpack.c.l.b16 %v5026
      %v5063 = vunpack.c.h.b16 %v5026
      %v5064 = vunpack.c.l.b16 %v5027
      %v5065 = vunpack.c.h.b16 %v5027
      %v5066 = vunpack.c.l.b16 %v5028
      %v5067 = vunpack.c.h.b16 %v5028
      %v5068 = vunpack.c.l.b16 %v5029
      %v5069 = vunpack.c.h.b16 %v5029
      %v5070 = vunpack.c.l.b16 %v5030
      %v5071 = vunpack.c.h.b16 %v5030
      %v5072 = vunpack.c.l.b16 %v5031
      %v5073 = vunpack.c.h.b16 %v5031
      %v5074 = vunpack.c.l.b16 %v5032
      %v5075 = vunpack.c.h.b16 %v5032
      %v5076 = vunpack.c.l.b16 %v5033
      %v5077 = vunpack.c.h.b16 %v5033
      %v5078 = vunpack.c.l.b16 %v5034
      %v5079 = vunpack.c.h.b16 %v5034
      %v5080 = vunpack.c.l.b16 %v5035
      %v5081 = vunpack.c.h.b16 %v5035
      %v5082 = vunpack.c.l.b16 %v5036
      %v5083 = vunpack.c.h.b16 %v5036
      %v5084 = vunpack.c.l.b16 %v5037
      %v5085 = vunpack.c.h.b16 %v5037
      %v5086 = vpack.c.b16 %v5054, %v5054
      %v5087 = vpack.c.b16 %v5055, %v5055
      %v5088 = vpack.c.b16 %v5056, %v5056
      %v5089 = vpack.c.b16 %v5057, %v5057
      %v5090 = vpack.c.b16 %v5058, %v5058
      %v5091 = vpack.c.b16 %v5059, %v5059
      %v5092 = vpack.c.b16 %v5060, %v5060
      %v5093 = vpack.c.b16 %v5061, %v5061
      %v5094 = vpack.c.b16 %v5062, %v5062
      %v5095 = vpack.c.b16 %v5063, %v5063
      %v5096 = vpack.c.b16 %v5064, %v5064
      %v5097 = vpack.c.b16 %v5065, %v5065
      %v5098 = vpack.c.b16 %v5066, %v5066
      %v5099 = vpack.c.b16 %v5067, %v5067
      %v5100 = vpack.c.b16 %v5068, %v5068
      %v5101 = vpack.c.b16 %v5069, %v5069
      %v5102 = vpack.c.b16 %v5070, %v5070
      %v5103 = vpack.c.b16 %v5071, %v5071
      %v5104 = vpack.c.b16 %v5072, %v5072
      %v5105 = vpack.c.b16 %v5073, %v5073
      %v5106 = vpack.c.b16 %v5074, %v5074
      %v5107 = vpack.c.b16 %v5075, %v5075
      %v5108 = vpack.c.b16 %v5076, %v5076
      %v5109 = vpack.c.b16 %v5077, %v5077
      %v5110 = vpack.c.b16 %v5078, %v5078
      %v5111 = vpack.c.b16 %v5079, %v5079
      %v5112 = vpack.c.b16 %v5080, %v5080
      %v5113 = vpack.c.b16 %v5081, %v5081
      %v5114 = vpack.c.b16 %v5082, %v5082
      %v5115 = vpack.c.b16 %v5083, %v5083
      %v5116 = vpack.c.b16 %v5084, %v5084
      %v5117 = vpack.c.b16 %v5085, %v5085
      %5150 = vst [vmem:[%s221 + $0x80] sm:$0xf] %v5086
      %5151 = vst [vmem:[%s221 + $0x84] sm:$0xf] %v5087
      %5152 = vst [vmem:[%s221 + $0x88] sm:$0xf] %v5088
      %5153 = vst [vmem:[%s221 + $0x8c] sm:$0xf] %v5089
      %5154 = vst [vmem:[%s221 + $0x90] sm:$0xf] %v5090
      %5155 = vst [vmem:[%s221 + $0x94] sm:$0xf] %v5091
      %5156 = vst [vmem:[%s221 + $0x98] sm:$0xf] %v5092
      %5157 = vst [vmem:[%s221 + $0x9c] sm:$0xf] %v5093
      %5158 = vst [vmem:[%s221 + $0xa0] sm:$0xf] %v5094
      %5159 = vst [vmem:[%s221 + $0xa4] sm:$0xf] %v5095
      %5160 = vst [vmem:[%s221 + $0xa8] sm:$0xf] %v5096
      %5161 = vst [vmem:[%s221 + $0xac] sm:$0xf] %v5097
      %5162 = vst [vmem:[%s221 + $0xb0] sm:$0xf] %v5098
      %5163 = vst [vmem:[%s221 + $0xb4] sm:$0xf] %v5099
      %5164 = vst [vmem:[%s221 + $0xb8] sm:$0xf] %v5100
      %5165 = vst [vmem:[%s221 + $0xbc] sm:$0xf] %v5101
      %5166 = vst [vmem:[%s221 + $0xc0] sm:$0xf] %v5102
      %5167 = vst [vmem:[%s221 + $0xc4] sm:$0xf] %v5103
      %5168 = vst [vmem:[%s221 + $0xc8] sm:$0xf] %v5104
      %5169 = vst [vmem:[%s221 + $0xcc] sm:$0xf] %v5105
      %5170 = vst [vmem:[%s221 + $0xd0] sm:$0xf] %v5106
      %5171 = vst [vmem:[%s221 + $0xd4] sm:$0xf] %v5107
      %5172 = vst [vmem:[%s221 + $0xd8] sm:$0xf] %v5108
      %5173 = vst [vmem:[%s221 + $0xdc] sm:$0xf] %v5109
      %5174 = vst [vmem:[%s221 + $0xe0] sm:$0xf] %v5110
      %5175 = vst [vmem:[%s221 + $0xe4] sm:$0xf] %v5111
      %5176 = vst [vmem:[%s221 + $0xe8] sm:$0xf] %v5112
      %5177 = vst [vmem:[%s221 + $0xec] sm:$0xf] %v5113
      %5178 = vst [vmem:[%s221 + $0xf0] sm:$0xf] %v5114
      %5179 = vst [vmem:[%s221 + $0xf4] sm:$0xf] %v5115
      %5180 = vst [vmem:[%s221 + $0xf8] sm:$0xf] %v5116
      %5181 = vst [vmem:[%s221 + $0xfc] sm:$0xf] %v5117
      %p5182 = scmp.lt.s32.totalorder %s18, 1
      %s5183 = scalar_select %p5182, %s18, 1
      %p5184 = scmp.lt.s32.totalorder %s19, 0
      %s5185 = scalar_select %p5184, %s19, 0
      %s5186 = smul.addr %s5183, 64
      %s5187 = sadd.s32 %s5185, %s5186
      %s5188 = smul.addr %s5187, 4
      %s5189 = scalar_lea.vmem %s3, %s5188
      // Predicated region
      $region33: #{hyper_analysis_ex.3} parent=31 // pred_check
        %p5190 = pneg %p124
      $region34: #{hyper_analysis_ex.3} parent=31 // pred_check_branch
        %5192 = sbr.rel (%p5190) target = $region36
      $region35: #{hyper_analysis_ex.3} parent=31 // pred_region
        _
      $region36: #{hyper_analysis_ex.3} parent=31 // pred_fallthru
        _
    $region32: #{hyper_analysis_ex.3} parent=5 // pred_fallthru
      _
    %p5193 = scmp.le.s32.totalorder 2, %s9
    // Predicated region
    $region37: #{hyper_analysis_ex.3} parent=5 // pred_check
      %p5194 = pneg %p5193
    $region38: #{hyper_analysis_ex.3} parent=5 // pred_check_branch
      %5196 = sbr.rel (%p5194) target = $region40
    $region39: #{hyper_analysis_ex.3} parent=5 // pred_region
      %s5197 = ssub.s32 %s9, 2
      // Predicated region
      $region41: #{hyper_analysis_ex.3} parent=39 // pred_check
        %p5198 = pneg %p130
      $region42: #{hyper_analysis_ex.3} parent=39 // pred_check_branch
        %5200 = sbr.rel (%p5198) target = $region44
      $region43: #{hyper_analysis_ex.3} parent=39 // pred_region
        %p5201 = scmp.lt.s32.totalorder %s20, 1
        %s5202 = scalar_select %p5201, %s20, 1
        %p5203 = scmp.lt.s32.totalorder %s21, 0
        %s5204 = scalar_select %p5203, %s21, 0
        %s5205 = smul.addr %s5202, 64
        %s5206 = sadd.s32 %s5204, %s5205
        %s5207 = smul.addr %s5206, 4
        %s5208 = scalar_lea.vmem %s3, %s5207
      $region44: #{hyper_analysis_ex.3} parent=39 // pred_fallthru
        _
    $region40: #{hyper_analysis_ex.3} parent=5 // pred_fallthru
      _
  $region6: #{hyper_analysis_ex.3} parent=0 // loop_footer
    %s13 = sadd.s32 1, %s9
  $region7: #{hyper_analysis_ex.3} parent=0 // loop_footer_branch
    %8 = sbr.rel target = $region3
  $region8: #{hyper_analysis_ex.3} parent=0 // loop_exit
    _

// kernel: hyper_analysis_ex.4
$region0: #{hyper_analysis_ex.4}
  #allocation0 [shape = 'u32[]', space=smem, size = 0x4, offset = 0x4, fixed_abs, tag = 'smem constant byte address 0x4 - core index']
  #allocation1 [shape = 'u32[144,128]{1,0:T(1,128)}', space=vmem, size = 0x12000, scoped, tag = 'internal scratch']
  %s0 = inlined_call_operand.vmem [shape: bf16[2,304,32], index: 0, kind: input, shape index: {}]
  %s1 = inlined_call_operand.vmem [shape: bf16[9,32,128], index: 1, kind: input, shape index: {}]
  %s2 = inlined_call_operand.vmem [shape: f32[1,128], index: 2, kind: input, shape index: {}]
  %s3 = inlined_call_operand.vmem [shape: bf16[2,256,128], index: 3, kind: output, shape index: {}]
  %s4 = sld [smem:[#allocation0]]
  $region45: #{hyper_analysis_ex.4} parent=0
    _
  %s6 = ssub.s32 1, %s4
  %s7 = scalar_select 0, %s6, %s4
  loop: start=0, step=1, limit=4
  $region2: #{hyper_analysis_ex.4} parent=0 // loop_pre_header
    _
  $region3: #{hyper_analysis_ex.4} parent=0 // loop_header
    %s9 = sphi 0, %s13
    %p10 = scmp.ge.s32.totalorder %s9, 4
    %s16 = sphi 0, %s28
    %s17 = sphi 0, %s24
    %s18 = sphi 0, %s16
    %s19 = sphi 0, %s17
    %s20 = sphi 0, %s18
    %s21 = sphi 0, %s19
    %s31 = sphi 0, %s33
    %s34 = sphi 0, %s31
    %s35 = sphi 0, %s34
    %s51 = sphi 0, %s35
    %s57 = sphi 0, %s59
    %s60 = sphi 0, %s57
    %s61 = sphi 0, %s60
    %s77 = sphi 0, %s61
    %s83 = sphi 0, %s85
    %s86 = sphi 0, %s83
    %s87 = sphi 0, %s86
    %s103 = sphi 0, %s87
    %s111 = sphi 0, %s113
    %s114 = sphi 0, %s111
    %s115 = sphi 0, %s114
    %s131 = sphi 0, %s115
  $region4: #{hyper_analysis_ex.4} parent=0 // loop_header_branch
    %12 = sbr.rel (%p10) target = $region8
  $region5: #{hyper_analysis_ex.4} parent=0 // loop_body
    %s14 = ssub.s32 %s9, 1
    %s15 = ssub.s32 %s9, 2
    %s22 = sadd.s32 1, %s17
    %p23 = scmp.ge.s32.totalorder %s22, 1
    %s24 = scalar_select %p23, 0, %s22
    %s25 = sadd.s32 1, %s16
    %s26 = scalar_select %p23, %s25, %s16
    %p27 = scmp.ge.s32.totalorder %s26, 2
    %s28 = scalar_select %p27, 0, %s26
    %s29 = ssub.s32 %s16, %s28
    %p30 = scmp.eq.s32.totalorder %s29, 0
    %s32 = sadd.s32 %s31, 1
    %s33 = scalar_select %p30, %s31, %s32
    %p36 = pneg %p30
    %p37 = scmp.eq.s32.totalorder %s9, 1
    %p38 = por %p36, %p37
    %p39 = scmp.ne.s32.totalorder %s31, %s34
    %p40 = scmp.eq.s32.totalorder %s9, 0
    %p41 = por %p39, %p40
    %p42 = scmp.ne.s32.totalorder %s31, %s34
    %p43 = scmp.eq.s32.totalorder %s14, 1
    %p44 = por %p42, %p43
    %p45 = scmp.ne.s32.totalorder %s34, %s35
    %p46 = scmp.eq.s32.totalorder %s14, 0
    %p47 = por %p45, %p46
    %p48 = scmp.ne.s32.totalorder %s34, %s35
    %p49 = scmp.eq.s32.totalorder %s15, 1
    %p50 = por %p48, %p49
    %p52 = scmp.ne.s32.totalorder %s35, %s51
    %p53 = scmp.eq.s32.totalorder %s15, 0
    %p54 = por %p52, %p53
    %s55 = ssub.s32 %s17, %s24
    %p56 = scmp.eq.s32.totalorder %s55, 0
    %s58 = sadd.s32 %s57, 1
    %s59 = scalar_select %p56, %s57, %s58
    %p62 = pneg %p56
    %p63 = scmp.eq.s32.totalorder %s9, 1
    %p64 = por %p62, %p63
    %p65 = scmp.ne.s32.totalorder %s57, %s60
    %p66 = scmp.eq.s32.totalorder %s9, 0
    %p67 = por %p65, %p66
    %p68 = scmp.ne.s32.totalorder %s57, %s60
    %p69 = scmp.eq.s32.totalorder %s14, 1
    %p70 = por %p68, %p69
    %p71 = scmp.ne.s32.totalorder %s60, %s61
    %p72 = scmp.eq.s32.totalorder %s14, 0
    %p73 = por %p71, %p72
    %p74 = scmp.ne.s32.totalorder %s60, %s61
    %p75 = scmp.eq.s32.totalorder %s15, 1
    %p76 = por %p74, %p75
    %p78 = scmp.ne.s32.totalorder %s61, %s77
    %p79 = scmp.eq.s32.totalorder %s15, 0
    %p80 = por %p78, %p79
    %s81 = ssub.s32 %s17, %s24
    %p82 = scmp.eq.s32.totalorder %s81, 0
    %s84 = sadd.s32 %s83, 1
    %s85 = scalar_select %p82, %s83, %s84
    %p88 = pneg %p82
    %p89 = scmp.eq.s32.totalorder %s9, 1
    %p90 = por %p88, %p89
    %p91 = scmp.ne.s32.totalorder %s83, %s86
    %p92 = scmp.eq.s32.totalorder %s9, 0
    %p93 = por %p91, %p92
    %p94 = scmp.ne.s32.totalorder %s83, %s86
    %p95 = scmp.eq.s32.totalorder %s14, 1
    %p96 = por %p94, %p95
    %p97 = scmp.ne.s32.totalorder %s86, %s87
    %p98 = scmp.eq.s32.totalorder %s14, 0
    %p99 = por %p97, %p98
    %p100 = scmp.ne.s32.totalorder %s86, %s87
    %p101 = scmp.eq.s32.totalorder %s15, 1
    %p102 = por %p100, %p101
    %p104 = scmp.ne.s32.totalorder %s87, %s103
    %p105 = scmp.eq.s32.totalorder %s15, 0
    %p106 = por %p104, %p105
    %s107 = ssub.s32 %s16, %s28
    %s108 = ssub.s32 %s17, %s24
    %s109 = sor.u32 %s107, %s108
    %p110 = scmp.eq.s32.totalorder %s109, 0
    %s112 = sadd.s32 %s111, 1
    %s113 = scalar_select %p110, %s111, %s112
    %p116 = pneg %p110
    %p117 = scmp.eq.s32.totalorder %s9, 1
    %p118 = por %p116, %p117
    %p119 = scmp.ne.s32.totalorder %s111, %s114
    %p120 = scmp.eq.s32.totalorder %s9, 0
    %p121 = por %p119, %p120
    %p122 = scmp.ne.s32.totalorder %s111, %s114
    %p123 = scmp.eq.s32.totalorder %s14, 1
    %p124 = por %p122, %p123
    %p125 = scmp.ne.s32.totalorder %s114, %s115
    %p126 = scmp.eq.s32.totalorder %s14, 0
    %p127 = por %p125, %p126
    %p128 = scmp.ne.s32.totalorder %s114, %s115
    %p129 = scmp.eq.s32.totalorder %s15, 1
    %p130 = por %p128, %p129
    %p132 = scmp.ne.s32.totalorder %s115, %s131
    %p133 = scmp.eq.s32.totalorder %s15, 0
    %p134 = por %p132, %p133
    %p135 = scmp.le.s32.totalorder 1, %s9
    %p136 = scmp.lt.s32.totalorder %s9, 3
    %p137 = pnand %p135, %p136
    %p138 = pneg %p137
    // Predicated region
    $region9: #{hyper_analysis_ex.4} parent=5 // pred_check
      _
    $region10: #{hyper_analysis_ex.4} parent=5 // pred_check_branch
      %140 = sbr.rel (%p137) target = $region12
    $region11: #{hyper_analysis_ex.4} parent=5 // pred_region
      %s141 = ssub.s32 %s9, 1
      // Predicated region
      $region13: #{hyper_analysis_ex.4} parent=11 // pred_check
        %p142 = pneg %p73
      $region14: #{hyper_analysis_ex.4} parent=11 // pred_check_branch
        %144 = sbr.rel (%p142) target = $region16
      $region15: #{hyper_analysis_ex.4} parent=11 // pred_region
        %p145 = scmp.lt.s32.totalorder %s19, 0
        %s146 = scalar_select %p145, %s19, 0
        %s147 = smul.addr %s146, 4
        %s148 = scalar_lea.vmem %s1, %s147
      $region16: #{hyper_analysis_ex.4} parent=11 // pred_fallthru
        _
      // Predicated region
      $region17: #{hyper_analysis_ex.4} parent=11 // pred_check
        %p149 = pneg %p99
      $region18: #{hyper_analysis_ex.4} parent=11 // pred_check_branch
        %151 = sbr.rel (%p149) target = $region20
      $region19: #{hyper_analysis_ex.4} parent=11 // pred_region
        %p152 = scmp.lt.s32.totalorder %s19, 0
        %s153 = scalar_select %p152, %s19, 0
        %s154 = scalar_lea.vmem %s2, %s153
      $region20: #{hyper_analysis_ex.4} parent=11 // pred_fallthru
        _
    $region12: #{hyper_analysis_ex.4} parent=5 // pred_fallthru
      _
    %p155 = scmp.lt.s32.totalorder %s9, 2
    // Predicated region
    $region21: #{hyper_analysis_ex.4} parent=5 // pred_check
      %p156 = pneg %p155
    $region22: #{hyper_analysis_ex.4} parent=5 // pred_check_branch
      %158 = sbr.rel (%p156) target = $region24
    $region23: #{hyper_analysis_ex.4} parent=5 // pred_region
      // Predicated region
      $region25: #{hyper_analysis_ex.4} parent=23 // pred_check
        %p159 = pneg %p41
      $region26: #{hyper_analysis_ex.4} parent=23 // pred_check_branch
        %161 = sbr.rel (%p159) target = $region28
      $region27: #{hyper_analysis_ex.4} parent=23 // pred_region
        %p162 = scmp.lt.s32.totalorder %s16, 1
        %s163 = scalar_select %p162, %s16, 1
        %s164 = smul.addr %s163, 38
        %s165 = smul.addr %s164, 4
        %s166 = scalar_lea.vmem %s0, %s165
      $region28: #{hyper_analysis_ex.4} parent=23 // pred_fallthru
        _
    $region24: #{hyper_analysis_ex.4} parent=5 // pred_fallthru
      _
    %p167 = scmp.le.s32.totalorder 1, %s9
    %p168 = scmp.lt.s32.totalorder %s9, 3
    %p169 = pnand %p167, %p168
    %p170 = pneg %p169
    // Predicated region
    $region29: #{hyper_analysis_ex.4} parent=5 // pred_check
      _
    $region30: #{hyper_analysis_ex.4} parent=5 // pred_check_branch
      %172 = sbr.rel (%p169) target = $region32
    $region31: #{hyper_analysis_ex.4} parent=5 // pred_region
      %s173 = ssub.s32 %s9, 1
      %p174 = scmp.lt.s32.totalorder %s18, 1
      %s175 = scalar_select %p174, %s18, 1
      %s176 = smul.addr %s175, 38
      %s177 = smul.addr %s176, 4
      %s178 = scalar_lea.vmem %s0, %s177
      %p179 = pneg %p47
      %p180 = pneg %p44
      %p181 = scmp.lt.s32.totalorder %s19, 0
      %s182 = scalar_select %p181, %s19, 0
      %s183 = smul.addr %s182, 4
      %s184 = scalar_lea.vmem %s1, %s183
      %p185 = pneg %p73
      %p186 = pneg %p70
      %p187 = scmp.lt.s32.totalorder %s19, 0
      %s188 = scalar_select %p187, %s19, 0
      %s189 = scalar_lea.vmem %s2, %s188
      %p190 = pneg %p99
      %p191 = pneg %p96
      %p192 = pneg %p127
      %p193 = pneg %p124
      %p194 = scmp.lt.s32.totalorder %s18, 1
      %s195 = scalar_select %p194, %s18, 1
      %p196 = scmp.lt.s32.totalorder %s19, 0
      %s197 = scalar_select %p196, %s19, 0
      %s198 = smul.addr %s195, 32
      %s199 = sadd.s32 %s197, %s198
      %s200 = smul.addr %s199, 4
      %s201 = scalar_lea.vmem %s3, %s200
      %p202 = scmp.lt.s32.totalorder %s18, 1
      %s203 = scalar_select %p202, %s18, 1
      %s204 = smul.addr %s203, 38
      %s205 = smul.addr %s204, 4
      %s206 = scalar_lea.vmem %s0, %s205
      %p207 = scmp.lt.s32.totalorder %s19, 0
      %s208 = scalar_select %p207, %s19, 0
      %s209 = smul.addr %s208, 4
      %s210 = scalar_lea.vmem %s1, %s209
      %p211 = scmp.lt.s32.totalorder %s19, 0
      %s212 = scalar_select %p211, %s19, 0
      %s213 = scalar_lea.vmem %s2, %s212
      %p214 = scmp.lt.s32.totalorder %s18, 1
      %s215 = scalar_select %p214, %s18, 1
      %p216 = scmp.lt.s32.totalorder %s19, 0
      %s217 = scalar_select %p216, %s19, 0
      %s218 = smul.addr %s215, 32
      %s219 = sadd.s32 %s217, %s218
      %s220 = smul.addr %s219, 4
      %s221 = scalar_lea.vmem %s3, %s220
      %v223 = vld [vmem:[%s213] sm:$0x1]
      %v224 = vld [vmem:[%s206] sm:$0xf]
      %v225 = vld [vmem:[%s206 + $0x4] sm:$0xf]
      %v226 = vld [vmem:[%s206 + $0x8] sm:$0xf]
      %v227 = vld [vmem:[%s206 + $0xc] sm:$0xf]
      %v228 = vld [vmem:[%s206 + $0x10] sm:$0xf]
      %v229 = vld [vmem:[%s206 + $0x14] sm:$0xf]
      %v230 = vld [vmem:[%s206 + $0x18] sm:$0xf]
      %v231 = vld [vmem:[%s206 + $0x1c] sm:$0xf]
      %v232 = vld [vmem:[%s206 + $0x20] sm:$0xf]
      %v233 = vld [vmem:[%s206 + $0x24] sm:$0xf]
      %v234 = vld [vmem:[%s206 + $0x28] sm:$0xf]
      %v235 = vld [vmem:[%s206 + $0x2c] sm:$0xf]
      %v236 = vld [vmem:[%s206 + $0x30] sm:$0xf]
      %v237 = vld [vmem:[%s206 + $0x34] sm:$0xf]
      %v238 = vld [vmem:[%s206 + $0x38] sm:$0xf]
      %v239 = vld [vmem:[%s206 + $0x3c] sm:$0xf]
      %v240 = vld [vmem:[%s206 + $0x40] sm:$0xf]
      %v241 = vld [vmem:[%s206 + $0x44] sm:$0xf]
      %v242 = vld [vmem:[%s206 + $0x48] sm:$0xf]
      %v243 = vld [vmem:[%s206 + $0x4c] sm:$0xf]
      %v244 = vld [vmem:[%s206 + $0x50] sm:$0xf]
      %v245 = vld [vmem:[%s206 + $0x54] sm:$0xf]
      %v246 = vld [vmem:[%s206 + $0x58] sm:$0xf]
      %v247 = vld [vmem:[%s206 + $0x5c] sm:$0xf]
      %v248 = vld [vmem:[%s206 + $0x60] sm:$0xf]
      %v249 = vld [vmem:[%s206 + $0x64] sm:$0xf]
      %v250 = vld [vmem:[%s206 + $0x68] sm:$0xf]
      %v251 = vld [vmem:[%s206 + $0x6c] sm:$0xf]
      %v252 = vld [vmem:[%s206 + $0x70] sm:$0xf]
      %v253 = vld [vmem:[%s206 + $0x74] sm:$0xf]
      %v254 = vld [vmem:[%s206 + $0x78] sm:$0xf]
      %v255 = vld [vmem:[%s206 + $0x7c] sm:$0xf]
      %v256 = vld [vmem:[%s206 + $0x80] sm:$0xf]
      %v257 = vld [vmem:[%s206 + $0x84] sm:$0xf]
      %v258 = vld [vmem:[%s206 + $0x88] sm:$0xf]
      %v259 = vld [vmem:[%s206 + $0x8c] sm:$0xf]
      %v260 = vld [vmem:[%s206 + $0x90] sm:$0xf]
      %v261 = vld [vmem:[%s210] sm:$0xf]
      %v262 = vld [vmem:[%s210 + $0x4] sm:$0xf]
      %v263 = vld [vmem:[%s210 + $0x8] sm:$0xf]
      %v264 = vld [vmem:[%s210 + $0xc] sm:$0xf]
      %s265 = scalar_lea.vmem %s210, 48
      %v266 = vld [vmem:[%s265] sm:$0xf]
      %v267 = vld [vmem:[%s265 + $0x4] sm:$0xf]
      %v268 = vld [vmem:[%s265 + $0x8] sm:$0xf]
      %v269 = vld [vmem:[%s265 + $0xc] sm:$0xf]
      %v302 = vunpack.c.l.b16 %v226
      %v303 = vunpack.c.l.b16 %v227
      %v304 = vunpack.c.l.b16 %v228
      %v305 = vunpack.c.l.b16 %v229
      %v306 = vunpack.c.l.b16 %v230
      %v307 = vunpack.c.l.b16 %v231
      %v308 = vunpack.c.l.b16 %v232
      %v309 = vunpack.c.l.b16 %v233
      %v310 = vunpack.c.l.b16 %v234
      %v311 = vunpack.c.l.b16 %v235
      %v312 = vunpack.c.l.b16 %v236
      %v313 = vunpack.c.l.b16 %v237
      %v314 = vunpack.c.l.b16 %v238
      %v315 = vunpack.c.l.b16 %v239
      %v316 = vunpack.c.l.b16 %v240
      %v317 = vunpack.c.l.b16 %v241
      %v318 = vunpack.c.l.b16 %v242
      %v319 = vunpack.c.l.b16 %v243
      %v320 = vunpack.c.l.b16 %v244
      %v321 = vunpack.c.l.b16 %v245
      %v322 = vunpack.c.l.b16 %v246
      %v323 = vunpack.c.l.b16 %v247
      %v324 = vunpack.c.l.b16 %v248
      %v325 = vunpack.c.l.b16 %v249
      %v326 = vunpack.c.l.b16 %v250
      %v327 = vunpack.c.l.b16 %v251
      %v328 = vunpack.c.l.b16 %v252
      %v329 = vunpack.c.l.b16 %v253
      %v330 = vunpack.c.l.b16 %v254
      %v331 = vunpack.c.l.b16 %v255
      %v332 = vunpack.c.l.b16 %v256
      %v333 = vunpack.c.l.b16 %v257
      %v334 = vpack.c.b16 %v303, %v302
      %v335 = vpack.c.b16 %v305, %v304
      %v336 = vpack.c.b16 %v307, %v306
      %v337 = vpack.c.b16 %v309, %v308
      %v338 = vpack.c.b16 %v311, %v310
      %v339 = vpack.c.b16 %v313, %v312
      %v340 = vpack.c.b16 %v315, %v314
      %v341 = vpack.c.b16 %v317, %v316
      %v342 = vpack.c.b16 %v319, %v318
      %v343 = vpack.c.b16 %v321, %v320
      %v344 = vpack.c.b16 %v323, %v322
      %v345 = vpack.c.b16 %v325, %v324
      %v346 = vpack.c.b16 %v327, %v326
      %v347 = vpack.c.b16 %v329, %v328
      %v348 = vpack.c.b16 %v331, %v330
      %v349 = vpack.c.b16 %v333, %v332
      %v354 = vunpack.c.l.b16 %v266
      %v355 = vunpack.c.l.b16 %v267
      %v356 = vunpack.c.l.b16 %v268
      %v357 = vunpack.c.l.b16 %v269
      %v358 = vpack.c.b16 %v355, %v354
      %v359 = vpack.c.b16 %v357, %v356
      %vm362 = vcmask 261120
      %v364 = vsel %vm362, %v334, 0
      %v367 = vsel %vm362, %v335, 0
      %v370 = vsel %vm362, %v336, 0
      %v373 = vsel %vm362, %v337, 0
      %v376 = vsel %vm362, %v338, 0
      %v379 = vsel %vm362, %v339, 0
      %v382 = vsel %vm362, %v340, 0
      %v385 = vsel %vm362, %v341, 0
      %v388 = vsel %vm362, %v342, 0
      %v391 = vsel %vm362, %v343, 0
      %v394 = vsel %vm362, %v344, 0
      %v397 = vsel %vm362, %v345, 0
      %v400 = vsel %vm362, %v346, 0
      %v403 = vsel %vm362, %v347, 0
      %v406 = vsel %vm362, %v348, 0
      %v409 = vsel %vm362, %v349, 0
      %411 = vmatprep.subr.bf16.mxu0 0
      %412 = vmatpush1.bf16.msra.mxu0 0
      %413 = vmatprep.subr.bf16.mxu0 0
      %414 = vmatpush1.bf16.msra.mxu0 0
      %415 = vmatprep.subr.bf16.mxu0 0
      %416 = vmatpush1.bf16.msra.mxu0 0
      %417 = vmatprep.subr.bf16.mxu0 0
      %418 = vmatpush1.bf16.msra.mxu0 0
      %419 = vmatprep.subr.bf16.mxu0 0
      %420 = vmatpush1.bf16.msra.mxu0 0
      %421 = vmatprep.subr.bf16.mxu0 0
      %422 = vmatpush1.bf16.msra.mxu0 0
      %423 = vmatprep.subr.bf16.mxu0 0
      %424 = vmatpush1.bf16.msra.mxu0 %v359
      %425 = vmatprep.subr.bf16.mxu0 0
      %426 = vmatpush1.bf16.msra.mxu0 %v358
      %427 = vmatprep.subr.bf16.mxu0 0
      %428 = vmatpush2.bf16.msra.mxu0 0
      %429 = vmatprep.subr.bf16.mxu0 0
      %430 = vmatpush2.bf16.msra.mxu0 0
      %431 = vmatprep.subr.bf16.mxu0 0
      %432 = vmatpush2.bf16.msra.mxu0 0
      %433 = vmatprep.subr.bf16.mxu0 0
      %434 = vmatpush2.bf16.msra.mxu0 0
      %435 = vmatprep.subr.bf16.mxu0 0
      %436 = vmatpush2.bf16.msra.mxu0 0
      %437 = vmatprep.subr.bf16.mxu0 0
      %438 = vmatpush2.bf16.msra.mxu0 0
      %439 = vmatprep.subr.bf16.mxu0 0
      %440 = vmatpush2.bf16.msra.mxu0 0
      %441 = vmatprep.subr.bf16.mxu0 0
      %442 = vmatpush2.bf16.msra.mxu0 0
      %443 = vmatprep.mubr.bf16.mxu0 0
      %444 = vmatmul.mubr.bf16.gmra.mxu0 %v364
      %v445 = vpop.f32.mrf.mxu0
      %v446 = vadd.f32 0.0, %v445
      %v447 = vpop.f32.mrf.mxu0
      %v448 = vpop.f32.mrf.mxu0
      %v449 = vadd.f32 0.0, %v448
      %v450 = vpop.f32.mrf.mxu0
      %451 = vmatprep.mubr.bf16.mxu0 0
      %452 = vmatmul.mubr.bf16.gmra.mxu0 %v367
      %v453 = vpop.f32.mrf.mxu0
      %v454 = vadd.f32 0.0, %v453
      %v455 = vpop.f32.mrf.mxu0
      %v456 = vpop.f32.mrf.mxu0
      %v457 = vadd.f32 0.0, %v456
      %v458 = vpop.f32.mrf.mxu0
      %459 = vmatprep.mubr.bf16.mxu0 0
      %460 = vmatmul.mubr.bf16.gmra.mxu0 %v370
      %v461 = vpop.f32.mrf.mxu0
      %v462 = vadd.f32 0.0, %v461
      %v463 = vpop.f32.mrf.mxu0
      %v464 = vpop.f32.mrf.mxu0
      %v465 = vadd.f32 0.0, %v464
      %v466 = vpop.f32.mrf.mxu0
      %467 = vmatprep.mubr.bf16.mxu0 0
      %468 = vmatmul.mubr.bf16.gmra.mxu0 %v373
      %v469 = vpop.f32.mrf.mxu0
      %v470 = vadd.f32 0.0, %v469
      %v471 = vpop.f32.mrf.mxu0
      %v472 = vpop.f32.mrf.mxu0
      %v473 = vadd.f32 0.0, %v472
      %v474 = vpop.f32.mrf.mxu0
      %475 = vmatprep.mubr.bf16.mxu0 0
      %476 = vmatmul.mubr.bf16.gmra.mxu0 %v376
      %v477 = vpop.f32.mrf.mxu0
      %v478 = vadd.f32 0.0, %v477
      %v479 = vpop.f32.mrf.mxu0
      %v480 = vpop.f32.mrf.mxu0
      %v481 = vadd.f32 0.0, %v480
      %v482 = vpop.f32.mrf.mxu0
      %483 = vmatprep.mubr.bf16.mxu0 0
      %484 = vmatmul.mubr.bf16.gmra.mxu0 %v379
      %v485 = vpop.f32.mrf.mxu0
      %v486 = vadd.f32 0.0, %v485
      %v487 = vpop.f32.mrf.mxu0
      %v488 = vpop.f32.mrf.mxu0
      %v489 = vadd.f32 0.0, %v488
      %v490 = vpop.f32.mrf.mxu0
      %491 = vmatprep.mubr.bf16.mxu0 0
      %492 = vmatmul.mubr.bf16.gmra.mxu0 %v382
      %v493 = vpop.f32.mrf.mxu0
      %v494 = vadd.f32 0.0, %v493
      %v495 = vpop.f32.mrf.mxu0
      %v496 = vpop.f32.mrf.mxu0
      %v497 = vadd.f32 0.0, %v496
      %v498 = vpop.f32.mrf.mxu0
      %499 = vmatprep.mubr.bf16.mxu0 0
      %500 = vmatmul.mubr.bf16.gmra.mxu0 %v385
      %v501 = vpop.f32.mrf.mxu0
      %v502 = vadd.f32 0.0, %v501
      %v503 = vpop.f32.mrf.mxu0
      %v504 = vpop.f32.mrf.mxu0
      %v505 = vadd.f32 0.0, %v504
      %v506 = vpop.f32.mrf.mxu0
      %507 = vmatprep.mubr.bf16.mxu0 0
      %508 = vmatmul.mubr.bf16.gmra.mxu0 %v388
      %v509 = vpop.f32.mrf.mxu0
      %v510 = vadd.f32 0.0, %v509
      %v511 = vpop.f32.mrf.mxu0
      %v512 = vpop.f32.mrf.mxu0
      %v513 = vadd.f32 0.0, %v512
      %v514 = vpop.f32.mrf.mxu0
      %515 = vmatprep.mubr.bf16.mxu0 0
      %516 = vmatmul.mubr.bf16.gmra.mxu0 %v391
      %v517 = vpop.f32.mrf.mxu0
      %v518 = vadd.f32 0.0, %v517
      %v519 = vpop.f32.mrf.mxu0
      %v520 = vpop.f32.mrf.mxu0
      %v521 = vadd.f32 0.0, %v520
      %v522 = vpop.f32.mrf.mxu0
      %523 = vmatprep.mubr.bf16.mxu0 0
      %524 = vmatmul.mubr.bf16.gmra.mxu0 %v394
      %v525 = vpop.f32.mrf.mxu0
      %v526 = vadd.f32 0.0, %v525
      %v527 = vpop.f32.mrf.mxu0
      %v528 = vpop.f32.mrf.mxu0
      %v529 = vadd.f32 0.0, %v528
      %v530 = vpop.f32.mrf.mxu0
      %531 = vmatprep.mubr.bf16.mxu0 0
      %532 = vmatmul.mubr.bf16.gmra.mxu0 %v397
      %v533 = vpop.f32.mrf.mxu0
      %v534 = vadd.f32 0.0, %v533
      %v535 = vpop.f32.mrf.mxu0
      %v536 = vpop.f32.mrf.mxu0
      %v537 = vadd.f32 0.0, %v536
      %v538 = vpop.f32.mrf.mxu0
      %539 = vmatprep.mubr.bf16.mxu0 0
      %540 = vmatmul.mubr.bf16.gmra.mxu0 %v400
      %v541 = vpop.f32.mrf.mxu0
      %v542 = vadd.f32 0.0, %v541
      %v543 = vpop.f32.mrf.mxu0
      %v544 = vpop.f32.mrf.mxu0
      %v545 = vadd.f32 0.0, %v544
      %v546 = vpop.f32.mrf.mxu0
      %547 = vmatprep.mubr.bf16.mxu0 0
      %548 = vmatmul.mubr.bf16.gmra.mxu0 %v403
      %v549 = vpop.f32.mrf.mxu0
      %v550 = vadd.f32 0.0, %v549
      %v551 = vpop.f32.mrf.mxu0
      %v552 = vpop.f32.mrf.mxu0
      %v553 = vadd.f32 0.0, %v552
      %v554 = vpop.f32.mrf.mxu0
      %555 = vmatprep.mubr.bf16.mxu0 0
      %556 = vmatmul.mubr.bf16.gmra.mxu0 %v406
      %v557 = vpop.f32.mrf.mxu0
      %v558 = vadd.f32 0.0, %v557
      %v559 = vpop.f32.mrf.mxu0
      %v560 = vpop.f32.mrf.mxu0
      %v561 = vadd.f32 0.0, %v560
      %v562 = vpop.f32.mrf.mxu0
      %563 = vmatprep.mubr.bf16.mxu0 0
      %564 = vmatmul.mubr.bf16.gmra.mxu0 %v409
      %v565 = vpop.f32.mrf.mxu0
      %v566 = vadd.f32 0.0, %v565
      %v567 = vpop.f32.mrf.mxu0
      %v568 = vpop.f32.mrf.mxu0
      %v569 = vadd.f32 0.0, %v568
      %v570 = vpop.f32.mrf.mxu0
      %571 = vdwg.mxu0
      %v574 = vunpack.c.l.b16 %v224
      %v575 = vunpack.c.l.b16 %v225
      %v576 = vpack.c.b16 %v575, %v574
      %v581 = vunpack.c.l.b16 %v261
      %v582 = vunpack.c.l.b16 %v262
      %v583 = vunpack.c.l.b16 %v263
      %v584 = vunpack.c.l.b16 %v264
      %v585 = vpack.c.b16 %v582, %v581
      %v586 = vpack.c.b16 %v584, %v583
      %v590 = vsel %vm362, %v576, 0
      %592 = vmatprep.subr.bf16.mxu0 0
      %593 = vmatpush1.bf16.msra.mxu0 0
      %594 = vmatprep.subr.bf16.mxu0 0
      %595 = vmatpush1.bf16.msra.mxu0 0
      %596 = vmatprep.subr.bf16.mxu0 0
      %597 = vmatpush1.bf16.msra.mxu0 0
      %598 = vmatprep.subr.bf16.mxu0 0
      %599 = vmatpush1.bf16.msra.mxu0 0
      %600 = vmatprep.subr.bf16.mxu0 0
      %601 = vmatpush1.bf16.msra.mxu0 0
      %602 = vmatprep.subr.bf16.mxu0 0
      %603 = vmatpush1.bf16.msra.mxu0 0
      %604 = vmatprep.subr.bf16.mxu0 0
      %605 = vmatpush1.bf16.msra.mxu0 %v586
      %606 = vmatprep.subr.bf16.mxu0 0
      %607 = vmatpush1.bf16.msra.mxu0 %v585
      %608 = vmatprep.subr.bf16.mxu0 0
      %609 = vmatpush2.bf16.msra.mxu0 0
      %610 = vmatprep.subr.bf16.mxu0 0
      %611 = vmatpush2.bf16.msra.mxu0 0
      %612 = vmatprep.subr.bf16.mxu0 0
      %613 = vmatpush2.bf16.msra.mxu0 0
      %614 = vmatprep.subr.bf16.mxu0 0
      %615 = vmatpush2.bf16.msra.mxu0 0
      %616 = vmatprep.subr.bf16.mxu0 0
      %617 = vmatpush2.bf16.msra.mxu0 0
      %618 = vmatprep.subr.bf16.mxu0 0
      %619 = vmatpush2.bf16.msra.mxu0 0
      %620 = vmatprep.subr.bf16.mxu0 0
      %621 = vmatpush2.bf16.msra.mxu0 0
      %622 = vmatprep.subr.bf16.mxu0 0
      %623 = vmatpush2.bf16.msra.mxu0 0
      %624 = vmatprep.mubr.bf16.mxu0 0
      %625 = vmatmul.mubr.bf16.gmra.mxu0 %v590
      %v626 = vpop.f32.mrf.mxu0
      %v627 = vadd.f32 %v446, %v626
      %v628 = vpop.f32.mrf.mxu0
      %v629 = vpop.f32.mrf.mxu0
      %v630 = vadd.f32 %v449, %v629
      %v631 = vpop.f32.mrf.mxu0
      %632 = vmatprep.mubr.bf16.mxu0 0
      %633 = vmatmul.mubr.bf16.gmra.mxu0 %v364
      %v634 = vpop.f32.mrf.mxu0
      %v635 = vadd.f32 %v454, %v634
      %v636 = vpop.f32.mrf.mxu0
      %v637 = vpop.f32.mrf.mxu0
      %v638 = vadd.f32 %v457, %v637
      %v639 = vpop.f32.mrf.mxu0
      %640 = vmatprep.mubr.bf16.mxu0 0
      %641 = vmatmul.mubr.bf16.gmra.mxu0 %v367
      %v642 = vpop.f32.mrf.mxu0
      %v643 = vadd.f32 %v462, %v642
      %v644 = vpop.f32.mrf.mxu0
      %v645 = vpop.f32.mrf.mxu0
      %v646 = vadd.f32 %v465, %v645
      %v647 = vpop.f32.mrf.mxu0
      %648 = vmatprep.mubr.bf16.mxu0 0
      %649 = vmatmul.mubr.bf16.gmra.mxu0 %v370
      %v650 = vpop.f32.mrf.mxu0
      %v651 = vadd.f32 %v470, %v650
      %v652 = vpop.f32.mrf.mxu0
      %v653 = vpop.f32.mrf.mxu0
      %v654 = vadd.f32 %v473, %v653
      %v655 = vpop.f32.mrf.mxu0
      %656 = vmatprep.mubr.bf16.mxu0 0
      %657 = vmatmul.mubr.bf16.gmra.mxu0 %v373
      %v658 = vpop.f32.mrf.mxu0
      %v659 = vadd.f32 %v478, %v658
      %v660 = vpop.f32.mrf.mxu0
      %v661 = vpop.f32.mrf.mxu0
      %v662 = vadd.f32 %v481, %v661
      %v663 = vpop.f32.mrf.mxu0
      %664 = vmatprep.mubr.bf16.mxu0 0
      %665 = vmatmul.mubr.bf16.gmra.mxu0 %v376
      %v666 = vpop.f32.mrf.mxu0
      %v667 = vadd.f32 %v486, %v666
      %v668 = vpop.f32.mrf.mxu0
      %v669 = vpop.f32.mrf.mxu0
      %v670 = vadd.f32 %v489, %v669
      %v671 = vpop.f32.mrf.mxu0
      %672 = vmatprep.mubr.bf16.mxu0 0
      %673 = vmatmul.mubr.bf16.gmra.mxu0 %v379
      %v674 = vpop.f32.mrf.mxu0
      %v675 = vadd.f32 %v494, %v674
      %v676 = vpop.f32.mrf.mxu0
      %v677 = vpop.f32.mrf.mxu0
      %v678 = vadd.f32 %v497, %v677
      %v679 = vpop.f32.mrf.mxu0
      %680 = vmatprep.mubr.bf16.mxu0 0
      %681 = vmatmul.mubr.bf16.gmra.mxu0 %v382
      %v682 = vpop.f32.mrf.mxu0
      %v683 = vadd.f32 %v502, %v682
      %v684 = vpop.f32.mrf.mxu0
      %v685 = vpop.f32.mrf.mxu0
      %v686 = vadd.f32 %v505, %v685
      %v687 = vpop.f32.mrf.mxu0
      %688 = vmatprep.mubr.bf16.mxu0 0
      %689 = vmatmul.mubr.bf16.gmra.mxu0 %v385
      %v690 = vpop.f32.mrf.mxu0
      %v691 = vadd.f32 %v510, %v690
      %v692 = vpop.f32.mrf.mxu0
      %v693 = vpop.f32.mrf.mxu0
      %v694 = vadd.f32 %v513, %v693
      %v695 = vpop.f32.mrf.mxu0
      %696 = vmatprep.mubr.bf16.mxu0 0
      %697 = vmatmul.mubr.bf16.gmra.mxu0 %v388
      %v698 = vpop.f32.mrf.mxu0
      %v699 = vadd.f32 %v518, %v698
      %v700 = vpop.f32.mrf.mxu0
      %v701 = vpop.f32.mrf.mxu0
      %v702 = vadd.f32 %v521, %v701
      %v703 = vpop.f32.mrf.mxu0
      %704 = vmatprep.mubr.bf16.mxu0 0
      %705 = vmatmul.mubr.bf16.gmra.mxu0 %v391
      %v706 = vpop.f32.mrf.mxu0
      %v707 = vadd.f32 %v526, %v706
      %v708 = vpop.f32.mrf.mxu0
      %v709 = vpop.f32.mrf.mxu0
      %v710 = vadd.f32 %v529, %v709
      %v711 = vpop.f32.mrf.mxu0
      %712 = vmatprep.mubr.bf16.mxu0 0
      %713 = vmatmul.mubr.bf16.gmra.mxu0 %v394
      %v714 = vpop.f32.mrf.mxu0
      %v715 = vadd.f32 %v534, %v714
      %v716 = vpop.f32.mrf.mxu0
      %v717 = vpop.f32.mrf.mxu0
      %v718 = vadd.f32 %v537, %v717
      %v719 = vpop.f32.mrf.mxu0
      %720 = vmatprep.mubr.bf16.mxu0 0
      %721 = vmatmul.mubr.bf16.gmra.mxu0 %v397
      %v722 = vpop.f32.mrf.mxu0
      %v723 = vadd.f32 %v542, %v722
      %v724 = vpop.f32.mrf.mxu0
      %v725 = vpop.f32.mrf.mxu0
      %v726 = vadd.f32 %v545, %v725
      %v727 = vpop.f32.mrf.mxu0
      %728 = vmatprep.mubr.bf16.mxu0 0
      %729 = vmatmul.mubr.bf16.gmra.mxu0 %v400
      %v730 = vpop.f32.mrf.mxu0
      %v731 = vadd.f32 %v550, %v730
      %v732 = vpop.f32.mrf.mxu0
      %v733 = vpop.f32.mrf.mxu0
      %v734 = vadd.f32 %v553, %v733
      %v735 = vpop.f32.mrf.mxu0
      %736 = vmatprep.mubr.bf16.mxu0 0
      %737 = vmatmul.mubr.bf16.gmra.mxu0 %v403
      %v738 = vpop.f32.mrf.mxu0
      %v739 = vadd.f32 %v558, %v738
      %v740 = vpop.f32.mrf.mxu0
      %v741 = vpop.f32.mrf.mxu0
      %v742 = vadd.f32 %v561, %v741
      %v743 = vpop.f32.mrf.mxu0
      %744 = vmatprep.mubr.bf16.mxu0 0
      %745 = vmatmul.mubr.bf16.gmra.mxu0 %v406
      %v746 = vpop.f32.mrf.mxu0
      %v747 = vadd.f32 %v566, %v746
      %v748 = vpop.f32.mrf.mxu0
      %v749 = vpop.f32.mrf.mxu0
      %v750 = vadd.f32 %v569, %v749
      %v751 = vpop.f32.mrf.mxu0
      %752 = vdwg.mxu0
      %s753 = scalar_lea.vmem %s210, 96
      %v754 = vld [vmem:[%s753] sm:$0xf]
      %v755 = vld [vmem:[%s753 + $0x4] sm:$0xf]
      %v756 = vld [vmem:[%s753 + $0x8] sm:$0xf]
      %v757 = vld [vmem:[%s753 + $0xc] sm:$0xf]
      %v760 = vunpack.c.l.b16 %v258
      %v761 = vunpack.c.l.b16 %v259
      %v762 = vpack.c.b16 %v761, %v760
      %v767 = vunpack.c.l.b16 %v754
      %v768 = vunpack.c.l.b16 %v755
      %v769 = vunpack.c.l.b16 %v756
      %v770 = vunpack.c.l.b16 %v757
      %v771 = vpack.c.b16 %v768, %v767
      %v772 = vpack.c.b16 %v770, %v769
      %v776 = vsel %vm362, %v762, 0
      %778 = vmatprep.subr.bf16.mxu0 0
      %779 = vmatpush1.bf16.msra.mxu0 0
      %780 = vmatprep.subr.bf16.mxu0 0
      %781 = vmatpush1.bf16.msra.mxu0 0
      %782 = vmatprep.subr.bf16.mxu0 0
      %783 = vmatpush1.bf16.msra.mxu0 0
      %784 = vmatprep.subr.bf16.mxu0 0
      %785 = vmatpush1.bf16.msra.mxu0 0
      %786 = vmatprep.subr.bf16.mxu0 0
      %787 = vmatpush1.bf16.msra.mxu0 0
      %788 = vmatprep.subr.bf16.mxu0 0
      %789 = vmatpush1.bf16.msra.mxu0 0
      %790 = vmatprep.subr.bf16.mxu0 0
      %791 = vmatpush1.bf16.msra.mxu0 %v772
      %792 = vmatprep.subr.bf16.mxu0 0
      %793 = vmatpush1.bf16.msra.mxu0 %v771
      %794 = vmatprep.subr.bf16.mxu0 0
      %795 = vmatpush2.bf16.msra.mxu0 0
      %796 = vmatprep.subr.bf16.mxu0 0
      %797 = vmatpush2.bf16.msra.mxu0 0
      %798 = vmatprep.subr.bf16.mxu0 0
      %799 = vmatpush2.bf16.msra.mxu0 0
      %800 = vmatprep.subr.bf16.mxu0 0
      %801 = vmatpush2.bf16.msra.mxu0 0
      %802 = vmatprep.subr.bf16.mxu0 0
      %803 = vmatpush2.bf16.msra.mxu0 0
      %804 = vmatprep.subr.bf16.mxu0 0
      %805 = vmatpush2.bf16.msra.mxu0 0
      %806 = vmatprep.subr.bf16.mxu0 0
      %807 = vmatpush2.bf16.msra.mxu0 0
      %808 = vmatprep.subr.bf16.mxu0 0
      %809 = vmatpush2.bf16.msra.mxu0 0
      %810 = vmatprep.mubr.bf16.mxu0 0
      %811 = vmatmul.mubr.bf16.gmra.mxu0 %v367
      %v812 = vpop.f32.mrf.mxu0
      %v813 = vadd.f32 0.0, %v812
      %v814 = vpop.f32.mrf.mxu0
      %v815 = vpop.f32.mrf.mxu0
      %v816 = vadd.f32 0.0, %v815
      %v817 = vpop.f32.mrf.mxu0
      %818 = vmatprep.mubr.bf16.mxu0 0
      %819 = vmatmul.mubr.bf16.gmra.mxu0 %v370
      %v820 = vpop.f32.mrf.mxu0
      %v821 = vadd.f32 0.0, %v820
      %v822 = vpop.f32.mrf.mxu0
      %v823 = vpop.f32.mrf.mxu0
      %v824 = vadd.f32 0.0, %v823
      %v825 = vpop.f32.mrf.mxu0
      %826 = vmatprep.mubr.bf16.mxu0 0
      %827 = vmatmul.mubr.bf16.gmra.mxu0 %v373
      %v828 = vpop.f32.mrf.mxu0
      %v829 = vadd.f32 0.0, %v828
      %v830 = vpop.f32.mrf.mxu0
      %v831 = vpop.f32.mrf.mxu0
      %v832 = vadd.f32 0.0, %v831
      %v833 = vpop.f32.mrf.mxu0
      %834 = vmatprep.mubr.bf16.mxu0 0
      %835 = vmatmul.mubr.bf16.gmra.mxu0 %v376
      %v836 = vpop.f32.mrf.mxu0
      %v837 = vadd.f32 0.0, %v836
      %v838 = vpop.f32.mrf.mxu0
      %v839 = vpop.f32.mrf.mxu0
      %v840 = vadd.f32 0.0, %v839
      %v841 = vpop.f32.mrf.mxu0
      %842 = vmatprep.mubr.bf16.mxu0 0
      %843 = vmatmul.mubr.bf16.gmra.mxu0 %v379
      %v844 = vpop.f32.mrf.mxu0
      %v845 = vadd.f32 0.0, %v844
      %v846 = vpop.f32.mrf.mxu0
      %v847 = vpop.f32.mrf.mxu0
      %v848 = vadd.f32 0.0, %v847
      %v849 = vpop.f32.mrf.mxu0
      %850 = vmatprep.mubr.bf16.mxu0 0
      %851 = vmatmul.mubr.bf16.gmra.mxu0 %v382
      %v852 = vpop.f32.mrf.mxu0
      %v853 = vadd.f32 0.0, %v852
      %v854 = vpop.f32.mrf.mxu0
      %v855 = vpop.f32.mrf.mxu0
      %v856 = vadd.f32 0.0, %v855
      %v857 = vpop.f32.mrf.mxu0
      %858 = vmatprep.mubr.bf16.mxu0 0
      %859 = vmatmul.mubr.bf16.gmra.mxu0 %v385
      %v860 = vpop.f32.mrf.mxu0
      %v861 = vadd.f32 0.0, %v860
      %v862 = vpop.f32.mrf.mxu0
      %v863 = vpop.f32.mrf.mxu0
      %v864 = vadd.f32 0.0, %v863
      %v865 = vpop.f32.mrf.mxu0
      %866 = vmatprep.mubr.bf16.mxu0 0
      %867 = vmatmul.mubr.bf16.gmra.mxu0 %v388
      %v868 = vpop.f32.mrf.mxu0
      %v869 = vadd.f32 0.0, %v868
      %v870 = vpop.f32.mrf.mxu0
      %v871 = vpop.f32.mrf.mxu0
      %v872 = vadd.f32 0.0, %v871
      %v873 = vpop.f32.mrf.mxu0
      %874 = vmatprep.mubr.bf16.mxu0 0
      %875 = vmatmul.mubr.bf16.gmra.mxu0 %v391
      %v876 = vpop.f32.mrf.mxu0
      %v877 = vadd.f32 0.0, %v876
      %v878 = vpop.f32.mrf.mxu0
      %v879 = vpop.f32.mrf.mxu0
      %v880 = vadd.f32 0.0, %v879
      %v881 = vpop.f32.mrf.mxu0
      %882 = vmatprep.mubr.bf16.mxu0 0
      %883 = vmatmul.mubr.bf16.gmra.mxu0 %v394
      %v884 = vpop.f32.mrf.mxu0
      %v885 = vadd.f32 0.0, %v884
      %v886 = vpop.f32.mrf.mxu0
      %v887 = vpop.f32.mrf.mxu0
      %v888 = vadd.f32 0.0, %v887
      %v889 = vpop.f32.mrf.mxu0
      %890 = vmatprep.mubr.bf16.mxu0 0
      %891 = vmatmul.mubr.bf16.gmra.mxu0 %v397
      %v892 = vpop.f32.mrf.mxu0
      %v893 = vadd.f32 0.0, %v892
      %v894 = vpop.f32.mrf.mxu0
      %v895 = vpop.f32.mrf.mxu0
      %v896 = vadd.f32 0.0, %v895
      %v897 = vpop.f32.mrf.mxu0
      %898 = vmatprep.mubr.bf16.mxu0 0
      %899 = vmatmul.mubr.bf16.gmra.mxu0 %v400
      %v900 = vpop.f32.mrf.mxu0
      %v901 = vadd.f32 0.0, %v900
      %v902 = vpop.f32.mrf.mxu0
      %v903 = vpop.f32.mrf.mxu0
      %v904 = vadd.f32 0.0, %v903
      %v905 = vpop.f32.mrf.mxu0
      %906 = vmatprep.mubr.bf16.mxu0 0
      %907 = vmatmul.mubr.bf16.gmra.mxu0 %v403
      %v908 = vpop.f32.mrf.mxu0
      %v909 = vadd.f32 0.0, %v908
      %v910 = vpop.f32.mrf.mxu0
      %v911 = vpop.f32.mrf.mxu0
      %v912 = vadd.f32 0.0, %v911
      %v913 = vpop.f32.mrf.mxu0
      %914 = vmatprep.mubr.bf16.mxu0 0
      %915 = vmatmul.mubr.bf16.gmra.mxu0 %v406
      %v916 = vpop.f32.mrf.mxu0
      %v917 = vadd.f32 0.0, %v916
      %v918 = vpop.f32.mrf.mxu0
      %v919 = vpop.f32.mrf.mxu0
      %v920 = vadd.f32 0.0, %v919
      %v921 = vpop.f32.mrf.mxu0
      %922 = vmatprep.mubr.bf16.mxu0 0
      %923 = vmatmul.mubr.bf16.gmra.mxu0 %v409
      %v924 = vpop.f32.mrf.mxu0
      %v925 = vadd.f32 0.0, %v924
      %v926 = vpop.f32.mrf.mxu0
      %v927 = vpop.f32.mrf.mxu0
      %v928 = vadd.f32 0.0, %v927
      %v929 = vpop.f32.mrf.mxu0
      %930 = vmatprep.mubr.bf16.mxu0 0
      %931 = vmatmul.mubr.bf16.gmra.mxu0 %v776
      %v932 = vpop.f32.mrf.mxu0
      %v933 = vadd.f32 0.0, %v932
      %v934 = vpop.f32.mrf.mxu0
      %v935 = vpop.f32.mrf.mxu0
      %v936 = vadd.f32 0.0, %v935
      %v937 = vpop.f32.mrf.mxu0
      %938 = vdwg.mxu0
      %v939 = vadd.f32 %v627, %v813
      %v940 = vadd.f32 %v630, %v816
      %v941 = vadd.f32 %v635, %v821
      %v942 = vadd.f32 %v638, %v824
      %v943 = vadd.f32 %v643, %v829
      %v944 = vadd.f32 %v646, %v832
      %v945 = vadd.f32 %v651, %v837
      %v946 = vadd.f32 %v654, %v840
      %v947 = vadd.f32 %v659, %v845
      %v948 = vadd.f32 %v662, %v848
      %v949 = vadd.f32 %v667, %v853
      %v950 = vadd.f32 %v670, %v856
      %v951 = vadd.f32 %v675, %v861
      %v952 = vadd.f32 %v678, %v864
      %v953 = vadd.f32 %v683, %v869
      %v954 = vadd.f32 %v686, %v872
      %v955 = vadd.f32 %v691, %v877
      %v956 = vadd.f32 %v694, %v880
      %v957 = vadd.f32 %v699, %v885
      %v958 = vadd.f32 %v702, %v888
      %v959 = vadd.f32 %v707, %v893
      %v960 = vadd.f32 %v710, %v896
      %v961 = vadd.f32 %v715, %v901
      %v962 = vadd.f32 %v718, %v904
      %v963 = vadd.f32 %v723, %v909
      %v964 = vadd.f32 %v726, %v912
      %v965 = vadd.f32 %v731, %v917
      %v966 = vadd.f32 %v734, %v920
      %v967 = vadd.f32 %v739, %v925
      %v968 = vadd.f32 %v742, %v928
      %v969 = vadd.f32 %v747, %v933
      %v970 = vadd.f32 %v750, %v936
      %s971 = scalar_lea.vmem %s210, 16
      %v972 = vld [vmem:[%s971] sm:$0xf]
      %v973 = vld [vmem:[%s971 + $0x4] sm:$0xf]
      %v974 = vld [vmem:[%s971 + $0x8] sm:$0xf]
      %v975 = vld [vmem:[%s971 + $0xc] sm:$0xf]
      %v976 = vpack.c.b16 %v332, %v332
      %vm977 = vsmask.f32 7424
      %v978 = vshrl.u32 %v576, 16
      %v980 = vshll.u32 %v576, 16
      %v982 = vrot.slane %v980, 1
      %v983 = vor.u32 %v978, %v982
      %v984 = vshll.u32 %v334, 16
      %v986 = vrot.slane %v984, 1
      %v987 = vsel %vm977, %v983, %v986
      %v988 = vshrl.u32 %v334, 16
      %v990 = vor.u32 %v988, %v986
      %v991 = vshll.u32 %v335, 16
      %v993 = vrot.slane %v991, 1
      %v994 = vsel %vm977, %v990, %v993
      %v995 = vshrl.u32 %v335, 16
      %v997 = vor.u32 %v995, %v993
      %v998 = vshll.u32 %v336, 16
      %v1000 = vrot.slane %v998, 1
      %v1001 = vsel %vm977, %v997, %v1000
      %v1002 = vshrl.u32 %v336, 16
      %v1004 = vor.u32 %v1002, %v1000
      %v1005 = vshll.u32 %v337, 16
      %v1007 = vrot.slane %v1005, 1
      %v1008 = vsel %vm977, %v1004, %v1007
      %v1009 = vshrl.u32 %v337, 16
      %v1011 = vor.u32 %v1009, %v1007
      %v1012 = vshll.u32 %v338, 16
      %v1014 = vrot.slane %v1012, 1
      %v1015 = vsel %vm977, %v1011, %v1014
      %v1016 = vshrl.u32 %v338, 16
      %v1018 = vor.u32 %v1016, %v1014
      %v1019 = vshll.u32 %v339, 16
      %v1021 = vrot.slane %v1019, 1
      %v1022 = vsel %vm977, %v1018, %v1021
      %v1023 = vshrl.u32 %v339, 16
      %v1025 = vor.u32 %v1023, %v1021
      %v1026 = vshll.u32 %v340, 16
      %v1028 = vrot.slane %v1026, 1
      %v1029 = vsel %vm977, %v1025, %v1028
      %v1030 = vshrl.u32 %v340, 16
      %v1032 = vor.u32 %v1030, %v1028
      %v1033 = vshll.u32 %v341, 16
      %v1035 = vrot.slane %v1033, 1
      %v1036 = vsel %vm977, %v1032, %v1035
      %v1037 = vshrl.u32 %v341, 16
      %v1039 = vor.u32 %v1037, %v1035
      %v1040 = vshll.u32 %v342, 16
      %v1042 = vrot.slane %v1040, 1
      %v1043 = vsel %vm977, %v1039, %v1042
      %v1044 = vshrl.u32 %v342, 16
      %v1046 = vor.u32 %v1044, %v1042
      %v1047 = vshll.u32 %v343, 16
      %v1049 = vrot.slane %v1047, 1
      %v1050 = vsel %vm977, %v1046, %v1049
      %v1051 = vshrl.u32 %v343, 16
      %v1053 = vor.u32 %v1051, %v1049
      %v1054 = vshll.u32 %v344, 16
      %v1056 = vrot.slane %v1054, 1
      %v1057 = vsel %vm977, %v1053, %v1056
      %v1058 = vshrl.u32 %v344, 16
      %v1060 = vor.u32 %v1058, %v1056
      %v1061 = vshll.u32 %v345, 16
      %v1063 = vrot.slane %v1061, 1
      %v1064 = vsel %vm977, %v1060, %v1063
      %v1065 = vshrl.u32 %v345, 16
      %v1067 = vor.u32 %v1065, %v1063
      %v1068 = vshll.u32 %v346, 16
      %v1070 = vrot.slane %v1068, 1
      %v1071 = vsel %vm977, %v1067, %v1070
      %v1072 = vshrl.u32 %v346, 16
      %v1074 = vor.u32 %v1072, %v1070
      %v1075 = vshll.u32 %v347, 16
      %v1077 = vrot.slane %v1075, 1
      %v1078 = vsel %vm977, %v1074, %v1077
      %v1079 = vshrl.u32 %v347, 16
      %v1081 = vor.u32 %v1079, %v1077
      %v1082 = vshll.u32 %v348, 16
      %v1084 = vrot.slane %v1082, 1
      %v1085 = vsel %vm977, %v1081, %v1084
      %v1086 = vshrl.u32 %v348, 16
      %v1088 = vor.u32 %v1086, %v1084
      %v1090 = vshll.u32 %v976, 16
      %v1092 = vrot.slane %v1090, 1
      %v1093 = vsel %vm977, %v1088, %v1092
      %v1098 = vunpack.c.l.b16 %v972
      %v1099 = vunpack.c.l.b16 %v973
      %v1100 = vunpack.c.l.b16 %v974
      %v1101 = vunpack.c.l.b16 %v975
      %v1102 = vpack.c.b16 %v1099, %v1098
      %v1103 = vpack.c.b16 %v1101, %v1100
      %v1107 = vsel %vm362, %v987, 0
      %v1110 = vsel %vm362, %v994, 0
      %v1113 = vsel %vm362, %v1001, 0
      %v1116 = vsel %vm362, %v1008, 0
      %v1119 = vsel %vm362, %v1015, 0
      %v1122 = vsel %vm362, %v1022, 0
      %v1125 = vsel %vm362, %v1029, 0
      %v1128 = vsel %vm362, %v1036, 0
      %v1131 = vsel %vm362, %v1043, 0
      %v1134 = vsel %vm362, %v1050, 0
      %v1137 = vsel %vm362, %v1057, 0
      %v1140 = vsel %vm362, %v1064, 0
      %v1143 = vsel %vm362, %v1071, 0
      %v1146 = vsel %vm362, %v1078, 0
      %v1149 = vsel %vm362, %v1085, 0
      %v1152 = vsel %vm362, %v1093, 0
      %1154 = vmatprep.subr.bf16.mxu0 0
      %1155 = vmatpush1.bf16.msra.mxu0 0
      %1156 = vmatprep.subr.bf16.mxu0 0
      %1157 = vmatpush1.bf16.msra.mxu0 0
      %1158 = vmatprep.subr.bf16.mxu0 0
      %1159 = vmatpush1.bf16.msra.mxu0 0
      %1160 = vmatprep.subr.bf16.mxu0 0
      %1161 = vmatpush1.bf16.msra.mxu0 0
      %1162 = vmatprep.subr.bf16.mxu0 0
      %1163 = vmatpush1.bf16.msra.mxu0 0
      %1164 = vmatprep.subr.bf16.mxu0 0
      %1165 = vmatpush1.bf16.msra.mxu0 0
      %1166 = vmatprep.subr.bf16.mxu0 0
      %1167 = vmatpush1.bf16.msra.mxu0 %v1103
      %1168 = vmatprep.subr.bf16.mxu0 0
      %1169 = vmatpush1.bf16.msra.mxu0 %v1102
      %1170 = vmatprep.subr.bf16.mxu0 0
      %1171 = vmatpush2.bf16.msra.mxu0 0
      %1172 = vmatprep.subr.bf16.mxu0 0
      %1173 = vmatpush2.bf16.msra.mxu0 0
      %1174 = vmatprep.subr.bf16.mxu0 0
      %1175 = vmatpush2.bf16.msra.mxu0 0
      %1176 = vmatprep.subr.bf16.mxu0 0
      %1177 = vmatpush2.bf16.msra.mxu0 0
      %1178 = vmatprep.subr.bf16.mxu0 0
      %1179 = vmatpush2.bf16.msra.mxu0 0
      %1180 = vmatprep.subr.bf16.mxu0 0
      %1181 = vmatpush2.bf16.msra.mxu0 0
      %1182 = vmatprep.subr.bf16.mxu0 0
      %1183 = vmatpush2.bf16.msra.mxu0 0
      %1184 = vmatprep.subr.bf16.mxu0 0
      %1185 = vmatpush2.bf16.msra.mxu0 0
      %1186 = vmatprep.mubr.bf16.mxu0 0
      %1187 = vmatmul.mubr.bf16.gmra.mxu0 %v1107
      %v1188 = vpop.f32.mrf.mxu0
      %v1189 = vadd.f32 0.0, %v1188
      %v1190 = vpop.f32.mrf.mxu0
      %v1191 = vpop.f32.mrf.mxu0
      %v1192 = vadd.f32 0.0, %v1191
      %v1193 = vpop.f32.mrf.mxu0
      %1194 = vmatprep.mubr.bf16.mxu0 0
      %1195 = vmatmul.mubr.bf16.gmra.mxu0 %v1110
      %v1196 = vpop.f32.mrf.mxu0
      %v1197 = vadd.f32 0.0, %v1196
      %v1198 = vpop.f32.mrf.mxu0
      %v1199 = vpop.f32.mrf.mxu0
      %v1200 = vadd.f32 0.0, %v1199
      %v1201 = vpop.f32.mrf.mxu0
      %1202 = vmatprep.mubr.bf16.mxu0 0
      %1203 = vmatmul.mubr.bf16.gmra.mxu0 %v1113
      %v1204 = vpop.f32.mrf.mxu0
      %v1205 = vadd.f32 0.0, %v1204
      %v1206 = vpop.f32.mrf.mxu0
      %v1207 = vpop.f32.mrf.mxu0
      %v1208 = vadd.f32 0.0, %v1207
      %v1209 = vpop.f32.mrf.mxu0
      %1210 = vmatprep.mubr.bf16.mxu0 0
      %1211 = vmatmul.mubr.bf16.gmra.mxu0 %v1116
      %v1212 = vpop.f32.mrf.mxu0
      %v1213 = vadd.f32 0.0, %v1212
      %v1214 = vpop.f32.mrf.mxu0
      %v1215 = vpop.f32.mrf.mxu0
      %v1216 = vadd.f32 0.0, %v1215
      %v1217 = vpop.f32.mrf.mxu0
      %1218 = vmatprep.mubr.bf16.mxu0 0
      %1219 = vmatmul.mubr.bf16.gmra.mxu0 %v1119
      %v1220 = vpop.f32.mrf.mxu0
      %v1221 = vadd.f32 0.0, %v1220
      %v1222 = vpop.f32.mrf.mxu0
      %v1223 = vpop.f32.mrf.mxu0
      %v1224 = vadd.f32 0.0, %v1223
      %v1225 = vpop.f32.mrf.mxu0
      %1226 = vmatprep.mubr.bf16.mxu0 0
      %1227 = vmatmul.mubr.bf16.gmra.mxu0 %v1122
      %v1228 = vpop.f32.mrf.mxu0
      %v1229 = vadd.f32 0.0, %v1228
      %v1230 = vpop.f32.mrf.mxu0
      %v1231 = vpop.f32.mrf.mxu0
      %v1232 = vadd.f32 0.0, %v1231
      %v1233 = vpop.f32.mrf.mxu0
      %1234 = vmatprep.mubr.bf16.mxu0 0
      %1235 = vmatmul.mubr.bf16.gmra.mxu0 %v1125
      %v1236 = vpop.f32.mrf.mxu0
      %v1237 = vadd.f32 0.0, %v1236
      %v1238 = vpop.f32.mrf.mxu0
      %v1239 = vpop.f32.mrf.mxu0
      %v1240 = vadd.f32 0.0, %v1239
      %v1241 = vpop.f32.mrf.mxu0
      %1242 = vmatprep.mubr.bf16.mxu0 0
      %1243 = vmatmul.mubr.bf16.gmra.mxu0 %v1128
      %v1244 = vpop.f32.mrf.mxu0
      %v1245 = vadd.f32 0.0, %v1244
      %v1246 = vpop.f32.mrf.mxu0
      %v1247 = vpop.f32.mrf.mxu0
      %v1248 = vadd.f32 0.0, %v1247
      %v1249 = vpop.f32.mrf.mxu0
      %1250 = vmatprep.mubr.bf16.mxu0 0
      %1251 = vmatmul.mubr.bf16.gmra.mxu0 %v1131
      %v1252 = vpop.f32.mrf.mxu0
      %v1253 = vadd.f32 0.0, %v1252
      %v1254 = vpop.f32.mrf.mxu0
      %v1255 = vpop.f32.mrf.mxu0
      %v1256 = vadd.f32 0.0, %v1255
      %v1257 = vpop.f32.mrf.mxu0
      %1258 = vmatprep.mubr.bf16.mxu0 0
      %1259 = vmatmul.mubr.bf16.gmra.mxu0 %v1134
      %v1260 = vpop.f32.mrf.mxu0
      %v1261 = vadd.f32 0.0, %v1260
      %v1262 = vpop.f32.mrf.mxu0
      %v1263 = vpop.f32.mrf.mxu0
      %v1264 = vadd.f32 0.0, %v1263
      %v1265 = vpop.f32.mrf.mxu0
      %1266 = vmatprep.mubr.bf16.mxu0 0
      %1267 = vmatmul.mubr.bf16.gmra.mxu0 %v1137
      %v1268 = vpop.f32.mrf.mxu0
      %v1269 = vadd.f32 0.0, %v1268
      %v1270 = vpop.f32.mrf.mxu0
      %v1271 = vpop.f32.mrf.mxu0
      %v1272 = vadd.f32 0.0, %v1271
      %v1273 = vpop.f32.mrf.mxu0
      %1274 = vmatprep.mubr.bf16.mxu0 0
      %1275 = vmatmul.mubr.bf16.gmra.mxu0 %v1140
      %v1276 = vpop.f32.mrf.mxu0
      %v1277 = vadd.f32 0.0, %v1276
      %v1278 = vpop.f32.mrf.mxu0
      %v1279 = vpop.f32.mrf.mxu0
      %v1280 = vadd.f32 0.0, %v1279
      %v1281 = vpop.f32.mrf.mxu0
      %1282 = vmatprep.mubr.bf16.mxu0 0
      %1283 = vmatmul.mubr.bf16.gmra.mxu0 %v1143
      %v1284 = vpop.f32.mrf.mxu0
      %v1285 = vadd.f32 0.0, %v1284
      %v1286 = vpop.f32.mrf.mxu0
      %v1287 = vpop.f32.mrf.mxu0
      %v1288 = vadd.f32 0.0, %v1287
      %v1289 = vpop.f32.mrf.mxu0
      %1290 = vmatprep.mubr.bf16.mxu0 0
      %1291 = vmatmul.mubr.bf16.gmra.mxu0 %v1146
      %v1292 = vpop.f32.mrf.mxu0
      %v1293 = vadd.f32 0.0, %v1292
      %v1294 = vpop.f32.mrf.mxu0
      %v1295 = vpop.f32.mrf.mxu0
      %v1296 = vadd.f32 0.0, %v1295
      %v1297 = vpop.f32.mrf.mxu0
      %1298 = vmatprep.mubr.bf16.mxu0 0
      %1299 = vmatmul.mubr.bf16.gmra.mxu0 %v1149
      %v1300 = vpop.f32.mrf.mxu0
      %v1301 = vadd.f32 0.0, %v1300
      %v1302 = vpop.f32.mrf.mxu0
      %v1303 = vpop.f32.mrf.mxu0
      %v1304 = vadd.f32 0.0, %v1303
      %v1305 = vpop.f32.mrf.mxu0
      %1306 = vmatprep.mubr.bf16.mxu0 0
      %1307 = vmatmul.mubr.bf16.gmra.mxu0 %v1152
      %v1308 = vpop.f32.mrf.mxu0
      %v1309 = vadd.f32 0.0, %v1308
      %v1310 = vpop.f32.mrf.mxu0
      %v1311 = vpop.f32.mrf.mxu0
      %v1312 = vadd.f32 0.0, %v1311
      %v1313 = vpop.f32.mrf.mxu0
      %1314 = vdwg.mxu0
      %v1315 = vadd.f32 %v939, %v1189
      %v1316 = vadd.f32 %v940, %v1192
      %v1317 = vadd.f32 %v941, %v1197
      %v1318 = vadd.f32 %v942, %v1200
      %v1319 = vadd.f32 %v943, %v1205
      %v1320 = vadd.f32 %v944, %v1208
      %v1321 = vadd.f32 %v945, %v1213
      %v1322 = vadd.f32 %v946, %v1216
      %v1323 = vadd.f32 %v947, %v1221
      %v1324 = vadd.f32 %v948, %v1224
      %v1325 = vadd.f32 %v949, %v1229
      %v1326 = vadd.f32 %v950, %v1232
      %v1327 = vadd.f32 %v951, %v1237
      %v1328 = vadd.f32 %v952, %v1240
      %v1329 = vadd.f32 %v953, %v1245
      %v1330 = vadd.f32 %v954, %v1248
      %v1331 = vadd.f32 %v955, %v1253
      %v1332 = vadd.f32 %v956, %v1256
      %v1333 = vadd.f32 %v957, %v1261
      %v1334 = vadd.f32 %v958, %v1264
      %v1335 = vadd.f32 %v959, %v1269
      %v1336 = vadd.f32 %v960, %v1272
      %v1337 = vadd.f32 %v961, %v1277
      %v1338 = vadd.f32 %v962, %v1280
      %v1339 = vadd.f32 %v963, %v1285
      %v1340 = vadd.f32 %v964, %v1288
      %v1341 = vadd.f32 %v965, %v1293
      %v1342 = vadd.f32 %v966, %v1296
      %v1343 = vadd.f32 %v967, %v1301
      %v1344 = vadd.f32 %v968, %v1304
      %v1345 = vadd.f32 %v969, %v1309
      %v1346 = vadd.f32 %v970, %v1312
      %s1347 = scalar_lea.vmem %s210, 64
      %v1348 = vld [vmem:[%s1347] sm:$0xf]
      %v1349 = vld [vmem:[%s1347 + $0x4] sm:$0xf]
      %v1350 = vld [vmem:[%s1347 + $0x8] sm:$0xf]
      %v1351 = vld [vmem:[%s1347 + $0xc] sm:$0xf]
      %v1352 = vpack.c.b16 %v760, %v760
      %v1353 = vshll.u32 %v349, 16
      %v1355 = vrot.slane %v1353, 1
      %v1356 = vsel %vm977, %v1088, %v1355
      %v1357 = vshrl.u32 %v349, 16
      %v1359 = vor.u32 %v1357, %v1355
      %v1361 = vshll.u32 %v1352, 16
      %v1363 = vrot.slane %v1361, 1
      %v1364 = vsel %vm977, %v1359, %v1363
      %v1369 = vunpack.c.l.b16 %v1348
      %v1370 = vunpack.c.l.b16 %v1349
      %v1371 = vunpack.c.l.b16 %v1350
      %v1372 = vunpack.c.l.b16 %v1351
      %v1373 = vpack.c.b16 %v1370, %v1369
      %v1374 = vpack.c.b16 %v1372, %v1371
      %v1378 = vsel %vm362, %v1356, 0
      %v1381 = vsel %vm362, %v1364, 0
      %1383 = vmatprep.subr.bf16.mxu0 0
      %1384 = vmatpush1.bf16.msra.mxu0 0
      %1385 = vmatprep.subr.bf16.mxu0 0
      %1386 = vmatpush1.bf16.msra.mxu0 0
      %1387 = vmatprep.subr.bf16.mxu0 0
      %1388 = vmatpush1.bf16.msra.mxu0 0
      %1389 = vmatprep.subr.bf16.mxu0 0
      %1390 = vmatpush1.bf16.msra.mxu0 0
      %1391 = vmatprep.subr.bf16.mxu0 0
      %1392 = vmatpush1.bf16.msra.mxu0 0
      %1393 = vmatprep.subr.bf16.mxu0 0
      %1394 = vmatpush1.bf16.msra.mxu0 0
      %1395 = vmatprep.subr.bf16.mxu0 0
      %1396 = vmatpush1.bf16.msra.mxu0 %v1374
      %1397 = vmatprep.subr.bf16.mxu0 0
      %1398 = vmatpush1.bf16.msra.mxu0 %v1373
      %1399 = vmatprep.subr.bf16.mxu0 0
      %1400 = vmatpush2.bf16.msra.mxu0 0
      %1401 = vmatprep.subr.bf16.mxu0 0
      %1402 = vmatpush2.bf16.msra.mxu0 0
      %1403 = vmatprep.subr.bf16.mxu0 0
      %1404 = vmatpush2.bf16.msra.mxu0 0
      %1405 = vmatprep.subr.bf16.mxu0 0
      %1406 = vmatpush2.bf16.msra.mxu0 0
      %1407 = vmatprep.subr.bf16.mxu0 0
      %1408 = vmatpush2.bf16.msra.mxu0 0
      %1409 = vmatprep.subr.bf16.mxu0 0
      %1410 = vmatpush2.bf16.msra.mxu0 0
      %1411 = vmatprep.subr.bf16.mxu0 0
      %1412 = vmatpush2.bf16.msra.mxu0 0
      %1413 = vmatprep.subr.bf16.mxu0 0
      %1414 = vmatpush2.bf16.msra.mxu0 0
      %1415 = vmatprep.mubr.bf16.mxu0 0
      %1416 = vmatmul.mubr.bf16.gmra.mxu0 %v1110
      %v1417 = vpop.f32.mrf.mxu0
      %v1418 = vadd.f32 0.0, %v1417
      %v1419 = vpop.f32.mrf.mxu0
      %v1420 = vpop.f32.mrf.mxu0
      %v1421 = vadd.f32 0.0, %v1420
      %v1422 = vpop.f32.mrf.mxu0
      %1423 = vmatprep.mubr.bf16.mxu0 0
      %1424 = vmatmul.mubr.bf16.gmra.mxu0 %v1113
      %v1425 = vpop.f32.mrf.mxu0
      %v1426 = vadd.f32 0.0, %v1425
      %v1427 = vpop.f32.mrf.mxu0
      %v1428 = vpop.f32.mrf.mxu0
      %v1429 = vadd.f32 0.0, %v1428
      %v1430 = vpop.f32.mrf.mxu0
      %1431 = vmatprep.mubr.bf16.mxu0 0
      %1432 = vmatmul.mubr.bf16.gmra.mxu0 %v1116
      %v1433 = vpop.f32.mrf.mxu0
      %v1434 = vadd.f32 0.0, %v1433
      %v1435 = vpop.f32.mrf.mxu0
      %v1436 = vpop.f32.mrf.mxu0
      %v1437 = vadd.f32 0.0, %v1436
      %v1438 = vpop.f32.mrf.mxu0
      %1439 = vmatprep.mubr.bf16.mxu0 0
      %1440 = vmatmul.mubr.bf16.gmra.mxu0 %v1119
      %v1441 = vpop.f32.mrf.mxu0
      %v1442 = vadd.f32 0.0, %v1441
      %v1443 = vpop.f32.mrf.mxu0
      %v1444 = vpop.f32.mrf.mxu0
      %v1445 = vadd.f32 0.0, %v1444
      %v1446 = vpop.f32.mrf.mxu0
      %1447 = vmatprep.mubr.bf16.mxu0 0
      %1448 = vmatmul.mubr.bf16.gmra.mxu0 %v1122
      %v1449 = vpop.f32.mrf.mxu0
      %v1450 = vadd.f32 0.0, %v1449
      %v1451 = vpop.f32.mrf.mxu0
      %v1452 = vpop.f32.mrf.mxu0
      %v1453 = vadd.f32 0.0, %v1452
      %v1454 = vpop.f32.mrf.mxu0
      %1455 = vmatprep.mubr.bf16.mxu0 0
      %1456 = vmatmul.mubr.bf16.gmra.mxu0 %v1125
      %v1457 = vpop.f32.mrf.mxu0
      %v1458 = vadd.f32 0.0, %v1457
      %v1459 = vpop.f32.mrf.mxu0
      %v1460 = vpop.f32.mrf.mxu0
      %v1461 = vadd.f32 0.0, %v1460
      %v1462 = vpop.f32.mrf.mxu0
      %1463 = vmatprep.mubr.bf16.mxu0 0
      %1464 = vmatmul.mubr.bf16.gmra.mxu0 %v1128
      %v1465 = vpop.f32.mrf.mxu0
      %v1466 = vadd.f32 0.0, %v1465
      %v1467 = vpop.f32.mrf.mxu0
      %v1468 = vpop.f32.mrf.mxu0
      %v1469 = vadd.f32 0.0, %v1468
      %v1470 = vpop.f32.mrf.mxu0
      %1471 = vmatprep.mubr.bf16.mxu0 0
      %1472 = vmatmul.mubr.bf16.gmra.mxu0 %v1131
      %v1473 = vpop.f32.mrf.mxu0
      %v1474 = vadd.f32 0.0, %v1473
      %v1475 = vpop.f32.mrf.mxu0
      %v1476 = vpop.f32.mrf.mxu0
      %v1477 = vadd.f32 0.0, %v1476
      %v1478 = vpop.f32.mrf.mxu0
      %1479 = vmatprep.mubr.bf16.mxu0 0
      %1480 = vmatmul.mubr.bf16.gmra.mxu0 %v1134
      %v1481 = vpop.f32.mrf.mxu0
      %v1482 = vadd.f32 0.0, %v1481
      %v1483 = vpop.f32.mrf.mxu0
      %v1484 = vpop.f32.mrf.mxu0
      %v1485 = vadd.f32 0.0, %v1484
      %v1486 = vpop.f32.mrf.mxu0
      %1487 = vmatprep.mubr.bf16.mxu0 0
      %1488 = vmatmul.mubr.bf16.gmra.mxu0 %v1137
      %v1489 = vpop.f32.mrf.mxu0
      %v1490 = vadd.f32 0.0, %v1489
      %v1491 = vpop.f32.mrf.mxu0
      %v1492 = vpop.f32.mrf.mxu0
      %v1493 = vadd.f32 0.0, %v1492
      %v1494 = vpop.f32.mrf.mxu0
      %1495 = vmatprep.mubr.bf16.mxu0 0
      %1496 = vmatmul.mubr.bf16.gmra.mxu0 %v1140
      %v1497 = vpop.f32.mrf.mxu0
      %v1498 = vadd.f32 0.0, %v1497
      %v1499 = vpop.f32.mrf.mxu0
      %v1500 = vpop.f32.mrf.mxu0
      %v1501 = vadd.f32 0.0, %v1500
      %v1502 = vpop.f32.mrf.mxu0
      %1503 = vmatprep.mubr.bf16.mxu0 0
      %1504 = vmatmul.mubr.bf16.gmra.mxu0 %v1143
      %v1505 = vpop.f32.mrf.mxu0
      %v1506 = vadd.f32 0.0, %v1505
      %v1507 = vpop.f32.mrf.mxu0
      %v1508 = vpop.f32.mrf.mxu0
      %v1509 = vadd.f32 0.0, %v1508
      %v1510 = vpop.f32.mrf.mxu0
      %1511 = vmatprep.mubr.bf16.mxu0 0
      %1512 = vmatmul.mubr.bf16.gmra.mxu0 %v1146
      %v1513 = vpop.f32.mrf.mxu0
      %v1514 = vadd.f32 0.0, %v1513
      %v1515 = vpop.f32.mrf.mxu0
      %v1516 = vpop.f32.mrf.mxu0
      %v1517 = vadd.f32 0.0, %v1516
      %v1518 = vpop.f32.mrf.mxu0
      %1519 = vmatprep.mubr.bf16.mxu0 0
      %1520 = vmatmul.mubr.bf16.gmra.mxu0 %v1149
      %v1521 = vpop.f32.mrf.mxu0
      %v1522 = vadd.f32 0.0, %v1521
      %v1523 = vpop.f32.mrf.mxu0
      %v1524 = vpop.f32.mrf.mxu0
      %v1525 = vadd.f32 0.0, %v1524
      %v1526 = vpop.f32.mrf.mxu0
      %1527 = vmatprep.mubr.bf16.mxu0 0
      %1528 = vmatmul.mubr.bf16.gmra.mxu0 %v1378
      %v1529 = vpop.f32.mrf.mxu0
      %v1530 = vadd.f32 0.0, %v1529
      %v1531 = vpop.f32.mrf.mxu0
      %v1532 = vpop.f32.mrf.mxu0
      %v1533 = vadd.f32 0.0, %v1532
      %v1534 = vpop.f32.mrf.mxu0
      %1535 = vmatprep.mubr.bf16.mxu0 0
      %1536 = vmatmul.mubr.bf16.gmra.mxu0 %v1381
      %v1537 = vpop.f32.mrf.mxu0
      %v1538 = vadd.f32 0.0, %v1537
      %v1539 = vpop.f32.mrf.mxu0
      %v1540 = vpop.f32.mrf.mxu0
      %v1541 = vadd.f32 0.0, %v1540
      %v1542 = vpop.f32.mrf.mxu0
      %1543 = vdwg.mxu0
      %v1544 = vadd.f32 %v1315, %v1418
      %v1545 = vadd.f32 %v1316, %v1421
      %v1546 = vadd.f32 %v1317, %v1426
      %v1547 = vadd.f32 %v1318, %v1429
      %v1548 = vadd.f32 %v1319, %v1434
      %v1549 = vadd.f32 %v1320, %v1437
      %v1550 = vadd.f32 %v1321, %v1442
      %v1551 = vadd.f32 %v1322, %v1445
      %v1552 = vadd.f32 %v1323, %v1450
      %v1553 = vadd.f32 %v1324, %v1453
      %v1554 = vadd.f32 %v1325, %v1458
      %v1555 = vadd.f32 %v1326, %v1461
      %v1556 = vadd.f32 %v1327, %v1466
      %v1557 = vadd.f32 %v1328, %v1469
      %v1558 = vadd.f32 %v1329, %v1474
      %v1559 = vadd.f32 %v1330, %v1477
      %v1560 = vadd.f32 %v1331, %v1482
      %v1561 = vadd.f32 %v1332, %v1485
      %v1562 = vadd.f32 %v1333, %v1490
      %v1563 = vadd.f32 %v1334, %v1493
      %v1564 = vadd.f32 %v1335, %v1498
      %v1565 = vadd.f32 %v1336, %v1501
      %v1566 = vadd.f32 %v1337, %v1506
      %v1567 = vadd.f32 %v1338, %v1509
      %v1568 = vadd.f32 %v1339, %v1514
      %v1569 = vadd.f32 %v1340, %v1517
      %v1570 = vadd.f32 %v1341, %v1522
      %v1571 = vadd.f32 %v1342, %v1525
      %v1572 = vadd.f32 %v1343, %v1530
      %v1573 = vadd.f32 %v1344, %v1533
      %v1574 = vadd.f32 %v1345, %v1538
      %v1575 = vadd.f32 %v1346, %v1541
      %s1576 = scalar_lea.vmem %s210, 112
      %v1577 = vld [vmem:[%s1576] sm:$0xf]
      %v1578 = vld [vmem:[%s1576 + $0x4] sm:$0xf]
      %v1579 = vld [vmem:[%s1576 + $0x8] sm:$0xf]
      %v1580 = vld [vmem:[%s1576 + $0xc] sm:$0xf]
      %v1582 = vunpack.c.l.b16 %v260
      %v1583 = vpack.c.b16 %v1582, %v1582
      %v1584 = vshll.u32 %v762, 16
      %v1586 = vrot.slane %v1584, 1
      %v1587 = vsel %vm977, %v1359, %v1586
      %v1588 = vshrl.u32 %v762, 16
      %v1590 = vor.u32 %v1588, %v1586
      %v1592 = vshll.u32 %v1583, 16
      %v1594 = vrot.slane %v1592, 1
      %v1595 = vsel %vm977, %v1590, %v1594
      %v1600 = vunpack.c.l.b16 %v1577
      %v1601 = vunpack.c.l.b16 %v1578
      %v1602 = vunpack.c.l.b16 %v1579
      %v1603 = vunpack.c.l.b16 %v1580
      %v1604 = vpack.c.b16 %v1601, %v1600
      %v1605 = vpack.c.b16 %v1603, %v1602
      %v1609 = vsel %vm362, %v1587, 0
      %v1612 = vsel %vm362, %v1595, 0
      %1614 = vmatprep.subr.bf16.mxu0 0
      %1615 = vmatpush1.bf16.msra.mxu0 0
      %1616 = vmatprep.subr.bf16.mxu0 0
      %1617 = vmatpush1.bf16.msra.mxu0 0
      %1618 = vmatprep.subr.bf16.mxu0 0
      %1619 = vmatpush1.bf16.msra.mxu0 0
      %1620 = vmatprep.subr.bf16.mxu0 0
      %1621 = vmatpush1.bf16.msra.mxu0 0
      %1622 = vmatprep.subr.bf16.mxu0 0
      %1623 = vmatpush1.bf16.msra.mxu0 0
      %1624 = vmatprep.subr.bf16.mxu0 0
      %1625 = vmatpush1.bf16.msra.mxu0 0
      %1626 = vmatprep.subr.bf16.mxu0 0
      %1627 = vmatpush1.bf16.msra.mxu0 %v1605
      %1628 = vmatprep.subr.bf16.mxu0 0
      %1629 = vmatpush1.bf16.msra.mxu0 %v1604
      %1630 = vmatprep.subr.bf16.mxu0 0
      %1631 = vmatpush2.bf16.msra.mxu0 0
      %1632 = vmatprep.subr.bf16.mxu0 0
      %1633 = vmatpush2.bf16.msra.mxu0 0
      %1634 = vmatprep.subr.bf16.mxu0 0
      %1635 = vmatpush2.bf16.msra.mxu0 0
      %1636 = vmatprep.subr.bf16.mxu0 0
      %1637 = vmatpush2.bf16.msra.mxu0 0
      %1638 = vmatprep.subr.bf16.mxu0 0
      %1639 = vmatpush2.bf16.msra.mxu0 0
      %1640 = vmatprep.subr.bf16.mxu0 0
      %1641 = vmatpush2.bf16.msra.mxu0 0
      %1642 = vmatprep.subr.bf16.mxu0 0
      %1643 = vmatpush2.bf16.msra.mxu0 0
      %1644 = vmatprep.subr.bf16.mxu0 0
      %1645 = vmatpush2.bf16.msra.mxu0 0
      %1646 = vmatprep.mubr.bf16.mxu0 0
      %1647 = vmatmul.mubr.bf16.gmra.mxu0 %v1113
      %v1648 = vpop.f32.mrf.mxu0
      %v1649 = vadd.f32 0.0, %v1648
      %v1650 = vpop.f32.mrf.mxu0
      %v1651 = vpop.f32.mrf.mxu0
      %v1652 = vadd.f32 0.0, %v1651
      %v1653 = vpop.f32.mrf.mxu0
      %1654 = vmatprep.mubr.bf16.mxu0 0
      %1655 = vmatmul.mubr.bf16.gmra.mxu0 %v1116
      %v1656 = vpop.f32.mrf.mxu0
      %v1657 = vadd.f32 0.0, %v1656
      %v1658 = vpop.f32.mrf.mxu0
      %v1659 = vpop.f32.mrf.mxu0
      %v1660 = vadd.f32 0.0, %v1659
      %v1661 = vpop.f32.mrf.mxu0
      %1662 = vmatprep.mubr.bf16.mxu0 0
      %1663 = vmatmul.mubr.bf16.gmra.mxu0 %v1119
      %v1664 = vpop.f32.mrf.mxu0
      %v1665 = vadd.f32 0.0, %v1664
      %v1666 = vpop.f32.mrf.mxu0
      %v1667 = vpop.f32.mrf.mxu0
      %v1668 = vadd.f32 0.0, %v1667
      %v1669 = vpop.f32.mrf.mxu0
      %1670 = vmatprep.mubr.bf16.mxu0 0
      %1671 = vmatmul.mubr.bf16.gmra.mxu0 %v1122
      %v1672 = vpop.f32.mrf.mxu0
      %v1673 = vadd.f32 0.0, %v1672
      %v1674 = vpop.f32.mrf.mxu0
      %v1675 = vpop.f32.mrf.mxu0
      %v1676 = vadd.f32 0.0, %v1675
      %v1677 = vpop.f32.mrf.mxu0
      %1678 = vmatprep.mubr.bf16.mxu0 0
      %1679 = vmatmul.mubr.bf16.gmra.mxu0 %v1125
      %v1680 = vpop.f32.mrf.mxu0
      %v1681 = vadd.f32 0.0, %v1680
      %v1682 = vpop.f32.mrf.mxu0
      %v1683 = vpop.f32.mrf.mxu0
      %v1684 = vadd.f32 0.0, %v1683
      %v1685 = vpop.f32.mrf.mxu0
      %1686 = vmatprep.mubr.bf16.mxu0 0
      %1687 = vmatmul.mubr.bf16.gmra.mxu0 %v1128
      %v1688 = vpop.f32.mrf.mxu0
      %v1689 = vadd.f32 0.0, %v1688
      %v1690 = vpop.f32.mrf.mxu0
      %v1691 = vpop.f32.mrf.mxu0
      %v1692 = vadd.f32 0.0, %v1691
      %v1693 = vpop.f32.mrf.mxu0
      %1694 = vmatprep.mubr.bf16.mxu0 0
      %1695 = vmatmul.mubr.bf16.gmra.mxu0 %v1131
      %v1696 = vpop.f32.mrf.mxu0
      %v1697 = vadd.f32 0.0, %v1696
      %v1698 = vpop.f32.mrf.mxu0
      %v1699 = vpop.f32.mrf.mxu0
      %v1700 = vadd.f32 0.0, %v1699
      %v1701 = vpop.f32.mrf.mxu0
      %1702 = vmatprep.mubr.bf16.mxu0 0
      %1703 = vmatmul.mubr.bf16.gmra.mxu0 %v1134
      %v1704 = vpop.f32.mrf.mxu0
      %v1705 = vadd.f32 0.0, %v1704
      %v1706 = vpop.f32.mrf.mxu0
      %v1707 = vpop.f32.mrf.mxu0
      %v1708 = vadd.f32 0.0, %v1707
      %v1709 = vpop.f32.mrf.mxu0
      %1710 = vmatprep.mubr.bf16.mxu0 0
      %1711 = vmatmul.mubr.bf16.gmra.mxu0 %v1137
      %v1712 = vpop.f32.mrf.mxu0
      %v1713 = vadd.f32 0.0, %v1712
      %v1714 = vpop.f32.mrf.mxu0
      %v1715 = vpop.f32.mrf.mxu0
      %v1716 = vadd.f32 0.0, %v1715
      %v1717 = vpop.f32.mrf.mxu0
      %1718 = vmatprep.mubr.bf16.mxu0 0
      %1719 = vmatmul.mubr.bf16.gmra.mxu0 %v1140
      %v1720 = vpop.f32.mrf.mxu0
      %v1721 = vadd.f32 0.0, %v1720
      %v1722 = vpop.f32.mrf.mxu0
      %v1723 = vpop.f32.mrf.mxu0
      %v1724 = vadd.f32 0.0, %v1723
      %v1725 = vpop.f32.mrf.mxu0
      %1726 = vmatprep.mubr.bf16.mxu0 0
      %1727 = vmatmul.mubr.bf16.gmra.mxu0 %v1143
      %v1728 = vpop.f32.mrf.mxu0
      %v1729 = vadd.f32 0.0, %v1728
      %v1730 = vpop.f32.mrf.mxu0
      %v1731 = vpop.f32.mrf.mxu0
      %v1732 = vadd.f32 0.0, %v1731
      %v1733 = vpop.f32.mrf.mxu0
      %1734 = vmatprep.mubr.bf16.mxu0 0
      %1735 = vmatmul.mubr.bf16.gmra.mxu0 %v1146
      %v1736 = vpop.f32.mrf.mxu0
      %v1737 = vadd.f32 0.0, %v1736
      %v1738 = vpop.f32.mrf.mxu0
      %v1739 = vpop.f32.mrf.mxu0
      %v1740 = vadd.f32 0.0, %v1739
      %v1741 = vpop.f32.mrf.mxu0
      %1742 = vmatprep.mubr.bf16.mxu0 0
      %1743 = vmatmul.mubr.bf16.gmra.mxu0 %v1149
      %v1744 = vpop.f32.mrf.mxu0
      %v1745 = vadd.f32 0.0, %v1744
      %v1746 = vpop.f32.mrf.mxu0
      %v1747 = vpop.f32.mrf.mxu0
      %v1748 = vadd.f32 0.0, %v1747
      %v1749 = vpop.f32.mrf.mxu0
      %1750 = vmatprep.mubr.bf16.mxu0 0
      %1751 = vmatmul.mubr.bf16.gmra.mxu0 %v1378
      %v1752 = vpop.f32.mrf.mxu0
      %v1753 = vadd.f32 0.0, %v1752
      %v1754 = vpop.f32.mrf.mxu0
      %v1755 = vpop.f32.mrf.mxu0
      %v1756 = vadd.f32 0.0, %v1755
      %v1757 = vpop.f32.mrf.mxu0
      %1758 = vmatprep.mubr.bf16.mxu0 0
      %1759 = vmatmul.mubr.bf16.gmra.mxu0 %v1609
      %v1760 = vpop.f32.mrf.mxu0
      %v1761 = vadd.f32 0.0, %v1760
      %v1762 = vpop.f32.mrf.mxu0
      %v1763 = vpop.f32.mrf.mxu0
      %v1764 = vadd.f32 0.0, %v1763
      %v1765 = vpop.f32.mrf.mxu0
      %1766 = vmatprep.mubr.bf16.mxu0 0
      %1767 = vmatmul.mubr.bf16.gmra.mxu0 %v1612
      %v1768 = vpop.f32.mrf.mxu0
      %v1769 = vadd.f32 0.0, %v1768
      %v1770 = vpop.f32.mrf.mxu0
      %v1771 = vpop.f32.mrf.mxu0
      %v1772 = vadd.f32 0.0, %v1771
      %v1773 = vpop.f32.mrf.mxu0
      %1774 = vdwg.mxu0
      %v1775 = vadd.f32 %v1544, %v1649
      %v1776 = vadd.f32 %v1545, %v1652
      %v1777 = vadd.f32 %v1546, %v1657
      %v1778 = vadd.f32 %v1547, %v1660
      %v1779 = vadd.f32 %v1548, %v1665
      %v1780 = vadd.f32 %v1549, %v1668
      %v1781 = vadd.f32 %v1550, %v1673
      %v1782 = vadd.f32 %v1551, %v1676
      %v1783 = vadd.f32 %v1552, %v1681
      %v1784 = vadd.f32 %v1553, %v1684
      %v1785 = vadd.f32 %v1554, %v1689
      %v1786 = vadd.f32 %v1555, %v1692
      %v1787 = vadd.f32 %v1556, %v1697
      %v1788 = vadd.f32 %v1557, %v1700
      %v1789 = vadd.f32 %v1558, %v1705
      %v1790 = vadd.f32 %v1559, %v1708
      %v1791 = vadd.f32 %v1560, %v1713
      %v1792 = vadd.f32 %v1561, %v1716
      %v1793 = vadd.f32 %v1562, %v1721
      %v1794 = vadd.f32 %v1563, %v1724
      %v1795 = vadd.f32 %v1564, %v1729
      %v1796 = vadd.f32 %v1565, %v1732
      %v1797 = vadd.f32 %v1566, %v1737
      %v1798 = vadd.f32 %v1567, %v1740
      %v1799 = vadd.f32 %v1568, %v1745
      %v1800 = vadd.f32 %v1569, %v1748
      %v1801 = vadd.f32 %v1570, %v1753
      %v1802 = vadd.f32 %v1571, %v1756
      %v1803 = vadd.f32 %v1572, %v1761
      %v1804 = vadd.f32 %v1573, %v1764
      %v1805 = vadd.f32 %v1574, %v1769
      %v1806 = vadd.f32 %v1575, %v1772
      %s1807 = scalar_lea.vmem %s210, 32
      %v1808 = vld [vmem:[%s1807] sm:$0xf]
      %v1809 = vld [vmem:[%s1807 + $0x4] sm:$0xf]
      %v1810 = vld [vmem:[%s1807 + $0x8] sm:$0xf]
      %v1811 = vld [vmem:[%s1807 + $0xc] sm:$0xf]
      %vm1812 = vcmask 1046528
      %v1813 = vrot.slane %v576, 1
      %v1814 = vrot.slane %v334, 1
      %v1815 = vsel %vm1812, %v1813, %v1814
      %v1816 = vrot.slane %v335, 1
      %v1817 = vsel %vm1812, %v1814, %v1816
      %v1818 = vrot.slane %v336, 1
      %v1819 = vsel %vm1812, %v1816, %v1818
      %v1820 = vrot.slane %v337, 1
      %v1821 = vsel %vm1812, %v1818, %v1820
      %v1822 = vrot.slane %v338, 1
      %v1823 = vsel %vm1812, %v1820, %v1822
      %v1824 = vrot.slane %v339, 1
      %v1825 = vsel %vm1812, %v1822, %v1824
      %v1826 = vrot.slane %v340, 1
      %v1827 = vsel %vm1812, %v1824, %v1826
      %v1828 = vrot.slane %v341, 1
      %v1829 = vsel %vm1812, %v1826, %v1828
      %v1830 = vrot.slane %v342, 1
      %v1831 = vsel %vm1812, %v1828, %v1830
      %v1832 = vrot.slane %v343, 1
      %v1833 = vsel %vm1812, %v1830, %v1832
      %v1834 = vrot.slane %v344, 1
      %v1835 = vsel %vm1812, %v1832, %v1834
      %v1836 = vrot.slane %v345, 1
      %v1837 = vsel %vm1812, %v1834, %v1836
      %v1838 = vrot.slane %v346, 1
      %v1839 = vsel %vm1812, %v1836, %v1838
      %v1840 = vrot.slane %v347, 1
      %v1841 = vsel %vm1812, %v1838, %v1840
      %v1842 = vrot.slane %v348, 1
      %v1843 = vsel %vm1812, %v1840, %v1842
      %v1844 = vrot.slane %v976, 1
      %v1845 = vsel %vm1812, %v1842, %v1844
      %v1850 = vunpack.c.l.b16 %v1808
      %v1851 = vunpack.c.l.b16 %v1809
      %v1852 = vunpack.c.l.b16 %v1810
      %v1853 = vunpack.c.l.b16 %v1811
      %v1854 = vpack.c.b16 %v1851, %v1850
      %v1855 = vpack.c.b16 %v1853, %v1852
      %v1859 = vsel %vm362, %v1815, 0
      %v1862 = vsel %vm362, %v1817, 0
      %v1865 = vsel %vm362, %v1819, 0
      %v1868 = vsel %vm362, %v1821, 0
      %v1871 = vsel %vm362, %v1823, 0
      %v1874 = vsel %vm362, %v1825, 0
      %v1877 = vsel %vm362, %v1827, 0
      %v1880 = vsel %vm362, %v1829, 0
      %v1883 = vsel %vm362, %v1831, 0
      %v1886 = vsel %vm362, %v1833, 0
      %v1889 = vsel %vm362, %v1835, 0
      %v1892 = vsel %vm362, %v1837, 0
      %v1895 = vsel %vm362, %v1839, 0
      %v1898 = vsel %vm362, %v1841, 0
      %v1901 = vsel %vm362, %v1843, 0
      %v1904 = vsel %vm362, %v1845, 0
      %1906 = vmatprep.subr.bf16.mxu0 0
      %1907 = vmatpush1.bf16.msra.mxu0 0
      %1908 = vmatprep.subr.bf16.mxu0 0
      %1909 = vmatpush1.bf16.msra.mxu0 0
      %1910 = vmatprep.subr.bf16.mxu0 0
      %1911 = vmatpush1.bf16.msra.mxu0 0
      %1912 = vmatprep.subr.bf16.mxu0 0
      %1913 = vmatpush1.bf16.msra.mxu0 0
      %1914 = vmatprep.subr.bf16.mxu0 0
      %1915 = vmatpush1.bf16.msra.mxu0 0
      %1916 = vmatprep.subr.bf16.mxu0 0
      %1917 = vmatpush1.bf16.msra.mxu0 0
      %1918 = vmatprep.subr.bf16.mxu0 0
      %1919 = vmatpush1.bf16.msra.mxu0 %v1855
      %1920 = vmatprep.subr.bf16.mxu0 0
      %1921 = vmatpush1.bf16.msra.mxu0 %v1854
      %1922 = vmatprep.subr.bf16.mxu0 0
      %1923 = vmatpush2.bf16.msra.mxu0 0
      %1924 = vmatprep.subr.bf16.mxu0 0
      %1925 = vmatpush2.bf16.msra.mxu0 0
      %1926 = vmatprep.subr.bf16.mxu0 0
      %1927 = vmatpush2.bf16.msra.mxu0 0
      %1928 = vmatprep.subr.bf16.mxu0 0
      %1929 = vmatpush2.bf16.msra.mxu0 0
      %1930 = vmatprep.subr.bf16.mxu0 0
      %1931 = vmatpush2.bf16.msra.mxu0 0
      %1932 = vmatprep.subr.bf16.mxu0 0
      %1933 = vmatpush2.bf16.msra.mxu0 0
      %1934 = vmatprep.subr.bf16.mxu0 0
      %1935 = vmatpush2.bf16.msra.mxu0 0
      %1936 = vmatprep.subr.bf16.mxu0 0
      %1937 = vmatpush2.bf16.msra.mxu0 0
      %1938 = vmatprep.mubr.bf16.mxu0 0
      %1939 = vmatmul.mubr.bf16.gmra.mxu0 %v1859
      %v1940 = vpop.f32.mrf.mxu0
      %v1941 = vadd.f32 0.0, %v1940
      %v1942 = vpop.f32.mrf.mxu0
      %v1943 = vpop.f32.mrf.mxu0
      %v1944 = vadd.f32 0.0, %v1943
      %v1945 = vpop.f32.mrf.mxu0
      %1946 = vmatprep.mubr.bf16.mxu0 0
      %1947 = vmatmul.mubr.bf16.gmra.mxu0 %v1862
      %v1948 = vpop.f32.mrf.mxu0
      %v1949 = vadd.f32 0.0, %v1948
      %v1950 = vpop.f32.mrf.mxu0
      %v1951 = vpop.f32.mrf.mxu0
      %v1952 = vadd.f32 0.0, %v1951
      %v1953 = vpop.f32.mrf.mxu0
      %1954 = vmatprep.mubr.bf16.mxu0 0
      %1955 = vmatmul.mubr.bf16.gmra.mxu0 %v1865
      %v1956 = vpop.f32.mrf.mxu0
      %v1957 = vadd.f32 0.0, %v1956
      %v1958 = vpop.f32.mrf.mxu0
      %v1959 = vpop.f32.mrf.mxu0
      %v1960 = vadd.f32 0.0, %v1959
      %v1961 = vpop.f32.mrf.mxu0
      %1962 = vmatprep.mubr.bf16.mxu0 0
      %1963 = vmatmul.mubr.bf16.gmra.mxu0 %v1868
      %v1964 = vpop.f32.mrf.mxu0
      %v1965 = vadd.f32 0.0, %v1964
      %v1966 = vpop.f32.mrf.mxu0
      %v1967 = vpop.f32.mrf.mxu0
      %v1968 = vadd.f32 0.0, %v1967
      %v1969 = vpop.f32.mrf.mxu0
      %1970 = vmatprep.mubr.bf16.mxu0 0
      %1971 = vmatmul.mubr.bf16.gmra.mxu0 %v1871
      %v1972 = vpop.f32.mrf.mxu0
      %v1973 = vadd.f32 0.0, %v1972
      %v1974 = vpop.f32.mrf.mxu0
      %v1975 = vpop.f32.mrf.mxu0
      %v1976 = vadd.f32 0.0, %v1975
      %v1977 = vpop.f32.mrf.mxu0
      %1978 = vmatprep.mubr.bf16.mxu0 0
      %1979 = vmatmul.mubr.bf16.gmra.mxu0 %v1874
      %v1980 = vpop.f32.mrf.mxu0
      %v1981 = vadd.f32 0.0, %v1980
      %v1982 = vpop.f32.mrf.mxu0
      %v1983 = vpop.f32.mrf.mxu0
      %v1984 = vadd.f32 0.0, %v1983
      %v1985 = vpop.f32.mrf.mxu0
      %1986 = vmatprep.mubr.bf16.mxu0 0
      %1987 = vmatmul.mubr.bf16.gmra.mxu0 %v1877
      %v1988 = vpop.f32.mrf.mxu0
      %v1989 = vadd.f32 0.0, %v1988
      %v1990 = vpop.f32.mrf.mxu0
      %v1991 = vpop.f32.mrf.mxu0
      %v1992 = vadd.f32 0.0, %v1991
      %v1993 = vpop.f32.mrf.mxu0
      %1994 = vmatprep.mubr.bf16.mxu0 0
      %1995 = vmatmul.mubr.bf16.gmra.mxu0 %v1880
      %v1996 = vpop.f32.mrf.mxu0
      %v1997 = vadd.f32 0.0, %v1996
      %v1998 = vpop.f32.mrf.mxu0
      %v1999 = vpop.f32.mrf.mxu0
      %v2000 = vadd.f32 0.0, %v1999
      %v2001 = vpop.f32.mrf.mxu0
      %2002 = vmatprep.mubr.bf16.mxu0 0
      %2003 = vmatmul.mubr.bf16.gmra.mxu0 %v1883
      %v2004 = vpop.f32.mrf.mxu0
      %v2005 = vadd.f32 0.0, %v2004
      %v2006 = vpop.f32.mrf.mxu0
      %v2007 = vpop.f32.mrf.mxu0
      %v2008 = vadd.f32 0.0, %v2007
      %v2009 = vpop.f32.mrf.mxu0
      %2010 = vmatprep.mubr.bf16.mxu0 0
      %2011 = vmatmul.mubr.bf16.gmra.mxu0 %v1886
      %v2012 = vpop.f32.mrf.mxu0
      %v2013 = vadd.f32 0.0, %v2012
      %v2014 = vpop.f32.mrf.mxu0
      %v2015 = vpop.f32.mrf.mxu0
      %v2016 = vadd.f32 0.0, %v2015
      %v2017 = vpop.f32.mrf.mxu0
      %2018 = vmatprep.mubr.bf16.mxu0 0
      %2019 = vmatmul.mubr.bf16.gmra.mxu0 %v1889
      %v2020 = vpop.f32.mrf.mxu0
      %v2021 = vadd.f32 0.0, %v2020
      %v2022 = vpop.f32.mrf.mxu0
      %v2023 = vpop.f32.mrf.mxu0
      %v2024 = vadd.f32 0.0, %v2023
      %v2025 = vpop.f32.mrf.mxu0
      %2026 = vmatprep.mubr.bf16.mxu0 0
      %2027 = vmatmul.mubr.bf16.gmra.mxu0 %v1892
      %v2028 = vpop.f32.mrf.mxu0
      %v2029 = vadd.f32 0.0, %v2028
      %v2030 = vpop.f32.mrf.mxu0
      %v2031 = vpop.f32.mrf.mxu0
      %v2032 = vadd.f32 0.0, %v2031
      %v2033 = vpop.f32.mrf.mxu0
      %2034 = vmatprep.mubr.bf16.mxu0 0
      %2035 = vmatmul.mubr.bf16.gmra.mxu0 %v1895
      %v2036 = vpop.f32.mrf.mxu0
      %v2037 = vadd.f32 0.0, %v2036
      %v2038 = vpop.f32.mrf.mxu0
      %v2039 = vpop.f32.mrf.mxu0
      %v2040 = vadd.f32 0.0, %v2039
      %v2041 = vpop.f32.mrf.mxu0
      %2042 = vmatprep.mubr.bf16.mxu0 0
      %2043 = vmatmul.mubr.bf16.gmra.mxu0 %v1898
      %v2044 = vpop.f32.mrf.mxu0
      %v2045 = vadd.f32 0.0, %v2044
      %v2046 = vpop.f32.mrf.mxu0
      %v2047 = vpop.f32.mrf.mxu0
      %v2048 = vadd.f32 0.0, %v2047
      %v2049 = vpop.f32.mrf.mxu0
      %2050 = vmatprep.mubr.bf16.mxu0 0
      %2051 = vmatmul.mubr.bf16.gmra.mxu0 %v1901
      %v2052 = vpop.f32.mrf.mxu0
      %v2053 = vadd.f32 0.0, %v2052
      %v2054 = vpop.f32.mrf.mxu0
      %v2055 = vpop.f32.mrf.mxu0
      %v2056 = vadd.f32 0.0, %v2055
      %v2057 = vpop.f32.mrf.mxu0
      %2058 = vmatprep.mubr.bf16.mxu0 0
      %2059 = vmatmul.mubr.bf16.gmra.mxu0 %v1904
      %v2060 = vpop.f32.mrf.mxu0
      %v2061 = vadd.f32 0.0, %v2060
      %v2062 = vpop.f32.mrf.mxu0
      %v2063 = vpop.f32.mrf.mxu0
      %v2064 = vadd.f32 0.0, %v2063
      %v2065 = vpop.f32.mrf.mxu0
      %2066 = vdwg.mxu0
      %v2067 = vadd.f32 %v1775, %v1941
      %v2068 = vadd.f32 %v1776, %v1944
      %v2069 = vadd.f32 %v1777, %v1949
      %v2070 = vadd.f32 %v1778, %v1952
      %v2071 = vadd.f32 %v1779, %v1957
      %v2072 = vadd.f32 %v1780, %v1960
      %v2073 = vadd.f32 %v1781, %v1965
      %v2074 = vadd.f32 %v1782, %v1968
      %v2075 = vadd.f32 %v1783, %v1973
      %v2076 = vadd.f32 %v1784, %v1976
      %v2077 = vadd.f32 %v1785, %v1981
      %v2078 = vadd.f32 %v1786, %v1984
      %v2079 = vadd.f32 %v1787, %v1989
      %v2080 = vadd.f32 %v1788, %v1992
      %v2081 = vadd.f32 %v1789, %v1997
      %v2082 = vadd.f32 %v1790, %v2000
      %v2083 = vadd.f32 %v1791, %v2005
      %v2084 = vadd.f32 %v1792, %v2008
      %v2085 = vadd.f32 %v1793, %v2013
      %v2086 = vadd.f32 %v1794, %v2016
      %v2087 = vadd.f32 %v1795, %v2021
      %v2088 = vadd.f32 %v1796, %v2024
      %v2089 = vadd.f32 %v1797, %v2029
      %v2090 = vadd.f32 %v1798, %v2032
      %v2091 = vadd.f32 %v1799, %v2037
      %v2092 = vadd.f32 %v1800, %v2040
      %v2093 = vadd.f32 %v1801, %v2045
      %v2094 = vadd.f32 %v1802, %v2048
      %v2095 = vadd.f32 %v1803, %v2053
      %v2096 = vadd.f32 %v1804, %v2056
      %v2097 = vadd.f32 %v1805, %v2061
      %v2098 = vadd.f32 %v1806, %v2064
      %s2099 = scalar_lea.vmem %s210, 80
      %v2100 = vld [vmem:[%s2099] sm:$0xf]
      %v2101 = vld [vmem:[%s2099 + $0x4] sm:$0xf]
      %v2102 = vld [vmem:[%s2099 + $0x8] sm:$0xf]
      %v2103 = vld [vmem:[%s2099 + $0xc] sm:$0xf]
      %v2104 = vrot.slane %v349, 1
      %v2105 = vsel %vm1812, %v1842, %v2104
      %v2106 = vrot.slane %v1352, 1
      %v2107 = vsel %vm1812, %v2104, %v2106
      %v2112 = vunpack.c.l.b16 %v2100
      %v2113 = vunpack.c.l.b16 %v2101
      %v2114 = vunpack.c.l.b16 %v2102
      %v2115 = vunpack.c.l.b16 %v2103
      %v2116 = vpack.c.b16 %v2113, %v2112
      %v2117 = vpack.c.b16 %v2115, %v2114
      %v2121 = vsel %vm362, %v2105, 0
      %v2124 = vsel %vm362, %v2107, 0
      %2126 = vmatprep.subr.bf16.mxu0 0
      %2127 = vmatpush1.bf16.msra.mxu0 0
      %2128 = vmatprep.subr.bf16.mxu0 0
      %2129 = vmatpush1.bf16.msra.mxu0 0
      %2130 = vmatprep.subr.bf16.mxu0 0
      %2131 = vmatpush1.bf16.msra.mxu0 0
      %2132 = vmatprep.subr.bf16.mxu0 0
      %2133 = vmatpush1.bf16.msra.mxu0 0
      %2134 = vmatprep.subr.bf16.mxu0 0
      %2135 = vmatpush1.bf16.msra.mxu0 0
      %2136 = vmatprep.subr.bf16.mxu0 0
      %2137 = vmatpush1.bf16.msra.mxu0 0
      %2138 = vmatprep.subr.bf16.mxu0 0
      %2139 = vmatpush1.bf16.msra.mxu0 %v2117
      %2140 = vmatprep.subr.bf16.mxu0 0
      %2141 = vmatpush1.bf16.msra.mxu0 %v2116
      %2142 = vmatprep.subr.bf16.mxu0 0
      %2143 = vmatpush2.bf16.msra.mxu0 0
      %2144 = vmatprep.subr.bf16.mxu0 0
      %2145 = vmatpush2.bf16.msra.mxu0 0
      %2146 = vmatprep.subr.bf16.mxu0 0
      %2147 = vmatpush2.bf16.msra.mxu0 0
      %2148 = vmatprep.subr.bf16.mxu0 0
      %2149 = vmatpush2.bf16.msra.mxu0 0
      %2150 = vmatprep.subr.bf16.mxu0 0
      %2151 = vmatpush2.bf16.msra.mxu0 0
      %2152 = vmatprep.subr.bf16.mxu0 0
      %2153 = vmatpush2.bf16.msra.mxu0 0
      %2154 = vmatprep.subr.bf16.mxu0 0
      %2155 = vmatpush2.bf16.msra.mxu0 0
      %2156 = vmatprep.subr.bf16.mxu0 0
      %2157 = vmatpush2.bf16.msra.mxu0 0
      %2158 = vmatprep.mubr.bf16.mxu0 0
      %2159 = vmatmul.mubr.bf16.gmra.mxu0 %v1862
      %v2160 = vpop.f32.mrf.mxu0
      %v2161 = vadd.f32 0.0, %v2160
      %v2162 = vpop.f32.mrf.mxu0
      %v2163 = vpop.f32.mrf.mxu0
      %v2164 = vadd.f32 0.0, %v2163
      %v2165 = vpop.f32.mrf.mxu0
      %2166 = vmatprep.mubr.bf16.mxu0 0
      %2167 = vmatmul.mubr.bf16.gmra.mxu0 %v1865
      %v2168 = vpop.f32.mrf.mxu0
      %v2169 = vadd.f32 0.0, %v2168
      %v2170 = vpop.f32.mrf.mxu0
      %v2171 = vpop.f32.mrf.mxu0
      %v2172 = vadd.f32 0.0, %v2171
      %v2173 = vpop.f32.mrf.mxu0
      %2174 = vmatprep.mubr.bf16.mxu0 0
      %2175 = vmatmul.mubr.bf16.gmra.mxu0 %v1868
      %v2176 = vpop.f32.mrf.mxu0
      %v2177 = vadd.f32 0.0, %v2176
      %v2178 = vpop.f32.mrf.mxu0
      %v2179 = vpop.f32.mrf.mxu0
      %v2180 = vadd.f32 0.0, %v2179
      %v2181 = vpop.f32.mrf.mxu0
      %2182 = vmatprep.mubr.bf16.mxu0 0
      %2183 = vmatmul.mubr.bf16.gmra.mxu0 %v1871
      %v2184 = vpop.f32.mrf.mxu0
      %v2185 = vadd.f32 0.0, %v2184
      %v2186 = vpop.f32.mrf.mxu0
      %v2187 = vpop.f32.mrf.mxu0
      %v2188 = vadd.f32 0.0, %v2187
      %v2189 = vpop.f32.mrf.mxu0
      %2190 = vmatprep.mubr.bf16.mxu0 0
      %2191 = vmatmul.mubr.bf16.gmra.mxu0 %v1874
      %v2192 = vpop.f32.mrf.mxu0
      %v2193 = vadd.f32 0.0, %v2192
      %v2194 = vpop.f32.mrf.mxu0
      %v2195 = vpop.f32.mrf.mxu0
      %v2196 = vadd.f32 0.0, %v2195
      %v2197 = vpop.f32.mrf.mxu0
      %2198 = vmatprep.mubr.bf16.mxu0 0
      %2199 = vmatmul.mubr.bf16.gmra.mxu0 %v1877
      %v2200 = vpop.f32.mrf.mxu0
      %v2201 = vadd.f32 0.0, %v2200
      %v2202 = vpop.f32.mrf.mxu0
      %v2203 = vpop.f32.mrf.mxu0
      %v2204 = vadd.f32 0.0, %v2203
      %v2205 = vpop.f32.mrf.mxu0
      %2206 = vmatprep.mubr.bf16.mxu0 0
      %2207 = vmatmul.mubr.bf16.gmra.mxu0 %v1880
      %v2208 = vpop.f32.mrf.mxu0
      %v2209 = vadd.f32 0.0, %v2208
      %v2210 = vpop.f32.mrf.mxu0
      %v2211 = vpop.f32.mrf.mxu0
      %v2212 = vadd.f32 0.0, %v2211
      %v2213 = vpop.f32.mrf.mxu0
      %2214 = vmatprep.mubr.bf16.mxu0 0
      %2215 = vmatmul.mubr.bf16.gmra.mxu0 %v1883
      %v2216 = vpop.f32.mrf.mxu0
      %v2217 = vadd.f32 0.0, %v2216
      %v2218 = vpop.f32.mrf.mxu0
      %v2219 = vpop.f32.mrf.mxu0
      %v2220 = vadd.f32 0.0, %v2219
      %v2221 = vpop.f32.mrf.mxu0
      %2222 = vmatprep.mubr.bf16.mxu0 0
      %2223 = vmatmul.mubr.bf16.gmra.mxu0 %v1886
      %v2224 = vpop.f32.mrf.mxu0
      %v2225 = vadd.f32 0.0, %v2224
      %v2226 = vpop.f32.mrf.mxu0
      %v2227 = vpop.f32.mrf.mxu0
      %v2228 = vadd.f32 0.0, %v2227
      %v2229 = vpop.f32.mrf.mxu0
      %2230 = vmatprep.mubr.bf16.mxu0 0
      %2231 = vmatmul.mubr.bf16.gmra.mxu0 %v1889
      %v2232 = vpop.f32.mrf.mxu0
      %v2233 = vadd.f32 0.0, %v2232
      %v2234 = vpop.f32.mrf.mxu0
      %v2235 = vpop.f32.mrf.mxu0
      %v2236 = vadd.f32 0.0, %v2235
      %v2237 = vpop.f32.mrf.mxu0
      %2238 = vmatprep.mubr.bf16.mxu0 0
      %2239 = vmatmul.mubr.bf16.gmra.mxu0 %v1892
      %v2240 = vpop.f32.mrf.mxu0
      %v2241 = vadd.f32 0.0, %v2240
      %v2242 = vpop.f32.mrf.mxu0
      %v2243 = vpop.f32.mrf.mxu0
      %v2244 = vadd.f32 0.0, %v2243
      %v2245 = vpop.f32.mrf.mxu0
      %2246 = vmatprep.mubr.bf16.mxu0 0
      %2247 = vmatmul.mubr.bf16.gmra.mxu0 %v1895
      %v2248 = vpop.f32.mrf.mxu0
      %v2249 = vadd.f32 0.0, %v2248
      %v2250 = vpop.f32.mrf.mxu0
      %v2251 = vpop.f32.mrf.mxu0
      %v2252 = vadd.f32 0.0, %v2251
      %v2253 = vpop.f32.mrf.mxu0
      %2254 = vmatprep.mubr.bf16.mxu0 0
      %2255 = vmatmul.mubr.bf16.gmra.mxu0 %v1898
      %v2256 = vpop.f32.mrf.mxu0
      %v2257 = vadd.f32 0.0, %v2256
      %v2258 = vpop.f32.mrf.mxu0
      %v2259 = vpop.f32.mrf.mxu0
      %v2260 = vadd.f32 0.0, %v2259
      %v2261 = vpop.f32.mrf.mxu0
      %2262 = vmatprep.mubr.bf16.mxu0 0
      %2263 = vmatmul.mubr.bf16.gmra.mxu0 %v1901
      %v2264 = vpop.f32.mrf.mxu0
      %v2265 = vadd.f32 0.0, %v2264
      %v2266 = vpop.f32.mrf.mxu0
      %v2267 = vpop.f32.mrf.mxu0
      %v2268 = vadd.f32 0.0, %v2267
      %v2269 = vpop.f32.mrf.mxu0
      %2270 = vmatprep.mubr.bf16.mxu0 0
      %2271 = vmatmul.mubr.bf16.gmra.mxu0 %v2121
      %v2272 = vpop.f32.mrf.mxu0
      %v2273 = vadd.f32 0.0, %v2272
      %v2274 = vpop.f32.mrf.mxu0
      %v2275 = vpop.f32.mrf.mxu0
      %v2276 = vadd.f32 0.0, %v2275
      %v2277 = vpop.f32.mrf.mxu0
      %2278 = vmatprep.mubr.bf16.mxu0 0
      %2279 = vmatmul.mubr.bf16.gmra.mxu0 %v2124
      %v2280 = vpop.f32.mrf.mxu0
      %v2281 = vadd.f32 0.0, %v2280
      %v2282 = vpop.f32.mrf.mxu0
      %v2283 = vpop.f32.mrf.mxu0
      %v2284 = vadd.f32 0.0, %v2283
      %v2285 = vpop.f32.mrf.mxu0
      %2286 = vdwg.mxu0
      %v2287 = vadd.f32 %v2067, %v2161
      %v2288 = vadd.f32 %v2068, %v2164
      %v2289 = vadd.f32 %v2069, %v2169
      %v2290 = vadd.f32 %v2070, %v2172
      %v2291 = vadd.f32 %v2071, %v2177
      %v2292 = vadd.f32 %v2072, %v2180
      %v2293 = vadd.f32 %v2073, %v2185
      %v2294 = vadd.f32 %v2074, %v2188
      %v2295 = vadd.f32 %v2075, %v2193
      %v2296 = vadd.f32 %v2076, %v2196
      %v2297 = vadd.f32 %v2077, %v2201
      %v2298 = vadd.f32 %v2078, %v2204
      %v2299 = vadd.f32 %v2079, %v2209
      %v2300 = vadd.f32 %v2080, %v2212
      %v2301 = vadd.f32 %v2081, %v2217
      %v2302 = vadd.f32 %v2082, %v2220
      %v2303 = vadd.f32 %v2083, %v2225
      %v2304 = vadd.f32 %v2084, %v2228
      %v2305 = vadd.f32 %v2085, %v2233
      %v2306 = vadd.f32 %v2086, %v2236
      %v2307 = vadd.f32 %v2087, %v2241
      %v2308 = vadd.f32 %v2088, %v2244
      %v2309 = vadd.f32 %v2089, %v2249
      %v2310 = vadd.f32 %v2090, %v2252
      %v2311 = vadd.f32 %v2091, %v2257
      %v2312 = vadd.f32 %v2092, %v2260
      %v2313 = vadd.f32 %v2093, %v2265
      %v2314 = vadd.f32 %v2094, %v2268
      %v2315 = vadd.f32 %v2095, %v2273
      %v2316 = vadd.f32 %v2096, %v2276
      %v2317 = vadd.f32 %v2097, %v2281
      %v2318 = vadd.f32 %v2098, %v2284
      %s2319 = scalar_lea.vmem %s210, 128
      %v2320 = vld [vmem:[%s2319] sm:$0xf]
      %v2321 = vld [vmem:[%s2319 + $0x4] sm:$0xf]
      %v2322 = vld [vmem:[%s2319 + $0x8] sm:$0xf]
      %v2323 = vld [vmem:[%s2319 + $0xc] sm:$0xf]
      %v2324 = vrot.slane %v762, 1
      %v2325 = vsel %vm1812, %v2104, %v2324
      %v2326 = vrot.slane %v1583, 1
      %v2327 = vsel %vm1812, %v2324, %v2326
      %v2332 = vunpack.c.l.b16 %v2320
      %v2333 = vunpack.c.l.b16 %v2321
      %v2334 = vunpack.c.l.b16 %v2322
      %v2335 = vunpack.c.l.b16 %v2323
      %v2336 = vpack.c.b16 %v2333, %v2332
      %v2337 = vpack.c.b16 %v2335, %v2334
      %v2341 = vsel %vm362, %v2325, 0
      %v2344 = vsel %vm362, %v2327, 0
      %2346 = vmatprep.subr.bf16.mxu0 0
      %2347 = vmatpush1.bf16.msra.mxu0 0
      %2348 = vmatprep.subr.bf16.mxu0 0
      %2349 = vmatpush1.bf16.msra.mxu0 0
      %2350 = vmatprep.subr.bf16.mxu0 0
      %2351 = vmatpush1.bf16.msra.mxu0 0
      %2352 = vmatprep.subr.bf16.mxu0 0
      %2353 = vmatpush1.bf16.msra.mxu0 0
      %2354 = vmatprep.subr.bf16.mxu0 0
      %2355 = vmatpush1.bf16.msra.mxu0 0
      %2356 = vmatprep.subr.bf16.mxu0 0
      %2357 = vmatpush1.bf16.msra.mxu0 0
      %2358 = vmatprep.subr.bf16.mxu0 0
      %2359 = vmatpush1.bf16.msra.mxu0 %v2337
      %2360 = vmatprep.subr.bf16.mxu0 0
      %2361 = vmatpush1.bf16.msra.mxu0 %v2336
      %2362 = vmatprep.subr.bf16.mxu0 0
      %2363 = vmatpush2.bf16.msra.mxu0 0
      %2364 = vmatprep.subr.bf16.mxu0 0
      %2365 = vmatpush2.bf16.msra.mxu0 0
      %2366 = vmatprep.subr.bf16.mxu0 0
      %2367 = vmatpush2.bf16.msra.mxu0 0
      %2368 = vmatprep.subr.bf16.mxu0 0
      %2369 = vmatpush2.bf16.msra.mxu0 0
      %2370 = vmatprep.subr.bf16.mxu0 0
      %2371 = vmatpush2.bf16.msra.mxu0 0
      %2372 = vmatprep.subr.bf16.mxu0 0
      %2373 = vmatpush2.bf16.msra.mxu0 0
      %2374 = vmatprep.subr.bf16.mxu0 0
      %2375 = vmatpush2.bf16.msra.mxu0 0
      %2376 = vmatprep.subr.bf16.mxu0 0
      %2377 = vmatpush2.bf16.msra.mxu0 0
      %2378 = vmatprep.mubr.bf16.mxu0 0
      %2379 = vmatmul.mubr.bf16.gmra.mxu0 %v1865
      %v2380 = vpop.f32.mrf.mxu0
      %v2381 = vadd.f32 0.0, %v2380
      %v2382 = vpop.f32.mrf.mxu0
      %v2383 = vpop.f32.mrf.mxu0
      %v2384 = vadd.f32 0.0, %v2383
      %v2385 = vpop.f32.mrf.mxu0
      %2386 = vmatprep.mubr.bf16.mxu0 0
      %2387 = vmatmul.mubr.bf16.gmra.mxu0 %v1868
      %v2388 = vpop.f32.mrf.mxu0
      %v2389 = vadd.f32 0.0, %v2388
      %v2390 = vpop.f32.mrf.mxu0
      %v2391 = vpop.f32.mrf.mxu0
      %v2392 = vadd.f32 0.0, %v2391
      %v2393 = vpop.f32.mrf.mxu0
      %2394 = vmatprep.mubr.bf16.mxu0 0
      %2395 = vmatmul.mubr.bf16.gmra.mxu0 %v1871
      %v2396 = vpop.f32.mrf.mxu0
      %v2397 = vadd.f32 0.0, %v2396
      %v2398 = vpop.f32.mrf.mxu0
      %v2399 = vpop.f32.mrf.mxu0
      %v2400 = vadd.f32 0.0, %v2399
      %v2401 = vpop.f32.mrf.mxu0
      %2402 = vmatprep.mubr.bf16.mxu0 0
      %2403 = vmatmul.mubr.bf16.gmra.mxu0 %v1874
      %v2404 = vpop.f32.mrf.mxu0
      %v2405 = vadd.f32 0.0, %v2404
      %v2406 = vpop.f32.mrf.mxu0
      %v2407 = vpop.f32.mrf.mxu0
      %v2408 = vadd.f32 0.0, %v2407
      %v2409 = vpop.f32.mrf.mxu0
      %2410 = vmatprep.mubr.bf16.mxu0 0
      %2411 = vmatmul.mubr.bf16.gmra.mxu0 %v1877
      %v2412 = vpop.f32.mrf.mxu0
      %v2413 = vadd.f32 0.0, %v2412
      %v2414 = vpop.f32.mrf.mxu0
      %v2415 = vpop.f32.mrf.mxu0
      %v2416 = vadd.f32 0.0, %v2415
      %v2417 = vpop.f32.mrf.mxu0
      %2418 = vmatprep.mubr.bf16.mxu0 0
      %2419 = vmatmul.mubr.bf16.gmra.mxu0 %v1880
      %v2420 = vpop.f32.mrf.mxu0
      %v2421 = vadd.f32 0.0, %v2420
      %v2422 = vpop.f32.mrf.mxu0
      %v2423 = vpop.f32.mrf.mxu0
      %v2424 = vadd.f32 0.0, %v2423
      %v2425 = vpop.f32.mrf.mxu0
      %2426 = vmatprep.mubr.bf16.mxu0 0
      %2427 = vmatmul.mubr.bf16.gmra.mxu0 %v1883
      %v2428 = vpop.f32.mrf.mxu0
      %v2429 = vadd.f32 0.0, %v2428
      %v2430 = vpop.f32.mrf.mxu0
      %v2431 = vpop.f32.mrf.mxu0
      %v2432 = vadd.f32 0.0, %v2431
      %v2433 = vpop.f32.mrf.mxu0
      %2434 = vmatprep.mubr.bf16.mxu0 0
      %2435 = vmatmul.mubr.bf16.gmra.mxu0 %v1886
      %v2436 = vpop.f32.mrf.mxu0
      %v2437 = vadd.f32 0.0, %v2436
      %v2438 = vpop.f32.mrf.mxu0
      %v2439 = vpop.f32.mrf.mxu0
      %v2440 = vadd.f32 0.0, %v2439
      %v2441 = vpop.f32.mrf.mxu0
      %2442 = vmatprep.mubr.bf16.mxu0 0
      %2443 = vmatmul.mubr.bf16.gmra.mxu0 %v1889
      %v2444 = vpop.f32.mrf.mxu0
      %v2445 = vadd.f32 0.0, %v2444
      %v2446 = vpop.f32.mrf.mxu0
      %v2447 = vpop.f32.mrf.mxu0
      %v2448 = vadd.f32 0.0, %v2447
      %v2449 = vpop.f32.mrf.mxu0
      %2450 = vmatprep.mubr.bf16.mxu0 0
      %2451 = vmatmul.mubr.bf16.gmra.mxu0 %v1892
      %v2452 = vpop.f32.mrf.mxu0
      %v2453 = vadd.f32 0.0, %v2452
      %v2454 = vpop.f32.mrf.mxu0
      %v2455 = vpop.f32.mrf.mxu0
      %v2456 = vadd.f32 0.0, %v2455
      %v2457 = vpop.f32.mrf.mxu0
      %2458 = vmatprep.mubr.bf16.mxu0 0
      %2459 = vmatmul.mubr.bf16.gmra.mxu0 %v1895
      %v2460 = vpop.f32.mrf.mxu0
      %v2461 = vadd.f32 0.0, %v2460
      %v2462 = vpop.f32.mrf.mxu0
      %v2463 = vpop.f32.mrf.mxu0
      %v2464 = vadd.f32 0.0, %v2463
      %v2465 = vpop.f32.mrf.mxu0
      %2466 = vmatprep.mubr.bf16.mxu0 0
      %2467 = vmatmul.mubr.bf16.gmra.mxu0 %v1898
      %v2468 = vpop.f32.mrf.mxu0
      %v2469 = vadd.f32 0.0, %v2468
      %v2470 = vpop.f32.mrf.mxu0
      %v2471 = vpop.f32.mrf.mxu0
      %v2472 = vadd.f32 0.0, %v2471
      %v2473 = vpop.f32.mrf.mxu0
      %2474 = vmatprep.mubr.bf16.mxu0 0
      %2475 = vmatmul.mubr.bf16.gmra.mxu0 %v1901
      %v2476 = vpop.f32.mrf.mxu0
      %v2477 = vadd.f32 0.0, %v2476
      %v2478 = vpop.f32.mrf.mxu0
      %v2479 = vpop.f32.mrf.mxu0
      %v2480 = vadd.f32 0.0, %v2479
      %v2481 = vpop.f32.mrf.mxu0
      %2482 = vmatprep.mubr.bf16.mxu0 0
      %2483 = vmatmul.mubr.bf16.gmra.mxu0 %v2121
      %v2484 = vpop.f32.mrf.mxu0
      %v2485 = vadd.f32 0.0, %v2484
      %v2486 = vpop.f32.mrf.mxu0
      %v2487 = vpop.f32.mrf.mxu0
      %v2488 = vadd.f32 0.0, %v2487
      %v2489 = vpop.f32.mrf.mxu0
      %2490 = vmatprep.mubr.bf16.mxu0 0
      %2491 = vmatmul.mubr.bf16.gmra.mxu0 %v2341
      %v2492 = vpop.f32.mrf.mxu0
      %v2493 = vadd.f32 0.0, %v2492
      %v2494 = vpop.f32.mrf.mxu0
      %v2495 = vpop.f32.mrf.mxu0
      %v2496 = vadd.f32 0.0, %v2495
      %v2497 = vpop.f32.mrf.mxu0
      %2498 = vmatprep.mubr.bf16.mxu0 0
      %2499 = vmatmul.mubr.bf16.gmra.mxu0 %v2344
      %v2500 = vpop.f32.mrf.mxu0
      %v2501 = vadd.f32 0.0, %v2500
      %v2502 = vpop.f32.mrf.mxu0
      %v2503 = vpop.f32.mrf.mxu0
      %v2504 = vadd.f32 0.0, %v2503
      %v2505 = vpop.f32.mrf.mxu0
      %2506 = vdwg.mxu0
      %v2507 = vadd.f32 %v2287, %v2381
      %v2508 = vadd.f32 %v2288, %v2384
      %v2509 = vadd.f32 %v2289, %v2389
      %v2510 = vadd.f32 %v2290, %v2392
      %v2511 = vadd.f32 %v2291, %v2397
      %v2512 = vadd.f32 %v2292, %v2400
      %v2513 = vadd.f32 %v2293, %v2405
      %v2514 = vadd.f32 %v2294, %v2408
      %v2515 = vadd.f32 %v2295, %v2413
      %v2516 = vadd.f32 %v2296, %v2416
      %v2517 = vadd.f32 %v2297, %v2421
      %v2518 = vadd.f32 %v2298, %v2424
      %v2519 = vadd.f32 %v2299, %v2429
      %v2520 = vadd.f32 %v2300, %v2432
      %v2521 = vadd.f32 %v2301, %v2437
      %v2522 = vadd.f32 %v2302, %v2440
      %v2523 = vadd.f32 %v2303, %v2445
      %v2524 = vadd.f32 %v2304, %v2448
      %v2525 = vadd.f32 %v2305, %v2453
      %v2526 = vadd.f32 %v2306, %v2456
      %v2527 = vadd.f32 %v2307, %v2461
      %v2528 = vadd.f32 %v2308, %v2464
      %v2529 = vadd.f32 %v2309, %v2469
      %v2530 = vadd.f32 %v2310, %v2472
      %v2531 = vadd.f32 %v2311, %v2477
      %v2532 = vadd.f32 %v2312, %v2480
      %v2533 = vadd.f32 %v2313, %v2485
      %v2534 = vadd.f32 %v2314, %v2488
      %v2535 = vadd.f32 %v2315, %v2493
      %v2536 = vadd.f32 %v2316, %v2496
      %v2537 = vadd.f32 %v2317, %v2501
      %v2538 = vadd.f32 %v2318, %v2504
      %v2540 = vlaneseq
      %v2541 = vshrl.u32 %v2540, 7
      %v2542 = vsub.s32 0, %v2541
      %v2543 = vrot.slane %v223, %v2542
      %v2545 = vadd.f32 %v2507, %v2543
      %v2546 = vadd.f32 %v2508, %v2543
      %v2547 = vadd.f32 %v2509, %v2543
      %v2548 = vadd.f32 %v2510, %v2543
      %v2549 = vadd.f32 %v2511, %v2543
      %v2550 = vadd.f32 %v2512, %v2543
      %v2551 = vadd.f32 %v2513, %v2543
      %v2552 = vadd.f32 %v2514, %v2543
      %v2553 = vadd.f32 %v2515, %v2543
      %v2554 = vadd.f32 %v2516, %v2543
      %v2555 = vadd.f32 %v2517, %v2543
      %v2556 = vadd.f32 %v2518, %v2543
      %v2557 = vadd.f32 %v2519, %v2543
      %v2558 = vadd.f32 %v2520, %v2543
      %v2559 = vadd.f32 %v2521, %v2543
      %v2560 = vadd.f32 %v2522, %v2543
      %v2561 = vadd.f32 %v2523, %v2543
      %v2562 = vadd.f32 %v2524, %v2543
      %v2563 = vadd.f32 %v2525, %v2543
      %v2564 = vadd.f32 %v2526, %v2543
      %v2565 = vadd.f32 %v2527, %v2543
      %v2566 = vadd.f32 %v2528, %v2543
      %v2567 = vadd.f32 %v2529, %v2543
      %v2568 = vadd.f32 %v2530, %v2543
      %v2569 = vadd.f32 %v2531, %v2543
      %v2570 = vadd.f32 %v2532, %v2543
      %v2571 = vadd.f32 %v2533, %v2543
      %v2572 = vadd.f32 %v2534, %v2543
      %v2573 = vadd.f32 %v2535, %v2543
      %v2574 = vadd.f32 %v2536, %v2543
      %v2575 = vadd.f32 %v2537, %v2543
      %v2576 = vadd.f32 %v2538, %v2543
      %v2577 = vmax.f32 %v2545, 0.0
      %v2578 = vmax.f32 %v2546, 0.0
      %v2579 = vmax.f32 %v2547, 0.0
      %v2580 = vmax.f32 %v2548, 0.0
      %v2581 = vmax.f32 %v2549, 0.0
      %v2582 = vmax.f32 %v2550, 0.0
      %v2583 = vmax.f32 %v2551, 0.0
      %v2584 = vmax.f32 %v2552, 0.0
      %v2585 = vmax.f32 %v2553, 0.0
      %v2586 = vmax.f32 %v2554, 0.0
      %v2587 = vmax.f32 %v2555, 0.0
      %v2588 = vmax.f32 %v2556, 0.0
      %v2589 = vmax.f32 %v2557, 0.0
      %v2590 = vmax.f32 %v2558, 0.0
      %v2591 = vmax.f32 %v2559, 0.0
      %v2592 = vmax.f32 %v2560, 0.0
      %v2593 = vmax.f32 %v2561, 0.0
      %v2594 = vmax.f32 %v2562, 0.0
      %v2595 = vmax.f32 %v2563, 0.0
      %v2596 = vmax.f32 %v2564, 0.0
      %v2597 = vmax.f32 %v2565, 0.0
      %v2598 = vmax.f32 %v2566, 0.0
      %v2599 = vmax.f32 %v2567, 0.0
      %v2600 = vmax.f32 %v2568, 0.0
      %v2601 = vmax.f32 %v2569, 0.0
      %v2602 = vmax.f32 %v2570, 0.0
      %v2603 = vmax.f32 %v2571, 0.0
      %v2604 = vmax.f32 %v2572, 0.0
      %v2605 = vmax.f32 %v2573, 0.0
      %v2606 = vmax.f32 %v2574, 0.0
      %v2607 = vmax.f32 %v2575, 0.0
      %v2608 = vmax.f32 %v2576, 0.0
      %v2609 = vpack.c.bf16 %v2578, %v2577
      %v2610 = vpack.c.bf16 %v2580, %v2579
      %v2611 = vpack.c.bf16 %v2582, %v2581
      %v2612 = vpack.c.bf16 %v2584, %v2583
      %v2613 = vpack.c.bf16 %v2586, %v2585
      %v2614 = vpack.c.bf16 %v2588, %v2587
      %v2615 = vpack.c.bf16 %v2590, %v2589
      %v2616 = vpack.c.bf16 %v2592, %v2591
      %v2617 = vpack.c.bf16 %v2594, %v2593
      %v2618 = vpack.c.bf16 %v2596, %v2595
      %v2619 = vpack.c.bf16 %v2598, %v2597
      %v2620 = vpack.c.bf16 %v2600, %v2599
      %v2621 = vpack.c.bf16 %v2602, %v2601
      %v2622 = vpack.c.bf16 %v2604, %v2603
      %v2623 = vpack.c.bf16 %v2606, %v2605
      %v2624 = vpack.c.bf16 %v2608, %v2607
      %v2641 = vunpack.c.l.b16 %v2609
      %v2642 = vunpack.c.h.b16 %v2609
      %v2643 = vunpack.c.l.b16 %v2610
      %v2644 = vunpack.c.h.b16 %v2610
      %v2645 = vunpack.c.l.b16 %v2611
      %v2646 = vunpack.c.h.b16 %v2611
      %v2647 = vunpack.c.l.b16 %v2612
      %v2648 = vunpack.c.h.b16 %v2612
      %v2649 = vunpack.c.l.b16 %v2613
      %v2650 = vunpack.c.h.b16 %v2613
      %v2651 = vunpack.c.l.b16 %v2614
      %v2652 = vunpack.c.h.b16 %v2614
      %v2653 = vunpack.c.l.b16 %v2615
      %v2654 = vunpack.c.h.b16 %v2615
      %v2655 = vunpack.c.l.b16 %v2616
      %v2656 = vunpack.c.h.b16 %v2616
      %v2657 = vunpack.c.l.b16 %v2617
      %v2658 = vunpack.c.h.b16 %v2617
      %v2659 = vunpack.c.l.b16 %v2618
      %v2660 = vunpack.c.h.b16 %v2618
      %v2661 = vunpack.c.l.b16 %v2619
      %v2662 = vunpack.c.h.b16 %v2619
      %v2663 = vunpack.c.l.b16 %v2620
      %v2664 = vunpack.c.h.b16 %v2620
      %v2665 = vunpack.c.l.b16 %v2621
      %v2666 = vunpack.c.h.b16 %v2621
      %v2667 = vunpack.c.l.b16 %v2622
      %v2668 = vunpack.c.h.b16 %v2622
      %v2669 = vunpack.c.l.b16 %v2623
      %v2670 = vunpack.c.h.b16 %v2623
      %v2671 = vunpack.c.l.b16 %v2624
      %v2672 = vunpack.c.h.b16 %v2624
      %v2673 = vpack.c.b16 %v2641, %v2641
      %v2674 = vpack.c.b16 %v2642, %v2642
      %v2675 = vpack.c.b16 %v2643, %v2643
      %v2676 = vpack.c.b16 %v2644, %v2644
      %v2677 = vpack.c.b16 %v2645, %v2645
      %v2678 = vpack.c.b16 %v2646, %v2646
      %v2679 = vpack.c.b16 %v2647, %v2647
      %v2680 = vpack.c.b16 %v2648, %v2648
      %v2681 = vpack.c.b16 %v2649, %v2649
      %v2682 = vpack.c.b16 %v2650, %v2650
      %v2683 = vpack.c.b16 %v2651, %v2651
      %v2684 = vpack.c.b16 %v2652, %v2652
      %v2685 = vpack.c.b16 %v2653, %v2653
      %v2686 = vpack.c.b16 %v2654, %v2654
      %v2687 = vpack.c.b16 %v2655, %v2655
      %v2688 = vpack.c.b16 %v2656, %v2656
      %v2689 = vpack.c.b16 %v2657, %v2657
      %v2690 = vpack.c.b16 %v2658, %v2658
      %v2691 = vpack.c.b16 %v2659, %v2659
      %v2692 = vpack.c.b16 %v2660, %v2660
      %v2693 = vpack.c.b16 %v2661, %v2661
      %v2694 = vpack.c.b16 %v2662, %v2662
      %v2695 = vpack.c.b16 %v2663, %v2663
      %v2696 = vpack.c.b16 %v2664, %v2664
      %v2697 = vpack.c.b16 %v2665, %v2665
      %v2698 = vpack.c.b16 %v2666, %v2666
      %v2699 = vpack.c.b16 %v2667, %v2667
      %v2700 = vpack.c.b16 %v2668, %v2668
      %v2701 = vpack.c.b16 %v2669, %v2669
      %v2702 = vpack.c.b16 %v2670, %v2670
      %v2703 = vpack.c.b16 %v2671, %v2671
      %v2704 = vpack.c.b16 %v2672, %v2672
      %2737 = vst [vmem:[%s221] sm:$0xf] %v2673
      %2738 = vst [vmem:[%s221 + $0x4] sm:$0xf] %v2674
      %2739 = vst [vmem:[%s221 + $0x8] sm:$0xf] %v2675
      %2740 = vst [vmem:[%s221 + $0xc] sm:$0xf] %v2676
      %2741 = vst [vmem:[%s221 + $0x10] sm:$0xf] %v2677
      %2742 = vst [vmem:[%s221 + $0x14] sm:$0xf] %v2678
      %2743 = vst [vmem:[%s221 + $0x18] sm:$0xf] %v2679
      %2744 = vst [vmem:[%s221 + $0x1c] sm:$0xf] %v2680
      %2745 = vst [vmem:[%s221 + $0x20] sm:$0xf] %v2681
      %2746 = vst [vmem:[%s221 + $0x24] sm:$0xf] %v2682
      %2747 = vst [vmem:[%s221 + $0x28] sm:$0xf] %v2683
      %2748 = vst [vmem:[%s221 + $0x2c] sm:$0xf] %v2684
      %2749 = vst [vmem:[%s221 + $0x30] sm:$0xf] %v2685
      %2750 = vst [vmem:[%s221 + $0x34] sm:$0xf] %v2686
      %2751 = vst [vmem:[%s221 + $0x38] sm:$0xf] %v2687
      %2752 = vst [vmem:[%s221 + $0x3c] sm:$0xf] %v2688
      %2753 = vst [vmem:[%s221 + $0x40] sm:$0xf] %v2689
      %2754 = vst [vmem:[%s221 + $0x44] sm:$0xf] %v2690
      %2755 = vst [vmem:[%s221 + $0x48] sm:$0xf] %v2691
      %2756 = vst [vmem:[%s221 + $0x4c] sm:$0xf] %v2692
      %2757 = vst [vmem:[%s221 + $0x50] sm:$0xf] %v2693
      %2758 = vst [vmem:[%s221 + $0x54] sm:$0xf] %v2694
      %2759 = vst [vmem:[%s221 + $0x58] sm:$0xf] %v2695
      %2760 = vst [vmem:[%s221 + $0x5c] sm:$0xf] %v2696
      %2761 = vst [vmem:[%s221 + $0x60] sm:$0xf] %v2697
      %2762 = vst [vmem:[%s221 + $0x64] sm:$0xf] %v2698
      %2763 = vst [vmem:[%s221 + $0x68] sm:$0xf] %v2699
      %2764 = vst [vmem:[%s221 + $0x6c] sm:$0xf] %v2700
      %2765 = vst [vmem:[%s221 + $0x70] sm:$0xf] %v2701
      %2766 = vst [vmem:[%s221 + $0x74] sm:$0xf] %v2702
      %2767 = vst [vmem:[%s221 + $0x78] sm:$0xf] %v2703
      %2768 = vst [vmem:[%s221 + $0x7c] sm:$0xf] %v2704
      %p2769 = scmp.lt.s32.totalorder %s18, 1
      %s2770 = scalar_select %p2769, %s18, 1
      %p2771 = scmp.lt.s32.totalorder %s19, 0
      %s2772 = scalar_select %p2771, %s19, 0
      %s2773 = smul.addr %s2770, 32
      %s2774 = sadd.s32 %s2772, %s2773
      %s2775 = smul.addr %s2774, 4
      %s2776 = scalar_lea.vmem %s3, %s2775
      // Predicated region
      $region33: #{hyper_analysis_ex.4} parent=31 // pred_check
        %p2777 = pneg %p124
      $region34: #{hyper_analysis_ex.4} parent=31 // pred_check_branch
        %2779 = sbr.rel (%p2777) target = $region36
      $region35: #{hyper_analysis_ex.4} parent=31 // pred_region
        _
      $region36: #{hyper_analysis_ex.4} parent=31 // pred_fallthru
        _
    $region32: #{hyper_analysis_ex.4} parent=5 // pred_fallthru
      _
    %p2780 = scmp.le.s32.totalorder 2, %s9
    // Predicated region
    $region37: #{hyper_analysis_ex.4} parent=5 // pred_check
      %p2781 = pneg %p2780
    $region38: #{hyper_analysis_ex.4} parent=5 // pred_check_branch
      %2783 = sbr.rel (%p2781) target = $region40
    $region39: #{hyper_analysis_ex.4} parent=5 // pred_region
      %s2784 = ssub.s32 %s9, 2
      // Predicated region
      $region41: #{hyper_analysis_ex.4} parent=39 // pred_check
        %p2785 = pneg %p130
      $region42: #{hyper_analysis_ex.4} parent=39 // pred_check_branch
        %2787 = sbr.rel (%p2785) target = $region44
      $region43: #{hyper_analysis_ex.4} parent=39 // pred_region
        %p2788 = scmp.lt.s32.totalorder %s20, 1
        %s2789 = scalar_select %p2788, %s20, 1
        %p2790 = scmp.lt.s32.totalorder %s21, 0
        %s2791 = scalar_select %p2790, %s21, 0
        %s2792 = smul.addr %s2789, 32
        %s2793 = sadd.s32 %s2791, %s2792
        %s2794 = smul.addr %s2793, 4
        %s2795 = scalar_lea.vmem %s3, %s2794
      $region44: #{hyper_analysis_ex.4} parent=39 // pred_fallthru
        _
    $region40: #{hyper_analysis_ex.4} parent=5 // pred_fallthru
      _
  $region6: #{hyper_analysis_ex.4} parent=0 // loop_footer
    %s13 = sadd.s32 1, %s9
  $region7: #{hyper_analysis_ex.4} parent=0 // loop_footer_branch
    %8 = sbr.rel target = $region3
  $region8: #{hyper_analysis_ex.4} parent=0 // loop_exit
    _

// kernel: hyper_analysis_ex.5
$region0: #{hyper_analysis_ex.5}
  #allocation0 [shape = 'u32[]', space=smem, size = 0x4, offset = 0x4, fixed_abs, tag = 'smem constant byte address 0x4 - core index']
  #allocation1 [shape = 'u32[144,128]{1,0:T(1,128)}', space=vmem, size = 0x12000, scoped, tag = 'internal scratch']
  %s0 = inlined_call_operand.vmem [shape: bf16[2,304,32], index: 0, kind: input, shape index: {}]
  %s1 = inlined_call_operand.vmem [shape: bf16[9,32,128], index: 1, kind: input, shape index: {}]
  %s2 = inlined_call_operand.vmem [shape: f32[1,128], index: 2, kind: input, shape index: {}]
  %s3 = inlined_call_operand.vmem [shape: f32[2,256,128], index: 3, kind: output, shape index: {}]
  %s4 = sld [smem:[#allocation0]]
  $region45: #{hyper_analysis_ex.5} parent=0
    _
  %s6 = ssub.s32 1, %s4
  %s7 = scalar_select 0, %s6, %s4
  loop: start=0, step=1, limit=4
  $region2: #{hyper_analysis_ex.5} parent=0 // loop_pre_header
    _
  $region3: #{hyper_analysis_ex.5} parent=0 // loop_header
    %s9 = sphi 0, %s13
    %p10 = scmp.ge.s32.totalorder %s9, 4
    %s16 = sphi 0, %s28
    %s17 = sphi 0, %s24
    %s18 = sphi 0, %s16
    %s19 = sphi 0, %s17
    %s20 = sphi 0, %s18
    %s21 = sphi 0, %s19
    %s31 = sphi 0, %s33
    %s34 = sphi 0, %s31
    %s35 = sphi 0, %s34
    %s51 = sphi 0, %s35
    %s57 = sphi 0, %s59
    %s60 = sphi 0, %s57
    %s61 = sphi 0, %s60
    %s77 = sphi 0, %s61
    %s83 = sphi 0, %s85
    %s86 = sphi 0, %s83
    %s87 = sphi 0, %s86
    %s103 = sphi 0, %s87
    %s111 = sphi 0, %s113
    %s114 = sphi 0, %s111
    %s115 = sphi 0, %s114
    %s131 = sphi 0, %s115
  $region4: #{hyper_analysis_ex.5} parent=0 // loop_header_branch
    %12 = sbr.rel (%p10) target = $region8
  $region5: #{hyper_analysis_ex.5} parent=0 // loop_body
    %s14 = ssub.s32 %s9, 1
    %s15 = ssub.s32 %s9, 2
    %s22 = sadd.s32 1, %s17
    %p23 = scmp.ge.s32.totalorder %s22, 1
    %s24 = scalar_select %p23, 0, %s22
    %s25 = sadd.s32 1, %s16
    %s26 = scalar_select %p23, %s25, %s16
    %p27 = scmp.ge.s32.totalorder %s26, 2
    %s28 = scalar_select %p27, 0, %s26
    %s29 = ssub.s32 %s16, %s28
    %p30 = scmp.eq.s32.totalorder %s29, 0
    %s32 = sadd.s32 %s31, 1
    %s33 = scalar_select %p30, %s31, %s32
    %p36 = pneg %p30
    %p37 = scmp.eq.s32.totalorder %s9, 1
    %p38 = por %p36, %p37
    %p39 = scmp.ne.s32.totalorder %s31, %s34
    %p40 = scmp.eq.s32.totalorder %s9, 0
    %p41 = por %p39, %p40
    %p42 = scmp.ne.s32.totalorder %s31, %s34
    %p43 = scmp.eq.s32.totalorder %s14, 1
    %p44 = por %p42, %p43
    %p45 = scmp.ne.s32.totalorder %s34, %s35
    %p46 = scmp.eq.s32.totalorder %s14, 0
    %p47 = por %p45, %p46
    %p48 = scmp.ne.s32.totalorder %s34, %s35
    %p49 = scmp.eq.s32.totalorder %s15, 1
    %p50 = por %p48, %p49
    %p52 = scmp.ne.s32.totalorder %s35, %s51
    %p53 = scmp.eq.s32.totalorder %s15, 0
    %p54 = por %p52, %p53
    %s55 = ssub.s32 %s17, %s24
    %p56 = scmp.eq.s32.totalorder %s55, 0
    %s58 = sadd.s32 %s57, 1
    %s59 = scalar_select %p56, %s57, %s58
    %p62 = pneg %p56
    %p63 = scmp.eq.s32.totalorder %s9, 1
    %p64 = por %p62, %p63
    %p65 = scmp.ne.s32.totalorder %s57, %s60
    %p66 = scmp.eq.s32.totalorder %s9, 0
    %p67 = por %p65, %p66
    %p68 = scmp.ne.s32.totalorder %s57, %s60
    %p69 = scmp.eq.s32.totalorder %s14, 1
    %p70 = por %p68, %p69
    %p71 = scmp.ne.s32.totalorder %s60, %s61
    %p72 = scmp.eq.s32.totalorder %s14, 0
    %p73 = por %p71, %p72
    %p74 = scmp.ne.s32.totalorder %s60, %s61
    %p75 = scmp.eq.s32.totalorder %s15, 1
    %p76 = por %p74, %p75
    %p78 = scmp.ne.s32.totalorder %s61, %s77
    %p79 = scmp.eq.s32.totalorder %s15, 0
    %p80 = por %p78, %p79
    %s81 = ssub.s32 %s17, %s24
    %p82 = scmp.eq.s32.totalorder %s81, 0
    %s84 = sadd.s32 %s83, 1
    %s85 = scalar_select %p82, %s83, %s84
    %p88 = pneg %p82
    %p89 = scmp.eq.s32.totalorder %s9, 1
    %p90 = por %p88, %p89
    %p91 = scmp.ne.s32.totalorder %s83, %s86
    %p92 = scmp.eq.s32.totalorder %s9, 0
    %p93 = por %p91, %p92
    %p94 = scmp.ne.s32.totalorder %s83, %s86
    %p95 = scmp.eq.s32.totalorder %s14, 1
    %p96 = por %p94, %p95
    %p97 = scmp.ne.s32.totalorder %s86, %s87
    %p98 = scmp.eq.s32.totalorder %s14, 0
    %p99 = por %p97, %p98
    %p100 = scmp.ne.s32.totalorder %s86, %s87
    %p101 = scmp.eq.s32.totalorder %s15, 1
    %p102 = por %p100, %p101
    %p104 = scmp.ne.s32.totalorder %s87, %s103
    %p105 = scmp.eq.s32.totalorder %s15, 0
    %p106 = por %p104, %p105
    %s107 = ssub.s32 %s16, %s28
    %s108 = ssub.s32 %s17, %s24
    %s109 = sor.u32 %s107, %s108
    %p110 = scmp.eq.s32.totalorder %s109, 0
    %s112 = sadd.s32 %s111, 1
    %s113 = scalar_select %p110, %s111, %s112
    %p116 = pneg %p110
    %p117 = scmp.eq.s32.totalorder %s9, 1
    %p118 = por %p116, %p117
    %p119 = scmp.ne.s32.totalorder %s111, %s114
    %p120 = scmp.eq.s32.totalorder %s9, 0
    %p121 = por %p119, %p120
    %p122 = scmp.ne.s32.totalorder %s111, %s114
    %p123 = scmp.eq.s32.totalorder %s14, 1
    %p124 = por %p122, %p123
    %p125 = scmp.ne.s32.totalorder %s114, %s115
    %p126 = scmp.eq.s32.totalorder %s14, 0
    %p127 = por %p125, %p126
    %p128 = scmp.ne.s32.totalorder %s114, %s115
    %p129 = scmp.eq.s32.totalorder %s15, 1
    %p130 = por %p128, %p129
    %p132 = scmp.ne.s32.totalorder %s115, %s131
    %p133 = scmp.eq.s32.totalorder %s15, 0
    %p134 = por %p132, %p133
    %p135 = scmp.le.s32.totalorder 1, %s9
    %p136 = scmp.lt.s32.totalorder %s9, 3
    %p137 = pnand %p135, %p136
    %p138 = pneg %p137
    // Predicated region
    $region9: #{hyper_analysis_ex.5} parent=5 // pred_check
      _
    $region10: #{hyper_analysis_ex.5} parent=5 // pred_check_branch
      %140 = sbr.rel (%p137) target = $region12
    $region11: #{hyper_analysis_ex.5} parent=5 // pred_region
      %s141 = ssub.s32 %s9, 1
      // Predicated region
      $region13: #{hyper_analysis_ex.5} parent=11 // pred_check
        %p142 = pneg %p73
      $region14: #{hyper_analysis_ex.5} parent=11 // pred_check_branch
        %144 = sbr.rel (%p142) target = $region16
      $region15: #{hyper_analysis_ex.5} parent=11 // pred_region
        %p145 = scmp.lt.s32.totalorder %s19, 0
        %s146 = scalar_select %p145, %s19, 0
        %s147 = smul.addr %s146, 4
        %s148 = scalar_lea.vmem %s1, %s147
      $region16: #{hyper_analysis_ex.5} parent=11 // pred_fallthru
        _
      // Predicated region
      $region17: #{hyper_analysis_ex.5} parent=11 // pred_check
        %p149 = pneg %p99
      $region18: #{hyper_analysis_ex.5} parent=11 // pred_check_branch
        %151 = sbr.rel (%p149) target = $region20
      $region19: #{hyper_analysis_ex.5} parent=11 // pred_region
        %p152 = scmp.lt.s32.totalorder %s19, 0
        %s153 = scalar_select %p152, %s19, 0
        %s154 = scalar_lea.vmem %s2, %s153
      $region20: #{hyper_analysis_ex.5} parent=11 // pred_fallthru
        _
    $region12: #{hyper_analysis_ex.5} parent=5 // pred_fallthru
      _
    %p155 = scmp.lt.s32.totalorder %s9, 2
    // Predicated region
    $region21: #{hyper_analysis_ex.5} parent=5 // pred_check
      %p156 = pneg %p155
    $region22: #{hyper_analysis_ex.5} parent=5 // pred_check_branch
      %158 = sbr.rel (%p156) target = $region24
    $region23: #{hyper_analysis_ex.5} parent=5 // pred_region
      // Predicated region
      $region25: #{hyper_analysis_ex.5} parent=23 // pred_check
        %p159 = pneg %p41
      $region26: #{hyper_analysis_ex.5} parent=23 // pred_check_branch
        %161 = sbr.rel (%p159) target = $region28
      $region27: #{hyper_analysis_ex.5} parent=23 // pred_region
        %p162 = scmp.lt.s32.totalorder %s16, 1
        %s163 = scalar_select %p162, %s16, 1
        %s164 = smul.addr %s163, 38
        %s165 = smul.addr %s164, 4
        %s166 = scalar_lea.vmem %s0, %s165
      $region28: #{hyper_analysis_ex.5} parent=23 // pred_fallthru
        _
    $region24: #{hyper_analysis_ex.5} parent=5 // pred_fallthru
      _
    %p167 = scmp.le.s32.totalorder 1, %s9
    %p168 = scmp.lt.s32.totalorder %s9, 3
    %p169 = pnand %p167, %p168
    %p170 = pneg %p169
    // Predicated region
    $region29: #{hyper_analysis_ex.5} parent=5 // pred_check
      _
    $region30: #{hyper_analysis_ex.5} parent=5 // pred_check_branch
      %172 = sbr.rel (%p169) target = $region32
    $region31: #{hyper_analysis_ex.5} parent=5 // pred_region
      %s173 = ssub.s32 %s9, 1
      %p174 = scmp.lt.s32.totalorder %s18, 1
      %s175 = scalar_select %p174, %s18, 1
      %s176 = smul.addr %s175, 38
      %s177 = smul.addr %s176, 4
      %s178 = scalar_lea.vmem %s0, %s177
      %p179 = pneg %p47
      %p180 = pneg %p44
      %p181 = scmp.lt.s32.totalorder %s19, 0
      %s182 = scalar_select %p181, %s19, 0
      %s183 = smul.addr %s182, 4
      %s184 = scalar_lea.vmem %s1, %s183
      %p185 = pneg %p73
      %p186 = pneg %p70
      %p187 = scmp.lt.s32.totalorder %s19, 0
      %s188 = scalar_select %p187, %s19, 0
      %s189 = scalar_lea.vmem %s2, %s188
      %p190 = pneg %p99
      %p191 = pneg %p96
      %p192 = pneg %p127
      %p193 = pneg %p124
      %p194 = scmp.lt.s32.totalorder %s18, 1
      %s195 = scalar_select %p194, %s18, 1
      %p196 = scmp.lt.s32.totalorder %s19, 0
      %s197 = scalar_select %p196, %s19, 0
      %s198 = smul.addr %s195, 32
      %s199 = sadd.s32 %s197, %s198
      %s200 = smul.addr %s199, 8
      %s201 = scalar_lea.vmem %s3, %s200
      %p202 = scmp.lt.s32.totalorder %s18, 1
      %s203 = scalar_select %p202, %s18, 1
      %s204 = smul.addr %s203, 38
      %s205 = smul.addr %s204, 4
      %s206 = scalar_lea.vmem %s0, %s205
      %p207 = scmp.lt.s32.totalorder %s19, 0
      %s208 = scalar_select %p207, %s19, 0
      %s209 = smul.addr %s208, 4
      %s210 = scalar_lea.vmem %s1, %s209
      %p211 = scmp.lt.s32.totalorder %s19, 0
      %s212 = scalar_select %p211, %s19, 0
      %s213 = scalar_lea.vmem %s2, %s212
      %p214 = scmp.lt.s32.totalorder %s18, 1
      %s215 = scalar_select %p214, %s18, 1
      %p216 = scmp.lt.s32.totalorder %s19, 0
      %s217 = scalar_select %p216, %s19, 0
      %s218 = smul.addr %s215, 32
      %s219 = sadd.s32 %s217, %s218
      %s220 = smul.addr %s219, 8
      %s221 = scalar_lea.vmem %s3, %s220
      %v223 = vld [vmem:[%s213] sm:$0x1]
      %v224 = vld [vmem:[%s206] sm:$0xf]
      %v225 = vld [vmem:[%s206 + $0x4] sm:$0xf]
      %v226 = vld [vmem:[%s206 + $0x8] sm:$0xf]
      %v227 = vld [vmem:[%s206 + $0xc] sm:$0xf]
      %v228 = vld [vmem:[%s206 + $0x10] sm:$0xf]
      %v229 = vld [vmem:[%s206 + $0x14] sm:$0xf]
      %v230 = vld [vmem:[%s206 + $0x18] sm:$0xf]
      %v231 = vld [vmem:[%s206 + $0x1c] sm:$0xf]
      %v232 = vld [vmem:[%s206 + $0x20] sm:$0xf]
      %v233 = vld [vmem:[%s206 + $0x24] sm:$0xf]
      %v234 = vld [vmem:[%s206 + $0x28] sm:$0xf]
      %v235 = vld [vmem:[%s206 + $0x2c] sm:$0xf]
      %v236 = vld [vmem:[%s206 + $0x30] sm:$0xf]
      %v237 = vld [vmem:[%s206 + $0x34] sm:$0xf]
      %v238 = vld [vmem:[%s206 + $0x38] sm:$0xf]
      %v239 = vld [vmem:[%s206 + $0x3c] sm:$0xf]
      %v240 = vld [vmem:[%s206 + $0x40] sm:$0xf]
      %v241 = vld [vmem:[%s206 + $0x44] sm:$0xf]
      %v242 = vld [vmem:[%s206 + $0x48] sm:$0xf]
      %v243 = vld [vmem:[%s206 + $0x4c] sm:$0xf]
      %v244 = vld [vmem:[%s206 + $0x50] sm:$0xf]
      %v245 = vld [vmem:[%s206 + $0x54] sm:$0xf]
      %v246 = vld [vmem:[%s206 + $0x58] sm:$0xf]
      %v247 = vld [vmem:[%s206 + $0x5c] sm:$0xf]
      %v248 = vld [vmem:[%s206 + $0x60] sm:$0xf]
      %v249 = vld [vmem:[%s206 + $0x64] sm:$0xf]
      %v250 = vld [vmem:[%s206 + $0x68] sm:$0xf]
      %v251 = vld [vmem:[%s206 + $0x6c] sm:$0xf]
      %v252 = vld [vmem:[%s206 + $0x70] sm:$0xf]
      %v253 = vld [vmem:[%s206 + $0x74] sm:$0xf]
      %v254 = vld [vmem:[%s206 + $0x78] sm:$0xf]
      %v255 = vld [vmem:[%s206 + $0x7c] sm:$0xf]
      %v256 = vld [vmem:[%s206 + $0x80] sm:$0xf]
      %v257 = vld [vmem:[%s206 + $0x84] sm:$0xf]
      %v258 = vld [vmem:[%s206 + $0x88] sm:$0xf]
      %v259 = vld [vmem:[%s206 + $0x8c] sm:$0xf]
      %v260 = vld [vmem:[%s206 + $0x90] sm:$0xf]
      %v261 = vld [vmem:[%s210] sm:$0xf]
      %v262 = vld [vmem:[%s210 + $0x4] sm:$0xf]
      %v263 = vld [vmem:[%s210 + $0x8] sm:$0xf]
      %v264 = vld [vmem:[%s210 + $0xc] sm:$0xf]
      %s265 = scalar_lea.vmem %s210, 48
      %v266 = vld [vmem:[%s265] sm:$0xf]
      %v267 = vld [vmem:[%s265 + $0x4] sm:$0xf]
      %v268 = vld [vmem:[%s265 + $0x8] sm:$0xf]
      %v269 = vld [vmem:[%s265 + $0xc] sm:$0xf]
      %v302 = vunpack.c.l.b16 %v226
      %v303 = vunpack.c.l.b16 %v227
      %v304 = vunpack.c.l.b16 %v228
      %v305 = vunpack.c.l.b16 %v229
      %v306 = vunpack.c.l.b16 %v230
      %v307 = vunpack.c.l.b16 %v231
      %v308 = vunpack.c.l.b16 %v232
      %v309 = vunpack.c.l.b16 %v233
      %v310 = vunpack.c.l.b16 %v234
      %v311 = vunpack.c.l.b16 %v235
      %v312 = vunpack.c.l.b16 %v236
      %v313 = vunpack.c.l.b16 %v237
      %v314 = vunpack.c.l.b16 %v238
      %v315 = vunpack.c.l.b16 %v239
      %v316 = vunpack.c.l.b16 %v240
      %v317 = vunpack.c.l.b16 %v241
      %v318 = vunpack.c.l.b16 %v242
      %v319 = vunpack.c.l.b16 %v243
      %v320 = vunpack.c.l.b16 %v244
      %v321 = vunpack.c.l.b16 %v245
      %v322 = vunpack.c.l.b16 %v246
      %v323 = vunpack.c.l.b16 %v247
      %v324 = vunpack.c.l.b16 %v248
      %v325 = vunpack.c.l.b16 %v249
      %v326 = vunpack.c.l.b16 %v250
      %v327 = vunpack.c.l.b16 %v251
      %v328 = vunpack.c.l.b16 %v252
      %v329 = vunpack.c.l.b16 %v253
      %v330 = vunpack.c.l.b16 %v254
      %v331 = vunpack.c.l.b16 %v255
      %v332 = vunpack.c.l.b16 %v256
      %v333 = vunpack.c.l.b16 %v257
      %v334 = vpack.c.b16 %v303, %v302
      %v335 = vpack.c.b16 %v305, %v304
      %v336 = vpack.c.b16 %v307, %v306
      %v337 = vpack.c.b16 %v309, %v308
      %v338 = vpack.c.b16 %v311, %v310
      %v339 = vpack.c.b16 %v313, %v312
      %v340 = vpack.c.b16 %v315, %v314
      %v341 = vpack.c.b16 %v317, %v316
      %v342 = vpack.c.b16 %v319, %v318
      %v343 = vpack.c.b16 %v321, %v320
      %v344 = vpack.c.b16 %v323, %v322
      %v345 = vpack.c.b16 %v325, %v324
      %v346 = vpack.c.b16 %v327, %v326
      %v347 = vpack.c.b16 %v329, %v328
      %v348 = vpack.c.b16 %v331, %v330
      %v349 = vpack.c.b16 %v333, %v332
      %v354 = vunpack.c.l.b16 %v266
      %v355 = vunpack.c.l.b16 %v267
      %v356 = vunpack.c.l.b16 %v268
      %v357 = vunpack.c.l.b16 %v269
      %v358 = vpack.c.b16 %v355, %v354
      %v359 = vpack.c.b16 %v357, %v356
      %vm362 = vcmask 261120
      %v364 = vsel %vm362, %v334, 0
      %v367 = vsel %vm362, %v335, 0
      %v370 = vsel %vm362, %v336, 0
      %v373 = vsel %vm362, %v337, 0
      %v376 = vsel %vm362, %v338, 0
      %v379 = vsel %vm362, %v339, 0
      %v382 = vsel %vm362, %v340, 0
      %v385 = vsel %vm362, %v341, 0
      %v388 = vsel %vm362, %v342, 0
      %v391 = vsel %vm362, %v343, 0
      %v394 = vsel %vm362, %v344, 0
      %v397 = vsel %vm362, %v345, 0
      %v400 = vsel %vm362, %v346, 0
      %v403 = vsel %vm362, %v347, 0
      %v406 = vsel %vm362, %v348, 0
      %v409 = vsel %vm362, %v349, 0
      %411 = vmatprep.subr.bf16.mxu0 0
      %412 = vmatpush1.bf16.msra.mxu0 0
      %413 = vmatprep.subr.bf16.mxu0 0
      %414 = vmatpush1.bf16.msra.mxu0 0
      %415 = vmatprep.subr.bf16.mxu0 0
      %416 = vmatpush1.bf16.msra.mxu0 0
      %417 = vmatprep.subr.bf16.mxu0 0
      %418 = vmatpush1.bf16.msra.mxu0 0
      %419 = vmatprep.subr.bf16.mxu0 0
      %420 = vmatpush1.bf16.msra.mxu0 0
      %421 = vmatprep.subr.bf16.mxu0 0
      %422 = vmatpush1.bf16.msra.mxu0 0
      %423 = vmatprep.subr.bf16.mxu0 0
      %424 = vmatpush1.bf16.msra.mxu0 %v359
      %425 = vmatprep.subr.bf16.mxu0 0
      %426 = vmatpush1.bf16.msra.mxu0 %v358
      %427 = vmatprep.subr.bf16.mxu0 0
      %428 = vmatpush2.bf16.msra.mxu0 0
      %429 = vmatprep.subr.bf16.mxu0 0
      %430 = vmatpush2.bf16.msra.mxu0 0
      %431 = vmatprep.subr.bf16.mxu0 0
      %432 = vmatpush2.bf16.msra.mxu0 0
      %433 = vmatprep.subr.bf16.mxu0 0
      %434 = vmatpush2.bf16.msra.mxu0 0
      %435 = vmatprep.subr.bf16.mxu0 0
      %436 = vmatpush2.bf16.msra.mxu0 0
      %437 = vmatprep.subr.bf16.mxu0 0
      %438 = vmatpush2.bf16.msra.mxu0 0
      %439 = vmatprep.subr.bf16.mxu0 0
      %440 = vmatpush2.bf16.msra.mxu0 0
      %441 = vmatprep.subr.bf16.mxu0 0
      %442 = vmatpush2.bf16.msra.mxu0 0
      %443 = vmatprep.mubr.bf16.mxu0 0
      %444 = vmatmul.mubr.bf16.gmra.mxu0 %v364
      %v445 = vpop.f32.mrf.mxu0
      %v446 = vadd.f32 0.0, %v445
      %v447 = vpop.f32.mrf.mxu0
      %v448 = vpop.f32.mrf.mxu0
      %v449 = vadd.f32 0.0, %v448
      %v450 = vpop.f32.mrf.mxu0
      %451 = vmatprep.mubr.bf16.mxu0 0
      %452 = vmatmul.mubr.bf16.gmra.mxu0 %v367
      %v453 = vpop.f32.mrf.mxu0
      %v454 = vadd.f32 0.0, %v453
      %v455 = vpop.f32.mrf.mxu0
      %v456 = vpop.f32.mrf.mxu0
      %v457 = vadd.f32 0.0, %v456
      %v458 = vpop.f32.mrf.mxu0
      %459 = vmatprep.mubr.bf16.mxu0 0
      %460 = vmatmul.mubr.bf16.gmra.mxu0 %v370
      %v461 = vpop.f32.mrf.mxu0
      %v462 = vadd.f32 0.0, %v461
      %v463 = vpop.f32.mrf.mxu0
      %v464 = vpop.f32.mrf.mxu0
      %v465 = vadd.f32 0.0, %v464
      %v466 = vpop.f32.mrf.mxu0
      %467 = vmatprep.mubr.bf16.mxu0 0
      %468 = vmatmul.mubr.bf16.gmra.mxu0 %v373
      %v469 = vpop.f32.mrf.mxu0
      %v470 = vadd.f32 0.0, %v469
      %v471 = vpop.f32.mrf.mxu0
      %v472 = vpop.f32.mrf.mxu0
      %v473 = vadd.f32 0.0, %v472
      %v474 = vpop.f32.mrf.mxu0
      %475 = vmatprep.mubr.bf16.mxu0 0
      %476 = vmatmul.mubr.bf16.gmra.mxu0 %v376
      %v477 = vpop.f32.mrf.mxu0
      %v478 = vadd.f32 0.0, %v477
      %v479 = vpop.f32.mrf.mxu0
      %v480 = vpop.f32.mrf.mxu0
      %v481 = vadd.f32 0.0, %v480
      %v482 = vpop.f32.mrf.mxu0
      %483 = vmatprep.mubr.bf16.mxu0 0
      %484 = vmatmul.mubr.bf16.gmra.mxu0 %v379
      %v485 = vpop.f32.mrf.mxu0
      %v486 = vadd.f32 0.0, %v485
      %v487 = vpop.f32.mrf.mxu0
      %v488 = vpop.f32.mrf.mxu0
      %v489 = vadd.f32 0.0, %v488
      %v490 = vpop.f32.mrf.mxu0
      %491 = vmatprep.mubr.bf16.mxu0 0
      %492 = vmatmul.mubr.bf16.gmra.mxu0 %v382
      %v493 = vpop.f32.mrf.mxu0
      %v494 = vadd.f32 0.0, %v493
      %v495 = vpop.f32.mrf.mxu0
      %v496 = vpop.f32.mrf.mxu0
      %v497 = vadd.f32 0.0, %v496
      %v498 = vpop.f32.mrf.mxu0
      %499 = vmatprep.mubr.bf16.mxu0 0
      %500 = vmatmul.mubr.bf16.gmra.mxu0 %v385
      %v501 = vpop.f32.mrf.mxu0
      %v502 = vadd.f32 0.0, %v501
      %v503 = vpop.f32.mrf.mxu0
      %v504 = vpop.f32.mrf.mxu0
      %v505 = vadd.f32 0.0, %v504
      %v506 = vpop.f32.mrf.mxu0
      %507 = vmatprep.mubr.bf16.mxu0 0
      %508 = vmatmul.mubr.bf16.gmra.mxu0 %v388
      %v509 = vpop.f32.mrf.mxu0
      %v510 = vadd.f32 0.0, %v509
      %v511 = vpop.f32.mrf.mxu0
      %v512 = vpop.f32.mrf.mxu0
      %v513 = vadd.f32 0.0, %v512
      %v514 = vpop.f32.mrf.mxu0
      %515 = vmatprep.mubr.bf16.mxu0 0
      %516 = vmatmul.mubr.bf16.gmra.mxu0 %v391
      %v517 = vpop.f32.mrf.mxu0
      %v518 = vadd.f32 0.0, %v517
      %v519 = vpop.f32.mrf.mxu0
      %v520 = vpop.f32.mrf.mxu0
      %v521 = vadd.f32 0.0, %v520
      %v522 = vpop.f32.mrf.mxu0
      %523 = vmatprep.mubr.bf16.mxu0 0
      %524 = vmatmul.mubr.bf16.gmra.mxu0 %v394
      %v525 = vpop.f32.mrf.mxu0
      %v526 = vadd.f32 0.0, %v525
      %v527 = vpop.f32.mrf.mxu0
      %v528 = vpop.f32.mrf.mxu0
      %v529 = vadd.f32 0.0, %v528
      %v530 = vpop.f32.mrf.mxu0
      %531 = vmatprep.mubr.bf16.mxu0 0
      %532 = vmatmul.mubr.bf16.gmra.mxu0 %v397
      %v533 = vpop.f32.mrf.mxu0
      %v534 = vadd.f32 0.0, %v533
      %v535 = vpop.f32.mrf.mxu0
      %v536 = vpop.f32.mrf.mxu0
      %v537 = vadd.f32 0.0, %v536
      %v538 = vpop.f32.mrf.mxu0
      %539 = vmatprep.mubr.bf16.mxu0 0
      %540 = vmatmul.mubr.bf16.gmra.mxu0 %v400
      %v541 = vpop.f32.mrf.mxu0
      %v542 = vadd.f32 0.0, %v541
      %v543 = vpop.f32.mrf.mxu0
      %v544 = vpop.f32.mrf.mxu0
      %v545 = vadd.f32 0.0, %v544
      %v546 = vpop.f32.mrf.mxu0
      %547 = vmatprep.mubr.bf16.mxu0 0
      %548 = vmatmul.mubr.bf16.gmra.mxu0 %v403
      %v549 = vpop.f32.mrf.mxu0
      %v550 = vadd.f32 0.0, %v549
      %v551 = vpop.f32.mrf.mxu0
      %v552 = vpop.f32.mrf.mxu0
      %v553 = vadd.f32 0.0, %v552
      %v554 = vpop.f32.mrf.mxu0
      %555 = vmatprep.mubr.bf16.mxu0 0
      %556 = vmatmul.mubr.bf16.gmra.mxu0 %v406
      %v557 = vpop.f32.mrf.mxu0
      %v558 = vadd.f32 0.0, %v557
      %v559 = vpop.f32.mrf.mxu0
      %v560 = vpop.f32.mrf.mxu0
      %v561 = vadd.f32 0.0, %v560
      %v562 = vpop.f32.mrf.mxu0
      %563 = vmatprep.mubr.bf16.mxu0 0
      %564 = vmatmul.mubr.bf16.gmra.mxu0 %v409
      %v565 = vpop.f32.mrf.mxu0
      %v566 = vadd.f32 0.0, %v565
      %v567 = vpop.f32.mrf.mxu0
      %v568 = vpop.f32.mrf.mxu0
      %v569 = vadd.f32 0.0, %v568
      %v570 = vpop.f32.mrf.mxu0
      %571 = vdwg.mxu0
      %v574 = vunpack.c.l.b16 %v224
      %v575 = vunpack.c.l.b16 %v225
      %v576 = vpack.c.b16 %v575, %v574
      %v581 = vunpack.c.l.b16 %v261
      %v582 = vunpack.c.l.b16 %v262
      %v583 = vunpack.c.l.b16 %v263
      %v584 = vunpack.c.l.b16 %v264
      %v585 = vpack.c.b16 %v582, %v581
      %v586 = vpack.c.b16 %v584, %v583
      %v590 = vsel %vm362, %v576, 0
      %592 = vmatprep.subr.bf16.mxu0 0
      %593 = vmatpush1.bf16.msra.mxu0 0
      %594 = vmatprep.subr.bf16.mxu0 0
      %595 = vmatpush1.bf16.msra.mxu0 0
      %596 = vmatprep.subr.bf16.mxu0 0
      %597 = vmatpush1.bf16.msra.mxu0 0
      %598 = vmatprep.subr.bf16.mxu0 0
      %599 = vmatpush1.bf16.msra.mxu0 0
      %600 = vmatprep.subr.bf16.mxu0 0
      %601 = vmatpush1.bf16.msra.mxu0 0
      %602 = vmatprep.subr.bf16.mxu0 0
      %603 = vmatpush1.bf16.msra.mxu0 0
      %604 = vmatprep.subr.bf16.mxu0 0
      %605 = vmatpush1.bf16.msra.mxu0 %v586
      %606 = vmatprep.subr.bf16.mxu0 0
      %607 = vmatpush1.bf16.msra.mxu0 %v585
      %608 = vmatprep.subr.bf16.mxu0 0
      %609 = vmatpush2.bf16.msra.mxu0 0
      %610 = vmatprep.subr.bf16.mxu0 0
      %611 = vmatpush2.bf16.msra.mxu0 0
      %612 = vmatprep.subr.bf16.mxu0 0
      %613 = vmatpush2.bf16.msra.mxu0 0
      %614 = vmatprep.subr.bf16.mxu0 0
      %615 = vmatpush2.bf16.msra.mxu0 0
      %616 = vmatprep.subr.bf16.mxu0 0
      %617 = vmatpush2.bf16.msra.mxu0 0
      %618 = vmatprep.subr.bf16.mxu0 0
      %619 = vmatpush2.bf16.msra.mxu0 0
      %620 = vmatprep.subr.bf16.mxu0 0
      %621 = vmatpush2.bf16.msra.mxu0 0
      %622 = vmatprep.subr.bf16.mxu0 0
      %623 = vmatpush2.bf16.msra.mxu0 0
      %624 = vmatprep.mubr.bf16.mxu0 0
      %625 = vmatmul.mubr.bf16.gmra.mxu0 %v590
      %v626 = vpop.f32.mrf.mxu0
      %v627 = vadd.f32 %v446, %v626
      %v628 = vpop.f32.mrf.mxu0
      %v629 = vpop.f32.mrf.mxu0
      %v630 = vadd.f32 %v449, %v629
      %v631 = vpop.f32.mrf.mxu0
      %632 = vmatprep.mubr.bf16.mxu0 0
      %633 = vmatmul.mubr.bf16.gmra.mxu0 %v364
      %v634 = vpop.f32.mrf.mxu0
      %v635 = vadd.f32 %v454, %v634
      %v636 = vpop.f32.mrf.mxu0
      %v637 = vpop.f32.mrf.mxu0
      %v638 = vadd.f32 %v457, %v637
      %v639 = vpop.f32.mrf.mxu0
      %640 = vmatprep.mubr.bf16.mxu0 0
      %641 = vmatmul.mubr.bf16.gmra.mxu0 %v367
      %v642 = vpop.f32.mrf.mxu0
      %v643 = vadd.f32 %v462, %v642
      %v644 = vpop.f32.mrf.mxu0
      %v645 = vpop.f32.mrf.mxu0
      %v646 = vadd.f32 %v465, %v645
      %v647 = vpop.f32.mrf.mxu0
      %648 = vmatprep.mubr.bf16.mxu0 0
      %649 = vmatmul.mubr.bf16.gmra.mxu0 %v370
      %v650 = vpop.f32.mrf.mxu0
      %v651 = vadd.f32 %v470, %v650
      %v652 = vpop.f32.mrf.mxu0
      %v653 = vpop.f32.mrf.mxu0
      %v654 = vadd.f32 %v473, %v653
      %v655 = vpop.f32.mrf.mxu0
      %656 = vmatprep.mubr.bf16.mxu0 0
      %657 = vmatmul.mubr.bf16.gmra.mxu0 %v373
      %v658 = vpop.f32.mrf.mxu0
      %v659 = vadd.f32 %v478, %v658
      %v660 = vpop.f32.mrf.mxu0
      %v661 = vpop.f32.mrf.mxu0
      %v662 = vadd.f32 %v481, %v661
      %v663 = vpop.f32.mrf.mxu0
      %664 = vmatprep.mubr.bf16.mxu0 0
      %665 = vmatmul.mubr.bf16.gmra.mxu0 %v376
      %v666 = vpop.f32.mrf.mxu0
      %v667 = vadd.f32 %v486, %v666
      %v668 = vpop.f32.mrf.mxu0
      %v669 = vpop.f32.mrf.mxu0
      %v670 = vadd.f32 %v489, %v669
      %v671 = vpop.f32.mrf.mxu0
      %672 = vmatprep.mubr.bf16.mxu0 0
      %673 = vmatmul.mubr.bf16.gmra.mxu0 %v379
      %v674 = vpop.f32.mrf.mxu0
      %v675 = vadd.f32 %v494, %v674
      %v676 = vpop.f32.mrf.mxu0
      %v677 = vpop.f32.mrf.mxu0
      %v678 = vadd.f32 %v497, %v677
      %v679 = vpop.f32.mrf.mxu0
      %680 = vmatprep.mubr.bf16.mxu0 0
      %681 = vmatmul.mubr.bf16.gmra.mxu0 %v382
      %v682 = vpop.f32.mrf.mxu0
      %v683 = vadd.f32 %v502, %v682
      %v684 = vpop.f32.mrf.mxu0
      %v685 = vpop.f32.mrf.mxu0
      %v686 = vadd.f32 %v505, %v685
      %v687 = vpop.f32.mrf.mxu0
      %688 = vmatprep.mubr.bf16.mxu0 0
      %689 = vmatmul.mubr.bf16.gmra.mxu0 %v385
      %v690 = vpop.f32.mrf.mxu0
      %v691 = vadd.f32 %v510, %v690
      %v692 = vpop.f32.mrf.mxu0
      %v693 = vpop.f32.mrf.mxu0
      %v694 = vadd.f32 %v513, %v693
      %v695 = vpop.f32.mrf.mxu0
      %696 = vmatprep.mubr.bf16.mxu0 0
      %697 = vmatmul.mubr.bf16.gmra.mxu0 %v388
      %v698 = vpop.f32.mrf.mxu0
      %v699 = vadd.f32 %v518, %v698
      %v700 = vpop.f32.mrf.mxu0
      %v701 = vpop.f32.mrf.mxu0
      %v702 = vadd.f32 %v521, %v701
      %v703 = vpop.f32.mrf.mxu0
      %704 = vmatprep.mubr.bf16.mxu0 0
      %705 = vmatmul.mubr.bf16.gmra.mxu0 %v391
      %v706 = vpop.f32.mrf.mxu0
      %v707 = vadd.f32 %v526, %v706
      %v708 = vpop.f32.mrf.mxu0
      %v709 = vpop.f32.mrf.mxu0
      %v710 = vadd.f32 %v529, %v709
      %v711 = vpop.f32.mrf.mxu0
      %712 = vmatprep.mubr.bf16.mxu0 0
      %713 = vmatmul.mubr.bf16.gmra.mxu0 %v394
      %v714 = vpop.f32.mrf.mxu0
      %v715 = vadd.f32 %v534, %v714
      %v716 = vpop.f32.mrf.mxu0
      %v717 = vpop.f32.mrf.mxu0
      %v718 = vadd.f32 %v537, %v717
      %v719 = vpop.f32.mrf.mxu0
      %720 = vmatprep.mubr.bf16.mxu0 0
      %721 = vmatmul.mubr.bf16.gmra.mxu0 %v397
      %v722 = vpop.f32.mrf.mxu0
      %v723 = vadd.f32 %v542, %v722
      %v724 = vpop.f32.mrf.mxu0
      %v725 = vpop.f32.mrf.mxu0
      %v726 = vadd.f32 %v545, %v725
      %v727 = vpop.f32.mrf.mxu0
      %728 = vmatprep.mubr.bf16.mxu0 0
      %729 = vmatmul.mubr.bf16.gmra.mxu0 %v400
      %v730 = vpop.f32.mrf.mxu0
      %v731 = vadd.f32 %v550, %v730
      %v732 = vpop.f32.mrf.mxu0
      %v733 = vpop.f32.mrf.mxu0
      %v734 = vadd.f32 %v553, %v733
      %v735 = vpop.f32.mrf.mxu0
      %736 = vmatprep.mubr.bf16.mxu0 0
      %737 = vmatmul.mubr.bf16.gmra.mxu0 %v403
      %v738 = vpop.f32.mrf.mxu0
      %v739 = vadd.f32 %v558, %v738
      %v740 = vpop.f32.mrf.mxu0
      %v741 = vpop.f32.mrf.mxu0
      %v742 = vadd.f32 %v561, %v741
      %v743 = vpop.f32.mrf.mxu0
      %744 = vmatprep.mubr.bf16.mxu0 0
      %745 = vmatmul.mubr.bf16.gmra.mxu0 %v406
      %v746 = vpop.f32.mrf.mxu0
      %v747 = vadd.f32 %v566, %v746
      %v748 = vpop.f32.mrf.mxu0
      %v749 = vpop.f32.mrf.mxu0
      %v750 = vadd.f32 %v569, %v749
      %v751 = vpop.f32.mrf.mxu0
      %752 = vdwg.mxu0
      %s753 = scalar_lea.vmem %s210, 96
      %v754 = vld [vmem:[%s753] sm:$0xf]
      %v755 = vld [vmem:[%s753 + $0x4] sm:$0xf]
      %v756 = vld [vmem:[%s753 + $0x8] sm:$0xf]
      %v757 = vld [vmem:[%s753 + $0xc] sm:$0xf]
      %v760 = vunpack.c.l.b16 %v258
      %v761 = vunpack.c.l.b16 %v259
      %v762 = vpack.c.b16 %v761, %v760
      %v767 = vunpack.c.l.b16 %v754
      %v768 = vunpack.c.l.b16 %v755
      %v769 = vunpack.c.l.b16 %v756
      %v770 = vunpack.c.l.b16 %v757
      %v771 = vpack.c.b16 %v768, %v767
      %v772 = vpack.c.b16 %v770, %v769
      %v776 = vsel %vm362, %v762, 0
      %778 = vmatprep.subr.bf16.mxu0 0
      %779 = vmatpush1.bf16.msra.mxu0 0
      %780 = vmatprep.subr.bf16.mxu0 0
      %781 = vmatpush1.bf16.msra.mxu0 0
      %782 = vmatprep.subr.bf16.mxu0 0
      %783 = vmatpush1.bf16.msra.mxu0 0
      %784 = vmatprep.subr.bf16.mxu0 0
      %785 = vmatpush1.bf16.msra.mxu0 0
      %786 = vmatprep.subr.bf16.mxu0 0
      %787 = vmatpush1.bf16.msra.mxu0 0
      %788 = vmatprep.subr.bf16.mxu0 0
      %789 = vmatpush1.bf16.msra.mxu0 0
      %790 = vmatprep.subr.bf16.mxu0 0
      %791 = vmatpush1.bf16.msra.mxu0 %v772
      %792 = vmatprep.subr.bf16.mxu0 0
      %793 = vmatpush1.bf16.msra.mxu0 %v771
      %794 = vmatprep.subr.bf16.mxu0 0
      %795 = vmatpush2.bf16.msra.mxu0 0
      %796 = vmatprep.subr.bf16.mxu0 0
      %797 = vmatpush2.bf16.msra.mxu0 0
      %798 = vmatprep.subr.bf16.mxu0 0
      %799 = vmatpush2.bf16.msra.mxu0 0
      %800 = vmatprep.subr.bf16.mxu0 0
      %801 = vmatpush2.bf16.msra.mxu0 0
      %802 = vmatprep.subr.bf16.mxu0 0
      %803 = vmatpush2.bf16.msra.mxu0 0
      %804 = vmatprep.subr.bf16.mxu0 0
      %805 = vmatpush2.bf16.msra.mxu0 0
      %806 = vmatprep.subr.bf16.mxu0 0
      %807 = vmatpush2.bf16.msra.mxu0 0
      %808 = vmatprep.subr.bf16.mxu0 0
      %809 = vmatpush2.bf16.msra.mxu0 0
      %810 = vmatprep.mubr.bf16.mxu0 0
      %811 = vmatmul.mubr.bf16.gmra.mxu0 %v367
      %v812 = vpop.f32.mrf.mxu0
      %v813 = vadd.f32 0.0, %v812
      %v814 = vpop.f32.mrf.mxu0
      %v815 = vpop.f32.mrf.mxu0
      %v816 = vadd.f32 0.0, %v815
      %v817 = vpop.f32.mrf.mxu0
      %818 = vmatprep.mubr.bf16.mxu0 0
      %819 = vmatmul.mubr.bf16.gmra.mxu0 %v370
      %v820 = vpop.f32.mrf.mxu0
      %v821 = vadd.f32 0.0, %v820
      %v822 = vpop.f32.mrf.mxu0
      %v823 = vpop.f32.mrf.mxu0
      %v824 = vadd.f32 0.0, %v823
      %v825 = vpop.f32.mrf.mxu0
      %826 = vmatprep.mubr.bf16.mxu0 0
      %827 = vmatmul.mubr.bf16.gmra.mxu0 %v373
      %v828 = vpop.f32.mrf.mxu0
      %v829 = vadd.f32 0.0, %v828
      %v830 = vpop.f32.mrf.mxu0
      %v831 = vpop.f32.mrf.mxu0
      %v832 = vadd.f32 0.0, %v831
      %v833 = vpop.f32.mrf.mxu0
      %834 = vmatprep.mubr.bf16.mxu0 0
      %835 = vmatmul.mubr.bf16.gmra.mxu0 %v376
      %v836 = vpop.f32.mrf.mxu0
      %v837 = vadd.f32 0.0, %v836
      %v838 = vpop.f32.mrf.mxu0
      %v839 = vpop.f32.mrf.mxu0
      %v840 = vadd.f32 0.0, %v839
      %v841 = vpop.f32.mrf.mxu0
      %842 = vmatprep.mubr.bf16.mxu0 0
      %843 = vmatmul.mubr.bf16.gmra.mxu0 %v379
      %v844 = vpop.f32.mrf.mxu0
      %v845 = vadd.f32 0.0, %v844
      %v846 = vpop.f32.mrf.mxu0
      %v847 = vpop.f32.mrf.mxu0
      %v848 = vadd.f32 0.0, %v847
      %v849 = vpop.f32.mrf.mxu0
      %850 = vmatprep.mubr.bf16.mxu0 0
      %851 = vmatmul.mubr.bf16.gmra.mxu0 %v382
      %v852 = vpop.f32.mrf.mxu0
      %v853 = vadd.f32 0.0, %v852
      %v854 = vpop.f32.mrf.mxu0
      %v855 = vpop.f32.mrf.mxu0
      %v856 = vadd.f32 0.0, %v855
      %v857 = vpop.f32.mrf.mxu0
      %858 = vmatprep.mubr.bf16.mxu0 0
      %859 = vmatmul.mubr.bf16.gmra.mxu0 %v385
      %v860 = vpop.f32.mrf.mxu0
      %v861 = vadd.f32 0.0, %v860
      %v862 = vpop.f32.mrf.mxu0
      %v863 = vpop.f32.mrf.mxu0
      %v864 = vadd.f32 0.0, %v863
      %v865 = vpop.f32.mrf.mxu0
      %866 = vmatprep.mubr.bf16.mxu0 0
      %867 = vmatmul.mubr.bf16.gmra.mxu0 %v388
      %v868 = vpop.f32.mrf.mxu0
      %v869 = vadd.f32 0.0, %v868
      %v870 = vpop.f32.mrf.mxu0
      %v871 = vpop.f32.mrf.mxu0
      %v872 = vadd.f32 0.0, %v871
      %v873 = vpop.f32.mrf.mxu0
      %874 = vmatprep.mubr.bf16.mxu0 0
      %875 = vmatmul.mubr.bf16.gmra.mxu0 %v391
      %v876 = vpop.f32.mrf.mxu0
      %v877 = vadd.f32 0.0, %v876
      %v878 = vpop.f32.mrf.mxu0
      %v879 = vpop.f32.mrf.mxu0
      %v880 = vadd.f32 0.0, %v879
      %v881 = vpop.f32.mrf.mxu0
      %882 = vmatprep.mubr.bf16.mxu0 0
      %883 = vmatmul.mubr.bf16.gmra.mxu0 %v394
      %v884 = vpop.f32.mrf.mxu0
      %v885 = vadd.f32 0.0, %v884
      %v886 = vpop.f32.mrf.mxu0
      %v887 = vpop.f32.mrf.mxu0
      %v888 = vadd.f32 0.0, %v887
      %v889 = vpop.f32.mrf.mxu0
      %890 = vmatprep.mubr.bf16.mxu0 0
      %891 = vmatmul.mubr.bf16.gmra.mxu0 %v397
      %v892 = vpop.f32.mrf.mxu0
      %v893 = vadd.f32 0.0, %v892
      %v894 = vpop.f32.mrf.mxu0
      %v895 = vpop.f32.mrf.mxu0
      %v896 = vadd.f32 0.0, %v895
      %v897 = vpop.f32.mrf.mxu0
      %898 = vmatprep.mubr.bf16.mxu0 0
      %899 = vmatmul.mubr.bf16.gmra.mxu0 %v400
      %v900 = vpop.f32.mrf.mxu0
      %v901 = vadd.f32 0.0, %v900
      %v902 = vpop.f32.mrf.mxu0
      %v903 = vpop.f32.mrf.mxu0
      %v904 = vadd.f32 0.0, %v903
      %v905 = vpop.f32.mrf.mxu0
      %906 = vmatprep.mubr.bf16.mxu0 0
      %907 = vmatmul.mubr.bf16.gmra.mxu0 %v403
      %v908 = vpop.f32.mrf.mxu0
      %v909 = vadd.f32 0.0, %v908
      %v910 = vpop.f32.mrf.mxu0
      %v911 = vpop.f32.mrf.mxu0
      %v912 = vadd.f32 0.0, %v911
      %v913 = vpop.f32.mrf.mxu0
      %914 = vmatprep.mubr.bf16.mxu0 0
      %915 = vmatmul.mubr.bf16.gmra.mxu0 %v406
      %v916 = vpop.f32.mrf.mxu0
      %v917 = vadd.f32 0.0, %v916
      %v918 = vpop.f32.mrf.mxu0
      %v919 = vpop.f32.mrf.mxu0
      %v920 = vadd.f32 0.0, %v919
      %v921 = vpop.f32.mrf.mxu0
      %922 = vmatprep.mubr.bf16.mxu0 0
      %923 = vmatmul.mubr.bf16.gmra.mxu0 %v409
      %v924 = vpop.f32.mrf.mxu0
      %v925 = vadd.f32 0.0, %v924
      %v926 = vpop.f32.mrf.mxu0
      %v927 = vpop.f32.mrf.mxu0
      %v928 = vadd.f32 0.0, %v927
      %v929 = vpop.f32.mrf.mxu0
      %930 = vmatprep.mubr.bf16.mxu0 0
      %931 = vmatmul.mubr.bf16.gmra.mxu0 %v776
      %v932 = vpop.f32.mrf.mxu0
      %v933 = vadd.f32 0.0, %v932
      %v934 = vpop.f32.mrf.mxu0
      %v935 = vpop.f32.mrf.mxu0
      %v936 = vadd.f32 0.0, %v935
      %v937 = vpop.f32.mrf.mxu0
      %938 = vdwg.mxu0
      %v939 = vadd.f32 %v627, %v813
      %v940 = vadd.f32 %v630, %v816
      %v941 = vadd.f32 %v635, %v821
      %v942 = vadd.f32 %v638, %v824
      %v943 = vadd.f32 %v643, %v829
      %v944 = vadd.f32 %v646, %v832
      %v945 = vadd.f32 %v651, %v837
      %v946 = vadd.f32 %v654, %v840
      %v947 = vadd.f32 %v659, %v845
      %v948 = vadd.f32 %v662, %v848
      %v949 = vadd.f32 %v667, %v853
      %v950 = vadd.f32 %v670, %v856
      %v951 = vadd.f32 %v675, %v861
      %v952 = vadd.f32 %v678, %v864
      %v953 = vadd.f32 %v683, %v869
      %v954 = vadd.f32 %v686, %v872
      %v955 = vadd.f32 %v691, %v877
      %v956 = vadd.f32 %v694, %v880
      %v957 = vadd.f32 %v699, %v885
      %v958 = vadd.f32 %v702, %v888
      %v959 = vadd.f32 %v707, %v893
      %v960 = vadd.f32 %v710, %v896
      %v961 = vadd.f32 %v715, %v901
      %v962 = vadd.f32 %v718, %v904
      %v963 = vadd.f32 %v723, %v909
      %v964 = vadd.f32 %v726, %v912
      %v965 = vadd.f32 %v731, %v917
      %v966 = vadd.f32 %v734, %v920
      %v967 = vadd.f32 %v739, %v925
      %v968 = vadd.f32 %v742, %v928
      %v969 = vadd.f32 %v747, %v933
      %v970 = vadd.f32 %v750, %v936
      %s971 = scalar_lea.vmem %s210, 16
      %v972 = vld [vmem:[%s971] sm:$0xf]
      %v973 = vld [vmem:[%s971 + $0x4] sm:$0xf]
      %v974 = vld [vmem:[%s971 + $0x8] sm:$0xf]
      %v975 = vld [vmem:[%s971 + $0xc] sm:$0xf]
      %v976 = vpack.c.b16 %v332, %v332
      %vm977 = vsmask.f32 7424
      %v978 = vshrl.u32 %v576, 16
      %v980 = vshll.u32 %v576, 16
      %v982 = vrot.slane %v980, 1
      %v983 = vor.u32 %v978, %v982
      %v984 = vshll.u32 %v334, 16
      %v986 = vrot.slane %v984, 1
      %v987 = vsel %vm977, %v983, %v986
      %v988 = vshrl.u32 %v334, 16
      %v990 = vor.u32 %v988, %v986
      %v991 = vshll.u32 %v335, 16
      %v993 = vrot.slane %v991, 1
      %v994 = vsel %vm977, %v990, %v993
      %v995 = vshrl.u32 %v335, 16
      %v997 = vor.u32 %v995, %v993
      %v998 = vshll.u32 %v336, 16
      %v1000 = vrot.slane %v998, 1
      %v1001 = vsel %vm977, %v997, %v1000
      %v1002 = vshrl.u32 %v336, 16
      %v1004 = vor.u32 %v1002, %v1000
      %v1005 = vshll.u32 %v337, 16
      %v1007 = vrot.slane %v1005, 1
      %v1008 = vsel %vm977, %v1004, %v1007
      %v1009 = vshrl.u32 %v337, 16
      %v1011 = vor.u32 %v1009, %v1007
      %v1012 = vshll.u32 %v338, 16
      %v1014 = vrot.slane %v1012, 1
      %v1015 = vsel %vm977, %v1011, %v1014
      %v1016 = vshrl.u32 %v338, 16
      %v1018 = vor.u32 %v1016, %v1014
      %v1019 = vshll.u32 %v339, 16
      %v1021 = vrot.slane %v1019, 1
      %v1022 = vsel %vm977, %v1018, %v1021
      %v1023 = vshrl.u32 %v339, 16
      %v1025 = vor.u32 %v1023, %v1021
      %v1026 = vshll.u32 %v340, 16
      %v1028 = vrot.slane %v1026, 1
      %v1029 = vsel %vm977, %v1025, %v1028
      %v1030 = vshrl.u32 %v340, 16
      %v1032 = vor.u32 %v1030, %v1028
      %v1033 = vshll.u32 %v341, 16
      %v1035 = vrot.slane %v1033, 1
      %v1036 = vsel %vm977, %v1032, %v1035
      %v1037 = vshrl.u32 %v341, 16
      %v1039 = vor.u32 %v1037, %v1035
      %v1040 = vshll.u32 %v342, 16
      %v1042 = vrot.slane %v1040, 1
      %v1043 = vsel %vm977, %v1039, %v1042
      %v1044 = vshrl.u32 %v342, 16
      %v1046 = vor.u32 %v1044, %v1042
      %v1047 = vshll.u32 %v343, 16
      %v1049 = vrot.slane %v1047, 1
      %v1050 = vsel %vm977, %v1046, %v1049
      %v1051 = vshrl.u32 %v343, 16
      %v1053 = vor.u32 %v1051, %v1049
      %v1054 = vshll.u32 %v344, 16
      %v1056 = vrot.slane %v1054, 1
      %v1057 = vsel %vm977, %v1053, %v1056
      %v1058 = vshrl.u32 %v344, 16
      %v1060 = vor.u32 %v1058, %v1056
      %v1061 = vshll.u32 %v345, 16
      %v1063 = vrot.slane %v1061, 1
      %v1064 = vsel %vm977, %v1060, %v1063
      %v1065 = vshrl.u32 %v345, 16
      %v1067 = vor.u32 %v1065, %v1063
      %v1068 = vshll.u32 %v346, 16
      %v1070 = vrot.slane %v1068, 1
      %v1071 = vsel %vm977, %v1067, %v1070
      %v1072 = vshrl.u32 %v346, 16
      %v1074 = vor.u32 %v1072, %v1070
      %v1075 = vshll.u32 %v347, 16
      %v1077 = vrot.slane %v1075, 1
      %v1078 = vsel %vm977, %v1074, %v1077
      %v1079 = vshrl.u32 %v347, 16
      %v1081 = vor.u32 %v1079, %v1077
      %v1082 = vshll.u32 %v348, 16
      %v1084 = vrot.slane %v1082, 1
      %v1085 = vsel %vm977, %v1081, %v1084
      %v1086 = vshrl.u32 %v348, 16
      %v1088 = vor.u32 %v1086, %v1084
      %v1090 = vshll.u32 %v976, 16
      %v1092 = vrot.slane %v1090, 1
      %v1093 = vsel %vm977, %v1088, %v1092
      %v1098 = vunpack.c.l.b16 %v972
      %v1099 = vunpack.c.l.b16 %v973
      %v1100 = vunpack.c.l.b16 %v974
      %v1101 = vunpack.c.l.b16 %v975
      %v1102 = vpack.c.b16 %v1099, %v1098
      %v1103 = vpack.c.b16 %v1101, %v1100
      %v1107 = vsel %vm362, %v987, 0
      %v1110 = vsel %vm362, %v994, 0
      %v1113 = vsel %vm362, %v1001, 0
      %v1116 = vsel %vm362, %v1008, 0
      %v1119 = vsel %vm362, %v1015, 0
      %v1122 = vsel %vm362, %v1022, 0
      %v1125 = vsel %vm362, %v1029, 0
      %v1128 = vsel %vm362, %v1036, 0
      %v1131 = vsel %vm362, %v1043, 0
      %v1134 = vsel %vm362, %v1050, 0
      %v1137 = vsel %vm362, %v1057, 0
      %v1140 = vsel %vm362, %v1064, 0
      %v1143 = vsel %vm362, %v1071, 0
      %v1146 = vsel %vm362, %v1078, 0
      %v1149 = vsel %vm362, %v1085, 0
      %v1152 = vsel %vm362, %v1093, 0
      %1154 = vmatprep.subr.bf16.mxu0 0
      %1155 = vmatpush1.bf16.msra.mxu0 0
      %1156 = vmatprep.subr.bf16.mxu0 0
      %1157 = vmatpush1.bf16.msra.mxu0 0
      %1158 = vmatprep.subr.bf16.mxu0 0
      %1159 = vmatpush1.bf16.msra.mxu0 0
      %1160 = vmatprep.subr.bf16.mxu0 0
      %1161 = vmatpush1.bf16.msra.mxu0 0
      %1162 = vmatprep.subr.bf16.mxu0 0
      %1163 = vmatpush1.bf16.msra.mxu0 0
      %1164 = vmatprep.subr.bf16.mxu0 0
      %1165 = vmatpush1.bf16.msra.mxu0 0
      %1166 = vmatprep.subr.bf16.mxu0 0
      %1167 = vmatpush1.bf16.msra.mxu0 %v1103
      %1168 = vmatprep.subr.bf16.mxu0 0
      %1169 = vmatpush1.bf16.msra.mxu0 %v1102
      %1170 = vmatprep.subr.bf16.mxu0 0
      %1171 = vmatpush2.bf16.msra.mxu0 0
      %1172 = vmatprep.subr.bf16.mxu0 0
      %1173 = vmatpush2.bf16.msra.mxu0 0
      %1174 = vmatprep.subr.bf16.mxu0 0
      %1175 = vmatpush2.bf16.msra.mxu0 0
      %1176 = vmatprep.subr.bf16.mxu0 0
      %1177 = vmatpush2.bf16.msra.mxu0 0
      %1178 = vmatprep.subr.bf16.mxu0 0
      %1179 = vmatpush2.bf16.msra.mxu0 0
      %1180 = vmatprep.subr.bf16.mxu0 0
      %1181 = vmatpush2.bf16.msra.mxu0 0
      %1182 = vmatprep.subr.bf16.mxu0 0
      %1183 = vmatpush2.bf16.msra.mxu0 0
      %1184 = vmatprep.subr.bf16.mxu0 0
      %1185 = vmatpush2.bf16.msra.mxu0 0
      %1186 = vmatprep.mubr.bf16.mxu0 0
      %1187 = vmatmul.mubr.bf16.gmra.mxu0 %v1107
      %v1188 = vpop.f32.mrf.mxu0
      %v1189 = vadd.f32 0.0, %v1188
      %v1190 = vpop.f32.mrf.mxu0
      %v1191 = vpop.f32.mrf.mxu0
      %v1192 = vadd.f32 0.0, %v1191
      %v1193 = vpop.f32.mrf.mxu0
      %1194 = vmatprep.mubr.bf16.mxu0 0
      %1195 = vmatmul.mubr.bf16.gmra.mxu0 %v1110
      %v1196 = vpop.f32.mrf.mxu0
      %v1197 = vadd.f32 0.0, %v1196
      %v1198 = vpop.f32.mrf.mxu0
      %v1199 = vpop.f32.mrf.mxu0
      %v1200 = vadd.f32 0.0, %v1199
      %v1201 = vpop.f32.mrf.mxu0
      %1202 = vmatprep.mubr.bf16.mxu0 0
      %1203 = vmatmul.mubr.bf16.gmra.mxu0 %v1113
      %v1204 = vpop.f32.mrf.mxu0
      %v1205 = vadd.f32 0.0, %v1204
      %v1206 = vpop.f32.mrf.mxu0
      %v1207 = vpop.f32.mrf.mxu0
      %v1208 = vadd.f32 0.0, %v1207
      %v1209 = vpop.f32.mrf.mxu0
      %1210 = vmatprep.mubr.bf16.mxu0 0
      %1211 = vmatmul.mubr.bf16.gmra.mxu0 %v1116
      %v1212 = vpop.f32.mrf.mxu0
      %v1213 = vadd.f32 0.0, %v1212
      %v1214 = vpop.f32.mrf.mxu0
      %v1215 = vpop.f32.mrf.mxu0
      %v1216 = vadd.f32 0.0, %v1215
      %v1217 = vpop.f32.mrf.mxu0
      %1218 = vmatprep.mubr.bf16.mxu0 0
      %1219 = vmatmul.mubr.bf16.gmra.mxu0 %v1119
      %v1220 = vpop.f32.mrf.mxu0
      %v1221 = vadd.f32 0.0, %v1220
      %v1222 = vpop.f32.mrf.mxu0
      %v1223 = vpop.f32.mrf.mxu0
      %v1224 = vadd.f32 0.0, %v1223
      %v1225 = vpop.f32.mrf.mxu0
      %1226 = vmatprep.mubr.bf16.mxu0 0
      %1227 = vmatmul.mubr.bf16.gmra.mxu0 %v1122
      %v1228 = vpop.f32.mrf.mxu0
      %v1229 = vadd.f32 0.0, %v1228
      %v1230 = vpop.f32.mrf.mxu0
      %v1231 = vpop.f32.mrf.mxu0
      %v1232 = vadd.f32 0.0, %v1231
      %v1233 = vpop.f32.mrf.mxu0
      %1234 = vmatprep.mubr.bf16.mxu0 0
      %1235 = vmatmul.mubr.bf16.gmra.mxu0 %v1125
      %v1236 = vpop.f32.mrf.mxu0
      %v1237 = vadd.f32 0.0, %v1236
      %v1238 = vpop.f32.mrf.mxu0
      %v1239 = vpop.f32.mrf.mxu0
      %v1240 = vadd.f32 0.0, %v1239
      %v1241 = vpop.f32.mrf.mxu0
      %1242 = vmatprep.mubr.bf16.mxu0 0
      %1243 = vmatmul.mubr.bf16.gmra.mxu0 %v1128
      %v1244 = vpop.f32.mrf.mxu0
      %v1245 = vadd.f32 0.0, %v1244
      %v1246 = vpop.f32.mrf.mxu0
      %v1247 = vpop.f32.mrf.mxu0
      %v1248 = vadd.f32 0.0, %v1247
      %v1249 = vpop.f32.mrf.mxu0
      %1250 = vmatprep.mubr.bf16.mxu0 0
      %1251 = vmatmul.mubr.bf16.gmra.mxu0 %v1131
      %v1252 = vpop.f32.mrf.mxu0
      %v1253 = vadd.f32 0.0, %v1252
      %v1254 = vpop.f32.mrf.mxu0
      %v1255 = vpop.f32.mrf.mxu0
      %v1256 = vadd.f32 0.0, %v1255
      %v1257 = vpop.f32.mrf.mxu0
      %1258 = vmatprep.mubr.bf16.mxu0 0
      %1259 = vmatmul.mubr.bf16.gmra.mxu0 %v1134
      %v1260 = vpop.f32.mrf.mxu0
      %v1261 = vadd.f32 0.0, %v1260
      %v1262 = vpop.f32.mrf.mxu0
      %v1263 = vpop.f32.mrf.mxu0
      %v1264 = vadd.f32 0.0, %v1263
      %v1265 = vpop.f32.mrf.mxu0
      %1266 = vmatprep.mubr.bf16.mxu0 0
      %1267 = vmatmul.mubr.bf16.gmra.mxu0 %v1137
      %v1268 = vpop.f32.mrf.mxu0
      %v1269 = vadd.f32 0.0, %v1268
      %v1270 = vpop.f32.mrf.mxu0
      %v1271 = vpop.f32.mrf.mxu0
      %v1272 = vadd.f32 0.0, %v1271
      %v1273 = vpop.f32.mrf.mxu0
      %1274 = vmatprep.mubr.bf16.mxu0 0
      %1275 = vmatmul.mubr.bf16.gmra.mxu0 %v1140
      %v1276 = vpop.f32.mrf.mxu0
      %v1277 = vadd.f32 0.0, %v1276
      %v1278 = vpop.f32.mrf.mxu0
      %v1279 = vpop.f32.mrf.mxu0
      %v1280 = vadd.f32 0.0, %v1279
      %v1281 = vpop.f32.mrf.mxu0
      %1282 = vmatprep.mubr.bf16.mxu0 0
      %1283 = vmatmul.mubr.bf16.gmra.mxu0 %v1143
      %v1284 = vpop.f32.mrf.mxu0
      %v1285 = vadd.f32 0.0, %v1284
      %v1286 = vpop.f32.mrf.mxu0
      %v1287 = vpop.f32.mrf.mxu0
      %v1288 = vadd.f32 0.0, %v1287
      %v1289 = vpop.f32.mrf.mxu0
      %1290 = vmatprep.mubr.bf16.mxu0 0
      %1291 = vmatmul.mubr.bf16.gmra.mxu0 %v1146
      %v1292 = vpop.f32.mrf.mxu0
      %v1293 = vadd.f32 0.0, %v1292
      %v1294 = vpop.f32.mrf.mxu0
      %v1295 = vpop.f32.mrf.mxu0
      %v1296 = vadd.f32 0.0, %v1295
      %v1297 = vpop.f32.mrf.mxu0
      %1298 = vmatprep.mubr.bf16.mxu0 0
      %1299 = vmatmul.mubr.bf16.gmra.mxu0 %v1149
      %v1300 = vpop.f32.mrf.mxu0
      %v1301 = vadd.f32 0.0, %v1300
      %v1302 = vpop.f32.mrf.mxu0
      %v1303 = vpop.f32.mrf.mxu0
      %v1304 = vadd.f32 0.0, %v1303
      %v1305 = vpop.f32.mrf.mxu0
      %1306 = vmatprep.mubr.bf16.mxu0 0
      %1307 = vmatmul.mubr.bf16.gmra.mxu0 %v1152
      %v1308 = vpop.f32.mrf.mxu0
      %v1309 = vadd.f32 0.0, %v1308
      %v1310 = vpop.f32.mrf.mxu0
      %v1311 = vpop.f32.mrf.mxu0
      %v1312 = vadd.f32 0.0, %v1311
      %v1313 = vpop.f32.mrf.mxu0
      %1314 = vdwg.mxu0
      %v1315 = vadd.f32 %v939, %v1189
      %v1316 = vadd.f32 %v940, %v1192
      %v1317 = vadd.f32 %v941, %v1197
      %v1318 = vadd.f32 %v942, %v1200
      %v1319 = vadd.f32 %v943, %v1205
      %v1320 = vadd.f32 %v944, %v1208
      %v1321 = vadd.f32 %v945, %v1213
      %v1322 = vadd.f32 %v946, %v1216
      %v1323 = vadd.f32 %v947, %v1221
      %v1324 = vadd.f32 %v948, %v1224
      %v1325 = vadd.f32 %v949, %v1229
      %v1326 = vadd.f32 %v950, %v1232
      %v1327 = vadd.f32 %v951, %v1237
      %v1328 = vadd.f32 %v952, %v1240
      %v1329 = vadd.f32 %v953, %v1245
      %v1330 = vadd.f32 %v954, %v1248
      %v1331 = vadd.f32 %v955, %v1253
      %v1332 = vadd.f32 %v956, %v1256
      %v1333 = vadd.f32 %v957, %v1261
      %v1334 = vadd.f32 %v958, %v1264
      %v1335 = vadd.f32 %v959, %v1269
      %v1336 = vadd.f32 %v960, %v1272
      %v1337 = vadd.f32 %v961, %v1277
      %v1338 = vadd.f32 %v962, %v1280
      %v1339 = vadd.f32 %v963, %v1285
      %v1340 = vadd.f32 %v964, %v1288
      %v1341 = vadd.f32 %v965, %v1293
      %v1342 = vadd.f32 %v966, %v1296
      %v1343 = vadd.f32 %v967, %v1301
      %v1344 = vadd.f32 %v968, %v1304
      %v1345 = vadd.f32 %v969, %v1309
      %v1346 = vadd.f32 %v970, %v1312
      %s1347 = scalar_lea.vmem %s210, 64
      %v1348 = vld [vmem:[%s1347] sm:$0xf]
      %v1349 = vld [vmem:[%s1347 + $0x4] sm:$0xf]
      %v1350 = vld [vmem:[%s1347 + $0x8] sm:$0xf]
      %v1351 = vld [vmem:[%s1347 + $0xc] sm:$0xf]
      %v1352 = vpack.c.b16 %v760, %v760
      %v1353 = vshll.u32 %v349, 16
      %v1355 = vrot.slane %v1353, 1
      %v1356 = vsel %vm977, %v1088, %v1355
      %v1357 = vshrl.u32 %v349, 16
      %v1359 = vor.u32 %v1357, %v1355
      %v1361 = vshll.u32 %v1352, 16
      %v1363 = vrot.slane %v1361, 1
      %v1364 = vsel %vm977, %v1359, %v1363
      %v1369 = vunpack.c.l.b16 %v1348
      %v1370 = vunpack.c.l.b16 %v1349
      %v1371 = vunpack.c.l.b16 %v1350
      %v1372 = vunpack.c.l.b16 %v1351
      %v1373 = vpack.c.b16 %v1370, %v1369
      %v1374 = vpack.c.b16 %v1372, %v1371
      %v1378 = vsel %vm362, %v1356, 0
      %v1381 = vsel %vm362, %v1364, 0
      %1383 = vmatprep.subr.bf16.mxu0 0
      %1384 = vmatpush1.bf16.msra.mxu0 0
      %1385 = vmatprep.subr.bf16.mxu0 0
      %1386 = vmatpush1.bf16.msra.mxu0 0
      %1387 = vmatprep.subr.bf16.mxu0 0
      %1388 = vmatpush1.bf16.msra.mxu0 0
      %1389 = vmatprep.subr.bf16.mxu0 0
      %1390 = vmatpush1.bf16.msra.mxu0 0
      %1391 = vmatprep.subr.bf16.mxu0 0
      %1392 = vmatpush1.bf16.msra.mxu0 0
      %1393 = vmatprep.subr.bf16.mxu0 0
      %1394 = vmatpush1.bf16.msra.mxu0 0
      %1395 = vmatprep.subr.bf16.mxu0 0
      %1396 = vmatpush1.bf16.msra.mxu0 %v1374
      %1397 = vmatprep.subr.bf16.mxu0 0
      %1398 = vmatpush1.bf16.msra.mxu0 %v1373
      %1399 = vmatprep.subr.bf16.mxu0 0
      %1400 = vmatpush2.bf16.msra.mxu0 0
      %1401 = vmatprep.subr.bf16.mxu0 0
      %1402 = vmatpush2.bf16.msra.mxu0 0
      %1403 = vmatprep.subr.bf16.mxu0 0
      %1404 = vmatpush2.bf16.msra.mxu0 0
      %1405 = vmatprep.subr.bf16.mxu0 0
      %1406 = vmatpush2.bf16.msra.mxu0 0
      %1407 = vmatprep.subr.bf16.mxu0 0
      %1408 = vmatpush2.bf16.msra.mxu0 0
      %1409 = vmatprep.subr.bf16.mxu0 0
      %1410 = vmatpush2.bf16.msra.mxu0 0
      %1411 = vmatprep.subr.bf16.mxu0 0
      %1412 = vmatpush2.bf16.msra.mxu0 0
      %1413 = vmatprep.subr.bf16.mxu0 0
      %1414 = vmatpush2.bf16.msra.mxu0 0
      %1415 = vmatprep.mubr.bf16.mxu0 0
      %1416 = vmatmul.mubr.bf16.gmra.mxu0 %v1110
      %v1417 = vpop.f32.mrf.mxu0
      %v1418 = vadd.f32 0.0, %v1417
      %v1419 = vpop.f32.mrf.mxu0
      %v1420 = vpop.f32.mrf.mxu0
      %v1421 = vadd.f32 0.0, %v1420
      %v1422 = vpop.f32.mrf.mxu0
      %1423 = vmatprep.mubr.bf16.mxu0 0
      %1424 = vmatmul.mubr.bf16.gmra.mxu0 %v1113
      %v1425 = vpop.f32.mrf.mxu0
      %v1426 = vadd.f32 0.0, %v1425
      %v1427 = vpop.f32.mrf.mxu0
      %v1428 = vpop.f32.mrf.mxu0
      %v1429 = vadd.f32 0.0, %v1428
      %v1430 = vpop.f32.mrf.mxu0
      %1431 = vmatprep.mubr.bf16.mxu0 0
      %1432 = vmatmul.mubr.bf16.gmra.mxu0 %v1116
      %v1433 = vpop.f32.mrf.mxu0
      %v1434 = vadd.f32 0.0, %v1433
      %v1435 = vpop.f32.mrf.mxu0
      %v1436 = vpop.f32.mrf.mxu0
      %v1437 = vadd.f32 0.0, %v1436
      %v1438 = vpop.f32.mrf.mxu0
      %1439 = vmatprep.mubr.bf16.mxu0 0
      %1440 = vmatmul.mubr.bf16.gmra.mxu0 %v1119
      %v1441 = vpop.f32.mrf.mxu0
      %v1442 = vadd.f32 0.0, %v1441
      %v1443 = vpop.f32.mrf.mxu0
      %v1444 = vpop.f32.mrf.mxu0
      %v1445 = vadd.f32 0.0, %v1444
      %v1446 = vpop.f32.mrf.mxu0
      %1447 = vmatprep.mubr.bf16.mxu0 0
      %1448 = vmatmul.mubr.bf16.gmra.mxu0 %v1122
      %v1449 = vpop.f32.mrf.mxu0
      %v1450 = vadd.f32 0.0, %v1449
      %v1451 = vpop.f32.mrf.mxu0
      %v1452 = vpop.f32.mrf.mxu0
      %v1453 = vadd.f32 0.0, %v1452
      %v1454 = vpop.f32.mrf.mxu0
      %1455 = vmatprep.mubr.bf16.mxu0 0
      %1456 = vmatmul.mubr.bf16.gmra.mxu0 %v1125
      %v1457 = vpop.f32.mrf.mxu0
      %v1458 = vadd.f32 0.0, %v1457
      %v1459 = vpop.f32.mrf.mxu0
      %v1460 = vpop.f32.mrf.mxu0
      %v1461 = vadd.f32 0.0, %v1460
      %v1462 = vpop.f32.mrf.mxu0
      %1463 = vmatprep.mubr.bf16.mxu0 0
      %1464 = vmatmul.mubr.bf16.gmra.mxu0 %v1128
      %v1465 = vpop.f32.mrf.mxu0
      %v1466 = vadd.f32 0.0, %v1465
      %v1467 = vpop.f32.mrf.mxu0
      %v1468 = vpop.f32.mrf.mxu0
      %v1469 = vadd.f32 0.0, %v1468
      %v1470 = vpop.f32.mrf.mxu0
      %1471 = vmatprep.mubr.bf16.mxu0 0
      %1472 = vmatmul.mubr.bf16.gmra.mxu0 %v1131
      %v1473 = vpop.f32.mrf.mxu0
      %v1474 = vadd.f32 0.0, %v1473
      %v1475 = vpop.f32.mrf.mxu0
      %v1476 = vpop.f32.mrf.mxu0
      %v1477 = vadd.f32 0.0, %v1476
      %v1478 = vpop.f32.mrf.mxu0
      %1479 = vmatprep.mubr.bf16.mxu0 0
      %1480 = vmatmul.mubr.bf16.gmra.mxu0 %v1134
      %v1481 = vpop.f32.mrf.mxu0
      %v1482 = vadd.f32 0.0, %v1481
      %v1483 = vpop.f32.mrf.mxu0
      %v1484 = vpop.f32.mrf.mxu0
      %v1485 = vadd.f32 0.0, %v1484
      %v1486 = vpop.f32.mrf.mxu0
      %1487 = vmatprep.mubr.bf16.mxu0 0
      %1488 = vmatmul.mubr.bf16.gmra.mxu0 %v1137
      %v1489 = vpop.f32.mrf.mxu0
      %v1490 = vadd.f32 0.0, %v1489
      %v1491 = vpop.f32.mrf.mxu0
      %v1492 = vpop.f32.mrf.mxu0
      %v1493 = vadd.f32 0.0, %v1492
      %v1494 = vpop.f32.mrf.mxu0
      %1495 = vmatprep.mubr.bf16.mxu0 0
      %1496 = vmatmul.mubr.bf16.gmra.mxu0 %v1140
      %v1497 = vpop.f32.mrf.mxu0
      %v1498 = vadd.f32 0.0, %v1497
      %v1499 = vpop.f32.mrf.mxu0
      %v1500 = vpop.f32.mrf.mxu0
      %v1501 = vadd.f32 0.0, %v1500
      %v1502 = vpop.f32.mrf.mxu0
      %1503 = vmatprep.mubr.bf16.mxu0 0
      %1504 = vmatmul.mubr.bf16.gmra.mxu0 %v1143
      %v1505 = vpop.f32.mrf.mxu0
      %v1506 = vadd.f32 0.0, %v1505
      %v1507 = vpop.f32.mrf.mxu0
      %v1508 = vpop.f32.mrf.mxu0
      %v1509 = vadd.f32 0.0, %v1508
      %v1510 = vpop.f32.mrf.mxu0
      %1511 = vmatprep.mubr.bf16.mxu0 0
      %1512 = vmatmul.mubr.bf16.gmra.mxu0 %v1146
      %v1513 = vpop.f32.mrf.mxu0
      %v1514 = vadd.f32 0.0, %v1513
      %v1515 = vpop.f32.mrf.mxu0
      %v1516 = vpop.f32.mrf.mxu0
      %v1517 = vadd.f32 0.0, %v1516
      %v1518 = vpop.f32.mrf.mxu0
      %1519 = vmatprep.mubr.bf16.mxu0 0
      %1520 = vmatmul.mubr.bf16.gmra.mxu0 %v1149
      %v1521 = vpop.f32.mrf.mxu0
      %v1522 = vadd.f32 0.0, %v1521
      %v1523 = vpop.f32.mrf.mxu0
      %v1524 = vpop.f32.mrf.mxu0
      %v1525 = vadd.f32 0.0, %v1524
      %v1526 = vpop.f32.mrf.mxu0
      %1527 = vmatprep.mubr.bf16.mxu0 0
      %1528 = vmatmul.mubr.bf16.gmra.mxu0 %v1378
      %v1529 = vpop.f32.mrf.mxu0
      %v1530 = vadd.f32 0.0, %v1529
      %v1531 = vpop.f32.mrf.mxu0
      %v1532 = vpop.f32.mrf.mxu0
      %v1533 = vadd.f32 0.0, %v1532
      %v1534 = vpop.f32.mrf.mxu0
      %1535 = vmatprep.mubr.bf16.mxu0 0
      %1536 = vmatmul.mubr.bf16.gmra.mxu0 %v1381
      %v1537 = vpop.f32.mrf.mxu0
      %v1538 = vadd.f32 0.0, %v1537
      %v1539 = vpop.f32.mrf.mxu0
      %v1540 = vpop.f32.mrf.mxu0
      %v1541 = vadd.f32 0.0, %v1540
      %v1542 = vpop.f32.mrf.mxu0
      %1543 = vdwg.mxu0
      %v1544 = vadd.f32 %v1315, %v1418
      %v1545 = vadd.f32 %v1316, %v1421
      %v1546 = vadd.f32 %v1317, %v1426
      %v1547 = vadd.f32 %v1318, %v1429
      %v1548 = vadd.f32 %v1319, %v1434
      %v1549 = vadd.f32 %v1320, %v1437
      %v1550 = vadd.f32 %v1321, %v1442
      %v1551 = vadd.f32 %v1322, %v1445
      %v1552 = vadd.f32 %v1323, %v1450
      %v1553 = vadd.f32 %v1324, %v1453
      %v1554 = vadd.f32 %v1325, %v1458
      %v1555 = vadd.f32 %v1326, %v1461
      %v1556 = vadd.f32 %v1327, %v1466
      %v1557 = vadd.f32 %v1328, %v1469
      %v1558 = vadd.f32 %v1329, %v1474
      %v1559 = vadd.f32 %v1330, %v1477
      %v1560 = vadd.f32 %v1331, %v1482
      %v1561 = vadd.f32 %v1332, %v1485
      %v1562 = vadd.f32 %v1333, %v1490
      %v1563 = vadd.f32 %v1334, %v1493
      %v1564 = vadd.f32 %v1335, %v1498
      %v1565 = vadd.f32 %v1336, %v1501
      %v1566 = vadd.f32 %v1337, %v1506
      %v1567 = vadd.f32 %v1338, %v1509
      %v1568 = vadd.f32 %v1339, %v1514
      %v1569 = vadd.f32 %v1340, %v1517
      %v1570 = vadd.f32 %v1341, %v1522
      %v1571 = vadd.f32 %v1342, %v1525
      %v1572 = vadd.f32 %v1343, %v1530
      %v1573 = vadd.f32 %v1344, %v1533
      %v1574 = vadd.f32 %v1345, %v1538
      %v1575 = vadd.f32 %v1346, %v1541
      %s1576 = scalar_lea.vmem %s210, 112
      %v1577 = vld [vmem:[%s1576] sm:$0xf]
      %v1578 = vld [vmem:[%s1576 + $0x4] sm:$0xf]
      %v1579 = vld [vmem:[%s1576 + $0x8] sm:$0xf]
      %v1580 = vld [vmem:[%s1576 + $0xc] sm:$0xf]
      %v1582 = vunpack.c.l.b16 %v260
      %v1583 = vpack.c.b16 %v1582, %v1582
      %v1584 = vshll.u32 %v762, 16
      %v1586 = vrot.slane %v1584, 1
      %v1587 = vsel %vm977, %v1359, %v1586
      %v1588 = vshrl.u32 %v762, 16
      %v1590 = vor.u32 %v1588, %v1586
      %v1592 = vshll.u32 %v1583, 16
      %v1594 = vrot.slane %v1592, 1
      %v1595 = vsel %vm977, %v1590, %v1594
      %v1600 = vunpack.c.l.b16 %v1577
      %v1601 = vunpack.c.l.b16 %v1578
      %v1602 = vunpack.c.l.b16 %v1579
      %v1603 = vunpack.c.l.b16 %v1580
      %v1604 = vpack.c.b16 %v1601, %v1600
      %v1605 = vpack.c.b16 %v1603, %v1602
      %v1609 = vsel %vm362, %v1587, 0
      %v1612 = vsel %vm362, %v1595, 0
      %1614 = vmatprep.subr.bf16.mxu0 0
      %1615 = vmatpush1.bf16.msra.mxu0 0
      %1616 = vmatprep.subr.bf16.mxu0 0
      %1617 = vmatpush1.bf16.msra.mxu0 0
      %1618 = vmatprep.subr.bf16.mxu0 0
      %1619 = vmatpush1.bf16.msra.mxu0 0
      %1620 = vmatprep.subr.bf16.mxu0 0
      %1621 = vmatpush1.bf16.msra.mxu0 0
      %1622 = vmatprep.subr.bf16.mxu0 0
      %1623 = vmatpush1.bf16.msra.mxu0 0
      %1624 = vmatprep.subr.bf16.mxu0 0
      %1625 = vmatpush1.bf16.msra.mxu0 0
      %1626 = vmatprep.subr.bf16.mxu0 0
      %1627 = vmatpush1.bf16.msra.mxu0 %v1605
      %1628 = vmatprep.subr.bf16.mxu0 0
      %1629 = vmatpush1.bf16.msra.mxu0 %v1604
      %1630 = vmatprep.subr.bf16.mxu0 0
      %1631 = vmatpush2.bf16.msra.mxu0 0
      %1632 = vmatprep.subr.bf16.mxu0 0
      %1633 = vmatpush2.bf16.msra.mxu0 0
      %1634 = vmatprep.subr.bf16.mxu0 0
      %1635 = vmatpush2.bf16.msra.mxu0 0
      %1636 = vmatprep.subr.bf16.mxu0 0
      %1637 = vmatpush2.bf16.msra.mxu0 0
      %1638 = vmatprep.subr.bf16.mxu0 0
      %1639 = vmatpush2.bf16.msra.mxu0 0
      %1640 = vmatprep.subr.bf16.mxu0 0
      %1641 = vmatpush2.bf16.msra.mxu0 0
      %1642 = vmatprep.subr.bf16.mxu0 0
      %1643 = vmatpush2.bf16.msra.mxu0 0
      %1644 = vmatprep.subr.bf16.mxu0 0
      %1645 = vmatpush2.bf16.msra.mxu0 0
      %1646 = vmatprep.mubr.bf16.mxu0 0
      %1647 = vmatmul.mubr.bf16.gmra.mxu0 %v1113
      %v1648 = vpop.f32.mrf.mxu0
      %v1649 = vadd.f32 0.0, %v1648
      %v1650 = vpop.f32.mrf.mxu0
      %v1651 = vpop.f32.mrf.mxu0
      %v1652 = vadd.f32 0.0, %v1651
      %v1653 = vpop.f32.mrf.mxu0
      %1654 = vmatprep.mubr.bf16.mxu0 0
      %1655 = vmatmul.mubr.bf16.gmra.mxu0 %v1116
      %v1656 = vpop.f32.mrf.mxu0
      %v1657 = vadd.f32 0.0, %v1656
      %v1658 = vpop.f32.mrf.mxu0
      %v1659 = vpop.f32.mrf.mxu0
      %v1660 = vadd.f32 0.0, %v1659
      %v1661 = vpop.f32.mrf.mxu0
      %1662 = vmatprep.mubr.bf16.mxu0 0
      %1663 = vmatmul.mubr.bf16.gmra.mxu0 %v1119
      %v1664 = vpop.f32.mrf.mxu0
      %v1665 = vadd.f32 0.0, %v1664
      %v1666 = vpop.f32.mrf.mxu0
      %v1667 = vpop.f32.mrf.mxu0
      %v1668 = vadd.f32 0.0, %v1667
      %v1669 = vpop.f32.mrf.mxu0
      %1670 = vmatprep.mubr.bf16.mxu0 0
      %1671 = vmatmul.mubr.bf16.gmra.mxu0 %v1122
      %v1672 = vpop.f32.mrf.mxu0
      %v1673 = vadd.f32 0.0, %v1672
      %v1674 = vpop.f32.mrf.mxu0
      %v1675 = vpop.f32.mrf.mxu0
      %v1676 = vadd.f32 0.0, %v1675
      %v1677 = vpop.f32.mrf.mxu0
      %1678 = vmatprep.mubr.bf16.mxu0 0
      %1679 = vmatmul.mubr.bf16.gmra.mxu0 %v1125
      %v1680 = vpop.f32.mrf.mxu0
      %v1681 = vadd.f32 0.0, %v1680
      %v1682 = vpop.f32.mrf.mxu0
      %v1683 = vpop.f32.mrf.mxu0
      %v1684 = vadd.f32 0.0, %v1683
      %v1685 = vpop.f32.mrf.mxu0
      %1686 = vmatprep.mubr.bf16.mxu0 0
      %1687 = vmatmul.mubr.bf16.gmra.mxu0 %v1128
      %v1688 = vpop.f32.mrf.mxu0
      %v1689 = vadd.f32 0.0, %v1688
      %v1690 = vpop.f32.mrf.mxu0
      %v1691 = vpop.f32.mrf.mxu0
      %v1692 = vadd.f32 0.0, %v1691
      %v1693 = vpop.f32.mrf.mxu0
      %1694 = vmatprep.mubr.bf16.mxu0 0
      %1695 = vmatmul.mubr.bf16.gmra.mxu0 %v1131
      %v1696 = vpop.f32.mrf.mxu0
      %v1697 = vadd.f32 0.0, %v1696
      %v1698 = vpop.f32.mrf.mxu0
      %v1699 = vpop.f32.mrf.mxu0
      %v1700 = vadd.f32 0.0, %v1699
      %v1701 = vpop.f32.mrf.mxu0
      %1702 = vmatprep.mubr.bf16.mxu0 0
      %1703 = vmatmul.mubr.bf16.gmra.mxu0 %v1134
      %v1704 = vpop.f32.mrf.mxu0
      %v1705 = vadd.f32 0.0, %v1704
      %v1706 = vpop.f32.mrf.mxu0
      %v1707 = vpop.f32.mrf.mxu0
      %v1708 = vadd.f32 0.0, %v1707
      %v1709 = vpop.f32.mrf.mxu0
      %1710 = vmatprep.mubr.bf16.mxu0 0
      %1711 = vmatmul.mubr.bf16.gmra.mxu0 %v1137
      %v1712 = vpop.f32.mrf.mxu0
      %v1713 = vadd.f32 0.0, %v1712
      %v1714 = vpop.f32.mrf.mxu0
      %v1715 = vpop.f32.mrf.mxu0
      %v1716 = vadd.f32 0.0, %v1715
      %v1717 = vpop.f32.mrf.mxu0
      %1718 = vmatprep.mubr.bf16.mxu0 0
      %1719 = vmatmul.mubr.bf16.gmra.mxu0 %v1140
      %v1720 = vpop.f32.mrf.mxu0
      %v1721 = vadd.f32 0.0, %v1720
      %v1722 = vpop.f32.mrf.mxu0
      %v1723 = vpop.f32.mrf.mxu0
      %v1724 = vadd.f32 0.0, %v1723
      %v1725 = vpop.f32.mrf.mxu0
      %1726 = vmatprep.mubr.bf16.mxu0 0
      %1727 = vmatmul.mubr.bf16.gmra.mxu0 %v1143
      %v1728 = vpop.f32.mrf.mxu0
      %v1729 = vadd.f32 0.0, %v1728
      %v1730 = vpop.f32.mrf.mxu0
      %v1731 = vpop.f32.mrf.mxu0
      %v1732 = vadd.f32 0.0, %v1731
      %v1733 = vpop.f32.mrf.mxu0
      %1734 = vmatprep.mubr.bf16.mxu0 0
      %1735 = vmatmul.mubr.bf16.gmra.mxu0 %v1146
      %v1736 = vpop.f32.mrf.mxu0
      %v1737 = vadd.f32 0.0, %v1736
      %v1738 = vpop.f32.mrf.mxu0
      %v1739 = vpop.f32.mrf.mxu0
      %v1740 = vadd.f32 0.0, %v1739
      %v1741 = vpop.f32.mrf.mxu0
      %1742 = vmatprep.mubr.bf16.mxu0 0
      %1743 = vmatmul.mubr.bf16.gmra.mxu0 %v1149
      %v1744 = vpop.f32.mrf.mxu0
      %v1745 = vadd.f32 0.0, %v1744
      %v1746 = vpop.f32.mrf.mxu0
      %v1747 = vpop.f32.mrf.mxu0
      %v1748 = vadd.f32 0.0, %v1747
      %v1749 = vpop.f32.mrf.mxu0
      %1750 = vmatprep.mubr.bf16.mxu0 0
      %1751 = vmatmul.mubr.bf16.gmra.mxu0 %v1378
      %v1752 = vpop.f32.mrf.mxu0
      %v1753 = vadd.f32 0.0, %v1752
      %v1754 = vpop.f32.mrf.mxu0
      %v1755 = vpop.f32.mrf.mxu0
      %v1756 = vadd.f32 0.0, %v1755
      %v1757 = vpop.f32.mrf.mxu0
      %1758 = vmatprep.mubr.bf16.mxu0 0
      %1759 = vmatmul.mubr.bf16.gmra.mxu0 %v1609
      %v1760 = vpop.f32.mrf.mxu0
      %v1761 = vadd.f32 0.0, %v1760
      %v1762 = vpop.f32.mrf.mxu0
      %v1763 = vpop.f32.mrf.mxu0
      %v1764 = vadd.f32 0.0, %v1763
      %v1765 = vpop.f32.mrf.mxu0
      %1766 = vmatprep.mubr.bf16.mxu0 0
      %1767 = vmatmul.mubr.bf16.gmra.mxu0 %v1612
      %v1768 = vpop.f32.mrf.mxu0
      %v1769 = vadd.f32 0.0, %v1768
      %v1770 = vpop.f32.mrf.mxu0
      %v1771 = vpop.f32.mrf.mxu0
      %v1772 = vadd.f32 0.0, %v1771
      %v1773 = vpop.f32.mrf.mxu0
      %1774 = vdwg.mxu0
      %v1775 = vadd.f32 %v1544, %v1649
      %v1776 = vadd.f32 %v1545, %v1652
      %v1777 = vadd.f32 %v1546, %v1657
      %v1778 = vadd.f32 %v1547, %v1660
      %v1779 = vadd.f32 %v1548, %v1665
      %v1780 = vadd.f32 %v1549, %v1668
      %v1781 = vadd.f32 %v1550, %v1673
      %v1782 = vadd.f32 %v1551, %v1676
      %v1783 = vadd.f32 %v1552, %v1681
      %v1784 = vadd.f32 %v1553, %v1684
      %v1785 = vadd.f32 %v1554, %v1689
      %v1786 = vadd.f32 %v1555, %v1692
      %v1787 = vadd.f32 %v1556, %v1697
      %v1788 = vadd.f32 %v1557, %v1700
      %v1789 = vadd.f32 %v1558, %v1705
      %v1790 = vadd.f32 %v1559, %v1708
      %v1791 = vadd.f32 %v1560, %v1713
      %v1792 = vadd.f32 %v1561, %v1716
      %v1793 = vadd.f32 %v1562, %v1721
      %v1794 = vadd.f32 %v1563, %v1724
      %v1795 = vadd.f32 %v1564, %v1729
      %v1796 = vadd.f32 %v1565, %v1732
      %v1797 = vadd.f32 %v1566, %v1737
      %v1798 = vadd.f32 %v1567, %v1740
      %v1799 = vadd.f32 %v1568, %v1745
      %v1800 = vadd.f32 %v1569, %v1748
      %v1801 = vadd.f32 %v1570, %v1753
      %v1802 = vadd.f32 %v1571, %v1756
      %v1803 = vadd.f32 %v1572, %v1761
      %v1804 = vadd.f32 %v1573, %v1764
      %v1805 = vadd.f32 %v1574, %v1769
      %v1806 = vadd.f32 %v1575, %v1772
      %s1807 = scalar_lea.vmem %s210, 32
      %v1808 = vld [vmem:[%s1807] sm:$0xf]
      %v1809 = vld [vmem:[%s1807 + $0x4] sm:$0xf]
      %v1810 = vld [vmem:[%s1807 + $0x8] sm:$0xf]
      %v1811 = vld [vmem:[%s1807 + $0xc] sm:$0xf]
      %vm1812 = vcmask 1046528
      %v1813 = vrot.slane %v576, 1
      %v1814 = vrot.slane %v334, 1
      %v1815 = vsel %vm1812, %v1813, %v1814
      %v1816 = vrot.slane %v335, 1
      %v1817 = vsel %vm1812, %v1814, %v1816
      %v1818 = vrot.slane %v336, 1
      %v1819 = vsel %vm1812, %v1816, %v1818
      %v1820 = vrot.slane %v337, 1
      %v1821 = vsel %vm1812, %v1818, %v1820
      %v1822 = vrot.slane %v338, 1
      %v1823 = vsel %vm1812, %v1820, %v1822
      %v1824 = vrot.slane %v339, 1
      %v1825 = vsel %vm1812, %v1822, %v1824
      %v1826 = vrot.slane %v340, 1
      %v1827 = vsel %vm1812, %v1824, %v1826
      %v1828 = vrot.slane %v341, 1
      %v1829 = vsel %vm1812, %v1826, %v1828
      %v1830 = vrot.slane %v342, 1
      %v1831 = vsel %vm1812, %v1828, %v1830
      %v1832 = vrot.slane %v343, 1
      %v1833 = vsel %vm1812, %v1830, %v1832
      %v1834 = vrot.slane %v344, 1
      %v1835 = vsel %vm1812, %v1832, %v1834
      %v1836 = vrot.slane %v345, 1
      %v1837 = vsel %vm1812, %v1834, %v1836
      %v1838 = vrot.slane %v346, 1
      %v1839 = vsel %vm1812, %v1836, %v1838
      %v1840 = vrot.slane %v347, 1
      %v1841 = vsel %vm1812, %v1838, %v1840
      %v1842 = vrot.slane %v348, 1
      %v1843 = vsel %vm1812, %v1840, %v1842
      %v1844 = vrot.slane %v976, 1
      %v1845 = vsel %vm1812, %v1842, %v1844
      %v1850 = vunpack.c.l.b16 %v1808
      %v1851 = vunpack.c.l.b16 %v1809
      %v1852 = vunpack.c.l.b16 %v1810
      %v1853 = vunpack.c.l.b16 %v1811
      %v1854 = vpack.c.b16 %v1851, %v1850
      %v1855 = vpack.c.b16 %v1853, %v1852
      %v1859 = vsel %vm362, %v1815, 0
      %v1862 = vsel %vm362, %v1817, 0
      %v1865 = vsel %vm362, %v1819, 0
      %v1868 = vsel %vm362, %v1821, 0
      %v1871 = vsel %vm362, %v1823, 0
      %v1874 = vsel %vm362, %v1825, 0
      %v1877 = vsel %vm362, %v1827, 0
      %v1880 = vsel %vm362, %v1829, 0
      %v1883 = vsel %vm362, %v1831, 0
      %v1886 = vsel %vm362, %v1833, 0
      %v1889 = vsel %vm362, %v1835, 0
      %v1892 = vsel %vm362, %v1837, 0
      %v1895 = vsel %vm362, %v1839, 0
      %v1898 = vsel %vm362, %v1841, 0
      %v1901 = vsel %vm362, %v1843, 0
      %v1904 = vsel %vm362, %v1845, 0
      %1906 = vmatprep.subr.bf16.mxu0 0
      %1907 = vmatpush1.bf16.msra.mxu0 0
      %1908 = vmatprep.subr.bf16.mxu0 0
      %1909 = vmatpush1.bf16.msra.mxu0 0
      %1910 = vmatprep.subr.bf16.mxu0 0
      %1911 = vmatpush1.bf16.msra.mxu0 0
      %1912 = vmatprep.subr.bf16.mxu0 0
      %1913 = vmatpush1.bf16.msra.mxu0 0
      %1914 = vmatprep.subr.bf16.mxu0 0
      %1915 = vmatpush1.bf16.msra.mxu0 0
      %1916 = vmatprep.subr.bf16.mxu0 0
      %1917 = vmatpush1.bf16.msra.mxu0 0
      %1918 = vmatprep.subr.bf16.mxu0 0
      %1919 = vmatpush1.bf16.msra.mxu0 %v1855
      %1920 = vmatprep.subr.bf16.mxu0 0
      %1921 = vmatpush1.bf16.msra.mxu0 %v1854
      %1922 = vmatprep.subr.bf16.mxu0 0
      %1923 = vmatpush2.bf16.msra.mxu0 0
      %1924 = vmatprep.subr.bf16.mxu0 0
      %1925 = vmatpush2.bf16.msra.mxu0 0
      %1926 = vmatprep.subr.bf16.mxu0 0
      %1927 = vmatpush2.bf16.msra.mxu0 0
      %1928 = vmatprep.subr.bf16.mxu0 0
      %1929 = vmatpush2.bf16.msra.mxu0 0
      %1930 = vmatprep.subr.bf16.mxu0 0
      %1931 = vmatpush2.bf16.msra.mxu0 0
      %1932 = vmatprep.subr.bf16.mxu0 0
      %1933 = vmatpush2.bf16.msra.mxu0 0
      %1934 = vmatprep.subr.bf16.mxu0 0
      %1935 = vmatpush2.bf16.msra.mxu0 0
      %1936 = vmatprep.subr.bf16.mxu0 0
      %1937 = vmatpush2.bf16.msra.mxu0 0
      %1938 = vmatprep.mubr.bf16.mxu0 0
      %1939 = vmatmul.mubr.bf16.gmra.mxu0 %v1859
      %v1940 = vpop.f32.mrf.mxu0
      %v1941 = vadd.f32 0.0, %v1940
      %v1942 = vpop.f32.mrf.mxu0
      %v1943 = vpop.f32.mrf.mxu0
      %v1944 = vadd.f32 0.0, %v1943
      %v1945 = vpop.f32.mrf.mxu0
      %1946 = vmatprep.mubr.bf16.mxu0 0
      %1947 = vmatmul.mubr.bf16.gmra.mxu0 %v1862
      %v1948 = vpop.f32.mrf.mxu0
      %v1949 = vadd.f32 0.0, %v1948
      %v1950 = vpop.f32.mrf.mxu0
      %v1951 = vpop.f32.mrf.mxu0
      %v1952 = vadd.f32 0.0, %v1951
      %v1953 = vpop.f32.mrf.mxu0
      %1954 = vmatprep.mubr.bf16.mxu0 0
      %1955 = vmatmul.mubr.bf16.gmra.mxu0 %v1865
      %v1956 = vpop.f32.mrf.mxu0
      %v1957 = vadd.f32 0.0, %v1956
      %v1958 = vpop.f32.mrf.mxu0
      %v1959 = vpop.f32.mrf.mxu0
      %v1960 = vadd.f32 0.0, %v1959
      %v1961 = vpop.f32.mrf.mxu0
      %1962 = vmatprep.mubr.bf16.mxu0 0
      %1963 = vmatmul.mubr.bf16.gmra.mxu0 %v1868
      %v1964 = vpop.f32.mrf.mxu0
      %v1965 = vadd.f32 0.0, %v1964
      %v1966 = vpop.f32.mrf.mxu0
      %v1967 = vpop.f32.mrf.mxu0
      %v1968 = vadd.f32 0.0, %v1967
      %v1969 = vpop.f32.mrf.mxu0
      %1970 = vmatprep.mubr.bf16.mxu0 0
      %1971 = vmatmul.mubr.bf16.gmra.mxu0 %v1871
      %v1972 = vpop.f32.mrf.mxu0
      %v1973 = vadd.f32 0.0, %v1972
      %v1974 = vpop.f32.mrf.mxu0
      %v1975 = vpop.f32.mrf.mxu0
      %v1976 = vadd.f32 0.0, %v1975
      %v1977 = vpop.f32.mrf.mxu0
      %1978 = vmatprep.mubr.bf16.mxu0 0
      %1979 = vmatmul.mubr.bf16.gmra.mxu0 %v1874
      %v1980 = vpop.f32.mrf.mxu0
      %v1981 = vadd.f32 0.0, %v1980
      %v1982 = vpop.f32.mrf.mxu0
      %v1983 = vpop.f32.mrf.mxu0
      %v1984 = vadd.f32 0.0, %v1983
      %v1985 = vpop.f32.mrf.mxu0
      %1986 = vmatprep.mubr.bf16.mxu0 0
      %1987 = vmatmul.mubr.bf16.gmra.mxu0 %v1877
      %v1988 = vpop.f32.mrf.mxu0
      %v1989 = vadd.f32 0.0, %v1988
      %v1990 = vpop.f32.mrf.mxu0
      %v1991 = vpop.f32.mrf.mxu0
      %v1992 = vadd.f32 0.0, %v1991
      %v1993 = vpop.f32.mrf.mxu0
      %1994 = vmatprep.mubr.bf16.mxu0 0
      %1995 = vmatmul.mubr.bf16.gmra.mxu0 %v1880
      %v1996 = vpop.f32.mrf.mxu0
      %v1997 = vadd.f32 0.0, %v1996
      %v1998 = vpop.f32.mrf.mxu0
      %v1999 = vpop.f32.mrf.mxu0
      %v2000 = vadd.f32 0.0, %v1999
      %v2001 = vpop.f32.mrf.mxu0
      %2002 = vmatprep.mubr.bf16.mxu0 0
      %2003 = vmatmul.mubr.bf16.gmra.mxu0 %v1883
      %v2004 = vpop.f32.mrf.mxu0
      %v2005 = vadd.f32 0.0, %v2004
      %v2006 = vpop.f32.mrf.mxu0
      %v2007 = vpop.f32.mrf.mxu0
      %v2008 = vadd.f32 0.0, %v2007
      %v2009 = vpop.f32.mrf.mxu0
      %2010 = vmatprep.mubr.bf16.mxu0 0
      %2011 = vmatmul.mubr.bf16.gmra.mxu0 %v1886
      %v2012 = vpop.f32.mrf.mxu0
      %v2013 = vadd.f32 0.0, %v2012
      %v2014 = vpop.f32.mrf.mxu0
      %v2015 = vpop.f32.mrf.mxu0
      %v2016 = vadd.f32 0.0, %v2015
      %v2017 = vpop.f32.mrf.mxu0
      %2018 = vmatprep.mubr.bf16.mxu0 0
      %2019 = vmatmul.mubr.bf16.gmra.mxu0 %v1889
      %v2020 = vpop.f32.mrf.mxu0
      %v2021 = vadd.f32 0.0, %v2020
      %v2022 = vpop.f32.mrf.mxu0
      %v2023 = vpop.f32.mrf.mxu0
      %v2024 = vadd.f32 0.0, %v2023
      %v2025 = vpop.f32.mrf.mxu0
      %2026 = vmatprep.mubr.bf16.mxu0 0
      %2027 = vmatmul.mubr.bf16.gmra.mxu0 %v1892
      %v2028 = vpop.f32.mrf.mxu0
      %v2029 = vadd.f32 0.0, %v2028
      %v2030 = vpop.f32.mrf.mxu0
      %v2031 = vpop.f32.mrf.mxu0
      %v2032 = vadd.f32 0.0, %v2031
      %v2033 = vpop.f32.mrf.mxu0
      %2034 = vmatprep.mubr.bf16.mxu0 0
      %2035 = vmatmul.mubr.bf16.gmra.mxu0 %v1895
      %v2036 = vpop.f32.mrf.mxu0
      %v2037 = vadd.f32 0.0, %v2036
      %v2038 = vpop.f32.mrf.mxu0
      %v2039 = vpop.f32.mrf.mxu0
      %v2040 = vadd.f32 0.0, %v2039
      %v2041 = vpop.f32.mrf.mxu0
      %2042 = vmatprep.mubr.bf16.mxu0 0
      %2043 = vmatmul.mubr.bf16.gmra.mxu0 %v1898
      %v2044 = vpop.f32.mrf.mxu0
      %v2045 = vadd.f32 0.0, %v2044
      %v2046 = vpop.f32.mrf.mxu0
      %v2047 = vpop.f32.mrf.mxu0
      %v2048 = vadd.f32 0.0, %v2047
      %v2049 = vpop.f32.mrf.mxu0
      %2050 = vmatprep.mubr.bf16.mxu0 0
      %2051 = vmatmul.mubr.bf16.gmra.mxu0 %v1901
      %v2052 = vpop.f32.mrf.mxu0
      %v2053 = vadd.f32 0.0, %v2052
      %v2054 = vpop.f32.mrf.mxu0
      %v2055 = vpop.f32.mrf.mxu0
      %v2056 = vadd.f32 0.0, %v2055
      %v2057 = vpop.f32.mrf.mxu0
      %2058 = vmatprep.mubr.bf16.mxu0 0
      %2059 = vmatmul.mubr.bf16.gmra.mxu0 %v1904
      %v2060 = vpop.f32.mrf.mxu0
      %v2061 = vadd.f32 0.0, %v2060
      %v2062 = vpop.f32.mrf.mxu0
      %v2063 = vpop.f32.mrf.mxu0
      %v2064 = vadd.f32 0.0, %v2063
      %v2065 = vpop.f32.mrf.mxu0
      %2066 = vdwg.mxu0
      %v2067 = vadd.f32 %v1775, %v1941
      %v2068 = vadd.f32 %v1776, %v1944
      %v2069 = vadd.f32 %v1777, %v1949
      %v2070 = vadd.f32 %v1778, %v1952
      %v2071 = vadd.f32 %v1779, %v1957
      %v2072 = vadd.f32 %v1780, %v1960
      %v2073 = vadd.f32 %v1781, %v1965
      %v2074 = vadd.f32 %v1782, %v1968
      %v2075 = vadd.f32 %v1783, %v1973
      %v2076 = vadd.f32 %v1784, %v1976
      %v2077 = vadd.f32 %v1785, %v1981
      %v2078 = vadd.f32 %v1786, %v1984
      %v2079 = vadd.f32 %v1787, %v1989
      %v2080 = vadd.f32 %v1788, %v1992
      %v2081 = vadd.f32 %v1789, %v1997
      %v2082 = vadd.f32 %v1790, %v2000
      %v2083 = vadd.f32 %v1791, %v2005
      %v2084 = vadd.f32 %v1792, %v2008
      %v2085 = vadd.f32 %v1793, %v2013
      %v2086 = vadd.f32 %v1794, %v2016
      %v2087 = vadd.f32 %v1795, %v2021
      %v2088 = vadd.f32 %v1796, %v2024
      %v2089 = vadd.f32 %v1797, %v2029
      %v2090 = vadd.f32 %v1798, %v2032
      %v2091 = vadd.f32 %v1799, %v2037
      %v2092 = vadd.f32 %v1800, %v2040
      %v2093 = vadd.f32 %v1801, %v2045
      %v2094 = vadd.f32 %v1802, %v2048
      %v2095 = vadd.f32 %v1803, %v2053
      %v2096 = vadd.f32 %v1804, %v2056
      %v2097 = vadd.f32 %v1805, %v2061
      %v2098 = vadd.f32 %v1806, %v2064
      %s2099 = scalar_lea.vmem %s210, 80
      %v2100 = vld [vmem:[%s2099] sm:$0xf]
      %v2101 = vld [vmem:[%s2099 + $0x4] sm:$0xf]
      %v2102 = vld [vmem:[%s2099 + $0x8] sm:$0xf]
      %v2103 = vld [vmem:[%s2099 + $0xc] sm:$0xf]
      %v2104 = vrot.slane %v349, 1
      %v2105 = vsel %vm1812, %v1842, %v2104
      %v2106 = vrot.slane %v1352, 1
      %v2107 = vsel %vm1812, %v2104, %v2106
      %v2112 = vunpack.c.l.b16 %v2100
      %v2113 = vunpack.c.l.b16 %v2101
      %v2114 = vunpack.c.l.b16 %v2102
      %v2115 = vunpack.c.l.b16 %v2103
      %v2116 = vpack.c.b16 %v2113, %v2112
      %v2117 = vpack.c.b16 %v2115, %v2114
      %v2121 = vsel %vm362, %v2105, 0
      %v2124 = vsel %vm362, %v2107, 0
      %2126 = vmatprep.subr.bf16.mxu0 0
      %2127 = vmatpush1.bf16.msra.mxu0 0
      %2128 = vmatprep.subr.bf16.mxu0 0
      %2129 = vmatpush1.bf16.msra.mxu0 0
      %2130 = vmatprep.subr.bf16.mxu0 0
      %2131 = vmatpush1.bf16.msra.mxu0 0
      %2132 = vmatprep.subr.bf16.mxu0 0
      %2133 = vmatpush1.bf16.msra.mxu0 0
      %2134 = vmatprep.subr.bf16.mxu0 0
      %2135 = vmatpush1.bf16.msra.mxu0 0
      %2136 = vmatprep.subr.bf16.mxu0 0
      %2137 = vmatpush1.bf16.msra.mxu0 0
      %2138 = vmatprep.subr.bf16.mxu0 0
      %2139 = vmatpush1.bf16.msra.mxu0 %v2117
      %2140 = vmatprep.subr.bf16.mxu0 0
      %2141 = vmatpush1.bf16.msra.mxu0 %v2116
      %2142 = vmatprep.subr.bf16.mxu0 0
      %2143 = vmatpush2.bf16.msra.mxu0 0
      %2144 = vmatprep.subr.bf16.mxu0 0
      %2145 = vmatpush2.bf16.msra.mxu0 0
      %2146 = vmatprep.subr.bf16.mxu0 0
      %2147 = vmatpush2.bf16.msra.mxu0 0
      %2148 = vmatprep.subr.bf16.mxu0 0
      %2149 = vmatpush2.bf16.msra.mxu0 0
      %2150 = vmatprep.subr.bf16.mxu0 0
      %2151 = vmatpush2.bf16.msra.mxu0 0
      %2152 = vmatprep.subr.bf16.mxu0 0
      %2153 = vmatpush2.bf16.msra.mxu0 0
      %2154 = vmatprep.subr.bf16.mxu0 0
      %2155 = vmatpush2.bf16.msra.mxu0 0
      %2156 = vmatprep.subr.bf16.mxu0 0
      %2157 = vmatpush2.bf16.msra.mxu0 0
      %2158 = vmatprep.mubr.bf16.mxu0 0
      %2159 = vmatmul.mubr.bf16.gmra.mxu0 %v1862
      %v2160 = vpop.f32.mrf.mxu0
      %v2161 = vadd.f32 0.0, %v2160
      %v2162 = vpop.f32.mrf.mxu0
      %v2163 = vpop.f32.mrf.mxu0
      %v2164 = vadd.f32 0.0, %v2163
      %v2165 = vpop.f32.mrf.mxu0
      %2166 = vmatprep.mubr.bf16.mxu0 0
      %2167 = vmatmul.mubr.bf16.gmra.mxu0 %v1865
      %v2168 = vpop.f32.mrf.mxu0
      %v2169 = vadd.f32 0.0, %v2168
      %v2170 = vpop.f32.mrf.mxu0
      %v2171 = vpop.f32.mrf.mxu0
      %v2172 = vadd.f32 0.0, %v2171
      %v2173 = vpop.f32.mrf.mxu0
      %2174 = vmatprep.mubr.bf16.mxu0 0
      %2175 = vmatmul.mubr.bf16.gmra.mxu0 %v1868
      %v2176 = vpop.f32.mrf.mxu0
      %v2177 = vadd.f32 0.0, %v2176
      %v2178 = vpop.f32.mrf.mxu0
      %v2179 = vpop.f32.mrf.mxu0
      %v2180 = vadd.f32 0.0, %v2179
      %v2181 = vpop.f32.mrf.mxu0
      %2182 = vmatprep.mubr.bf16.mxu0 0
      %2183 = vmatmul.mubr.bf16.gmra.mxu0 %v1871
      %v2184 = vpop.f32.mrf.mxu0
      %v2185 = vadd.f32 0.0, %v2184
      %v2186 = vpop.f32.mrf.mxu0
      %v2187 = vpop.f32.mrf.mxu0
      %v2188 = vadd.f32 0.0, %v2187
      %v2189 = vpop.f32.mrf.mxu0
      %2190 = vmatprep.mubr.bf16.mxu0 0
      %2191 = vmatmul.mubr.bf16.gmra.mxu0 %v1874
      %v2192 = vpop.f32.mrf.mxu0
      %v2193 = vadd.f32 0.0, %v2192
      %v2194 = vpop.f32.mrf.mxu0
      %v2195 = vpop.f32.mrf.mxu0
      %v2196 = vadd.f32 0.0, %v2195
      %v2197 = vpop.f32.mrf.mxu0
      %2198 = vmatprep.mubr.bf16.mxu0 0
      %2199 = vmatmul.mubr.bf16.gmra.mxu0 %v1877
      %v2200 = vpop.f32.mrf.mxu0
      %v2201 = vadd.f32 0.0, %v2200
      %v2202 = vpop.f32.mrf.mxu0
      %v2203 = vpop.f32.mrf.mxu0
      %v2204 = vadd.f32 0.0, %v2203
      %v2205 = vpop.f32.mrf.mxu0
      %2206 = vmatprep.mubr.bf16.mxu0 0
      %2207 = vmatmul.mubr.bf16.gmra.mxu0 %v1880
      %v2208 = vpop.f32.mrf.mxu0
      %v2209 = vadd.f32 0.0, %v2208
      %v2210 = vpop.f32.mrf.mxu0
      %v2211 = vpop.f32.mrf.mxu0
      %v2212 = vadd.f32 0.0, %v2211
      %v2213 = vpop.f32.mrf.mxu0
      %2214 = vmatprep.mubr.bf16.mxu0 0
      %2215 = vmatmul.mubr.bf16.gmra.mxu0 %v1883
      %v2216 = vpop.f32.mrf.mxu0
      %v2217 = vadd.f32 0.0, %v2216
      %v2218 = vpop.f32.mrf.mxu0
      %v2219 = vpop.f32.mrf.mxu0
      %v2220 = vadd.f32 0.0, %v2219
      %v2221 = vpop.f32.mrf.mxu0
      %2222 = vmatprep.mubr.bf16.mxu0 0
      %2223 = vmatmul.mubr.bf16.gmra.mxu0 %v1886
      %v2224 = vpop.f32.mrf.mxu0
      %v2225 = vadd.f32 0.0, %v2224
      %v2226 = vpop.f32.mrf.mxu0
      %v2227 = vpop.f32.mrf.mxu0
      %v2228 = vadd.f32 0.0, %v2227
      %v2229 = vpop.f32.mrf.mxu0
      %2230 = vmatprep.mubr.bf16.mxu0 0
      %2231 = vmatmul.mubr.bf16.gmra.mxu0 %v1889
      %v2232 = vpop.f32.mrf.mxu0
      %v2233 = vadd.f32 0.0, %v2232
      %v2234 = vpop.f32.mrf.mxu0
      %v2235 = vpop.f32.mrf.mxu0
      %v2236 = vadd.f32 0.0, %v2235
      %v2237 = vpop.f32.mrf.mxu0
      %2238 = vmatprep.mubr.bf16.mxu0 0
      %2239 = vmatmul.mubr.bf16.gmra.mxu0 %v1892
      %v2240 = vpop.f32.mrf.mxu0
      %v2241 = vadd.f32 0.0, %v2240
      %v2242 = vpop.f32.mrf.mxu0
      %v2243 = vpop.f32.mrf.mxu0
      %v2244 = vadd.f32 0.0, %v2243
      %v2245 = vpop.f32.mrf.mxu0
      %2246 = vmatprep.mubr.bf16.mxu0 0
      %2247 = vmatmul.mubr.bf16.gmra.mxu0 %v1895
      %v2248 = vpop.f32.mrf.mxu0
      %v2249 = vadd.f32 0.0, %v2248
      %v2250 = vpop.f32.mrf.mxu0
      %v2251 = vpop.f32.mrf.mxu0
      %v2252 = vadd.f32 0.0, %v2251
      %v2253 = vpop.f32.mrf.mxu0
      %2254 = vmatprep.mubr.bf16.mxu0 0
      %2255 = vmatmul.mubr.bf16.gmra.mxu0 %v1898
      %v2256 = vpop.f32.mrf.mxu0
      %v2257 = vadd.f32 0.0, %v2256
      %v2258 = vpop.f32.mrf.mxu0
      %v2259 = vpop.f32.mrf.mxu0
      %v2260 = vadd.f32 0.0, %v2259
      %v2261 = vpop.f32.mrf.mxu0
      %2262 = vmatprep.mubr.bf16.mxu0 0
      %2263 = vmatmul.mubr.bf16.gmra.mxu0 %v1901
      %v2264 = vpop.f32.mrf.mxu0
      %v2265 = vadd.f32 0.0, %v2264
      %v2266 = vpop.f32.mrf.mxu0
      %v2267 = vpop.f32.mrf.mxu0
      %v2268 = vadd.f32 0.0, %v2267
      %v2269 = vpop.f32.mrf.mxu0
      %2270 = vmatprep.mubr.bf16.mxu0 0
      %2271 = vmatmul.mubr.bf16.gmra.mxu0 %v2121
      %v2272 = vpop.f32.mrf.mxu0
      %v2273 = vadd.f32 0.0, %v2272
      %v2274 = vpop.f32.mrf.mxu0
      %v2275 = vpop.f32.mrf.mxu0
      %v2276 = vadd.f32 0.0, %v2275
      %v2277 = vpop.f32.mrf.mxu0
      %2278 = vmatprep.mubr.bf16.mxu0 0
      %2279 = vmatmul.mubr.bf16.gmra.mxu0 %v2124
      %v2280 = vpop.f32.mrf.mxu0
      %v2281 = vadd.f32 0.0, %v2280
      %v2282 = vpop.f32.mrf.mxu0
      %v2283 = vpop.f32.mrf.mxu0
      %v2284 = vadd.f32 0.0, %v2283
      %v2285 = vpop.f32.mrf.mxu0
      %2286 = vdwg.mxu0
      %v2287 = vadd.f32 %v2067, %v2161
      %v2288 = vadd.f32 %v2068, %v2164
      %v2289 = vadd.f32 %v2069, %v2169
      %v2290 = vadd.f32 %v2070, %v2172
      %v2291 = vadd.f32 %v2071, %v2177
      %v2292 = vadd.f32 %v2072, %v2180
      %v2293 = vadd.f32 %v2073, %v2185
      %v2294 = vadd.f32 %v2074, %v2188
      %v2295 = vadd.f32 %v2075, %v2193
      %v2296 = vadd.f32 %v2076, %v2196
      %v2297 = vadd.f32 %v2077, %v2201
      %v2298 = vadd.f32 %v2078, %v2204
      %v2299 = vadd.f32 %v2079, %v2209
      %v2300 = vadd.f32 %v2080, %v2212
      %v2301 = vadd.f32 %v2081, %v2217
      %v2302 = vadd.f32 %v2082, %v2220
      %v2303 = vadd.f32 %v2083, %v2225
      %v2304 = vadd.f32 %v2084, %v2228
      %v2305 = vadd.f32 %v2085, %v2233
      %v2306 = vadd.f32 %v2086, %v2236
      %v2307 = vadd.f32 %v2087, %v2241
      %v2308 = vadd.f32 %v2088, %v2244
      %v2309 = vadd.f32 %v2089, %v2249
      %v2310 = vadd.f32 %v2090, %v2252
      %v2311 = vadd.f32 %v2091, %v2257
      %v2312 = vadd.f32 %v2092, %v2260
      %v2313 = vadd.f32 %v2093, %v2265
      %v2314 = vadd.f32 %v2094, %v2268
      %v2315 = vadd.f32 %v2095, %v2273
      %v2316 = vadd.f32 %v2096, %v2276
      %v2317 = vadd.f32 %v2097, %v2281
      %v2318 = vadd.f32 %v2098, %v2284
      %s2319 = scalar_lea.vmem %s210, 128
      %v2320 = vld [vmem:[%s2319] sm:$0xf]
      %v2321 = vld [vmem:[%s2319 + $0x4] sm:$0xf]
      %v2322 = vld [vmem:[%s2319 + $0x8] sm:$0xf]
      %v2323 = vld [vmem:[%s2319 + $0xc] sm:$0xf]
      %v2324 = vrot.slane %v762, 1
      %v2325 = vsel %vm1812, %v2104, %v2324
      %v2326 = vrot.slane %v1583, 1
      %v2327 = vsel %vm1812, %v2324, %v2326
      %v2332 = vunpack.c.l.b16 %v2320
      %v2333 = vunpack.c.l.b16 %v2321
      %v2334 = vunpack.c.l.b16 %v2322
      %v2335 = vunpack.c.l.b16 %v2323
      %v2336 = vpack.c.b16 %v2333, %v2332
      %v2337 = vpack.c.b16 %v2335, %v2334
      %v2341 = vsel %vm362, %v2325, 0
      %v2344 = vsel %vm362, %v2327, 0
      %2346 = vmatprep.subr.bf16.mxu0 0
      %2347 = vmatpush1.bf16.msra.mxu0 0
      %2348 = vmatprep.subr.bf16.mxu0 0
      %2349 = vmatpush1.bf16.msra.mxu0 0
      %2350 = vmatprep.subr.bf16.mxu0 0
      %2351 = vmatpush1.bf16.msra.mxu0 0
      %2352 = vmatprep.subr.bf16.mxu0 0
      %2353 = vmatpush1.bf16.msra.mxu0 0
      %2354 = vmatprep.subr.bf16.mxu0 0
      %2355 = vmatpush1.bf16.msra.mxu0 0
      %2356 = vmatprep.subr.bf16.mxu0 0
      %2357 = vmatpush1.bf16.msra.mxu0 0
      %2358 = vmatprep.subr.bf16.mxu0 0
      %2359 = vmatpush1.bf16.msra.mxu0 %v2337
      %2360 = vmatprep.subr.bf16.mxu0 0
      %2361 = vmatpush1.bf16.msra.mxu0 %v2336
      %2362 = vmatprep.subr.bf16.mxu0 0
      %2363 = vmatpush2.bf16.msra.mxu0 0
      %2364 = vmatprep.subr.bf16.mxu0 0
      %2365 = vmatpush2.bf16.msra.mxu0 0
      %2366 = vmatprep.subr.bf16.mxu0 0
      %2367 = vmatpush2.bf16.msra.mxu0 0
      %2368 = vmatprep.subr.bf16.mxu0 0
      %2369 = vmatpush2.bf16.msra.mxu0 0
      %2370 = vmatprep.subr.bf16.mxu0 0
      %2371 = vmatpush2.bf16.msra.mxu0 0
      %2372 = vmatprep.subr.bf16.mxu0 0
      %2373 = vmatpush2.bf16.msra.mxu0 0
      %2374 = vmatprep.subr.bf16.mxu0 0
      %2375 = vmatpush2.bf16.msra.mxu0 0
      %2376 = vmatprep.subr.bf16.mxu0 0
      %2377 = vmatpush2.bf16.msra.mxu0 0
      %2378 = vmatprep.mubr.bf16.mxu0 0
      %2379 = vmatmul.mubr.bf16.gmra.mxu0 %v1865
      %v2380 = vpop.f32.mrf.mxu0
      %v2381 = vadd.f32 0.0, %v2380
      %v2382 = vpop.f32.mrf.mxu0
      %v2383 = vpop.f32.mrf.mxu0
      %v2384 = vadd.f32 0.0, %v2383
      %v2385 = vpop.f32.mrf.mxu0
      %2386 = vmatprep.mubr.bf16.mxu0 0
      %2387 = vmatmul.mubr.bf16.gmra.mxu0 %v1868
      %v2388 = vpop.f32.mrf.mxu0
      %v2389 = vadd.f32 0.0, %v2388
      %v2390 = vpop.f32.mrf.mxu0
      %v2391 = vpop.f32.mrf.mxu0
      %v2392 = vadd.f32 0.0, %v2391
      %v2393 = vpop.f32.mrf.mxu0
      %2394 = vmatprep.mubr.bf16.mxu0 0
      %2395 = vmatmul.mubr.bf16.gmra.mxu0 %v1871
      %v2396 = vpop.f32.mrf.mxu0
      %v2397 = vadd.f32 0.0, %v2396
      %v2398 = vpop.f32.mrf.mxu0
      %v2399 = vpop.f32.mrf.mxu0
      %v2400 = vadd.f32 0.0, %v2399
      %v2401 = vpop.f32.mrf.mxu0
      %2402 = vmatprep.mubr.bf16.mxu0 0
      %2403 = vmatmul.mubr.bf16.gmra.mxu0 %v1874
      %v2404 = vpop.f32.mrf.mxu0
      %v2405 = vadd.f32 0.0, %v2404
      %v2406 = vpop.f32.mrf.mxu0
      %v2407 = vpop.f32.mrf.mxu0
      %v2408 = vadd.f32 0.0, %v2407
      %v2409 = vpop.f32.mrf.mxu0
      %2410 = vmatprep.mubr.bf16.mxu0 0
      %2411 = vmatmul.mubr.bf16.gmra.mxu0 %v1877
      %v2412 = vpop.f32.mrf.mxu0
      %v2413 = vadd.f32 0.0, %v2412
      %v2414 = vpop.f32.mrf.mxu0
      %v2415 = vpop.f32.mrf.mxu0
      %v2416 = vadd.f32 0.0, %v2415
      %v2417 = vpop.f32.mrf.mxu0
      %2418 = vmatprep.mubr.bf16.mxu0 0
      %2419 = vmatmul.mubr.bf16.gmra.mxu0 %v1880
      %v2420 = vpop.f32.mrf.mxu0
      %v2421 = vadd.f32 0.0, %v2420
      %v2422 = vpop.f32.mrf.mxu0
      %v2423 = vpop.f32.mrf.mxu0
      %v2424 = vadd.f32 0.0, %v2423
      %v2425 = vpop.f32.mrf.mxu0
      %2426 = vmatprep.mubr.bf16.mxu0 0
      %2427 = vmatmul.mubr.bf16.gmra.mxu0 %v1883
      %v2428 = vpop.f32.mrf.mxu0
      %v2429 = vadd.f32 0.0, %v2428
      %v2430 = vpop.f32.mrf.mxu0
      %v2431 = vpop.f32.mrf.mxu0
      %v2432 = vadd.f32 0.0, %v2431
      %v2433 = vpop.f32.mrf.mxu0
      %2434 = vmatprep.mubr.bf16.mxu0 0
      %2435 = vmatmul.mubr.bf16.gmra.mxu0 %v1886
      %v2436 = vpop.f32.mrf.mxu0
      %v2437 = vadd.f32 0.0, %v2436
      %v2438 = vpop.f32.mrf.mxu0
      %v2439 = vpop.f32.mrf.mxu0
      %v2440 = vadd.f32 0.0, %v2439
      %v2441 = vpop.f32.mrf.mxu0
      %2442 = vmatprep.mubr.bf16.mxu0 0
      %2443 = vmatmul.mubr.bf16.gmra.mxu0 %v1889
      %v2444 = vpop.f32.mrf.mxu0
      %v2445 = vadd.f32 0.0, %v2444
      %v2446 = vpop.f32.mrf.mxu0
      %v2447 = vpop.f32.mrf.mxu0
      %v2448 = vadd.f32 0.0, %v2447
      %v2449 = vpop.f32.mrf.mxu0
      %2450 = vmatprep.mubr.bf16.mxu0 0
      %2451 = vmatmul.mubr.bf16.gmra.mxu0 %v1892
      %v2452 = vpop.f32.mrf.mxu0
      %v2453 = vadd.f32 0.0, %v2452
      %v2454 = vpop.f32.mrf.mxu0
      %v2455 = vpop.f32.mrf.mxu0
      %v2456 = vadd.f32 0.0, %v2455
      %v2457 = vpop.f32.mrf.mxu0
      %2458 = vmatprep.mubr.bf16.mxu0 0
      %2459 = vmatmul.mubr.bf16.gmra.mxu0 %v1895
      %v2460 = vpop.f32.mrf.mxu0
      %v2461 = vadd.f32 0.0, %v2460
      %v2462 = vpop.f32.mrf.mxu0
      %v2463 = vpop.f32.mrf.mxu0
      %v2464 = vadd.f32 0.0, %v2463
      %v2465 = vpop.f32.mrf.mxu0
      %2466 = vmatprep.mubr.bf16.mxu0 0
      %2467 = vmatmul.mubr.bf16.gmra.mxu0 %v1898
      %v2468 = vpop.f32.mrf.mxu0
      %v2469 = vadd.f32 0.0, %v2468
      %v2470 = vpop.f32.mrf.mxu0
      %v2471 = vpop.f32.mrf.mxu0
      %v2472 = vadd.f32 0.0, %v2471
      %v2473 = vpop.f32.mrf.mxu0
      %2474 = vmatprep.mubr.bf16.mxu0 0
      %2475 = vmatmul.mubr.bf16.gmra.mxu0 %v1901
      %v2476 = vpop.f32.mrf.mxu0
      %v2477 = vadd.f32 0.0, %v2476
      %v2478 = vpop.f32.mrf.mxu0
      %v2479 = vpop.f32.mrf.mxu0
      %v2480 = vadd.f32 0.0, %v2479
      %v2481 = vpop.f32.mrf.mxu0
      %2482 = vmatprep.mubr.bf16.mxu0 0
      %2483 = vmatmul.mubr.bf16.gmra.mxu0 %v2121
      %v2484 = vpop.f32.mrf.mxu0
      %v2485 = vadd.f32 0.0, %v2484
      %v2486 = vpop.f32.mrf.mxu0
      %v2487 = vpop.f32.mrf.mxu0
      %v2488 = vadd.f32 0.0, %v2487
      %v2489 = vpop.f32.mrf.mxu0
      %2490 = vmatprep.mubr.bf16.mxu0 0
      %2491 = vmatmul.mubr.bf16.gmra.mxu0 %v2341
      %v2492 = vpop.f32.mrf.mxu0
      %v2493 = vadd.f32 0.0, %v2492
      %v2494 = vpop.f32.mrf.mxu0
      %v2495 = vpop.f32.mrf.mxu0
      %v2496 = vadd.f32 0.0, %v2495
      %v2497 = vpop.f32.mrf.mxu0
      %2498 = vmatprep.mubr.bf16.mxu0 0
      %2499 = vmatmul.mubr.bf16.gmra.mxu0 %v2344
      %v2500 = vpop.f32.mrf.mxu0
      %v2501 = vadd.f32 0.0, %v2500
      %v2502 = vpop.f32.mrf.mxu0
      %v2503 = vpop.f32.mrf.mxu0
      %v2504 = vadd.f32 0.0, %v2503
      %v2505 = vpop.f32.mrf.mxu0
      %2506 = vdwg.mxu0
      %v2507 = vadd.f32 %v2287, %v2381
      %v2508 = vadd.f32 %v2288, %v2384
      %v2509 = vadd.f32 %v2289, %v2389
      %v2510 = vadd.f32 %v2290, %v2392
      %v2511 = vadd.f32 %v2291, %v2397
      %v2512 = vadd.f32 %v2292, %v2400
      %v2513 = vadd.f32 %v2293, %v2405
      %v2514 = vadd.f32 %v2294, %v2408
      %v2515 = vadd.f32 %v2295, %v2413
      %v2516 = vadd.f32 %v2296, %v2416
      %v2517 = vadd.f32 %v2297, %v2421
      %v2518 = vadd.f32 %v2298, %v2424
      %v2519 = vadd.f32 %v2299, %v2429
      %v2520 = vadd.f32 %v2300, %v2432
      %v2521 = vadd.f32 %v2301, %v2437
      %v2522 = vadd.f32 %v2302, %v2440
      %v2523 = vadd.f32 %v2303, %v2445
      %v2524 = vadd.f32 %v2304, %v2448
      %v2525 = vadd.f32 %v2305, %v2453
      %v2526 = vadd.f32 %v2306, %v2456
      %v2527 = vadd.f32 %v2307, %v2461
      %v2528 = vadd.f32 %v2308, %v2464
      %v2529 = vadd.f32 %v2309, %v2469
      %v2530 = vadd.f32 %v2310, %v2472
      %v2531 = vadd.f32 %v2311, %v2477
      %v2532 = vadd.f32 %v2312, %v2480
      %v2533 = vadd.f32 %v2313, %v2485
      %v2534 = vadd.f32 %v2314, %v2488
      %v2535 = vadd.f32 %v2315, %v2493
      %v2536 = vadd.f32 %v2316, %v2496
      %v2537 = vadd.f32 %v2317, %v2501
      %v2538 = vadd.f32 %v2318, %v2504
      %v2540 = vlaneseq
      %v2541 = vshrl.u32 %v2540, 7
      %v2542 = vsub.s32 0, %v2541
      %v2543 = vrot.slane %v223, %v2542
      %v2545 = vadd.f32 %v2507, %v2543
      %v2546 = vadd.f32 %v2508, %v2543
      %v2547 = vadd.f32 %v2509, %v2543
      %v2548 = vadd.f32 %v2510, %v2543
      %v2549 = vadd.f32 %v2511, %v2543
      %v2550 = vadd.f32 %v2512, %v2543
      %v2551 = vadd.f32 %v2513, %v2543
      %v2552 = vadd.f32 %v2514, %v2543
      %v2553 = vadd.f32 %v2515, %v2543
      %v2554 = vadd.f32 %v2516, %v2543
      %v2555 = vadd.f32 %v2517, %v2543
      %v2556 = vadd.f32 %v2518, %v2543
      %v2557 = vadd.f32 %v2519, %v2543
      %v2558 = vadd.f32 %v2520, %v2543
      %v2559 = vadd.f32 %v2521, %v2543
      %v2560 = vadd.f32 %v2522, %v2543
      %v2561 = vadd.f32 %v2523, %v2543
      %v2562 = vadd.f32 %v2524, %v2543
      %v2563 = vadd.f32 %v2525, %v2543
      %v2564 = vadd.f32 %v2526, %v2543
      %v2565 = vadd.f32 %v2527, %v2543
      %v2566 = vadd.f32 %v2528, %v2543
      %v2567 = vadd.f32 %v2529, %v2543
      %v2568 = vadd.f32 %v2530, %v2543
      %v2569 = vadd.f32 %v2531, %v2543
      %v2570 = vadd.f32 %v2532, %v2543
      %v2571 = vadd.f32 %v2533, %v2543
      %v2572 = vadd.f32 %v2534, %v2543
      %v2573 = vadd.f32 %v2535, %v2543
      %v2574 = vadd.f32 %v2536, %v2543
      %v2575 = vadd.f32 %v2537, %v2543
      %v2576 = vadd.f32 %v2538, %v2543
      %2577 = vst [vmem:[%s221] sm:$0xff] %v2545
      %2578 = vst [vmem:[%s221 + $0x8] sm:$0xff] %v2546
      %2579 = vst [vmem:[%s221 + $0x10] sm:$0xff] %v2547
      %2580 = vst [vmem:[%s221 + $0x18] sm:$0xff] %v2548
      %2581 = vst [vmem:[%s221 + $0x20] sm:$0xff] %v2549
      %2582 = vst [vmem:[%s221 + $0x28] sm:$0xff] %v2550
      %2583 = vst [vmem:[%s221 + $0x30] sm:$0xff] %v2551
      %2584 = vst [vmem:[%s221 + $0x38] sm:$0xff] %v2552
      %2585 = vst [vmem:[%s221 + $0x40] sm:$0xff] %v2553
      %2586 = vst [vmem:[%s221 + $0x48] sm:$0xff] %v2554
      %2587 = vst [vmem:[%s221 + $0x50] sm:$0xff] %v2555
      %2588 = vst [vmem:[%s221 + $0x58] sm:$0xff] %v2556
      %2589 = vst [vmem:[%s221 + $0x60] sm:$0xff] %v2557
      %2590 = vst [vmem:[%s221 + $0x68] sm:$0xff] %v2558
      %2591 = vst [vmem:[%s221 + $0x70] sm:$0xff] %v2559
      %2592 = vst [vmem:[%s221 + $0x78] sm:$0xff] %v2560
      %2593 = vst [vmem:[%s221 + $0x80] sm:$0xff] %v2561
      %2594 = vst [vmem:[%s221 + $0x88] sm:$0xff] %v2562
      %2595 = vst [vmem:[%s221 + $0x90] sm:$0xff] %v2563
      %2596 = vst [vmem:[%s221 + $0x98] sm:$0xff] %v2564
      %2597 = vst [vmem:[%s221 + $0xa0] sm:$0xff] %v2565
      %2598 = vst [vmem:[%s221 + $0xa8] sm:$0xff] %v2566
      %2599 = vst [vmem:[%s221 + $0xb0] sm:$0xff] %v2567
      %2600 = vst [vmem:[%s221 + $0xb8] sm:$0xff] %v2568
      %2601 = vst [vmem:[%s221 + $0xc0] sm:$0xff] %v2569
      %2602 = vst [vmem:[%s221 + $0xc8] sm:$0xff] %v2570
      %2603 = vst [vmem:[%s221 + $0xd0] sm:$0xff] %v2571
      %2604 = vst [vmem:[%s221 + $0xd8] sm:$0xff] %v2572
      %2605 = vst [vmem:[%s221 + $0xe0] sm:$0xff] %v2573
      %2606 = vst [vmem:[%s221 + $0xe8] sm:$0xff] %v2574
      %2607 = vst [vmem:[%s221 + $0xf0] sm:$0xff] %v2575
      %2608 = vst [vmem:[%s221 + $0xf8] sm:$0xff] %v2576
      %p2609 = scmp.lt.s32.totalorder %s18, 1
      %s2610 = scalar_select %p2609, %s18, 1
      %p2611 = scmp.lt.s32.totalorder %s19, 0
      %s2612 = scalar_select %p2611, %s19, 0
      %s2613 = smul.addr %s2610, 32
      %s2614 = sadd.s32 %s2612, %s2613
      %s2615 = smul.addr %s2614, 8
      %s2616 = scalar_lea.vmem %s3, %s2615
      // Predicated region
      $region33: #{hyper_analysis_ex.5} parent=31 // pred_check
        %p2617 = pneg %p124
      $region34: #{hyper_analysis_ex.5} parent=31 // pred_check_branch
        %2619 = sbr.rel (%p2617) target = $region36
      $region35: #{hyper_analysis_ex.5} parent=31 // pred_region
        _
      $region36: #{hyper_analysis_ex.5} parent=31 // pred_fallthru
        _
    $region32: #{hyper_analysis_ex.5} parent=5 // pred_fallthru
      _
    %p2620 = scmp.le.s32.totalorder 2, %s9
    // Predicated region
    $region37: #{hyper_analysis_ex.5} parent=5 // pred_check
      %p2621 = pneg %p2620
    $region38: #{hyper_analysis_ex.5} parent=5 // pred_check_branch
      %2623 = sbr.rel (%p2621) target = $region40
    $region39: #{hyper_analysis_ex.5} parent=5 // pred_region
      %s2624 = ssub.s32 %s9, 2
      // Predicated region
      $region41: #{hyper_analysis_ex.5} parent=39 // pred_check
        %p2625 = pneg %p130
      $region42: #{hyper_analysis_ex.5} parent=39 // pred_check_branch
        %2627 = sbr.rel (%p2625) target = $region44
      $region43: #{hyper_analysis_ex.5} parent=39 // pred_region
        %p2628 = scmp.lt.s32.totalorder %s20, 1
        %s2629 = scalar_select %p2628, %s20, 1
        %p2630 = scmp.lt.s32.totalorder %s21, 0
        %s2631 = scalar_select %p2630, %s21, 0
        %s2632 = smul.addr %s2629, 32
        %s2633 = sadd.s32 %s2631, %s2632
        %s2634 = smul.addr %s2633, 8
        %s2635 = scalar_lea.vmem %s3, %s2634
      $region44: #{hyper_analysis_ex.5} parent=39 // pred_fallthru
        _
    $region40: #{hyper_analysis_ex.5} parent=5 // pred_fallthru
      _
  $region6: #{hyper_analysis_ex.5} parent=0 // loop_footer
    %s13 = sadd.s32 1, %s9
  $region7: #{hyper_analysis_ex.5} parent=0 // loop_footer_branch
    %8 = sbr.rel target = $region3
  $region8: #{hyper_analysis_ex.5} parent=0 // loop_exit
    _

</llo_original>
